<compile_context>
chip_gen: v7x
topology: tpu7x:2x2x1
jax: 0.10.0
libtpu: 0.0.40
codegen_flags: <defaults>
</compile_context>

<pallas_src>
import functools
import math

import jax
import jax.numpy as jnp
import numpy as np
from jax import lax
from jax.experimental import pallas as pl
from jax.experimental.pallas import tpu as pltpu

LEAKY_SLOPE = 0.01
BN_EPS = 1e-5


def _leaky(x):
    return jnp.where(x >= 0, x, LEAKY_SLOPE * x)


def bnblock_kernel(x_ref, masks_ref, w1_ref, b1_ref, w2_ref, b2_ref, o_ref,
                   *, width, cout):
    # x_ref    : (Cin, Nb)       one upsampled image, channels on sublanes, Nb = H*W lanes
    # masks_ref: (9, Nb) bf16    0/1 zero-padding validity mask per 3x3 tap
    # w1_ref   : (9*Cout, Cin)   per-tap conv1 weights (BN1 scale folded), tap t = rows [t*Cout, (t+1)*Cout)
    # b1_ref   : (Cout, 1) f32   folded BN1 shift (conv bias + running stats)
    # w2_ref   : (9*Cout, Cout)  per-tap conv2 weights (BN2 scale folded)
    # b2_ref   : (Cout, 1) f32   folded BN2 shift
    # o_ref    : (Cout, Nb)      lane-dense output
    n = x_ref.shape[1]

    def conv3x3(src, w_ref):
        # src: (C, Nb) f32 value.  Accumulate 9 per-tap matmuls directly on
        # values (no scratch round-trip).  pltpu.roll runs on the XLU and the
        # mask multiply implements the zero padding; the tap is cast to the
        # matmul dtype only at the MXU boundary.
        acc = None
        t = 0
        for dy in (-1, 0, 1):
            for dx in (-1, 0, 1):
                delta = dy * width + dx
                if delta == 0:
                    tap = src                                   # center tap: always valid
                else:
                    shifted = pltpu.roll(src, (-delta) % n, axis=1)
                    tap = shifted * masks_ref[pl.ds(t, 1), :]   # (1, Nb) mask, bcast on sublanes
                w_tap = w_ref[pl.ds(t * cout, cout), :]         # (Cout, C), sublane-aligned slice
                contrib = jnp.dot(w_tap, tap.astype(w_ref.dtype),
                                  preferred_element_type=jnp.float32)
                acc = contrib if acc is None else acc + contrib
                t += 1
        return acc                                              # (Cout, Nb) f32

    # conv1 (+ folded BN1 shift) + LeakyReLU
    h = _leaky(conv3x3(x_ref[...].astype(jnp.float32), w1_ref) + b1_ref[...])
    # conv2 on the in-register intermediate (+ folded BN2 shift) + LeakyReLU
    o_ref[...] = _leaky(conv3x3(h, w2_ref) + b2_ref[...]).astype(o_ref.dtype)


def nearest_resize_nhwc(x, scale):
    """PyTorch F.interpolate(mode='nearest', scale_factor=scale) semantics."""
    B, H, W, C = x.shape
    Ho = int(math.floor(H * scale))
    Wo = int(math.floor(W * scale))
    hi = (jnp.arange(Ho) * H // Ho).astype(jnp.int32)
    wi = (jnp.arange(Wo) * W // Wo).astype(jnp.int32)
    return x[:, hi][:, :, wi]


def fold_conv_bn(w, bias, gamma, beta, mean, var, eps=BN_EPS):
    """Fold eval-mode BatchNorm into the conv:  BN(Wx + b) == (W*s) x + shift."""
    s = gamma / jnp.sqrt(var + eps)               # (Cout,)
    w_f = w * s[None, None, None, :]              # scale per output channel (HWIO)
    shift = (bias - mean) * s + beta              # (Cout,)
    return w_f, shift


def _tap_masks(H, W):
    """(9, H*W) 0/1 masks implementing the 3x3 zero padding for ONE image."""
    n = jnp.arange(H * W, dtype=jnp.int32)
    hh = n // W
    ww = n % W
    rows = []
    for dy in (-1, 0, 1):
        for dx in (-1, 0, 1):
            ok = ((hh + dy >= 0) & (hh + dy < H) &
                  (ww + dx >= 0) & (ww + dx < W))
            rows.append(ok.astype(jnp.float32))
    return jnp.stack(rows, axis=0)


def _per_tap_weights(w_folded, cin, cout, dtype):
    """(3,3,Cin,Cout) HWIO -> (9*Cout, Cin): tap t (dy-major, dx-minor) at rows [t*Cout,(t+1)*Cout)."""
    w = w_folded.reshape(9, cin, cout)            # tap-major
    w = jnp.transpose(w, (0, 2, 1))               # (9, Cout, Cin)
    return w.reshape(9 * cout, cin).astype(dtype)


def bnblock_forward(x_nchw, params, scale_factor, matmul_dtype=jnp.bfloat16):
    """x_nchw: (B, Cin, H, W) float32. Returns (B, Cout, Ho, Wo) float32."""
    w1, b1, g1, be1, m1, v1, w2, b2, g2, be2, m2, v2 = params
    Cin, Cout = w1.shape[2], w1.shape[3]
    B = x_nchw.shape[0]

    # --- Nearest upsample + channels-first flatten: (B,Cin,H,W) -> (Cin, B*Ho*Wo) ---
    if float(scale_factor).is_integer() and scale_factor >= 1:
        si = int(scale_factor)
        x_t = jnp.transpose(x_nchw, (1, 0, 2, 3)).astype(jnp.float32)   # (C,B,H,W)
        C, _, H, W = x_t.shape
        Ho, Wo = H * si, W * si
        x_t = jnp.broadcast_to(x_t[:, :, :, None, :, None],
                               (C, B, H, si, W, si)).reshape(C, B * Ho * Wo)
    else:
        # TODO(synk): non-integer scales use the gather fallback; verify edge
        # cases vs PyTorch's float-floor nearest indexing if ever used.
        x = jnp.transpose(x_nchw, (0, 2, 3, 1)).astype(jnp.float32)
        x = nearest_resize_nhwc(x, scale_factor)
        B, Ho, Wo, C = x.shape
        x_t = jnp.transpose(x, (3, 0, 1, 2)).reshape(C, B * Ho * Wo)

    Nb = Ho * Wo
    N = B * Nb

    # --- Fold BN into the convs; pre-reshape per-tap weights; bf16 multiplicands ---
    w1f, sh1 = fold_conv_bn(w1, b1, g1, be1, m1, v1)
    w2f, sh2 = fold_conv_bn(w2, b2, g2, be2, m2, v2)
    w1t = _per_tap_weights(w1f, Cin, Cout, matmul_dtype)
    w2t = _per_tap_weights(w2f, Cout, Cout, matmul_dtype)
    sh1 = sh1.reshape(Cout, 1).astype(jnp.float32)
    sh2 = sh2.reshape(Cout, 1).astype(jnp.float32)

    masks = _tap_masks(Ho, Wo).astype(jnp.bfloat16)   # 0/1 exact; halves mask DMA

    kernel = functools.partial(bnblock_kernel, width=Wo, cout=Cout)

    out_t = pl.pallas_call(
        kernel,
        out_shape=jax.ShapeDtypeStruct((Cout, N), jnp.float32),
        grid_spec=pltpu.PrefetchScalarGridSpec(
            num_scalar_prefetch=0,
            grid=(B,),   # one whole image per step; shardable across v7x's 2 TCs
            in_specs=[
                pl.BlockSpec((Cin, Nb), lambda b: (0, b)),
                pl.BlockSpec((9, Nb), lambda b: (0, 0)),
                pl.BlockSpec((9 * Cout, Cin), lambda b: (0, 0)),
                pl.BlockSpec((Cout, 1), lambda b: (0, 0)),
                pl.BlockSpec((9 * Cout, Cout), lambda b: (0, 0)),
                pl.BlockSpec((Cout, 1), lambda b: (0, 0)),
            ],
            out_specs=pl.BlockSpec((Cout, Nb), lambda b: (0, b)),
        ),
        compiler_params=pltpu.CompilerParams(
            dimension_semantics=("parallel",)),
    )(x_t, masks, w1t, sh1, w2t, sh2)

    # (Cout, B*Ho*Wo) -> (B, Cout, Ho, Wo): pure layout plumbing outside the kernel.
    return jnp.transpose(out_t.reshape(Cout, B, Ho, Wo), (1, 0, 2, 3))


def bnblock_reference(x_nchw, params, scale_factor):
    """Pure-JAX reference (same math, lax.conv) for a sanity check."""
    w1, b1, g1, be1, m1, v1, w2, b2, g2, be2, m2, v2 = params
    x = jnp.transpose(x_nchw, (0, 2, 3, 1)).astype(jnp.float32)
    x = nearest_resize_nhwc(x, scale_factor)
    dn = ("NHWC", "HWIO", "NHWC")

    y = lax.conv_general_dilated(x, w1, (1, 1), "SAME",
                                 dimension_numbers=dn) + b1
    y = (y - m1) / jnp.sqrt(v1 + BN_EPS) * g1 + be1
    y = _leaky(y)

    y = lax.conv_general_dilated(y, w2, (1, 1), "SAME",
                                 dimension_numbers=dn) + b2
    y = (y - m2) / jnp.sqrt(v2 + BN_EPS) * g2 + be2
    y = _leaky(y)
    return jnp.transpose(y, (0, 3, 1, 2))


def make_params(key, in_channels, out_channels):
    ks = jax.random.split(key, 8)
    fan1 = in_channels * 9
    fan2 = out_channels * 9
    w1 = jax.random.uniform(ks[0], (3, 3, in_channels, out_channels),
                            jnp.float32, -1.0, 1.0) / math.sqrt(fan1)
    b1 = jax.random.uniform(ks[1], (out_channels,), jnp.float32,
                            -1.0, 1.0) / math.sqrt(fan1)
    w2 = jax.random.uniform(ks[2], (3, 3, out_channels, out_channels),
                            jnp.float32, -1.0, 1.0) / math.sqrt(fan2)
    b2 = jax.random.uniform(ks[3], (out_channels,), jnp.float32,
                            -1.0, 1.0) / math.sqrt(fan2)
    # BatchNorm params / running stats (deterministic, non-trivial).
    g1 = 1.0 + 0.1 * jax.random.normal(ks[4], (out_channels,), jnp.float32)
    be1 = 0.1 * jax.random.normal(ks[5], (out_channels,), jnp.float32)
    m1 = 0.05 * jax.random.normal(ks[6], (out_channels,), jnp.float32)
    v1 = 1.0 + 0.1 * jnp.abs(jax.random.normal(ks[7], (out_channels,),
                                               jnp.float32))
    g2 = jnp.roll(g1, 1)
    be2 = jnp.roll(be1, 1)
    m2 = jnp.roll(m1, 1)
    v2 = jnp.roll(v1, 1)
    return (w1, b1, g1, be1, m1, v1, w2, b2, g2, be2, m2, v2)


if __name__ == "__main__":
    # BNBlock(in_channels=4, out_channels=8, sampler=2.0) at small shapes.
    B, Cin, H, W = 2, 4, 16, 16
    Cout = 8
    scale_factor = 2.0

    key = jax.random.PRNGKey(0)
    kx, kp = jax.random.split(key)
    x = jax.random.normal(kx, (B, Cin, H, W), jnp.float32)
    params = make_params(kp, Cin, Cout)

    ref = jax.block_until_ready(bnblock_reference(x, params, scale_factor))

    # Strict numerical check on the f32 debug path (same math as reference).
    out_f32 = jax.block_until_ready(
        bnblock_forward(x, params, scale_factor, matmul_dtype=jnp.float32))
    np.testing.assert_allclose(np.asarray(out_f32), np.asarray(ref),
                               rtol=1e-4, atol=1e-4)

    # Fast path: bf16 MXU multiplicands, f32 accumulation (deliberately loose tolerance).
    out = jax.block_until_ready(
        bnblock_forward(x, params, scale_factor, matmul_dtype=jnp.bfloat16))
    np.testing.assert_allclose(np.asarray(out), np.asarray(ref),
                               rtol=5e-2, atol=5e-2)

    assert out.shape == (B, Cout, int(H * scale_factor), int(W * scale_factor))

    print("KERNEL_OK")
</pallas_src>

<mosaic_0001>
module attributes {stable_mosaic.version = 11 : i64} {
  func.func @bnblock_kernel(%arg0: i32, %arg1: memref<4x1024xf32, #tpu.memory_space<vmem>>, %arg2: memref<9x1024xbf16, #tpu.memory_space<vmem>>, %arg3: memref<72x4xf32, #tpu.memory_space<vmem>>, %arg4: memref<8x1xf32, #tpu.memory_space<vmem>>, %arg5: memref<72x8xf32, #tpu.memory_space<vmem>>, %arg6: memref<8x1xf32, #tpu.memory_space<vmem>>, %arg7: memref<8x1024xf32, #tpu.memory_space<vmem>>) attributes {dimension_semantics = [#tpu.dimension_semantics<parallel>], iteration_bounds = array<i64: 2>, scalar_prefetch = 0 : i64, scratch_operands = 0 : i64, tpu.core_type = #tpu.core_type<tc>, window_params = [{transform_indices = @transform_0, window_bounds = array<i64: 4, 1024>}, {pipeline_mode = #tpu.pipeline_mode<synchronous>, transform_indices = @transform_1, window_bounds = array<i64: 9, 1024>}, {pipeline_mode = #tpu.pipeline_mode<synchronous>, transform_indices = @transform_2, window_bounds = array<i64: 72, 4>}, {pipeline_mode = #tpu.pipeline_mode<synchronous>, transform_indices = @transform_3, window_bounds = array<i64: 8, 1>}, {pipeline_mode = #tpu.pipeline_mode<synchronous>, transform_indices = @transform_4, window_bounds = array<i64: 72, 8>}, {pipeline_mode = #tpu.pipeline_mode<synchronous>, transform_indices = @transform_5, window_bounds = array<i64: 8, 1>}, {transform_indices = @transform_6, window_bounds = array<i64: 8, 1024>}]} {
    %c0 = arith.constant 0 : index
    %c0_0 = arith.constant 0 : index
    %0 = vector.load %arg1[%c0, %c0_0] : memref<4x1024xf32, #tpu.memory_space<vmem>>, vector<4x1024xf32>
    %c33_i32 = arith.constant 33 : i32
    %1 = tpu.dynamic_rotate %0 by %c33_i32 dim 1 : vector<4x1024xf32>, i32 -> vector<4x1024xf32>
    %c0_1 = arith.constant 0 : index
    %c0_2 = arith.constant 0 : index
    %2 = vector.load %arg2[%c0_1, %c0_2] : memref<9x1024xbf16, #tpu.memory_space<vmem>>, vector<1x1024xbf16>
    %3 = arith.extf %2 : vector<1x1024xbf16> to vector<1x1024xf32>
    %4 = vector.broadcast %3 : vector<1x1024xf32> to vector<4x1024xf32>
    %5 = arith.mulf %1, %4 : vector<4x1024xf32>
    %c0_3 = arith.constant 0 : index
    %c0_4 = arith.constant 0 : index
    %6 = vector.load %arg3[%c0_3, %c0_4] : memref<72x4xf32, #tpu.memory_space<vmem>>, vector<8x4xf32>
    %cst = arith.constant dense<0.000000e+00> : vector<8x1024xf32>
    %7 = tpu.matmul %6, %5, %cst {dimension_numbers = #tpu.dot_dimension_numbers<[1], [0], [0], [1], [0, 0, 1, 1], [], []>} : vector<8x4xf32>, vector<4x1024xf32>, vector<8x1024xf32> -> vector<8x1024xf32>
    %c32_i32 = arith.constant 32 : i32
    %8 = tpu.dynamic_rotate %0 by %c32_i32 dim 1 : vector<4x1024xf32>, i32 -> vector<4x1024xf32>
    %c1 = arith.constant 1 : index
    %c0_5 = arith.constant 0 : index
    %9 = vector.load %arg2[%c1, %c0_5] : memref<9x1024xbf16, #tpu.memory_space<vmem>>, vector<1x1024xbf16>
    %10 = arith.extf %9 : vector<1x1024xbf16> to vector<1x1024xf32>
    %11 = vector.broadcast %10 : vector<1x1024xf32> to vector<4x1024xf32>
    %12 = arith.mulf %8, %11 : vector<4x1024xf32>
    %c8 = arith.constant 8 : index
    %c0_6 = arith.constant 0 : index
    %13 = vector.load %arg3[%c8, %c0_6] : memref<72x4xf32, #tpu.memory_space<vmem>>, vector<8x4xf32>
    %cst_7 = arith.constant dense<0.000000e+00> : vector<8x1024xf32>
    %14 = tpu.matmul %13, %12, %cst_7 {dimension_numbers = #tpu.dot_dimension_numbers<[1], [0], [0], [1], [0, 0, 1, 1], [], []>} : vector<8x4xf32>, vector<4x1024xf32>, vector<8x1024xf32> -> vector<8x1024xf32>
    %15 = arith.addf %7, %14 : vector<8x1024xf32>
    %c31_i32 = arith.constant 31 : i32
    %16 = tpu.dynamic_rotate %0 by %c31_i32 dim 1 : vector<4x1024xf32>, i32 -> vector<4x1024xf32>
    %c2 = arith.constant 2 : index
    %c0_8 = arith.constant 0 : index
    %17 = vector.load %arg2[%c2, %c0_8] : memref<9x1024xbf16, #tpu.memory_space<vmem>>, vector<1x1024xbf16>
    %18 = arith.extf %17 : vector<1x1024xbf16> to vector<1x1024xf32>
    %19 = vector.broadcast %18 : vector<1x1024xf32> to vector<4x1024xf32>
    %20 = arith.mulf %16, %19 : vector<4x1024xf32>
    %c16 = arith.constant 16 : index
    %c0_9 = arith.constant 0 : index
    %21 = vector.load %arg3[%c16, %c0_9] : memref<72x4xf32, #tpu.memory_space<vmem>>, vector<8x4xf32>
    %cst_10 = arith.constant dense<0.000000e+00> : vector<8x1024xf32>
    %22 = tpu.matmul %21, %20, %cst_10 {dimension_numbers = #tpu.dot_dimension_numbers<[1], [0], [0], [1], [0, 0, 1, 1], [], []>} : vector<8x4xf32>, vector<4x1024xf32>, vector<8x1024xf32> -> vector<8x1024xf32>
    %23 = arith.addf %15, %22 : vector<8x1024xf32>
    %c1_i32 = arith.constant 1 : i32
    %24 = tpu.dynamic_rotate %0 by %c1_i32 dim 1 : vector<4x1024xf32>, i32 -> vector<4x1024xf32>
    %c3 = arith.constant 3 : index
    %c0_11 = arith.constant 0 : index
    %25 = vector.load %arg2[%c3, %c0_11] : memref<9x1024xbf16, #tpu.memory_space<vmem>>, vector<1x1024xbf16>
    %26 = arith.extf %25 : vector<1x1024xbf16> to vector<1x1024xf32>
    %27 = vector.broadcast %26 : vector<1x1024xf32> to vector<4x1024xf32>
    %28 = arith.mulf %24, %27 : vector<4x1024xf32>
    %c24 = arith.constant 24 : index
    %c0_12 = arith.constant 0 : index
    %29 = vector.load %arg3[%c24, %c0_12] : memref<72x4xf32, #tpu.memory_space<vmem>>, vector<8x4xf32>
    %cst_13 = arith.constant dense<0.000000e+00> : vector<8x1024xf32>
    %30 = tpu.matmul %29, %28, %cst_13 {dimension_numbers = #tpu.dot_dimension_numbers<[1], [0], [0], [1], [0, 0, 1, 1], [], []>} : vector<8x4xf32>, vector<4x1024xf32>, vector<8x1024xf32> -> vector<8x1024xf32>
    %31 = arith.addf %23, %30 : vector<8x1024xf32>
    %c32 = arith.constant 32 : index
    %c0_14 = arith.constant 0 : index
    %32 = vector.load %arg3[%c32, %c0_14] : memref<72x4xf32, #tpu.memory_space<vmem>>, vector<8x4xf32>
    %cst_15 = arith.constant dense<0.000000e+00> : vector<8x1024xf32>
    %33 = tpu.matmul %32, %0, %cst_15 {dimension_numbers = #tpu.dot_dimension_numbers<[1], [0], [0], [1], [0, 0, 1, 1], [], []>} : vector<8x4xf32>, vector<4x1024xf32>, vector<8x1024xf32> -> vector<8x1024xf32>
    %34 = arith.addf %31, %33 : vector<8x1024xf32>
    %c1023_i32 = arith.constant 1023 : i32
    %35 = tpu.dynamic_rotate %0 by %c1023_i32 dim 1 : vector<4x1024xf32>, i32 -> vector<4x1024xf32>
    %c5 = arith.constant 5 : index
    %c0_16 = arith.constant 0 : index
    %36 = vector.load %arg2[%c5, %c0_16] : memref<9x1024xbf16, #tpu.memory_space<vmem>>, vector<1x1024xbf16>
    %37 = arith.extf %36 : vector<1x1024xbf16> to vector<1x1024xf32>
    %38 = vector.broadcast %37 : vector<1x1024xf32> to vector<4x1024xf32>
    %39 = arith.mulf %35, %38 : vector<4x1024xf32>
    %c40 = arith.constant 40 : index
    %c0_17 = arith.constant 0 : index
    %40 = vector.load %arg3[%c40, %c0_17] : memref<72x4xf32, #tpu.memory_space<vmem>>, vector<8x4xf32>
    %cst_18 = arith.constant dense<0.000000e+00> : vector<8x1024xf32>
    %41 = tpu.matmul %40, %39, %cst_18 {dimension_numbers = #tpu.dot_dimension_numbers<[1], [0], [0], [1], [0, 0, 1, 1], [], []>} : vector<8x4xf32>, vector<4x1024xf32>, vector<8x1024xf32> -> vector<8x1024xf32>
    %42 = arith.addf %34, %41 : vector<8x1024xf32>
    %c993_i32 = arith.constant 993 : i32
    %43 = tpu.dynamic_rotate %0 by %c993_i32 dim 1 : vector<4x1024xf32>, i32 -> vector<4x1024xf32>
    %c6 = arith.constant 6 : index
    %c0_19 = arith.constant 0 : index
    %44 = vector.load %arg2[%c6, %c0_19] : memref<9x1024xbf16, #tpu.memory_space<vmem>>, vector<1x1024xbf16>
    %45 = arith.extf %44 : vector<1x1024xbf16> to vector<1x1024xf32>
    %46 = vector.broadcast %45 : vector<1x1024xf32> to vector<4x1024xf32>
    %47 = arith.mulf %43, %46 : vector<4x1024xf32>
    %c48 = arith.constant 48 : index
    %c0_20 = arith.constant 0 : index
    %48 = vector.load %arg3[%c48, %c0_20] : memref<72x4xf32, #tpu.memory_space<vmem>>, vector<8x4xf32>
    %cst_21 = arith.constant dense<0.000000e+00> : vector<8x1024xf32>
    %49 = tpu.matmul %48, %47, %cst_21 {dimension_numbers = #tpu.dot_dimension_numbers<[1], [0], [0], [1], [0, 0, 1, 1], [], []>} : vector<8x4xf32>, vector<4x1024xf32>, vector<8x1024xf32> -> vector<8x1024xf32>
    %50 = arith.addf %42, %49 : vector<8x1024xf32>
    %c992_i32 = arith.constant 992 : i32
    %51 = tpu.dynamic_rotate %0 by %c992_i32 dim 1 : vector<4x1024xf32>, i32 -> vector<4x1024xf32>
    %c7 = arith.constant 7 : index
    %c0_22 = arith.constant 0 : index
    %52 = vector.load %arg2[%c7, %c0_22] : memref<9x1024xbf16, #tpu.memory_space<vmem>>, vector<1x1024xbf16>
    %53 = arith.extf %52 : vector<1x1024xbf16> to vector<1x1024xf32>
    %54 = vector.broadcast %53 : vector<1x1024xf32> to vector<4x1024xf32>
    %55 = arith.mulf %51, %54 : vector<4x1024xf32>
    %c56 = arith.constant 56 : index
    %c0_23 = arith.constant 0 : index
    %56 = vector.load %arg3[%c56, %c0_23] : memref<72x4xf32, #tpu.memory_space<vmem>>, vector<8x4xf32>
    %cst_24 = arith.constant dense<0.000000e+00> : vector<8x1024xf32>
    %57 = tpu.matmul %56, %55, %cst_24 {dimension_numbers = #tpu.dot_dimension_numbers<[1], [0], [0], [1], [0, 0, 1, 1], [], []>} : vector<8x4xf32>, vector<4x1024xf32>, vector<8x1024xf32> -> vector<8x1024xf32>
    %58 = arith.addf %50, %57 : vector<8x1024xf32>
    %c991_i32 = arith.constant 991 : i32
    %59 = tpu.dynamic_rotate %0 by %c991_i32 dim 1 : vector<4x1024xf32>, i32 -> vector<4x1024xf32>
    %c8_25 = arith.constant 8 : index
    %c0_26 = arith.constant 0 : index
    %60 = vector.load %arg2[%c8_25, %c0_26] : memref<9x1024xbf16, #tpu.memory_space<vmem>>, vector<1x1024xbf16>
    %61 = arith.extf %60 : vector<1x1024xbf16> to vector<1x1024xf32>
    %62 = vector.broadcast %61 : vector<1x1024xf32> to vector<4x1024xf32>
    %63 = arith.mulf %59, %62 : vector<4x1024xf32>
    %c64 = arith.constant 64 : index
    %c0_27 = arith.constant 0 : index
    %64 = vector.load %arg3[%c64, %c0_27] : memref<72x4xf32, #tpu.memory_space<vmem>>, vector<8x4xf32>
    %cst_28 = arith.constant dense<0.000000e+00> : vector<8x1024xf32>
    %65 = tpu.matmul %64, %63, %cst_28 {dimension_numbers = #tpu.dot_dimension_numbers<[1], [0], [0], [1], [0, 0, 1, 1], [], []>} : vector<8x4xf32>, vector<4x1024xf32>, vector<8x1024xf32> -> vector<8x1024xf32>
    %66 = arith.addf %58, %65 : vector<8x1024xf32>
    %c0_29 = arith.constant 0 : index
    %c0_30 = arith.constant 0 : index
    %67 = vector.load %arg4[%c0_29, %c0_30] : memref<8x1xf32, #tpu.memory_space<vmem>>, vector<8x1xf32>
    %68 = vector.broadcast %67 : vector<8x1xf32> to vector<8x1024xf32>
    %69 = arith.addf %66, %68 : vector<8x1024xf32>
    %cst_31 = arith.constant 0.000000e+00 : f32
    %70 = vector.broadcast %cst_31 : f32 to vector<8x1024xf32>
    %71 = arith.cmpf oge, %69, %70 : vector<8x1024xf32>
    %cst_32 = arith.constant 0.00999999977 : f32
    %72 = vector.broadcast %cst_32 : f32 to vector<8x1024xf32>
    %73 = arith.mulf %72, %69 : vector<8x1024xf32>
    %74 = arith.select %71, %69, %73 : vector<8x1024xi1>, vector<8x1024xf32>
    %c33_i32_33 = arith.constant 33 : i32
    %75 = tpu.dynamic_rotate %74 by %c33_i32_33 dim 1 : vector<8x1024xf32>, i32 -> vector<8x1024xf32>
    %c0_34 = arith.constant 0 : index
    %c0_35 = arith.constant 0 : index
    %76 = vector.load %arg2[%c0_34, %c0_35] : memref<9x1024xbf16, #tpu.memory_space<vmem>>, vector<1x1024xbf16>
    %77 = arith.extf %76 : vector<1x1024xbf16> to vector<1x1024xf32>
    %78 = vector.broadcast %77 : vector<1x1024xf32> to vector<8x1024xf32>
    %79 = arith.mulf %75, %78 : vector<8x1024xf32>
    %c0_36 = arith.constant 0 : index
    %c0_37 = arith.constant 0 : index
    %80 = vector.load %arg5[%c0_36, %c0_37] : memref<72x8xf32, #tpu.memory_space<vmem>>, vector<8x8xf32>
    %cst_38 = arith.constant dense<0.000000e+00> : vector<8x1024xf32>
    %81 = tpu.matmul %80, %79, %cst_38 {dimension_numbers = #tpu.dot_dimension_numbers<[1], [0], [0], [1], [0, 0, 1, 1], [], []>} : vector<8x8xf32>, vector<8x1024xf32>, vector<8x1024xf32> -> vector<8x1024xf32>
    %c32_i32_39 = arith.constant 32 : i32
    %82 = tpu.dynamic_rotate %74 by %c32_i32_39 dim 1 : vector<8x1024xf32>, i32 -> vector<8x1024xf32>
    %c1_40 = arith.constant 1 : index
    %c0_41 = arith.constant 0 : index
    %83 = vector.load %arg2[%c1_40, %c0_41] : memref<9x1024xbf16, #tpu.memory_space<vmem>>, vector<1x1024xbf16>
    %84 = arith.extf %83 : vector<1x1024xbf16> to vector<1x1024xf32>
    %85 = vector.broadcast %84 : vector<1x1024xf32> to vector<8x1024xf32>
    %86 = arith.mulf %82, %85 : vector<8x1024xf32>
    %c8_42 = arith.constant 8 : index
    %c0_43 = arith.constant 0 : index
    %87 = vector.load %arg5[%c8_42, %c0_43] : memref<72x8xf32, #tpu.memory_space<vmem>>, vector<8x8xf32>
    %cst_44 = arith.constant dense<0.000000e+00> : vector<8x1024xf32>
    %88 = tpu.matmul %87, %86, %cst_44 {dimension_numbers = #tpu.dot_dimension_numbers<[1], [0], [0], [1], [0, 0, 1, 1], [], []>} : vector<8x8xf32>, vector<8x1024xf32>, vector<8x1024xf32> -> vector<8x1024xf32>
    %89 = arith.addf %81, %88 : vector<8x1024xf32>
    %c31_i32_45 = arith.constant 31 : i32
    %90 = tpu.dynamic_rotate %74 by %c31_i32_45 dim 1 : vector<8x1024xf32>, i32 -> vector<8x1024xf32>
    %c2_46 = arith.constant 2 : index
    %c0_47 = arith.constant 0 : index
    %91 = vector.load %arg2[%c2_46, %c0_47] : memref<9x1024xbf16, #tpu.memory_space<vmem>>, vector<1x1024xbf16>
    %92 = arith.extf %91 : vector<1x1024xbf16> to vector<1x1024xf32>
    %93 = vector.broadcast %92 : vector<1x1024xf32> to vector<8x1024xf32>
    %94 = arith.mulf %90, %93 : vector<8x1024xf32>
    %c16_48 = arith.constant 16 : index
    %c0_49 = arith.constant 0 : index
    %95 = vector.load %arg5[%c16_48, %c0_49] : memref<72x8xf32, #tpu.memory_space<vmem>>, vector<8x8xf32>
    %cst_50 = arith.constant dense<0.000000e+00> : vector<8x1024xf32>
    %96 = tpu.matmul %95, %94, %cst_50 {dimension_numbers = #tpu.dot_dimension_numbers<[1], [0], [0], [1], [0, 0, 1, 1], [], []>} : vector<8x8xf32>, vector<8x1024xf32>, vector<8x1024xf32> -> vector<8x1024xf32>
    %97 = arith.addf %89, %96 : vector<8x1024xf32>
    %c1_i32_51 = arith.constant 1 : i32
    %98 = tpu.dynamic_rotate %74 by %c1_i32_51 dim 1 : vector<8x1024xf32>, i32 -> vector<8x1024xf32>
    %c3_52 = arith.constant 3 : index
    %c0_53 = arith.constant 0 : index
    %99 = vector.load %arg2[%c3_52, %c0_53] : memref<9x1024xbf16, #tpu.memory_space<vmem>>, vector<1x1024xbf16>
    %100 = arith.extf %99 : vector<1x1024xbf16> to vector<1x1024xf32>
    %101 = vector.broadcast %100 : vector<1x1024xf32> to vector<8x1024xf32>
    %102 = arith.mulf %98, %101 : vector<8x1024xf32>
    %c24_54 = arith.constant 24 : index
    %c0_55 = arith.constant 0 : index
    %103 = vector.load %arg5[%c24_54, %c0_55] : memref<72x8xf32, #tpu.memory_space<vmem>>, vector<8x8xf32>
    %cst_56 = arith.constant dense<0.000000e+00> : vector<8x1024xf32>
    %104 = tpu.matmul %103, %102, %cst_56 {dimension_numbers = #tpu.dot_dimension_numbers<[1], [0], [0], [1], [0, 0, 1, 1], [], []>} : vector<8x8xf32>, vector<8x1024xf32>, vector<8x1024xf32> -> vector<8x1024xf32>
    %105 = arith.addf %97, %104 : vector<8x1024xf32>
    %c32_57 = arith.constant 32 : index
    %c0_58 = arith.constant 0 : index
    %106 = vector.load %arg5[%c32_57, %c0_58] : memref<72x8xf32, #tpu.memory_space<vmem>>, vector<8x8xf32>
    %cst_59 = arith.constant dense<0.000000e+00> : vector<8x1024xf32>
    %107 = tpu.matmul %106, %74, %cst_59 {dimension_numbers = #tpu.dot_dimension_numbers<[1], [0], [0], [1], [0, 0, 1, 1], [], []>} : vector<8x8xf32>, vector<8x1024xf32>, vector<8x1024xf32> -> vector<8x1024xf32>
    %108 = arith.addf %105, %107 : vector<8x1024xf32>
    %c1023_i32_60 = arith.constant 1023 : i32
    %109 = tpu.dynamic_rotate %74 by %c1023_i32_60 dim 1 : vector<8x1024xf32>, i32 -> vector<8x1024xf32>
    %c5_61 = arith.constant 5 : index
    %c0_62 = arith.constant 0 : index
    %110 = vector.load %arg2[%c5_61, %c0_62] : memref<9x1024xbf16, #tpu.memory_space<vmem>>, vector<1x1024xbf16>
    %111 = arith.extf %110 : vector<1x1024xbf16> to vector<1x1024xf32>
    %112 = vector.broadcast %111 : vector<1x1024xf32> to vector<8x1024xf32>
    %113 = arith.mulf %109, %112 : vector<8x1024xf32>
    %c40_63 = arith.constant 40 : index
    %c0_64 = arith.constant 0 : index
    %114 = vector.load %arg5[%c40_63, %c0_64] : memref<72x8xf32, #tpu.memory_space<vmem>>, vector<8x8xf32>
    %cst_65 = arith.constant dense<0.000000e+00> : vector<8x1024xf32>
    %115 = tpu.matmul %114, %113, %cst_65 {dimension_numbers = #tpu.dot_dimension_numbers<[1], [0], [0], [1], [0, 0, 1, 1], [], []>} : vector<8x8xf32>, vector<8x1024xf32>, vector<8x1024xf32> -> vector<8x1024xf32>
    %116 = arith.addf %108, %115 : vector<8x1024xf32>
    %c993_i32_66 = arith.constant 993 : i32
    %117 = tpu.dynamic_rotate %74 by %c993_i32_66 dim 1 : vector<8x1024xf32>, i32 -> vector<8x1024xf32>
    %c6_67 = arith.constant 6 : index
    %c0_68 = arith.constant 0 : index
    %118 = vector.load %arg2[%c6_67, %c0_68] : memref<9x1024xbf16, #tpu.memory_space<vmem>>, vector<1x1024xbf16>
    %119 = arith.extf %118 : vector<1x1024xbf16> to vector<1x1024xf32>
    %120 = vector.broadcast %119 : vector<1x1024xf32> to vector<8x1024xf32>
    %121 = arith.mulf %117, %120 : vector<8x1024xf32>
    %c48_69 = arith.constant 48 : index
    %c0_70 = arith.constant 0 : index
    %122 = vector.load %arg5[%c48_69, %c0_70] : memref<72x8xf32, #tpu.memory_space<vmem>>, vector<8x8xf32>
    %cst_71 = arith.constant dense<0.000000e+00> : vector<8x1024xf32>
    %123 = tpu.matmul %122, %121, %cst_71 {dimension_numbers = #tpu.dot_dimension_numbers<[1], [0], [0], [1], [0, 0, 1, 1], [], []>} : vector<8x8xf32>, vector<8x1024xf32>, vector<8x1024xf32> -> vector<8x1024xf32>
    %124 = arith.addf %116, %123 : vector<8x1024xf32>
    %c992_i32_72 = arith.constant 992 : i32
    %125 = tpu.dynamic_rotate %74 by %c992_i32_72 dim 1 : vector<8x1024xf32>, i32 -> vector<8x1024xf32>
    %c7_73 = arith.constant 7 : index
    %c0_74 = arith.constant 0 : index
    %126 = vector.load %arg2[%c7_73, %c0_74] : memref<9x1024xbf16, #tpu.memory_space<vmem>>, vector<1x1024xbf16>
    %127 = arith.extf %126 : vector<1x1024xbf16> to vector<1x1024xf32>
    %128 = vector.broadcast %127 : vector<1x1024xf32> to vector<8x1024xf32>
    %129 = arith.mulf %125, %128 : vector<8x1024xf32>
    %c56_75 = arith.constant 56 : index
    %c0_76 = arith.constant 0 : index
    %130 = vector.load %arg5[%c56_75, %c0_76] : memref<72x8xf32, #tpu.memory_space<vmem>>, vector<8x8xf32>
    %cst_77 = arith.constant dense<0.000000e+00> : vector<8x1024xf32>
    %131 = tpu.matmul %130, %129, %cst_77 {dimension_numbers = #tpu.dot_dimension_numbers<[1], [0], [0], [1], [0, 0, 1, 1], [], []>} : vector<8x8xf32>, vector<8x1024xf32>, vector<8x1024xf32> -> vector<8x1024xf32>
    %132 = arith.addf %124, %131 : vector<8x1024xf32>
    %c991_i32_78 = arith.constant 991 : i32
    %133 = tpu.dynamic_rotate %74 by %c991_i32_78 dim 1 : vector<8x1024xf32>, i32 -> vector<8x1024xf32>
    %c8_79 = arith.constant 8 : index
    %c0_80 = arith.constant 0 : index
    %134 = vector.load %arg2[%c8_79, %c0_80] : memref<9x1024xbf16, #tpu.memory_space<vmem>>, vector<1x1024xbf16>
    %135 = arith.extf %134 : vector<1x1024xbf16> to vector<1x1024xf32>
    %136 = vector.broadcast %135 : vector<1x1024xf32> to vector<8x1024xf32>
    %137 = arith.mulf %133, %136 : vector<8x1024xf32>
    %c64_81 = arith.constant 64 : index
    %c0_82 = arith.constant 0 : index
    %138 = vector.load %arg5[%c64_81, %c0_82] : memref<72x8xf32, #tpu.memory_space<vmem>>, vector<8x8xf32>
    %cst_83 = arith.constant dense<0.000000e+00> : vector<8x1024xf32>
    %139 = tpu.matmul %138, %137, %cst_83 {dimension_numbers = #tpu.dot_dimension_numbers<[1], [0], [0], [1], [0, 0, 1, 1], [], []>} : vector<8x8xf32>, vector<8x1024xf32>, vector<8x1024xf32> -> vector<8x1024xf32>
    %140 = arith.addf %132, %139 : vector<8x1024xf32>
    %c0_84 = arith.constant 0 : index
    %c0_85 = arith.constant 0 : index
    %141 = vector.load %arg6[%c0_84, %c0_85] : memref<8x1xf32, #tpu.memory_space<vmem>>, vector<8x1xf32>
    %142 = vector.broadcast %141 : vector<8x1xf32> to vector<8x1024xf32>
    %143 = arith.addf %140, %142 : vector<8x1024xf32>
    %cst_86 = arith.constant 0.000000e+00 : f32
    %144 = vector.broadcast %cst_86 : f32 to vector<8x1024xf32>
    %145 = arith.cmpf oge, %143, %144 : vector<8x1024xf32>
    %cst_87 = arith.constant 0.00999999977 : f32
    %146 = vector.broadcast %cst_87 : f32 to vector<8x1024xf32>
    %147 = arith.mulf %146, %143 : vector<8x1024xf32>
    %148 = arith.select %145, %143, %147 : vector<8x1024xi1>, vector<8x1024xf32>
    %c0_88 = arith.constant 0 : index
    %c0_89 = arith.constant 0 : index
    %149 = vector.load %arg7[%c0_88, %c0_89] : memref<8x1024xf32, #tpu.memory_space<vmem>>, vector<8x1024xf32>
    tpu.vector_store %arg7[%c0_88, %c0_89], %148 {strides = array<i32>} : memref<8x1024xf32, #tpu.memory_space<vmem>>, vector<8x1024xf32>,
    return
  }
  func.func @transform_0(%arg0: i32) -> (i32, i32) {
    %c0_i32 = arith.constant 0 : i32
    %c0_i32_0 = arith.constant 0 : i32
    return %c0_i32, %arg0 : i32, i32
  }
  func.func @transform_1(%arg0: i32) -> (i32, i32) {
    %c0_i32 = arith.constant 0 : i32
    %c0_i32_0 = arith.constant 0 : i32
    %c0_i32_1 = arith.constant 0 : i32
    return %c0_i32, %c0_i32_0 : i32, i32
  }
  func.func @transform_2(%arg0: i32) -> (i32, i32) {
    %c0_i32 = arith.constant 0 : i32
    %c0_i32_0 = arith.constant 0 : i32
    %c0_i32_1 = arith.constant 0 : i32
    return %c0_i32, %c0_i32_0 : i32, i32
  }
  func.func @transform_3(%arg0: i32) -> (i32, i32) {
    %c0_i32 = arith.constant 0 : i32
    %c0_i32_0 = arith.constant 0 : i32
    %c0_i32_1 = arith.constant 0 : i32
    return %c0_i32, %c0_i32_0 : i32, i32
  }
  func.func @transform_4(%arg0: i32) -> (i32, i32) {
    %c0_i32 = arith.constant 0 : i32
    %c0_i32_0 = arith.constant 0 : i32
    %c0_i32_1 = arith.constant 0 : i32
    return %c0_i32, %c0_i32_0 : i32, i32
  }
  func.func @transform_5(%arg0: i32) -> (i32, i32) {
    %c0_i32 = arith.constant 0 : i32
    %c0_i32_0 = arith.constant 0 : i32
    %c0_i32_1 = arith.constant 0 : i32
    return %c0_i32, %c0_i32_0 : i32, i32
  }
  func.func @transform_6(%arg0: i32) -> (i32, i32) {
    %c0_i32 = arith.constant 0 : i32
    %c0_i32_0 = arith.constant 0 : i32
    return %c0_i32, %arg0 : i32, i32
  }
}

</mosaic_0001>

<llo_original>
// kernel: tpu_custom_call.1
$region0: #{tpu_custom_call.1}
  #allocation0 [shape = 'u32[]', space=smem, size = 0x4, offset = 0x4, fixed_abs, tag = 'smem constant byte address 0x4 - core index']
  #allocation1 [shape = 'u32[144,128]{1,0:T(1,128)}', space=vmem, size = 0x12000, scoped, tag = 'internal scratch']
  %s0 = inlined_call_operand.vmem [shape: f32[4,2048], index: 0, kind: input, shape index: {}]
  %s1 = inlined_call_operand.vmem [shape: bf16[9,1024], index: 1, kind: input, shape index: {}]
  %s2 = inlined_call_operand.vmem [shape: f32[72,4], index: 2, kind: input, shape index: {}]
  %s3 = inlined_call_operand.vmem [shape: f32[8,1], index: 3, kind: input, shape index: {}]
  %s4 = inlined_call_operand.vmem [shape: f32[72,8], index: 4, kind: input, shape index: {}]
  %s5 = inlined_call_operand.vmem [shape: f32[8,1], index: 5, kind: input, shape index: {}]
  %s6 = inlined_call_operand.hbm [shape: f32[8,2048], index: 6, kind: output, shape index: {}]
  %s7 = sld [smem:[#allocation0]]
  $region57: #{tpu_custom_call.1} parent=0
    _
  %s9 = ssub.s32 1, %s7
  %s10 = scalar_select 0, %s9, %s7
  $region1: #{tpu_custom_call.1} parent=0
    #allocation2 [shape = 'u8[65536]{0}', space=vmem, size = 0x10000, scoped, tag = 'output window, operand 0']
    #allocation3 [shape = 's32[2]{0}', space=sflag, size = 0x8, scoped, tag = 'scoped memory for tpu_custom_call.1']
    %11 = vsyncpa [#allocation3], 0
    %s12 = scalar_lea.sflag [#allocation3], 1
    %13 = vsyncpa %s12, 0
    loop: start=0, step=1, limit=4
    $region2: #{tpu_custom_call.1} parent=1 // loop_pre_header
      _
    $region3: #{tpu_custom_call.1} parent=1 // loop_header
      %s15 = sphi 0, %s19
      %p16 = scmp.ge.s32.totalorder %s15, 4
      %s25 = sphi 0, %s27
      %s28 = sphi 0, %s25
      %s29 = sphi 0, %s28
      %s45 = sphi 0, %s29
      %s49 = sphi 0, %s49
      %s51 = sphi 0, %s49
      %s52 = sphi 0, %s51
      %s66 = sphi 0, %s52
      %s70 = sphi 0, %s70
      %s72 = sphi 0, %s70
      %s73 = sphi 0, %s72
      %s87 = sphi 0, %s73
      %s91 = sphi 0, %s91
      %s93 = sphi 0, %s91
      %s94 = sphi 0, %s93
      %s108 = sphi 0, %s94
      %s112 = sphi 0, %s112
      %s114 = sphi 0, %s112
      %s115 = sphi 0, %s114
      %s129 = sphi 0, %s115
      %s133 = sphi 0, %s133
      %s135 = sphi 0, %s133
      %s136 = sphi 0, %s135
      %s150 = sphi 0, %s136
      %s156 = sphi 0, %s158
      %s159 = sphi 0, %s156
      %s160 = sphi 0, %s159
      %s176 = sphi 0, %s160
    $region4: #{tpu_custom_call.1} parent=1 // loop_header_branch
      %18 = sbr.rel (%p16) target = $region8
    $region5: #{tpu_custom_call.1} parent=1 // loop_body
      %s20 = ssub.s32 %s15, 1
      %s21 = ssub.s32 %s15, 2
      %s22 = sadd.s32 %s15, 1
      %s23 = ssub.s32 %s15, %s22
      %p24 = scmp.eq.s32.totalorder %s23, 0
      %s26 = sadd.s32 %s25, 1
      %s27 = scalar_select %p24, %s25, %s26
      %p30 = pneg %p24
      %p31 = scmp.eq.s32.totalorder %s15, 1
      %p32 = por %p30, %p31
      %p33 = scmp.ne.s32.totalorder %s25, %s28
      %p34 = scmp.eq.s32.totalorder %s15, 0
      %p35 = por %p33, %p34
      %p36 = scmp.ne.s32.totalorder %s25, %s28
      %p37 = scmp.eq.s32.totalorder %s20, 1
      %p38 = por %p36, %p37
      %p39 = scmp.ne.s32.totalorder %s28, %s29
      %p40 = scmp.eq.s32.totalorder %s20, 0
      %p41 = por %p39, %p40
      %p42 = scmp.ne.s32.totalorder %s28, %s29
      %p43 = scmp.eq.s32.totalorder %s21, 1
      %p44 = por %p42, %p43
      %p46 = scmp.ne.s32.totalorder %s29, %s45
      %p47 = scmp.eq.s32.totalorder %s21, 0
      %p48 = por %p46, %p47
      %s50 = sadd.s32 %s49, 1
      %p53 = scmp.eq.s32.totalorder %s15, 1
      %p54 = scmp.ne.s32.totalorder %s49, %s51
      %p55 = scmp.eq.s32.totalorder %s15, 0
      %p56 = por %p54, %p55
      %p57 = scmp.ne.s32.totalorder %s49, %s51
      %p58 = scmp.eq.s32.totalorder %s20, 1
      %p59 = por %p57, %p58
      %p60 = scmp.ne.s32.totalorder %s51, %s52
      %p61 = scmp.eq.s32.totalorder %s20, 0
      %p62 = por %p60, %p61
      %p63 = scmp.ne.s32.totalorder %s51, %s52
      %p64 = scmp.eq.s32.totalorder %s21, 1
      %p65 = por %p63, %p64
      %p67 = scmp.ne.s32.totalorder %s52, %s66
      %p68 = scmp.eq.s32.totalorder %s21, 0
      %p69 = por %p67, %p68
      %s71 = sadd.s32 %s70, 1
      %p74 = scmp.eq.s32.totalorder %s15, 1
      %p75 = scmp.ne.s32.totalorder %s70, %s72
      %p76 = scmp.eq.s32.totalorder %s15, 0
      %p77 = por %p75, %p76
      %p78 = scmp.ne.s32.totalorder %s70, %s72
      %p79 = scmp.eq.s32.totalorder %s20, 1
      %p80 = por %p78, %p79
      %p81 = scmp.ne.s32.totalorder %s72, %s73
      %p82 = scmp.eq.s32.totalorder %s20, 0
      %p83 = por %p81, %p82
      %p84 = scmp.ne.s32.totalorder %s72, %s73
      %p85 = scmp.eq.s32.totalorder %s21, 1
      %p86 = por %p84, %p85
      %p88 = scmp.ne.s32.totalorder %s73, %s87
      %p89 = scmp.eq.s32.totalorder %s21, 0
      %p90 = por %p88, %p89
      %s92 = sadd.s32 %s91, 1
      %p95 = scmp.eq.s32.totalorder %s15, 1
      %p96 = scmp.ne.s32.totalorder %s91, %s93
      %p97 = scmp.eq.s32.totalorder %s15, 0
      %p98 = por %p96, %p97
      %p99 = scmp.ne.s32.totalorder %s91, %s93
      %p100 = scmp.eq.s32.totalorder %s20, 1
      %p101 = por %p99, %p100
      %p102 = scmp.ne.s32.totalorder %s93, %s94
      %p103 = scmp.eq.s32.totalorder %s20, 0
      %p104 = por %p102, %p103
      %p105 = scmp.ne.s32.totalorder %s93, %s94
      %p106 = scmp.eq.s32.totalorder %s21, 1
      %p107 = por %p105, %p106
      %p109 = scmp.ne.s32.totalorder %s94, %s108
      %p110 = scmp.eq.s32.totalorder %s21, 0
      %p111 = por %p109, %p110
      %s113 = sadd.s32 %s112, 1
      %p116 = scmp.eq.s32.totalorder %s15, 1
      %p117 = scmp.ne.s32.totalorder %s112, %s114
      %p118 = scmp.eq.s32.totalorder %s15, 0
      %p119 = por %p117, %p118
      %p120 = scmp.ne.s32.totalorder %s112, %s114
      %p121 = scmp.eq.s32.totalorder %s20, 1
      %p122 = por %p120, %p121
      %p123 = scmp.ne.s32.totalorder %s114, %s115
      %p124 = scmp.eq.s32.totalorder %s20, 0
      %p125 = por %p123, %p124
      %p126 = scmp.ne.s32.totalorder %s114, %s115
      %p127 = scmp.eq.s32.totalorder %s21, 1
      %p128 = por %p126, %p127
      %p130 = scmp.ne.s32.totalorder %s115, %s129
      %p131 = scmp.eq.s32.totalorder %s21, 0
      %p132 = por %p130, %p131
      %s134 = sadd.s32 %s133, 1
      %p137 = scmp.eq.s32.totalorder %s15, 1
      %p138 = scmp.ne.s32.totalorder %s133, %s135
      %p139 = scmp.eq.s32.totalorder %s15, 0
      %p140 = por %p138, %p139
      %p141 = scmp.ne.s32.totalorder %s133, %s135
      %p142 = scmp.eq.s32.totalorder %s20, 1
      %p143 = por %p141, %p142
      %p144 = scmp.ne.s32.totalorder %s135, %s136
      %p145 = scmp.eq.s32.totalorder %s20, 0
      %p146 = por %p144, %p145
      %p147 = scmp.ne.s32.totalorder %s135, %s136
      %p148 = scmp.eq.s32.totalorder %s21, 1
      %p149 = por %p147, %p148
      %p151 = scmp.ne.s32.totalorder %s136, %s150
      %p152 = scmp.eq.s32.totalorder %s21, 0
      %p153 = por %p151, %p152
      %s154 = ssub.s32 %s15, %s22
      %p155 = scmp.eq.s32.totalorder %s154, 0
      %s157 = sadd.s32 %s156, 1
      %s158 = scalar_select %p155, %s156, %s157
      %p161 = pneg %p155
      %p162 = scmp.eq.s32.totalorder %s15, 1
      %p163 = por %p161, %p162
      %p164 = scmp.ne.s32.totalorder %s156, %s159
      %p165 = scmp.eq.s32.totalorder %s15, 0
      %p166 = por %p164, %p165
      %p167 = scmp.ne.s32.totalorder %s156, %s159
      %p168 = scmp.eq.s32.totalorder %s20, 1
      %p169 = por %p167, %p168
      %p170 = scmp.ne.s32.totalorder %s159, %s160
      %p171 = scmp.eq.s32.totalorder %s20, 0
      %p172 = por %p170, %p171
      %p173 = scmp.ne.s32.totalorder %s159, %s160
      %p174 = scmp.eq.s32.totalorder %s21, 1
      %p175 = por %p173, %p174
      %p177 = scmp.ne.s32.totalorder %s160, %s176
      %p178 = scmp.eq.s32.totalorder %s21, 0
      %p179 = por %p177, %p178
      %p180 = scmp.le.s32.totalorder 1, %s15
      %p181 = scmp.lt.s32.totalorder %s15, 3
      %p182 = pnand %p180, %p181
      %p183 = pneg %p182
      // Predicated region
      $region9: #{tpu_custom_call.1} parent=5 // pred_check
        _
      $region10: #{tpu_custom_call.1} parent=5 // pred_check_branch
        %185 = sbr.rel (%p182) target = $region12
      $region11: #{tpu_custom_call.1} parent=5 // pred_region
        %s186 = ssub.s32 %s15, 1
        // Predicated region
        $region13: #{tpu_custom_call.1} parent=11 // pred_check
          %p187 = pneg %p62
        $region14: #{tpu_custom_call.1} parent=11 // pred_check_branch
          %189 = sbr.rel (%p187) target = $region16
        $region15: #{tpu_custom_call.1} parent=11 // pred_region
          _
        $region16: #{tpu_custom_call.1} parent=11 // pred_fallthru
          _
        // Predicated region
        $region17: #{tpu_custom_call.1} parent=11 // pred_check
          %p190 = pneg %p83
        $region18: #{tpu_custom_call.1} parent=11 // pred_check_branch
          %192 = sbr.rel (%p190) target = $region20
        $region19: #{tpu_custom_call.1} parent=11 // pred_region
          _
        $region20: #{tpu_custom_call.1} parent=11 // pred_fallthru
          _
        // Predicated region
        $region21: #{tpu_custom_call.1} parent=11 // pred_check
          %p193 = pneg %p104
        $region22: #{tpu_custom_call.1} parent=11 // pred_check_branch
          %195 = sbr.rel (%p193) target = $region24
        $region23: #{tpu_custom_call.1} parent=11 // pred_region
          _
        $region24: #{tpu_custom_call.1} parent=11 // pred_fallthru
          _
        // Predicated region
        $region25: #{tpu_custom_call.1} parent=11 // pred_check
          %p196 = pneg %p125
        $region26: #{tpu_custom_call.1} parent=11 // pred_check_branch
          %198 = sbr.rel (%p196) target = $region28
        $region27: #{tpu_custom_call.1} parent=11 // pred_region
          _
        $region28: #{tpu_custom_call.1} parent=11 // pred_fallthru
          _
        // Predicated region
        $region29: #{tpu_custom_call.1} parent=11 // pred_check
          %p199 = pneg %p146
        $region30: #{tpu_custom_call.1} parent=11 // pred_check_branch
          %201 = sbr.rel (%p199) target = $region32
        $region31: #{tpu_custom_call.1} parent=11 // pred_region
          _
        $region32: #{tpu_custom_call.1} parent=11 // pred_fallthru
          _
      $region12: #{tpu_custom_call.1} parent=5 // pred_fallthru
        _
      %p202 = scmp.lt.s32.totalorder %s15, 2
      // Predicated region
      $region33: #{tpu_custom_call.1} parent=5 // pred_check
        %p203 = pneg %p202
      $region34: #{tpu_custom_call.1} parent=5 // pred_check_branch
        %205 = sbr.rel (%p203) target = $region36
      $region35: #{tpu_custom_call.1} parent=5 // pred_region
        // Predicated region
        $region37: #{tpu_custom_call.1} parent=35 // pred_check
          %p206 = pneg %p35
        $region38: #{tpu_custom_call.1} parent=35 // pred_check_branch
          %208 = sbr.rel (%p206) target = $region40
        $region39: #{tpu_custom_call.1} parent=35 // pred_region
          %s209 = smul.u32 8, %s15
          %p210 = scmp.lt.s32.totalorder %s209, 15
          %s211 = scalar_select %p210, %s209, 15
          %s212 = smul.addr %s211, 4
          %s213 = scalar_lea.vmem %s0, %s212
          %s214 = smul.u32 8, %s15
        $region40: #{tpu_custom_call.1} parent=35 // pred_fallthru
          _
      $region36: #{tpu_custom_call.1} parent=5 // pred_fallthru
        _
      %p215 = scmp.le.s32.totalorder 1, %s15
      %p216 = scmp.lt.s32.totalorder %s15, 3
      %p217 = pnand %p215, %p216
      %p218 = pneg %p217
      // Predicated region
      $region41: #{tpu_custom_call.1} parent=5 // pred_check
        _
      $region42: #{tpu_custom_call.1} parent=5 // pred_check_branch
        %220 = sbr.rel (%p217) target = $region44
      $region43: #{tpu_custom_call.1} parent=5 // pred_region
        %s221 = ssub.s32 %s15, 1
        %s222 = smul.u32 8, %s20
        %p223 = scmp.lt.s32.totalorder %s222, 15
        %s224 = scalar_select %p223, %s222, 15
        %s225 = smul.addr %s224, 4
        %s226 = scalar_lea.vmem %s0, %s225
        %p227 = pneg %p41
        %p228 = pneg %p38
        %p229 = pneg %p62
        %p230 = pneg %p59
        %p231 = pneg %p83
        %p232 = pneg %p80
        %p233 = pneg %p104
        %p234 = pneg %p101
        %p235 = pneg %p125
        %p236 = pneg %p122
        %p237 = pneg %p146
        %p238 = pneg %p143
        %p239 = pneg %p172
        %p240 = pneg %p169
        %s241 = sand.u32 %s159, 1
        %s242 = scalar_lea.sflag [#allocation3], %s241
        %s243 = sand.u32 %s159, 1
        %s244 = smul.addr %s243, 64
        %s245 = scalar_lea.vmem [#allocation2], %s244
        %s246 = smul.u32 8, %s20
        %p247 = scmp.lt.s32.totalorder %s246, 15
        %s248 = scalar_select %p247, %s246, 15
        %s249 = smul.addr %s248, 4
        %s250 = scalar_lea.vmem %s0, %s249
        %s251 = smul.u32 8, %s20
        %s252 = smul.u32 8, %s20
        %v253 = vld [vmem:[%s250] sm:$0xff]
        %v254 = vld [vmem:[%s250 + $0x8] sm:$0xff]
        %v255 = vld [vmem:[%s250 + $0x10] sm:$0xff]
        %v256 = vld [vmem:[%s250 + $0x18] sm:$0xff]
        %v261 = vcombine.high %v253, %v253
        %v262 = vcombine.high %v254, %v254
        %v263 = vcombine.high %v255, %v255
        %v264 = vcombine.high %v256, %v256
        %269 = vrot.lane.b32.xlu0 %v253, 33
        %v270 = vpop.permute.xlu0 %269
        %271 = vrot.lane.b32.xlu0 %v261, 33
        %v272 = vpop.permute.xlu0 %271
        %273 = vrot.lane.b32.xlu0 %v254, 33
        %v274 = vpop.permute.xlu0 %273
        %275 = vrot.lane.b32.xlu0 %v262, 33
        %v276 = vpop.permute.xlu0 %275
        %277 = vrot.lane.b32.xlu0 %v255, 33
        %v278 = vpop.permute.xlu0 %277
        %279 = vrot.lane.b32.xlu0 %v263, 33
        %v280 = vpop.permute.xlu0 %279
        %281 = vrot.lane.b32.xlu0 %v256, 33
        %v282 = vpop.permute.xlu0 %281
        %283 = vrot.lane.b32.xlu0 %v264, 33
        %v284 = vpop.permute.xlu0 %283
        %v285 = vlaneseq
        %v286 = vand.u32 %v285, 127
        %vm287 = vcmp.lt.s32.totalorder %v286, 33
        %v288 = vsel %vm287, %v282, %v284
        %v289 = vsel %vm287, %v280, %v282
        %v290 = vsel %vm287, %v278, %v280
        %v291 = vsel %vm287, %v276, %v278
        %v292 = vsel %vm287, %v274, %v276
        %v293 = vsel %vm287, %v272, %v274
        %v294 = vsel %vm287, %v270, %v272
        %v295 = vsel %vm287, %v284, %v270
        %v296 = vld [vmem:[%s1] sm:$0x11]
        %v297 = vld [vmem:[%s1 + $0x8] sm:$0x11]
        %v298 = vld [vmem:[%s1 + $0x10] sm:$0x11]
        %v299 = vld [vmem:[%s1 + $0x18] sm:$0x11]
        %v300 = vunpack.c.l.bf16 %v296
        %v301 = vunpack.c.h.bf16 %v296
        %v302 = vunpack.c.l.bf16 %v297
        %v303 = vunpack.c.h.bf16 %v297
        %v304 = vunpack.c.l.bf16 %v298
        %v305 = vunpack.c.h.bf16 %v298
        %v306 = vunpack.c.l.bf16 %v299
        %v307 = vunpack.c.h.bf16 %v299
        %v308 = vlaneseq
        %v309 = vshrl.u32 %v308, 7
        %v310 = vsub.s32 0, %v309
        %v311 = vrot.slane %v300, %v310
        %v312 = vlaneseq
        %v313 = vshrl.u32 %v312, 7
        %v314 = vsub.s32 0, %v313
        %v315 = vrot.slane %v301, %v314
        %v316 = vlaneseq
        %v317 = vshrl.u32 %v316, 7
        %v318 = vsub.s32 0, %v317
        %v319 = vrot.slane %v302, %v318
        %v320 = vlaneseq
        %v321 = vshrl.u32 %v320, 7
        %v322 = vsub.s32 0, %v321
        %v323 = vrot.slane %v303, %v322
        %v324 = vlaneseq
        %v325 = vshrl.u32 %v324, 7
        %v326 = vsub.s32 0, %v325
        %v327 = vrot.slane %v304, %v326
        %v328 = vlaneseq
        %v329 = vshrl.u32 %v328, 7
        %v330 = vsub.s32 0, %v329
        %v331 = vrot.slane %v305, %v330
        %v332 = vlaneseq
        %v333 = vshrl.u32 %v332, 7
        %v334 = vsub.s32 0, %v333
        %v335 = vrot.slane %v306, %v334
        %v336 = vlaneseq
        %v337 = vshrl.u32 %v336, 7
        %v338 = vsub.s32 0, %v337
        %v339 = vrot.slane %v307, %v338
        %v340 = vmul.f32 %v295, %v311
        %v341 = vmul.f32 %v294, %v315
        %v342 = vmul.f32 %v293, %v319
        %v343 = vmul.f32 %v292, %v323
        %v344 = vmul.f32 %v291, %v327
        %v345 = vmul.f32 %v290, %v331
        %v346 = vmul.f32 %v289, %v335
        %v347 = vmul.f32 %v288, %v339
        %v348 = vld [vmem:[%s2] sm:$0xff]
        %349 = vrot.lane.b32.xlu0 %v253, 32
        %v350 = vpop.permute.xlu0 %349
        %351 = vrot.lane.b32.xlu0 %v261, 32
        %v352 = vpop.permute.xlu0 %351
        %353 = vrot.lane.b32.xlu0 %v254, 32
        %v354 = vpop.permute.xlu0 %353
        %355 = vrot.lane.b32.xlu0 %v262, 32
        %v356 = vpop.permute.xlu0 %355
        %357 = vrot.lane.b32.xlu0 %v255, 32
        %v358 = vpop.permute.xlu0 %357
        %359 = vrot.lane.b32.xlu0 %v263, 32
        %v360 = vpop.permute.xlu0 %359
        %361 = vrot.lane.b32.xlu0 %v256, 32
        %v362 = vpop.permute.xlu0 %361
        %363 = vrot.lane.b32.xlu0 %v264, 32
        %v364 = vpop.permute.xlu0 %363
        %vm365 = vcmp.lt.s32.totalorder %v286, 32
        %v366 = vsel %vm365, %v362, %v364
        %v367 = vsel %vm365, %v360, %v362
        %v368 = vsel %vm365, %v358, %v360
        %v369 = vsel %vm365, %v356, %v358
        %v370 = vsel %vm365, %v354, %v356
        %v371 = vsel %vm365, %v352, %v354
        %v372 = vsel %vm365, %v350, %v352
        %v373 = vsel %vm365, %v364, %v350
        %v374 = vlaneseq
        %v375 = vshrl.u32 %v374, 7
        %v376 = vsub.s32 1, %v375
        %v377 = vrot.slane %v300, %v376
        %v378 = vlaneseq
        %v379 = vshrl.u32 %v378, 7
        %v380 = vsub.s32 1, %v379
        %v381 = vrot.slane %v301, %v380
        %v382 = vlaneseq
        %v383 = vshrl.u32 %v382, 7
        %v384 = vsub.s32 1, %v383
        %v385 = vrot.slane %v302, %v384
        %v386 = vlaneseq
        %v387 = vshrl.u32 %v386, 7
        %v388 = vsub.s32 1, %v387
        %v389 = vrot.slane %v303, %v388
        %v390 = vlaneseq
        %v391 = vshrl.u32 %v390, 7
        %v392 = vsub.s32 1, %v391
        %v393 = vrot.slane %v304, %v392
        %v394 = vlaneseq
        %v395 = vshrl.u32 %v394, 7
        %v396 = vsub.s32 1, %v395
        %v397 = vrot.slane %v305, %v396
        %v398 = vlaneseq
        %v399 = vshrl.u32 %v398, 7
        %v400 = vsub.s32 1, %v399
        %v401 = vrot.slane %v306, %v400
        %v402 = vlaneseq
        %v403 = vshrl.u32 %v402, 7
        %v404 = vsub.s32 1, %v403
        %v405 = vrot.slane %v307, %v404
        %v406 = vmul.f32 %v373, %v377
        %v407 = vmul.f32 %v372, %v381
        %v408 = vmul.f32 %v371, %v385
        %v409 = vmul.f32 %v370, %v389
        %v410 = vmul.f32 %v369, %v393
        %v411 = vmul.f32 %v368, %v397
        %v412 = vmul.f32 %v367, %v401
        %v413 = vmul.f32 %v366, %v405
        %v414 = vld [vmem:[%s2 + $0x8] sm:$0xff]
        %vm415 = vcmask 31744
        %v417 = vsel %vm415, %v414, 0
        %vm419 = vcmask 1043456
        %v421 = vsel %vm419, %v406, 0
        %v424 = vsel %vm419, %v407, 0
        %v427 = vsel %vm419, %v408, 0
        %v430 = vsel %vm419, %v409, 0
        %v433 = vsel %vm419, %v410, 0
        %v436 = vsel %vm419, %v411, 0
        %v439 = vsel %vm419, %v412, 0
        %v442 = vsel %vm419, %v413, 0
        %444 = vmatprep.subr.mxu0 %v424
        %445 = vmatpush1.msra.mxu0 %v421
        %446 = vmatprep.subr.mxu0 0.0
        %447 = vmatpush1.msra.mxu0 0.0
        %448 = vmatprep.subr.mxu0 0.0
        %449 = vmatpush1.msra.mxu0 0.0
        %450 = vmatprep.subr.mxu0 0.0
        %451 = vmatpush1.msra.mxu0 0.0
        %452 = vmatprep.subr.mxu0 0.0
        %453 = vmatpush1.msra.mxu0 0.0
        %454 = vmatprep.subr.mxu0 0.0
        %455 = vmatpush1.msra.mxu0 0.0
        %456 = vmatprep.subr.mxu0 0.0
        %457 = vmatpush1.msra.mxu0 0.0
        %458 = vmatprep.subr.mxu0 0.0
        %459 = vmatpush1.msra.mxu0 0.0
        %460 = vmatprep.subr.mxu0 0.0
        %461 = vmatpush1.msra.mxu0 0.0
        %462 = vmatprep.subr.mxu0 0.0
        %463 = vmatpush1.msra.mxu0 0.0
        %464 = vmatprep.subr.mxu0 0.0
        %465 = vmatpush1.msra.mxu0 0.0
        %466 = vmatprep.subr.mxu0 0.0
        %467 = vmatpush1.msra.mxu0 0.0
        %468 = vmatprep.subr.mxu0 0.0
        %469 = vmatpush1.msra.mxu0 0.0
        %470 = vmatprep.subr.mxu0 0.0
        %471 = vmatpush1.msra.mxu0 0.0
        %472 = vmatprep.subr.mxu0 0.0
        %473 = vmatpush1.msra.mxu0 0.0
        %474 = vmatprep.subr.mxu0 0.0
        %475 = vmatpush1.msra.mxu0 0.0
        %476 = vmatprep.subr.mxu0 0.0
        %477 = vmatpush1.msra.mxu0 0.0
        %478 = vmatprep.subr.mxu0 0.0
        %479 = vmatpush1.msra.mxu0 0.0
        %480 = vmatprep.subr.mxu0 0.0
        %481 = vmatpush1.msra.mxu0 0.0
        %482 = vmatprep.subr.mxu0 0.0
        %483 = vmatpush1.msra.mxu0 0.0
        %484 = vmatprep.subr.mxu0 0.0
        %485 = vmatpush1.msra.mxu0 0.0
        %486 = vmatprep.subr.mxu0 0.0
        %487 = vmatpush1.msra.mxu0 0.0
        %488 = vmatprep.subr.mxu0 0.0
        %489 = vmatpush1.msra.mxu0 0.0
        %490 = vmatprep.subr.mxu0 0.0
        %491 = vmatpush1.msra.mxu0 0.0
        %492 = vmatprep.subr.mxu0 0.0
        %493 = vmatpush1.msra.mxu0 0.0
        %494 = vmatprep.subr.mxu0 0.0
        %495 = vmatpush1.msra.mxu0 0.0
        %496 = vmatprep.subr.mxu0 0.0
        %497 = vmatpush1.msra.mxu0 0.0
        %498 = vmatprep.subr.mxu0 0.0
        %499 = vmatpush1.msra.mxu0 0.0
        %500 = vmatprep.subr.mxu0 0.0
        %501 = vmatpush1.msra.mxu0 0.0
        %502 = vmatprep.subr.mxu0 0.0
        %503 = vmatpush1.msra.mxu0 0.0
        %504 = vmatprep.subr.mxu0 0.0
        %505 = vmatpush1.msra.mxu0 0.0
        %506 = vmatprep.subr.mxu0 0.0
        %507 = vmatpush1.msra.mxu0 0.0
        %508 = vmatprep.mubr.f32.mxu0 0.0
        %509 = vmatmul.mubr.f32.gmra.mrb[0].mxu0 %v417
        %v510 = vpop.f32.mrb[0].mxu0
        %v511 = vadd.f32 0.0, %v510
        %v512 = vpop.f32.mrb[0].mxu0
        %v513 = vadd.f32 0.0, %v512
        %514 = vdwg.mxu0
        %515 = vmatprep.subr.mxu0 %v430
        %516 = vmatpush1.msra.mxu0 %v427
        %517 = vmatprep.subr.mxu0 0.0
        %518 = vmatpush1.msra.mxu0 0.0
        %519 = vmatprep.subr.mxu0 0.0
        %520 = vmatpush1.msra.mxu0 0.0
        %521 = vmatprep.subr.mxu0 0.0
        %522 = vmatpush1.msra.mxu0 0.0
        %523 = vmatprep.subr.mxu0 0.0
        %524 = vmatpush1.msra.mxu0 0.0
        %525 = vmatprep.subr.mxu0 0.0
        %526 = vmatpush1.msra.mxu0 0.0
        %527 = vmatprep.subr.mxu0 0.0
        %528 = vmatpush1.msra.mxu0 0.0
        %529 = vmatprep.subr.mxu0 0.0
        %530 = vmatpush1.msra.mxu0 0.0
        %531 = vmatprep.subr.mxu0 0.0
        %532 = vmatpush1.msra.mxu0 0.0
        %533 = vmatprep.subr.mxu0 0.0
        %534 = vmatpush1.msra.mxu0 0.0
        %535 = vmatprep.subr.mxu0 0.0
        %536 = vmatpush1.msra.mxu0 0.0
        %537 = vmatprep.subr.mxu0 0.0
        %538 = vmatpush1.msra.mxu0 0.0
        %539 = vmatprep.subr.mxu0 0.0
        %540 = vmatpush1.msra.mxu0 0.0
        %541 = vmatprep.subr.mxu0 0.0
        %542 = vmatpush1.msra.mxu0 0.0
        %543 = vmatprep.subr.mxu0 0.0
        %544 = vmatpush1.msra.mxu0 0.0
        %545 = vmatprep.subr.mxu0 0.0
        %546 = vmatpush1.msra.mxu0 0.0
        %547 = vmatprep.subr.mxu0 0.0
        %548 = vmatpush1.msra.mxu0 0.0
        %549 = vmatprep.subr.mxu0 0.0
        %550 = vmatpush1.msra.mxu0 0.0
        %551 = vmatprep.subr.mxu0 0.0
        %552 = vmatpush1.msra.mxu0 0.0
        %553 = vmatprep.subr.mxu0 0.0
        %554 = vmatpush1.msra.mxu0 0.0
        %555 = vmatprep.subr.mxu0 0.0
        %556 = vmatpush1.msra.mxu0 0.0
        %557 = vmatprep.subr.mxu0 0.0
        %558 = vmatpush1.msra.mxu0 0.0
        %559 = vmatprep.subr.mxu0 0.0
        %560 = vmatpush1.msra.mxu0 0.0
        %561 = vmatprep.subr.mxu0 0.0
        %562 = vmatpush1.msra.mxu0 0.0
        %563 = vmatprep.subr.mxu0 0.0
        %564 = vmatpush1.msra.mxu0 0.0
        %565 = vmatprep.subr.mxu0 0.0
        %566 = vmatpush1.msra.mxu0 0.0
        %567 = vmatprep.subr.mxu0 0.0
        %568 = vmatpush1.msra.mxu0 0.0
        %569 = vmatprep.subr.mxu0 0.0
        %570 = vmatpush1.msra.mxu0 0.0
        %571 = vmatprep.subr.mxu0 0.0
        %572 = vmatpush1.msra.mxu0 0.0
        %573 = vmatprep.subr.mxu0 0.0
        %574 = vmatpush1.msra.mxu0 0.0
        %575 = vmatprep.subr.mxu0 0.0
        %576 = vmatpush1.msra.mxu0 0.0
        %577 = vmatprep.subr.mxu0 0.0
        %578 = vmatpush1.msra.mxu0 0.0
        %579 = vmatprep.mubr.f32.mxu0 0.0
        %580 = vmatmul.mubr.f32.gmra.mrb[0].mxu0 %v417
        %v581 = vpop.f32.mrb[0].mxu0
        %v582 = vadd.f32 0.0, %v581
        %v583 = vpop.f32.mrb[0].mxu0
        %v584 = vadd.f32 0.0, %v583
        %585 = vdwg.mxu0
        %586 = vmatprep.subr.mxu0 %v436
        %587 = vmatpush1.msra.mxu0 %v433
        %588 = vmatprep.subr.mxu0 0.0
        %589 = vmatpush1.msra.mxu0 0.0
        %590 = vmatprep.subr.mxu0 0.0
        %591 = vmatpush1.msra.mxu0 0.0
        %592 = vmatprep.subr.mxu0 0.0
        %593 = vmatpush1.msra.mxu0 0.0
        %594 = vmatprep.subr.mxu0 0.0
        %595 = vmatpush1.msra.mxu0 0.0
        %596 = vmatprep.subr.mxu0 0.0
        %597 = vmatpush1.msra.mxu0 0.0
        %598 = vmatprep.subr.mxu0 0.0
        %599 = vmatpush1.msra.mxu0 0.0
        %600 = vmatprep.subr.mxu0 0.0
        %601 = vmatpush1.msra.mxu0 0.0
        %602 = vmatprep.subr.mxu0 0.0
        %603 = vmatpush1.msra.mxu0 0.0
        %604 = vmatprep.subr.mxu0 0.0
        %605 = vmatpush1.msra.mxu0 0.0
        %606 = vmatprep.subr.mxu0 0.0
        %607 = vmatpush1.msra.mxu0 0.0
        %608 = vmatprep.subr.mxu0 0.0
        %609 = vmatpush1.msra.mxu0 0.0
        %610 = vmatprep.subr.mxu0 0.0
        %611 = vmatpush1.msra.mxu0 0.0
        %612 = vmatprep.subr.mxu0 0.0
        %613 = vmatpush1.msra.mxu0 0.0
        %614 = vmatprep.subr.mxu0 0.0
        %615 = vmatpush1.msra.mxu0 0.0
        %616 = vmatprep.subr.mxu0 0.0
        %617 = vmatpush1.msra.mxu0 0.0
        %618 = vmatprep.subr.mxu0 0.0
        %619 = vmatpush1.msra.mxu0 0.0
        %620 = vmatprep.subr.mxu0 0.0
        %621 = vmatpush1.msra.mxu0 0.0
        %622 = vmatprep.subr.mxu0 0.0
        %623 = vmatpush1.msra.mxu0 0.0
        %624 = vmatprep.subr.mxu0 0.0
        %625 = vmatpush1.msra.mxu0 0.0
        %626 = vmatprep.subr.mxu0 0.0
        %627 = vmatpush1.msra.mxu0 0.0
        %628 = vmatprep.subr.mxu0 0.0
        %629 = vmatpush1.msra.mxu0 0.0
        %630 = vmatprep.subr.mxu0 0.0
        %631 = vmatpush1.msra.mxu0 0.0
        %632 = vmatprep.subr.mxu0 0.0
        %633 = vmatpush1.msra.mxu0 0.0
        %634 = vmatprep.subr.mxu0 0.0
        %635 = vmatpush1.msra.mxu0 0.0
        %636 = vmatprep.subr.mxu0 0.0
        %637 = vmatpush1.msra.mxu0 0.0
        %638 = vmatprep.subr.mxu0 0.0
        %639 = vmatpush1.msra.mxu0 0.0
        %640 = vmatprep.subr.mxu0 0.0
        %641 = vmatpush1.msra.mxu0 0.0
        %642 = vmatprep.subr.mxu0 0.0
        %643 = vmatpush1.msra.mxu0 0.0
        %644 = vmatprep.subr.mxu0 0.0
        %645 = vmatpush1.msra.mxu0 0.0
        %646 = vmatprep.subr.mxu0 0.0
        %647 = vmatpush1.msra.mxu0 0.0
        %648 = vmatprep.subr.mxu0 0.0
        %649 = vmatpush1.msra.mxu0 0.0
        %650 = vmatprep.mubr.f32.mxu0 0.0
        %651 = vmatmul.mubr.f32.gmra.mrb[0].mxu0 %v417
        %v652 = vpop.f32.mrb[0].mxu0
        %v653 = vadd.f32 0.0, %v652
        %v654 = vpop.f32.mrb[0].mxu0
        %v655 = vadd.f32 0.0, %v654
        %656 = vdwg.mxu0
        %657 = vmatprep.subr.mxu0 %v442
        %658 = vmatpush1.msra.mxu0 %v439
        %659 = vmatprep.subr.mxu0 0.0
        %660 = vmatpush1.msra.mxu0 0.0
        %661 = vmatprep.subr.mxu0 0.0
        %662 = vmatpush1.msra.mxu0 0.0
        %663 = vmatprep.subr.mxu0 0.0
        %664 = vmatpush1.msra.mxu0 0.0
        %665 = vmatprep.subr.mxu0 0.0
        %666 = vmatpush1.msra.mxu0 0.0
        %667 = vmatprep.subr.mxu0 0.0
        %668 = vmatpush1.msra.mxu0 0.0
        %669 = vmatprep.subr.mxu0 0.0
        %670 = vmatpush1.msra.mxu0 0.0
        %671 = vmatprep.subr.mxu0 0.0
        %672 = vmatpush1.msra.mxu0 0.0
        %673 = vmatprep.subr.mxu0 0.0
        %674 = vmatpush1.msra.mxu0 0.0
        %675 = vmatprep.subr.mxu0 0.0
        %676 = vmatpush1.msra.mxu0 0.0
        %677 = vmatprep.subr.mxu0 0.0
        %678 = vmatpush1.msra.mxu0 0.0
        %679 = vmatprep.subr.mxu0 0.0
        %680 = vmatpush1.msra.mxu0 0.0
        %681 = vmatprep.subr.mxu0 0.0
        %682 = vmatpush1.msra.mxu0 0.0
        %683 = vmatprep.subr.mxu0 0.0
        %684 = vmatpush1.msra.mxu0 0.0
        %685 = vmatprep.subr.mxu0 0.0
        %686 = vmatpush1.msra.mxu0 0.0
        %687 = vmatprep.subr.mxu0 0.0
        %688 = vmatpush1.msra.mxu0 0.0
        %689 = vmatprep.subr.mxu0 0.0
        %690 = vmatpush1.msra.mxu0 0.0
        %691 = vmatprep.subr.mxu0 0.0
        %692 = vmatpush1.msra.mxu0 0.0
        %693 = vmatprep.subr.mxu0 0.0
        %694 = vmatpush1.msra.mxu0 0.0
        %695 = vmatprep.subr.mxu0 0.0
        %696 = vmatpush1.msra.mxu0 0.0
        %697 = vmatprep.subr.mxu0 0.0
        %698 = vmatpush1.msra.mxu0 0.0
        %699 = vmatprep.subr.mxu0 0.0
        %700 = vmatpush1.msra.mxu0 0.0
        %701 = vmatprep.subr.mxu0 0.0
        %702 = vmatpush1.msra.mxu0 0.0
        %703 = vmatprep.subr.mxu0 0.0
        %704 = vmatpush1.msra.mxu0 0.0
        %705 = vmatprep.subr.mxu0 0.0
        %706 = vmatpush1.msra.mxu0 0.0
        %707 = vmatprep.subr.mxu0 0.0
        %708 = vmatpush1.msra.mxu0 0.0
        %709 = vmatprep.subr.mxu0 0.0
        %710 = vmatpush1.msra.mxu0 0.0
        %711 = vmatprep.subr.mxu0 0.0
        %712 = vmatpush1.msra.mxu0 0.0
        %713 = vmatprep.subr.mxu0 0.0
        %714 = vmatpush1.msra.mxu0 0.0
        %715 = vmatprep.subr.mxu0 0.0
        %716 = vmatpush1.msra.mxu0 0.0
        %717 = vmatprep.subr.mxu0 0.0
        %718 = vmatpush1.msra.mxu0 0.0
        %719 = vmatprep.subr.mxu0 0.0
        %720 = vmatpush1.msra.mxu0 0.0
        %721 = vmatprep.mubr.f32.mxu0 0.0
        %722 = vmatmul.mubr.f32.gmra.mrb[0].mxu0 %v417
        %v723 = vpop.f32.mrb[0].mxu0
        %v724 = vadd.f32 0.0, %v723
        %v725 = vpop.f32.mrb[0].mxu0
        %v726 = vadd.f32 0.0, %v725
        %727 = vdwg.mxu0
        %v729 = vsel %vm415, %v348, 0
        %v732 = vsel %vm419, %v340, 0
        %v735 = vsel %vm419, %v341, 0
        %v738 = vsel %vm419, %v342, 0
        %v741 = vsel %vm419, %v343, 0
        %v744 = vsel %vm419, %v344, 0
        %v747 = vsel %vm419, %v345, 0
        %v750 = vsel %vm419, %v346, 0
        %v753 = vsel %vm419, %v347, 0
        %755 = vmatprep.subr.mxu0 %v735
        %756 = vmatpush1.msra.mxu0 %v732
        %757 = vmatprep.subr.mxu0 0.0
        %758 = vmatpush1.msra.mxu0 0.0
        %759 = vmatprep.subr.mxu0 0.0
        %760 = vmatpush1.msra.mxu0 0.0
        %761 = vmatprep.subr.mxu0 0.0
        %762 = vmatpush1.msra.mxu0 0.0
        %763 = vmatprep.subr.mxu0 0.0
        %764 = vmatpush1.msra.mxu0 0.0
        %765 = vmatprep.subr.mxu0 0.0
        %766 = vmatpush1.msra.mxu0 0.0
        %767 = vmatprep.subr.mxu0 0.0
        %768 = vmatpush1.msra.mxu0 0.0
        %769 = vmatprep.subr.mxu0 0.0
        %770 = vmatpush1.msra.mxu0 0.0
        %771 = vmatprep.subr.mxu0 0.0
        %772 = vmatpush1.msra.mxu0 0.0
        %773 = vmatprep.subr.mxu0 0.0
        %774 = vmatpush1.msra.mxu0 0.0
        %775 = vmatprep.subr.mxu0 0.0
        %776 = vmatpush1.msra.mxu0 0.0
        %777 = vmatprep.subr.mxu0 0.0
        %778 = vmatpush1.msra.mxu0 0.0
        %779 = vmatprep.subr.mxu0 0.0
        %780 = vmatpush1.msra.mxu0 0.0
        %781 = vmatprep.subr.mxu0 0.0
        %782 = vmatpush1.msra.mxu0 0.0
        %783 = vmatprep.subr.mxu0 0.0
        %784 = vmatpush1.msra.mxu0 0.0
        %785 = vmatprep.subr.mxu0 0.0
        %786 = vmatpush1.msra.mxu0 0.0
        %787 = vmatprep.subr.mxu0 0.0
        %788 = vmatpush1.msra.mxu0 0.0
        %789 = vmatprep.subr.mxu0 0.0
        %790 = vmatpush1.msra.mxu0 0.0
        %791 = vmatprep.subr.mxu0 0.0
        %792 = vmatpush1.msra.mxu0 0.0
        %793 = vmatprep.subr.mxu0 0.0
        %794 = vmatpush1.msra.mxu0 0.0
        %795 = vmatprep.subr.mxu0 0.0
        %796 = vmatpush1.msra.mxu0 0.0
        %797 = vmatprep.subr.mxu0 0.0
        %798 = vmatpush1.msra.mxu0 0.0
        %799 = vmatprep.subr.mxu0 0.0
        %800 = vmatpush1.msra.mxu0 0.0
        %801 = vmatprep.subr.mxu0 0.0
        %802 = vmatpush1.msra.mxu0 0.0
        %803 = vmatprep.subr.mxu0 0.0
        %804 = vmatpush1.msra.mxu0 0.0
        %805 = vmatprep.subr.mxu0 0.0
        %806 = vmatpush1.msra.mxu0 0.0
        %807 = vmatprep.subr.mxu0 0.0
        %808 = vmatpush1.msra.mxu0 0.0
        %809 = vmatprep.subr.mxu0 0.0
        %810 = vmatpush1.msra.mxu0 0.0
        %811 = vmatprep.subr.mxu0 0.0
        %812 = vmatpush1.msra.mxu0 0.0
        %813 = vmatprep.subr.mxu0 0.0
        %814 = vmatpush1.msra.mxu0 0.0
        %815 = vmatprep.subr.mxu0 0.0
        %816 = vmatpush1.msra.mxu0 0.0
        %817 = vmatprep.subr.mxu0 0.0
        %818 = vmatpush1.msra.mxu0 0.0
        %819 = vmatprep.mubr.f32.mxu0 0.0
        %820 = vmatmul.mubr.f32.gmra.mrb[0].mxu0 %v729
        %v821 = vpop.f32.mrb[0].mxu0
        %v822 = vadd.f32 %v511, %v821
        %v823 = vpop.f32.mrb[0].mxu0
        %v824 = vadd.f32 %v513, %v823
        %825 = vdwg.mxu0
        %826 = vmatprep.subr.mxu0 %v741
        %827 = vmatpush1.msra.mxu0 %v738
        %828 = vmatprep.subr.mxu0 0.0
        %829 = vmatpush1.msra.mxu0 0.0
        %830 = vmatprep.subr.mxu0 0.0
        %831 = vmatpush1.msra.mxu0 0.0
        %832 = vmatprep.subr.mxu0 0.0
        %833 = vmatpush1.msra.mxu0 0.0
        %834 = vmatprep.subr.mxu0 0.0
        %835 = vmatpush1.msra.mxu0 0.0
        %836 = vmatprep.subr.mxu0 0.0
        %837 = vmatpush1.msra.mxu0 0.0
        %838 = vmatprep.subr.mxu0 0.0
        %839 = vmatpush1.msra.mxu0 0.0
        %840 = vmatprep.subr.mxu0 0.0
        %841 = vmatpush1.msra.mxu0 0.0
        %842 = vmatprep.subr.mxu0 0.0
        %843 = vmatpush1.msra.mxu0 0.0
        %844 = vmatprep.subr.mxu0 0.0
        %845 = vmatpush1.msra.mxu0 0.0
        %846 = vmatprep.subr.mxu0 0.0
        %847 = vmatpush1.msra.mxu0 0.0
        %848 = vmatprep.subr.mxu0 0.0
        %849 = vmatpush1.msra.mxu0 0.0
        %850 = vmatprep.subr.mxu0 0.0
        %851 = vmatpush1.msra.mxu0 0.0
        %852 = vmatprep.subr.mxu0 0.0
        %853 = vmatpush1.msra.mxu0 0.0
        %854 = vmatprep.subr.mxu0 0.0
        %855 = vmatpush1.msra.mxu0 0.0
        %856 = vmatprep.subr.mxu0 0.0
        %857 = vmatpush1.msra.mxu0 0.0
        %858 = vmatprep.subr.mxu0 0.0
        %859 = vmatpush1.msra.mxu0 0.0
        %860 = vmatprep.subr.mxu0 0.0
        %861 = vmatpush1.msra.mxu0 0.0
        %862 = vmatprep.subr.mxu0 0.0
        %863 = vmatpush1.msra.mxu0 0.0
        %864 = vmatprep.subr.mxu0 0.0
        %865 = vmatpush1.msra.mxu0 0.0
        %866 = vmatprep.subr.mxu0 0.0
        %867 = vmatpush1.msra.mxu0 0.0
        %868 = vmatprep.subr.mxu0 0.0
        %869 = vmatpush1.msra.mxu0 0.0
        %870 = vmatprep.subr.mxu0 0.0
        %871 = vmatpush1.msra.mxu0 0.0
        %872 = vmatprep.subr.mxu0 0.0
        %873 = vmatpush1.msra.mxu0 0.0
        %874 = vmatprep.subr.mxu0 0.0
        %875 = vmatpush1.msra.mxu0 0.0
        %876 = vmatprep.subr.mxu0 0.0
        %877 = vmatpush1.msra.mxu0 0.0
        %878 = vmatprep.subr.mxu0 0.0
        %879 = vmatpush1.msra.mxu0 0.0
        %880 = vmatprep.subr.mxu0 0.0
        %881 = vmatpush1.msra.mxu0 0.0
        %882 = vmatprep.subr.mxu0 0.0
        %883 = vmatpush1.msra.mxu0 0.0
        %884 = vmatprep.subr.mxu0 0.0
        %885 = vmatpush1.msra.mxu0 0.0
        %886 = vmatprep.subr.mxu0 0.0
        %887 = vmatpush1.msra.mxu0 0.0
        %888 = vmatprep.subr.mxu0 0.0
        %889 = vmatpush1.msra.mxu0 0.0
        %890 = vmatprep.mubr.f32.mxu0 0.0
        %891 = vmatmul.mubr.f32.gmra.mrb[0].mxu0 %v729
        %v892 = vpop.f32.mrb[0].mxu0
        %v893 = vadd.f32 %v582, %v892
        %v894 = vpop.f32.mrb[0].mxu0
        %v895 = vadd.f32 %v584, %v894
        %896 = vdwg.mxu0
        %897 = vmatprep.subr.mxu0 %v747
        %898 = vmatpush1.msra.mxu0 %v744
        %899 = vmatprep.subr.mxu0 0.0
        %900 = vmatpush1.msra.mxu0 0.0
        %901 = vmatprep.subr.mxu0 0.0
        %902 = vmatpush1.msra.mxu0 0.0
        %903 = vmatprep.subr.mxu0 0.0
        %904 = vmatpush1.msra.mxu0 0.0
        %905 = vmatprep.subr.mxu0 0.0
        %906 = vmatpush1.msra.mxu0 0.0
        %907 = vmatprep.subr.mxu0 0.0
        %908 = vmatpush1.msra.mxu0 0.0
        %909 = vmatprep.subr.mxu0 0.0
        %910 = vmatpush1.msra.mxu0 0.0
        %911 = vmatprep.subr.mxu0 0.0
        %912 = vmatpush1.msra.mxu0 0.0
        %913 = vmatprep.subr.mxu0 0.0
        %914 = vmatpush1.msra.mxu0 0.0
        %915 = vmatprep.subr.mxu0 0.0
        %916 = vmatpush1.msra.mxu0 0.0
        %917 = vmatprep.subr.mxu0 0.0
        %918 = vmatpush1.msra.mxu0 0.0
        %919 = vmatprep.subr.mxu0 0.0
        %920 = vmatpush1.msra.mxu0 0.0
        %921 = vmatprep.subr.mxu0 0.0
        %922 = vmatpush1.msra.mxu0 0.0
        %923 = vmatprep.subr.mxu0 0.0
        %924 = vmatpush1.msra.mxu0 0.0
        %925 = vmatprep.subr.mxu0 0.0
        %926 = vmatpush1.msra.mxu0 0.0
        %927 = vmatprep.subr.mxu0 0.0
        %928 = vmatpush1.msra.mxu0 0.0
        %929 = vmatprep.subr.mxu0 0.0
        %930 = vmatpush1.msra.mxu0 0.0
        %931 = vmatprep.subr.mxu0 0.0
        %932 = vmatpush1.msra.mxu0 0.0
        %933 = vmatprep.subr.mxu0 0.0
        %934 = vmatpush1.msra.mxu0 0.0
        %935 = vmatprep.subr.mxu0 0.0
        %936 = vmatpush1.msra.mxu0 0.0
        %937 = vmatprep.subr.mxu0 0.0
        %938 = vmatpush1.msra.mxu0 0.0
        %939 = vmatprep.subr.mxu0 0.0
        %940 = vmatpush1.msra.mxu0 0.0
        %941 = vmatprep.subr.mxu0 0.0
        %942 = vmatpush1.msra.mxu0 0.0
        %943 = vmatprep.subr.mxu0 0.0
        %944 = vmatpush1.msra.mxu0 0.0
        %945 = vmatprep.subr.mxu0 0.0
        %946 = vmatpush1.msra.mxu0 0.0
        %947 = vmatprep.subr.mxu0 0.0
        %948 = vmatpush1.msra.mxu0 0.0
        %949 = vmatprep.subr.mxu0 0.0
        %950 = vmatpush1.msra.mxu0 0.0
        %951 = vmatprep.subr.mxu0 0.0
        %952 = vmatpush1.msra.mxu0 0.0
        %953 = vmatprep.subr.mxu0 0.0
        %954 = vmatpush1.msra.mxu0 0.0
        %955 = vmatprep.subr.mxu0 0.0
        %956 = vmatpush1.msra.mxu0 0.0
        %957 = vmatprep.subr.mxu0 0.0
        %958 = vmatpush1.msra.mxu0 0.0
        %959 = vmatprep.subr.mxu0 0.0
        %960 = vmatpush1.msra.mxu0 0.0
        %961 = vmatprep.mubr.f32.mxu0 0.0
        %962 = vmatmul.mubr.f32.gmra.mrb[0].mxu0 %v729
        %v963 = vpop.f32.mrb[0].mxu0
        %v964 = vadd.f32 %v653, %v963
        %v965 = vpop.f32.mrb[0].mxu0
        %v966 = vadd.f32 %v655, %v965
        %967 = vdwg.mxu0
        %968 = vmatprep.subr.mxu0 %v753
        %969 = vmatpush1.msra.mxu0 %v750
        %970 = vmatprep.subr.mxu0 0.0
        %971 = vmatpush1.msra.mxu0 0.0
        %972 = vmatprep.subr.mxu0 0.0
        %973 = vmatpush1.msra.mxu0 0.0
        %974 = vmatprep.subr.mxu0 0.0
        %975 = vmatpush1.msra.mxu0 0.0
        %976 = vmatprep.subr.mxu0 0.0
        %977 = vmatpush1.msra.mxu0 0.0
        %978 = vmatprep.subr.mxu0 0.0
        %979 = vmatpush1.msra.mxu0 0.0
        %980 = vmatprep.subr.mxu0 0.0
        %981 = vmatpush1.msra.mxu0 0.0
        %982 = vmatprep.subr.mxu0 0.0
        %983 = vmatpush1.msra.mxu0 0.0
        %984 = vmatprep.subr.mxu0 0.0
        %985 = vmatpush1.msra.mxu0 0.0
        %986 = vmatprep.subr.mxu0 0.0
        %987 = vmatpush1.msra.mxu0 0.0
        %988 = vmatprep.subr.mxu0 0.0
        %989 = vmatpush1.msra.mxu0 0.0
        %990 = vmatprep.subr.mxu0 0.0
        %991 = vmatpush1.msra.mxu0 0.0
        %992 = vmatprep.subr.mxu0 0.0
        %993 = vmatpush1.msra.mxu0 0.0
        %994 = vmatprep.subr.mxu0 0.0
        %995 = vmatpush1.msra.mxu0 0.0
        %996 = vmatprep.subr.mxu0 0.0
        %997 = vmatpush1.msra.mxu0 0.0
        %998 = vmatprep.subr.mxu0 0.0
        %999 = vmatpush1.msra.mxu0 0.0
        %1000 = vmatprep.subr.mxu0 0.0
        %1001 = vmatpush1.msra.mxu0 0.0
        %1002 = vmatprep.subr.mxu0 0.0
        %1003 = vmatpush1.msra.mxu0 0.0
        %1004 = vmatprep.subr.mxu0 0.0
        %1005 = vmatpush1.msra.mxu0 0.0
        %1006 = vmatprep.subr.mxu0 0.0
        %1007 = vmatpush1.msra.mxu0 0.0
        %1008 = vmatprep.subr.mxu0 0.0
        %1009 = vmatpush1.msra.mxu0 0.0
        %1010 = vmatprep.subr.mxu0 0.0
        %1011 = vmatpush1.msra.mxu0 0.0
        %1012 = vmatprep.subr.mxu0 0.0
        %1013 = vmatpush1.msra.mxu0 0.0
        %1014 = vmatprep.subr.mxu0 0.0
        %1015 = vmatpush1.msra.mxu0 0.0
        %1016 = vmatprep.subr.mxu0 0.0
        %1017 = vmatpush1.msra.mxu0 0.0
        %1018 = vmatprep.subr.mxu0 0.0
        %1019 = vmatpush1.msra.mxu0 0.0
        %1020 = vmatprep.subr.mxu0 0.0
        %1021 = vmatpush1.msra.mxu0 0.0
        %1022 = vmatprep.subr.mxu0 0.0
        %1023 = vmatpush1.msra.mxu0 0.0
        %1024 = vmatprep.subr.mxu0 0.0
        %1025 = vmatpush1.msra.mxu0 0.0
        %1026 = vmatprep.subr.mxu0 0.0
        %1027 = vmatpush1.msra.mxu0 0.0
        %1028 = vmatprep.subr.mxu0 0.0
        %1029 = vmatpush1.msra.mxu0 0.0
        %1030 = vmatprep.subr.mxu0 0.0
        %1031 = vmatpush1.msra.mxu0 0.0
        %1032 = vmatprep.mubr.f32.mxu0 0.0
        %1033 = vmatmul.mubr.f32.gmra.mrb[0].mxu0 %v729
        %v1034 = vpop.f32.mrb[0].mxu0
        %v1035 = vadd.f32 %v724, %v1034
        %v1036 = vpop.f32.mrb[0].mxu0
        %v1037 = vadd.f32 %v726, %v1036
        %1038 = vdwg.mxu0
        %1039 = vrot.lane.b32.xlu0 %v253, 31
        %v1040 = vpop.permute.xlu0 %1039
        %1041 = vrot.lane.b32.xlu0 %v261, 31
        %v1042 = vpop.permute.xlu0 %1041
        %1043 = vrot.lane.b32.xlu0 %v254, 31
        %v1044 = vpop.permute.xlu0 %1043
        %1045 = vrot.lane.b32.xlu0 %v262, 31
        %v1046 = vpop.permute.xlu0 %1045
        %1047 = vrot.lane.b32.xlu0 %v255, 31
        %v1048 = vpop.permute.xlu0 %1047
        %1049 = vrot.lane.b32.xlu0 %v263, 31
        %v1050 = vpop.permute.xlu0 %1049
        %1051 = vrot.lane.b32.xlu0 %v256, 31
        %v1052 = vpop.permute.xlu0 %1051
        %1053 = vrot.lane.b32.xlu0 %v264, 31
        %v1054 = vpop.permute.xlu0 %1053
        %vm1055 = vcmp.lt.s32.totalorder %v286, 31
        %v1056 = vsel %vm1055, %v1052, %v1054
        %v1057 = vsel %vm1055, %v1050, %v1052
        %v1058 = vsel %vm1055, %v1048, %v1050
        %v1059 = vsel %vm1055, %v1046, %v1048
        %v1060 = vsel %vm1055, %v1044, %v1046
        %v1061 = vsel %vm1055, %v1042, %v1044
        %v1062 = vsel %vm1055, %v1040, %v1042
        %v1063 = vsel %vm1055, %v1054, %v1040
        %v1064 = vld [vmem:[%s1] sm:$0x22]
        %v1065 = vld [vmem:[%s1 + $0x8] sm:$0x22]
        %v1066 = vld [vmem:[%s1 + $0x10] sm:$0x22]
        %v1067 = vld [vmem:[%s1 + $0x18] sm:$0x22]
        %v1068 = vunpack.c.l.bf16 %v1064
        %v1069 = vunpack.c.h.bf16 %v1064
        %v1070 = vunpack.c.l.bf16 %v1065
        %v1071 = vunpack.c.h.bf16 %v1065
        %v1072 = vunpack.c.l.bf16 %v1066
        %v1073 = vunpack.c.h.bf16 %v1066
        %v1074 = vunpack.c.l.bf16 %v1067
        %v1075 = vunpack.c.h.bf16 %v1067
        %v1076 = vlaneseq
        %v1077 = vshrl.u32 %v1076, 7
        %v1078 = vsub.s32 2, %v1077
        %v1079 = vrot.slane %v1068, %v1078
        %v1080 = vlaneseq
        %v1081 = vshrl.u32 %v1080, 7
        %v1082 = vsub.s32 2, %v1081
        %v1083 = vrot.slane %v1069, %v1082
        %v1084 = vlaneseq
        %v1085 = vshrl.u32 %v1084, 7
        %v1086 = vsub.s32 2, %v1085
        %v1087 = vrot.slane %v1070, %v1086
        %v1088 = vlaneseq
        %v1089 = vshrl.u32 %v1088, 7
        %v1090 = vsub.s32 2, %v1089
        %v1091 = vrot.slane %v1071, %v1090
        %v1092 = vlaneseq
        %v1093 = vshrl.u32 %v1092, 7
        %v1094 = vsub.s32 2, %v1093
        %v1095 = vrot.slane %v1072, %v1094
        %v1096 = vlaneseq
        %v1097 = vshrl.u32 %v1096, 7
        %v1098 = vsub.s32 2, %v1097
        %v1099 = vrot.slane %v1073, %v1098
        %v1100 = vlaneseq
        %v1101 = vshrl.u32 %v1100, 7
        %v1102 = vsub.s32 2, %v1101
        %v1103 = vrot.slane %v1074, %v1102
        %v1104 = vlaneseq
        %v1105 = vshrl.u32 %v1104, 7
        %v1106 = vsub.s32 2, %v1105
        %v1107 = vrot.slane %v1075, %v1106
        %v1108 = vmul.f32 %v1063, %v1079
        %v1109 = vmul.f32 %v1062, %v1083
        %v1110 = vmul.f32 %v1061, %v1087
        %v1111 = vmul.f32 %v1060, %v1091
        %v1112 = vmul.f32 %v1059, %v1095
        %v1113 = vmul.f32 %v1058, %v1099
        %v1114 = vmul.f32 %v1057, %v1103
        %v1115 = vmul.f32 %v1056, %v1107
        %v1116 = vld [vmem:[%s2 + $0x10] sm:$0xff]
        %v1118 = vsel %vm415, %v1116, 0
        %v1121 = vsel %vm419, %v1108, 0
        %v1124 = vsel %vm419, %v1109, 0
        %v1127 = vsel %vm419, %v1110, 0
        %v1130 = vsel %vm419, %v1111, 0
        %v1133 = vsel %vm419, %v1112, 0
        %v1136 = vsel %vm419, %v1113, 0
        %v1139 = vsel %vm419, %v1114, 0
        %v1142 = vsel %vm419, %v1115, 0
        %1144 = vmatprep.subr.mxu0 %v1124
        %1145 = vmatpush1.msra.mxu0 %v1121
        %1146 = vmatprep.subr.mxu0 0.0
        %1147 = vmatpush1.msra.mxu0 0.0
        %1148 = vmatprep.subr.mxu0 0.0
        %1149 = vmatpush1.msra.mxu0 0.0
        %1150 = vmatprep.subr.mxu0 0.0
        %1151 = vmatpush1.msra.mxu0 0.0
        %1152 = vmatprep.subr.mxu0 0.0
        %1153 = vmatpush1.msra.mxu0 0.0
        %1154 = vmatprep.subr.mxu0 0.0
        %1155 = vmatpush1.msra.mxu0 0.0
        %1156 = vmatprep.subr.mxu0 0.0
        %1157 = vmatpush1.msra.mxu0 0.0
        %1158 = vmatprep.subr.mxu0 0.0
        %1159 = vmatpush1.msra.mxu0 0.0
        %1160 = vmatprep.subr.mxu0 0.0
        %1161 = vmatpush1.msra.mxu0 0.0
        %1162 = vmatprep.subr.mxu0 0.0
        %1163 = vmatpush1.msra.mxu0 0.0
        %1164 = vmatprep.subr.mxu0 0.0
        %1165 = vmatpush1.msra.mxu0 0.0
        %1166 = vmatprep.subr.mxu0 0.0
        %1167 = vmatpush1.msra.mxu0 0.0
        %1168 = vmatprep.subr.mxu0 0.0
        %1169 = vmatpush1.msra.mxu0 0.0
        %1170 = vmatprep.subr.mxu0 0.0
        %1171 = vmatpush1.msra.mxu0 0.0
        %1172 = vmatprep.subr.mxu0 0.0
        %1173 = vmatpush1.msra.mxu0 0.0
        %1174 = vmatprep.subr.mxu0 0.0
        %1175 = vmatpush1.msra.mxu0 0.0
        %1176 = vmatprep.subr.mxu0 0.0
        %1177 = vmatpush1.msra.mxu0 0.0
        %1178 = vmatprep.subr.mxu0 0.0
        %1179 = vmatpush1.msra.mxu0 0.0
        %1180 = vmatprep.subr.mxu0 0.0
        %1181 = vmatpush1.msra.mxu0 0.0
        %1182 = vmatprep.subr.mxu0 0.0
        %1183 = vmatpush1.msra.mxu0 0.0
        %1184 = vmatprep.subr.mxu0 0.0
        %1185 = vmatpush1.msra.mxu0 0.0
        %1186 = vmatprep.subr.mxu0 0.0
        %1187 = vmatpush1.msra.mxu0 0.0
        %1188 = vmatprep.subr.mxu0 0.0
        %1189 = vmatpush1.msra.mxu0 0.0
        %1190 = vmatprep.subr.mxu0 0.0
        %1191 = vmatpush1.msra.mxu0 0.0
        %1192 = vmatprep.subr.mxu0 0.0
        %1193 = vmatpush1.msra.mxu0 0.0
        %1194 = vmatprep.subr.mxu0 0.0
        %1195 = vmatpush1.msra.mxu0 0.0
        %1196 = vmatprep.subr.mxu0 0.0
        %1197 = vmatpush1.msra.mxu0 0.0
        %1198 = vmatprep.subr.mxu0 0.0
        %1199 = vmatpush1.msra.mxu0 0.0
        %1200 = vmatprep.subr.mxu0 0.0
        %1201 = vmatpush1.msra.mxu0 0.0
        %1202 = vmatprep.subr.mxu0 0.0
        %1203 = vmatpush1.msra.mxu0 0.0
        %1204 = vmatprep.subr.mxu0 0.0
        %1205 = vmatpush1.msra.mxu0 0.0
        %1206 = vmatprep.subr.mxu0 0.0
        %1207 = vmatpush1.msra.mxu0 0.0
        %1208 = vmatprep.mubr.f32.mxu0 0.0
        %1209 = vmatmul.mubr.f32.gmra.mrb[0].mxu0 %v1118
        %v1210 = vpop.f32.mrb[0].mxu0
        %v1211 = vadd.f32 0.0, %v1210
        %v1212 = vpop.f32.mrb[0].mxu0
        %v1213 = vadd.f32 0.0, %v1212
        %1214 = vdwg.mxu0
        %1215 = vmatprep.subr.mxu0 %v1130
        %1216 = vmatpush1.msra.mxu0 %v1127
        %1217 = vmatprep.subr.mxu0 0.0
        %1218 = vmatpush1.msra.mxu0 0.0
        %1219 = vmatprep.subr.mxu0 0.0
        %1220 = vmatpush1.msra.mxu0 0.0
        %1221 = vmatprep.subr.mxu0 0.0
        %1222 = vmatpush1.msra.mxu0 0.0
        %1223 = vmatprep.subr.mxu0 0.0
        %1224 = vmatpush1.msra.mxu0 0.0
        %1225 = vmatprep.subr.mxu0 0.0
        %1226 = vmatpush1.msra.mxu0 0.0
        %1227 = vmatprep.subr.mxu0 0.0
        %1228 = vmatpush1.msra.mxu0 0.0
        %1229 = vmatprep.subr.mxu0 0.0
        %1230 = vmatpush1.msra.mxu0 0.0
        %1231 = vmatprep.subr.mxu0 0.0
        %1232 = vmatpush1.msra.mxu0 0.0
        %1233 = vmatprep.subr.mxu0 0.0
        %1234 = vmatpush1.msra.mxu0 0.0
        %1235 = vmatprep.subr.mxu0 0.0
        %1236 = vmatpush1.msra.mxu0 0.0
        %1237 = vmatprep.subr.mxu0 0.0
        %1238 = vmatpush1.msra.mxu0 0.0
        %1239 = vmatprep.subr.mxu0 0.0
        %1240 = vmatpush1.msra.mxu0 0.0
        %1241 = vmatprep.subr.mxu0 0.0
        %1242 = vmatpush1.msra.mxu0 0.0
        %1243 = vmatprep.subr.mxu0 0.0
        %1244 = vmatpush1.msra.mxu0 0.0
        %1245 = vmatprep.subr.mxu0 0.0
        %1246 = vmatpush1.msra.mxu0 0.0
        %1247 = vmatprep.subr.mxu0 0.0
        %1248 = vmatpush1.msra.mxu0 0.0
        %1249 = vmatprep.subr.mxu0 0.0
        %1250 = vmatpush1.msra.mxu0 0.0
        %1251 = vmatprep.subr.mxu0 0.0
        %1252 = vmatpush1.msra.mxu0 0.0
        %1253 = vmatprep.subr.mxu0 0.0
        %1254 = vmatpush1.msra.mxu0 0.0
        %1255 = vmatprep.subr.mxu0 0.0
        %1256 = vmatpush1.msra.mxu0 0.0
        %1257 = vmatprep.subr.mxu0 0.0
        %1258 = vmatpush1.msra.mxu0 0.0
        %1259 = vmatprep.subr.mxu0 0.0
        %1260 = vmatpush1.msra.mxu0 0.0
        %1261 = vmatprep.subr.mxu0 0.0
        %1262 = vmatpush1.msra.mxu0 0.0
        %1263 = vmatprep.subr.mxu0 0.0
        %1264 = vmatpush1.msra.mxu0 0.0
        %1265 = vmatprep.subr.mxu0 0.0
        %1266 = vmatpush1.msra.mxu0 0.0
        %1267 = vmatprep.subr.mxu0 0.0
        %1268 = vmatpush1.msra.mxu0 0.0
        %1269 = vmatprep.subr.mxu0 0.0
        %1270 = vmatpush1.msra.mxu0 0.0
        %1271 = vmatprep.subr.mxu0 0.0
        %1272 = vmatpush1.msra.mxu0 0.0
        %1273 = vmatprep.subr.mxu0 0.0
        %1274 = vmatpush1.msra.mxu0 0.0
        %1275 = vmatprep.subr.mxu0 0.0
        %1276 = vmatpush1.msra.mxu0 0.0
        %1277 = vmatprep.subr.mxu0 0.0
        %1278 = vmatpush1.msra.mxu0 0.0
        %1279 = vmatprep.mubr.f32.mxu0 0.0
        %1280 = vmatmul.mubr.f32.gmra.mrb[0].mxu0 %v1118
        %v1281 = vpop.f32.mrb[0].mxu0
        %v1282 = vadd.f32 0.0, %v1281
        %v1283 = vpop.f32.mrb[0].mxu0
        %v1284 = vadd.f32 0.0, %v1283
        %1285 = vdwg.mxu0
        %1286 = vmatprep.subr.mxu0 %v1136
        %1287 = vmatpush1.msra.mxu0 %v1133
        %1288 = vmatprep.subr.mxu0 0.0
        %1289 = vmatpush1.msra.mxu0 0.0
        %1290 = vmatprep.subr.mxu0 0.0
        %1291 = vmatpush1.msra.mxu0 0.0
        %1292 = vmatprep.subr.mxu0 0.0
        %1293 = vmatpush1.msra.mxu0 0.0
        %1294 = vmatprep.subr.mxu0 0.0
        %1295 = vmatpush1.msra.mxu0 0.0
        %1296 = vmatprep.subr.mxu0 0.0
        %1297 = vmatpush1.msra.mxu0 0.0
        %1298 = vmatprep.subr.mxu0 0.0
        %1299 = vmatpush1.msra.mxu0 0.0
        %1300 = vmatprep.subr.mxu0 0.0
        %1301 = vmatpush1.msra.mxu0 0.0
        %1302 = vmatprep.subr.mxu0 0.0
        %1303 = vmatpush1.msra.mxu0 0.0
        %1304 = vmatprep.subr.mxu0 0.0
        %1305 = vmatpush1.msra.mxu0 0.0
        %1306 = vmatprep.subr.mxu0 0.0
        %1307 = vmatpush1.msra.mxu0 0.0
        %1308 = vmatprep.subr.mxu0 0.0
        %1309 = vmatpush1.msra.mxu0 0.0
        %1310 = vmatprep.subr.mxu0 0.0
        %1311 = vmatpush1.msra.mxu0 0.0
        %1312 = vmatprep.subr.mxu0 0.0
        %1313 = vmatpush1.msra.mxu0 0.0
        %1314 = vmatprep.subr.mxu0 0.0
        %1315 = vmatpush1.msra.mxu0 0.0
        %1316 = vmatprep.subr.mxu0 0.0
        %1317 = vmatpush1.msra.mxu0 0.0
        %1318 = vmatprep.subr.mxu0 0.0
        %1319 = vmatpush1.msra.mxu0 0.0
        %1320 = vmatprep.subr.mxu0 0.0
        %1321 = vmatpush1.msra.mxu0 0.0
        %1322 = vmatprep.subr.mxu0 0.0
        %1323 = vmatpush1.msra.mxu0 0.0
        %1324 = vmatprep.subr.mxu0 0.0
        %1325 = vmatpush1.msra.mxu0 0.0
        %1326 = vmatprep.subr.mxu0 0.0
        %1327 = vmatpush1.msra.mxu0 0.0
        %1328 = vmatprep.subr.mxu0 0.0
        %1329 = vmatpush1.msra.mxu0 0.0
        %1330 = vmatprep.subr.mxu0 0.0
        %1331 = vmatpush1.msra.mxu0 0.0
        %1332 = vmatprep.subr.mxu0 0.0
        %1333 = vmatpush1.msra.mxu0 0.0
        %1334 = vmatprep.subr.mxu0 0.0
        %1335 = vmatpush1.msra.mxu0 0.0
        %1336 = vmatprep.subr.mxu0 0.0
        %1337 = vmatpush1.msra.mxu0 0.0
        %1338 = vmatprep.subr.mxu0 0.0
        %1339 = vmatpush1.msra.mxu0 0.0
        %1340 = vmatprep.subr.mxu0 0.0
        %1341 = vmatpush1.msra.mxu0 0.0
        %1342 = vmatprep.subr.mxu0 0.0
        %1343 = vmatpush1.msra.mxu0 0.0
        %1344 = vmatprep.subr.mxu0 0.0
        %1345 = vmatpush1.msra.mxu0 0.0
        %1346 = vmatprep.subr.mxu0 0.0
        %1347 = vmatpush1.msra.mxu0 0.0
        %1348 = vmatprep.subr.mxu0 0.0
        %1349 = vmatpush1.msra.mxu0 0.0
        %1350 = vmatprep.mubr.f32.mxu0 0.0
        %1351 = vmatmul.mubr.f32.gmra.mrb[0].mxu0 %v1118
        %v1352 = vpop.f32.mrb[0].mxu0
        %v1353 = vadd.f32 0.0, %v1352
        %v1354 = vpop.f32.mrb[0].mxu0
        %v1355 = vadd.f32 0.0, %v1354
        %1356 = vdwg.mxu0
        %1357 = vmatprep.subr.mxu0 %v1142
        %1358 = vmatpush1.msra.mxu0 %v1139
        %1359 = vmatprep.subr.mxu0 0.0
        %1360 = vmatpush1.msra.mxu0 0.0
        %1361 = vmatprep.subr.mxu0 0.0
        %1362 = vmatpush1.msra.mxu0 0.0
        %1363 = vmatprep.subr.mxu0 0.0
        %1364 = vmatpush1.msra.mxu0 0.0
        %1365 = vmatprep.subr.mxu0 0.0
        %1366 = vmatpush1.msra.mxu0 0.0
        %1367 = vmatprep.subr.mxu0 0.0
        %1368 = vmatpush1.msra.mxu0 0.0
        %1369 = vmatprep.subr.mxu0 0.0
        %1370 = vmatpush1.msra.mxu0 0.0
        %1371 = vmatprep.subr.mxu0 0.0
        %1372 = vmatpush1.msra.mxu0 0.0
        %1373 = vmatprep.subr.mxu0 0.0
        %1374 = vmatpush1.msra.mxu0 0.0
        %1375 = vmatprep.subr.mxu0 0.0
        %1376 = vmatpush1.msra.mxu0 0.0
        %1377 = vmatprep.subr.mxu0 0.0
        %1378 = vmatpush1.msra.mxu0 0.0
        %1379 = vmatprep.subr.mxu0 0.0
        %1380 = vmatpush1.msra.mxu0 0.0
        %1381 = vmatprep.subr.mxu0 0.0
        %1382 = vmatpush1.msra.mxu0 0.0
        %1383 = vmatprep.subr.mxu0 0.0
        %1384 = vmatpush1.msra.mxu0 0.0
        %1385 = vmatprep.subr.mxu0 0.0
        %1386 = vmatpush1.msra.mxu0 0.0
        %1387 = vmatprep.subr.mxu0 0.0
        %1388 = vmatpush1.msra.mxu0 0.0
        %1389 = vmatprep.subr.mxu0 0.0
        %1390 = vmatpush1.msra.mxu0 0.0
        %1391 = vmatprep.subr.mxu0 0.0
        %1392 = vmatpush1.msra.mxu0 0.0
        %1393 = vmatprep.subr.mxu0 0.0
        %1394 = vmatpush1.msra.mxu0 0.0
        %1395 = vmatprep.subr.mxu0 0.0
        %1396 = vmatpush1.msra.mxu0 0.0
        %1397 = vmatprep.subr.mxu0 0.0
        %1398 = vmatpush1.msra.mxu0 0.0
        %1399 = vmatprep.subr.mxu0 0.0
        %1400 = vmatpush1.msra.mxu0 0.0
        %1401 = vmatprep.subr.mxu0 0.0
        %1402 = vmatpush1.msra.mxu0 0.0
        %1403 = vmatprep.subr.mxu0 0.0
        %1404 = vmatpush1.msra.mxu0 0.0
        %1405 = vmatprep.subr.mxu0 0.0
        %1406 = vmatpush1.msra.mxu0 0.0
        %1407 = vmatprep.subr.mxu0 0.0
        %1408 = vmatpush1.msra.mxu0 0.0
        %1409 = vmatprep.subr.mxu0 0.0
        %1410 = vmatpush1.msra.mxu0 0.0
        %1411 = vmatprep.subr.mxu0 0.0
        %1412 = vmatpush1.msra.mxu0 0.0
        %1413 = vmatprep.subr.mxu0 0.0
        %1414 = vmatpush1.msra.mxu0 0.0
        %1415 = vmatprep.subr.mxu0 0.0
        %1416 = vmatpush1.msra.mxu0 0.0
        %1417 = vmatprep.subr.mxu0 0.0
        %1418 = vmatpush1.msra.mxu0 0.0
        %1419 = vmatprep.subr.mxu0 0.0
        %1420 = vmatpush1.msra.mxu0 0.0
        %1421 = vmatprep.mubr.f32.mxu0 0.0
        %1422 = vmatmul.mubr.f32.gmra.mrb[0].mxu0 %v1118
        %v1423 = vpop.f32.mrb[0].mxu0
        %v1424 = vadd.f32 0.0, %v1423
        %v1425 = vpop.f32.mrb[0].mxu0
        %v1426 = vadd.f32 0.0, %v1425
        %1427 = vdwg.mxu0
        %v1428 = vadd.f32 %v822, %v1211
        %v1429 = vadd.f32 %v824, %v1213
        %v1430 = vadd.f32 %v893, %v1282
        %v1431 = vadd.f32 %v895, %v1284
        %v1432 = vadd.f32 %v964, %v1353
        %v1433 = vadd.f32 %v966, %v1355
        %v1434 = vadd.f32 %v1035, %v1424
        %v1435 = vadd.f32 %v1037, %v1426
        %1436 = vrot.lane.b32.xlu0 %v253, 1
        %v1437 = vpop.permute.xlu0 %1436
        %1438 = vrot.lane.b32.xlu0 %v261, 1
        %v1439 = vpop.permute.xlu0 %1438
        %1440 = vrot.lane.b32.xlu0 %v254, 1
        %v1441 = vpop.permute.xlu0 %1440
        %1442 = vrot.lane.b32.xlu0 %v262, 1
        %v1443 = vpop.permute.xlu0 %1442
        %1444 = vrot.lane.b32.xlu0 %v255, 1
        %v1445 = vpop.permute.xlu0 %1444
        %1446 = vrot.lane.b32.xlu0 %v263, 1
        %v1447 = vpop.permute.xlu0 %1446
        %1448 = vrot.lane.b32.xlu0 %v256, 1
        %v1449 = vpop.permute.xlu0 %1448
        %1450 = vrot.lane.b32.xlu0 %v264, 1
        %v1451 = vpop.permute.xlu0 %1450
        %vm1452 = vcmp.lt.s32.totalorder %v286, 1
        %v1453 = vsel %vm1452, %v1449, %v1451
        %v1454 = vsel %vm1452, %v1447, %v1449
        %v1455 = vsel %vm1452, %v1445, %v1447
        %v1456 = vsel %vm1452, %v1443, %v1445
        %v1457 = vsel %vm1452, %v1441, %v1443
        %v1458 = vsel %vm1452, %v1439, %v1441
        %v1459 = vsel %vm1452, %v1437, %v1439
        %v1460 = vsel %vm1452, %v1451, %v1437
        %v1461 = vld [vmem:[%s1] sm:$0x22]
        %v1462 = vld [vmem:[%s1 + $0x8] sm:$0x22]
        %v1463 = vld [vmem:[%s1 + $0x10] sm:$0x22]
        %v1464 = vld [vmem:[%s1 + $0x18] sm:$0x22]
        %v1465 = vunpack.c.l.bf16 %v1461
        %v1466 = vunpack.c.h.bf16 %v1461
        %v1467 = vunpack.c.l.bf16 %v1462
        %v1468 = vunpack.c.h.bf16 %v1462
        %v1469 = vunpack.c.l.bf16 %v1463
        %v1470 = vunpack.c.h.bf16 %v1463
        %v1471 = vunpack.c.l.bf16 %v1464
        %v1472 = vunpack.c.h.bf16 %v1464
        %v1473 = vlaneseq
        %v1474 = vshrl.u32 %v1473, 7
        %v1475 = vsub.s32 3, %v1474
        %v1476 = vrot.slane %v1465, %v1475
        %v1477 = vlaneseq
        %v1478 = vshrl.u32 %v1477, 7
        %v1479 = vsub.s32 3, %v1478
        %v1480 = vrot.slane %v1466, %v1479
        %v1481 = vlaneseq
        %v1482 = vshrl.u32 %v1481, 7
        %v1483 = vsub.s32 3, %v1482
        %v1484 = vrot.slane %v1467, %v1483
        %v1485 = vlaneseq
        %v1486 = vshrl.u32 %v1485, 7
        %v1487 = vsub.s32 3, %v1486
        %v1488 = vrot.slane %v1468, %v1487
        %v1489 = vlaneseq
        %v1490 = vshrl.u32 %v1489, 7
        %v1491 = vsub.s32 3, %v1490
        %v1492 = vrot.slane %v1469, %v1491
        %v1493 = vlaneseq
        %v1494 = vshrl.u32 %v1493, 7
        %v1495 = vsub.s32 3, %v1494
        %v1496 = vrot.slane %v1470, %v1495
        %v1497 = vlaneseq
        %v1498 = vshrl.u32 %v1497, 7
        %v1499 = vsub.s32 3, %v1498
        %v1500 = vrot.slane %v1471, %v1499
        %v1501 = vlaneseq
        %v1502 = vshrl.u32 %v1501, 7
        %v1503 = vsub.s32 3, %v1502
        %v1504 = vrot.slane %v1472, %v1503
        %v1505 = vmul.f32 %v1460, %v1476
        %v1506 = vmul.f32 %v1459, %v1480
        %v1507 = vmul.f32 %v1458, %v1484
        %v1508 = vmul.f32 %v1457, %v1488
        %v1509 = vmul.f32 %v1456, %v1492
        %v1510 = vmul.f32 %v1455, %v1496
        %v1511 = vmul.f32 %v1454, %v1500
        %v1512 = vmul.f32 %v1453, %v1504
        %v1513 = vld [vmem:[%s2 + $0x18] sm:$0xff]
        %v1515 = vsel %vm415, %v1513, 0
        %v1518 = vsel %vm419, %v1505, 0
        %v1521 = vsel %vm419, %v1506, 0
        %v1524 = vsel %vm419, %v1507, 0
        %v1527 = vsel %vm419, %v1508, 0
        %v1530 = vsel %vm419, %v1509, 0
        %v1533 = vsel %vm419, %v1510, 0
        %v1536 = vsel %vm419, %v1511, 0
        %v1539 = vsel %vm419, %v1512, 0
        %1541 = vmatprep.subr.mxu0 %v1521
        %1542 = vmatpush1.msra.mxu0 %v1518
        %1543 = vmatprep.subr.mxu0 0.0
        %1544 = vmatpush1.msra.mxu0 0.0
        %1545 = vmatprep.subr.mxu0 0.0
        %1546 = vmatpush1.msra.mxu0 0.0
        %1547 = vmatprep.subr.mxu0 0.0
        %1548 = vmatpush1.msra.mxu0 0.0
        %1549 = vmatprep.subr.mxu0 0.0
        %1550 = vmatpush1.msra.mxu0 0.0
        %1551 = vmatprep.subr.mxu0 0.0
        %1552 = vmatpush1.msra.mxu0 0.0
        %1553 = vmatprep.subr.mxu0 0.0
        %1554 = vmatpush1.msra.mxu0 0.0
        %1555 = vmatprep.subr.mxu0 0.0
        %1556 = vmatpush1.msra.mxu0 0.0
        %1557 = vmatprep.subr.mxu0 0.0
        %1558 = vmatpush1.msra.mxu0 0.0
        %1559 = vmatprep.subr.mxu0 0.0
        %1560 = vmatpush1.msra.mxu0 0.0
        %1561 = vmatprep.subr.mxu0 0.0
        %1562 = vmatpush1.msra.mxu0 0.0
        %1563 = vmatprep.subr.mxu0 0.0
        %1564 = vmatpush1.msra.mxu0 0.0
        %1565 = vmatprep.subr.mxu0 0.0
        %1566 = vmatpush1.msra.mxu0 0.0
        %1567 = vmatprep.subr.mxu0 0.0
        %1568 = vmatpush1.msra.mxu0 0.0
        %1569 = vmatprep.subr.mxu0 0.0
        %1570 = vmatpush1.msra.mxu0 0.0
        %1571 = vmatprep.subr.mxu0 0.0
        %1572 = vmatpush1.msra.mxu0 0.0
        %1573 = vmatprep.subr.mxu0 0.0
        %1574 = vmatpush1.msra.mxu0 0.0
        %1575 = vmatprep.subr.mxu0 0.0
        %1576 = vmatpush1.msra.mxu0 0.0
        %1577 = vmatprep.subr.mxu0 0.0
        %1578 = vmatpush1.msra.mxu0 0.0
        %1579 = vmatprep.subr.mxu0 0.0
        %1580 = vmatpush1.msra.mxu0 0.0
        %1581 = vmatprep.subr.mxu0 0.0
        %1582 = vmatpush1.msra.mxu0 0.0
        %1583 = vmatprep.subr.mxu0 0.0
        %1584 = vmatpush1.msra.mxu0 0.0
        %1585 = vmatprep.subr.mxu0 0.0
        %1586 = vmatpush1.msra.mxu0 0.0
        %1587 = vmatprep.subr.mxu0 0.0
        %1588 = vmatpush1.msra.mxu0 0.0
        %1589 = vmatprep.subr.mxu0 0.0
        %1590 = vmatpush1.msra.mxu0 0.0
        %1591 = vmatprep.subr.mxu0 0.0
        %1592 = vmatpush1.msra.mxu0 0.0
        %1593 = vmatprep.subr.mxu0 0.0
        %1594 = vmatpush1.msra.mxu0 0.0
        %1595 = vmatprep.subr.mxu0 0.0
        %1596 = vmatpush1.msra.mxu0 0.0
        %1597 = vmatprep.subr.mxu0 0.0
        %1598 = vmatpush1.msra.mxu0 0.0
        %1599 = vmatprep.subr.mxu0 0.0
        %1600 = vmatpush1.msra.mxu0 0.0
        %1601 = vmatprep.subr.mxu0 0.0
        %1602 = vmatpush1.msra.mxu0 0.0
        %1603 = vmatprep.subr.mxu0 0.0
        %1604 = vmatpush1.msra.mxu0 0.0
        %1605 = vmatprep.mubr.f32.mxu0 0.0
        %1606 = vmatmul.mubr.f32.gmra.mrb[0].mxu0 %v1515
        %v1607 = vpop.f32.mrb[0].mxu0
        %v1608 = vadd.f32 0.0, %v1607
        %v1609 = vpop.f32.mrb[0].mxu0
        %v1610 = vadd.f32 0.0, %v1609
        %1611 = vdwg.mxu0
        %1612 = vmatprep.subr.mxu0 %v1527
        %1613 = vmatpush1.msra.mxu0 %v1524
        %1614 = vmatprep.subr.mxu0 0.0
        %1615 = vmatpush1.msra.mxu0 0.0
        %1616 = vmatprep.subr.mxu0 0.0
        %1617 = vmatpush1.msra.mxu0 0.0
        %1618 = vmatprep.subr.mxu0 0.0
        %1619 = vmatpush1.msra.mxu0 0.0
        %1620 = vmatprep.subr.mxu0 0.0
        %1621 = vmatpush1.msra.mxu0 0.0
        %1622 = vmatprep.subr.mxu0 0.0
        %1623 = vmatpush1.msra.mxu0 0.0
        %1624 = vmatprep.subr.mxu0 0.0
        %1625 = vmatpush1.msra.mxu0 0.0
        %1626 = vmatprep.subr.mxu0 0.0
        %1627 = vmatpush1.msra.mxu0 0.0
        %1628 = vmatprep.subr.mxu0 0.0
        %1629 = vmatpush1.msra.mxu0 0.0
        %1630 = vmatprep.subr.mxu0 0.0
        %1631 = vmatpush1.msra.mxu0 0.0
        %1632 = vmatprep.subr.mxu0 0.0
        %1633 = vmatpush1.msra.mxu0 0.0
        %1634 = vmatprep.subr.mxu0 0.0
        %1635 = vmatpush1.msra.mxu0 0.0
        %1636 = vmatprep.subr.mxu0 0.0
        %1637 = vmatpush1.msra.mxu0 0.0
        %1638 = vmatprep.subr.mxu0 0.0
        %1639 = vmatpush1.msra.mxu0 0.0
        %1640 = vmatprep.subr.mxu0 0.0
        %1641 = vmatpush1.msra.mxu0 0.0
        %1642 = vmatprep.subr.mxu0 0.0
        %1643 = vmatpush1.msra.mxu0 0.0
        %1644 = vmatprep.subr.mxu0 0.0
        %1645 = vmatpush1.msra.mxu0 0.0
        %1646 = vmatprep.subr.mxu0 0.0
        %1647 = vmatpush1.msra.mxu0 0.0
        %1648 = vmatprep.subr.mxu0 0.0
        %1649 = vmatpush1.msra.mxu0 0.0
        %1650 = vmatprep.subr.mxu0 0.0
        %1651 = vmatpush1.msra.mxu0 0.0
        %1652 = vmatprep.subr.mxu0 0.0
        %1653 = vmatpush1.msra.mxu0 0.0
        %1654 = vmatprep.subr.mxu0 0.0
        %1655 = vmatpush1.msra.mxu0 0.0
        %1656 = vmatprep.subr.mxu0 0.0
        %1657 = vmatpush1.msra.mxu0 0.0
        %1658 = vmatprep.subr.mxu0 0.0
        %1659 = vmatpush1.msra.mxu0 0.0
        %1660 = vmatprep.subr.mxu0 0.0
        %1661 = vmatpush1.msra.mxu0 0.0
        %1662 = vmatprep.subr.mxu0 0.0
        %1663 = vmatpush1.msra.mxu0 0.0
        %1664 = vmatprep.subr.mxu0 0.0
        %1665 = vmatpush1.msra.mxu0 0.0
        %1666 = vmatprep.subr.mxu0 0.0
        %1667 = vmatpush1.msra.mxu0 0.0
        %1668 = vmatprep.subr.mxu0 0.0
        %1669 = vmatpush1.msra.mxu0 0.0
        %1670 = vmatprep.subr.mxu0 0.0
        %1671 = vmatpush1.msra.mxu0 0.0
        %1672 = vmatprep.subr.mxu0 0.0
        %1673 = vmatpush1.msra.mxu0 0.0
        %1674 = vmatprep.subr.mxu0 0.0
        %1675 = vmatpush1.msra.mxu0 0.0
        %1676 = vmatprep.mubr.f32.mxu0 0.0
        %1677 = vmatmul.mubr.f32.gmra.mrb[0].mxu0 %v1515
        %v1678 = vpop.f32.mrb[0].mxu0
        %v1679 = vadd.f32 0.0, %v1678
        %v1680 = vpop.f32.mrb[0].mxu0
        %v1681 = vadd.f32 0.0, %v1680
        %1682 = vdwg.mxu0
        %1683 = vmatprep.subr.mxu0 %v1533
        %1684 = vmatpush1.msra.mxu0 %v1530
        %1685 = vmatprep.subr.mxu0 0.0
        %1686 = vmatpush1.msra.mxu0 0.0
        %1687 = vmatprep.subr.mxu0 0.0
        %1688 = vmatpush1.msra.mxu0 0.0
        %1689 = vmatprep.subr.mxu0 0.0
        %1690 = vmatpush1.msra.mxu0 0.0
        %1691 = vmatprep.subr.mxu0 0.0
        %1692 = vmatpush1.msra.mxu0 0.0
        %1693 = vmatprep.subr.mxu0 0.0
        %1694 = vmatpush1.msra.mxu0 0.0
        %1695 = vmatprep.subr.mxu0 0.0
        %1696 = vmatpush1.msra.mxu0 0.0
        %1697 = vmatprep.subr.mxu0 0.0
        %1698 = vmatpush1.msra.mxu0 0.0
        %1699 = vmatprep.subr.mxu0 0.0
        %1700 = vmatpush1.msra.mxu0 0.0
        %1701 = vmatprep.subr.mxu0 0.0
        %1702 = vmatpush1.msra.mxu0 0.0
        %1703 = vmatprep.subr.mxu0 0.0
        %1704 = vmatpush1.msra.mxu0 0.0
        %1705 = vmatprep.subr.mxu0 0.0
        %1706 = vmatpush1.msra.mxu0 0.0
        %1707 = vmatprep.subr.mxu0 0.0
        %1708 = vmatpush1.msra.mxu0 0.0
        %1709 = vmatprep.subr.mxu0 0.0
        %1710 = vmatpush1.msra.mxu0 0.0
        %1711 = vmatprep.subr.mxu0 0.0
        %1712 = vmatpush1.msra.mxu0 0.0
        %1713 = vmatprep.subr.mxu0 0.0
        %1714 = vmatpush1.msra.mxu0 0.0
        %1715 = vmatprep.subr.mxu0 0.0
        %1716 = vmatpush1.msra.mxu0 0.0
        %1717 = vmatprep.subr.mxu0 0.0
        %1718 = vmatpush1.msra.mxu0 0.0
        %1719 = vmatprep.subr.mxu0 0.0
        %1720 = vmatpush1.msra.mxu0 0.0
        %1721 = vmatprep.subr.mxu0 0.0
        %1722 = vmatpush1.msra.mxu0 0.0
        %1723 = vmatprep.subr.mxu0 0.0
        %1724 = vmatpush1.msra.mxu0 0.0
        %1725 = vmatprep.subr.mxu0 0.0
        %1726 = vmatpush1.msra.mxu0 0.0
        %1727 = vmatprep.subr.mxu0 0.0
        %1728 = vmatpush1.msra.mxu0 0.0
        %1729 = vmatprep.subr.mxu0 0.0
        %1730 = vmatpush1.msra.mxu0 0.0
        %1731 = vmatprep.subr.mxu0 0.0
        %1732 = vmatpush1.msra.mxu0 0.0
        %1733 = vmatprep.subr.mxu0 0.0
        %1734 = vmatpush1.msra.mxu0 0.0
        %1735 = vmatprep.subr.mxu0 0.0
        %1736 = vmatpush1.msra.mxu0 0.0
        %1737 = vmatprep.subr.mxu0 0.0
        %1738 = vmatpush1.msra.mxu0 0.0
        %1739 = vmatprep.subr.mxu0 0.0
        %1740 = vmatpush1.msra.mxu0 0.0
        %1741 = vmatprep.subr.mxu0 0.0
        %1742 = vmatpush1.msra.mxu0 0.0
        %1743 = vmatprep.subr.mxu0 0.0
        %1744 = vmatpush1.msra.mxu0 0.0
        %1745 = vmatprep.subr.mxu0 0.0
        %1746 = vmatpush1.msra.mxu0 0.0
        %1747 = vmatprep.mubr.f32.mxu0 0.0
        %1748 = vmatmul.mubr.f32.gmra.mrb[0].mxu0 %v1515
        %v1749 = vpop.f32.mrb[0].mxu0
        %v1750 = vadd.f32 0.0, %v1749
        %v1751 = vpop.f32.mrb[0].mxu0
        %v1752 = vadd.f32 0.0, %v1751
        %1753 = vdwg.mxu0
        %1754 = vmatprep.subr.mxu0 %v1539
        %1755 = vmatpush1.msra.mxu0 %v1536
        %1756 = vmatprep.subr.mxu0 0.0
        %1757 = vmatpush1.msra.mxu0 0.0
        %1758 = vmatprep.subr.mxu0 0.0
        %1759 = vmatpush1.msra.mxu0 0.0
        %1760 = vmatprep.subr.mxu0 0.0
        %1761 = vmatpush1.msra.mxu0 0.0
        %1762 = vmatprep.subr.mxu0 0.0
        %1763 = vmatpush1.msra.mxu0 0.0
        %1764 = vmatprep.subr.mxu0 0.0
        %1765 = vmatpush1.msra.mxu0 0.0
        %1766 = vmatprep.subr.mxu0 0.0
        %1767 = vmatpush1.msra.mxu0 0.0
        %1768 = vmatprep.subr.mxu0 0.0
        %1769 = vmatpush1.msra.mxu0 0.0
        %1770 = vmatprep.subr.mxu0 0.0
        %1771 = vmatpush1.msra.mxu0 0.0
        %1772 = vmatprep.subr.mxu0 0.0
        %1773 = vmatpush1.msra.mxu0 0.0
        %1774 = vmatprep.subr.mxu0 0.0
        %1775 = vmatpush1.msra.mxu0 0.0
        %1776 = vmatprep.subr.mxu0 0.0
        %1777 = vmatpush1.msra.mxu0 0.0
        %1778 = vmatprep.subr.mxu0 0.0
        %1779 = vmatpush1.msra.mxu0 0.0
        %1780 = vmatprep.subr.mxu0 0.0
        %1781 = vmatpush1.msra.mxu0 0.0
        %1782 = vmatprep.subr.mxu0 0.0
        %1783 = vmatpush1.msra.mxu0 0.0
        %1784 = vmatprep.subr.mxu0 0.0
        %1785 = vmatpush1.msra.mxu0 0.0
        %1786 = vmatprep.subr.mxu0 0.0
        %1787 = vmatpush1.msra.mxu0 0.0
        %1788 = vmatprep.subr.mxu0 0.0
        %1789 = vmatpush1.msra.mxu0 0.0
        %1790 = vmatprep.subr.mxu0 0.0
        %1791 = vmatpush1.msra.mxu0 0.0
        %1792 = vmatprep.subr.mxu0 0.0
        %1793 = vmatpush1.msra.mxu0 0.0
        %1794 = vmatprep.subr.mxu0 0.0
        %1795 = vmatpush1.msra.mxu0 0.0
        %1796 = vmatprep.subr.mxu0 0.0
        %1797 = vmatpush1.msra.mxu0 0.0
        %1798 = vmatprep.subr.mxu0 0.0
        %1799 = vmatpush1.msra.mxu0 0.0
        %1800 = vmatprep.subr.mxu0 0.0
        %1801 = vmatpush1.msra.mxu0 0.0
        %1802 = vmatprep.subr.mxu0 0.0
        %1803 = vmatpush1.msra.mxu0 0.0
        %1804 = vmatprep.subr.mxu0 0.0
        %1805 = vmatpush1.msra.mxu0 0.0
        %1806 = vmatprep.subr.mxu0 0.0
        %1807 = vmatpush1.msra.mxu0 0.0
        %1808 = vmatprep.subr.mxu0 0.0
        %1809 = vmatpush1.msra.mxu0 0.0
        %1810 = vmatprep.subr.mxu0 0.0
        %1811 = vmatpush1.msra.mxu0 0.0
        %1812 = vmatprep.subr.mxu0 0.0
        %1813 = vmatpush1.msra.mxu0 0.0
        %1814 = vmatprep.subr.mxu0 0.0
        %1815 = vmatpush1.msra.mxu0 0.0
        %1816 = vmatprep.subr.mxu0 0.0
        %1817 = vmatpush1.msra.mxu0 0.0
        %1818 = vmatprep.mubr.f32.mxu0 0.0
        %1819 = vmatmul.mubr.f32.gmra.mrb[0].mxu0 %v1515
        %v1820 = vpop.f32.mrb[0].mxu0
        %v1821 = vadd.f32 0.0, %v1820
        %v1822 = vpop.f32.mrb[0].mxu0
        %v1823 = vadd.f32 0.0, %v1822
        %1824 = vdwg.mxu0
        %v1825 = vadd.f32 %v1428, %v1608
        %v1826 = vadd.f32 %v1429, %v1610
        %v1827 = vadd.f32 %v1430, %v1679
        %v1828 = vadd.f32 %v1431, %v1681
        %v1829 = vadd.f32 %v1432, %v1750
        %v1830 = vadd.f32 %v1433, %v1752
        %v1831 = vadd.f32 %v1434, %v1821
        %v1832 = vadd.f32 %v1435, %v1823
        %v1833 = vld [vmem:[%s2 + $0x20] sm:$0xff]
        %v1835 = vsel %vm415, %v1833, 0
        %v1837 = vsel %vm419, %v253, 0
        %v1839 = vsel %vm419, %v261, 0
        %v1841 = vsel %vm419, %v254, 0
        %v1843 = vsel %vm419, %v262, 0
        %v1845 = vsel %vm419, %v255, 0
        %v1847 = vsel %vm419, %v263, 0
        %v1849 = vsel %vm419, %v256, 0
        %v1851 = vsel %vm419, %v264, 0
        %1853 = vmatprep.subr.mxu0 %v1839
        %1854 = vmatpush1.msra.mxu0 %v1837
        %1855 = vmatprep.subr.mxu0 0.0
        %1856 = vmatpush1.msra.mxu0 0.0
        %1857 = vmatprep.subr.mxu0 0.0
        %1858 = vmatpush1.msra.mxu0 0.0
        %1859 = vmatprep.subr.mxu0 0.0
        %1860 = vmatpush1.msra.mxu0 0.0
        %1861 = vmatprep.subr.mxu0 0.0
        %1862 = vmatpush1.msra.mxu0 0.0
        %1863 = vmatprep.subr.mxu0 0.0
        %1864 = vmatpush1.msra.mxu0 0.0
        %1865 = vmatprep.subr.mxu0 0.0
        %1866 = vmatpush1.msra.mxu0 0.0
        %1867 = vmatprep.subr.mxu0 0.0
        %1868 = vmatpush1.msra.mxu0 0.0
        %1869 = vmatprep.subr.mxu0 0.0
        %1870 = vmatpush1.msra.mxu0 0.0
        %1871 = vmatprep.subr.mxu0 0.0
        %1872 = vmatpush1.msra.mxu0 0.0
        %1873 = vmatprep.subr.mxu0 0.0
        %1874 = vmatpush1.msra.mxu0 0.0
        %1875 = vmatprep.subr.mxu0 0.0
        %1876 = vmatpush1.msra.mxu0 0.0
        %1877 = vmatprep.subr.mxu0 0.0
        %1878 = vmatpush1.msra.mxu0 0.0
        %1879 = vmatprep.subr.mxu0 0.0
        %1880 = vmatpush1.msra.mxu0 0.0
        %1881 = vmatprep.subr.mxu0 0.0
        %1882 = vmatpush1.msra.mxu0 0.0
        %1883 = vmatprep.subr.mxu0 0.0
        %1884 = vmatpush1.msra.mxu0 0.0
        %1885 = vmatprep.subr.mxu0 0.0
        %1886 = vmatpush1.msra.mxu0 0.0
        %1887 = vmatprep.subr.mxu0 0.0
        %1888 = vmatpush1.msra.mxu0 0.0
        %1889 = vmatprep.subr.mxu0 0.0
        %1890 = vmatpush1.msra.mxu0 0.0
        %1891 = vmatprep.subr.mxu0 0.0
        %1892 = vmatpush1.msra.mxu0 0.0
        %1893 = vmatprep.subr.mxu0 0.0
        %1894 = vmatpush1.msra.mxu0 0.0
        %1895 = vmatprep.subr.mxu0 0.0
        %1896 = vmatpush1.msra.mxu0 0.0
        %1897 = vmatprep.subr.mxu0 0.0
        %1898 = vmatpush1.msra.mxu0 0.0
        %1899 = vmatprep.subr.mxu0 0.0
        %1900 = vmatpush1.msra.mxu0 0.0
        %1901 = vmatprep.subr.mxu0 0.0
        %1902 = vmatpush1.msra.mxu0 0.0
        %1903 = vmatprep.subr.mxu0 0.0
        %1904 = vmatpush1.msra.mxu0 0.0
        %1905 = vmatprep.subr.mxu0 0.0
        %1906 = vmatpush1.msra.mxu0 0.0
        %1907 = vmatprep.subr.mxu0 0.0
        %1908 = vmatpush1.msra.mxu0 0.0
        %1909 = vmatprep.subr.mxu0 0.0
        %1910 = vmatpush1.msra.mxu0 0.0
        %1911 = vmatprep.subr.mxu0 0.0
        %1912 = vmatpush1.msra.mxu0 0.0
        %1913 = vmatprep.subr.mxu0 0.0
        %1914 = vmatpush1.msra.mxu0 0.0
        %1915 = vmatprep.subr.mxu0 0.0
        %1916 = vmatpush1.msra.mxu0 0.0
        %1917 = vmatprep.mubr.f32.mxu0 0.0
        %1918 = vmatmul.mubr.f32.gmra.mrb[0].mxu0 %v1835
        %v1919 = vpop.f32.mrb[0].mxu0
        %v1920 = vadd.f32 0.0, %v1919
        %v1921 = vpop.f32.mrb[0].mxu0
        %v1922 = vadd.f32 0.0, %v1921
        %1923 = vdwg.mxu0
        %1924 = vmatprep.subr.mxu0 %v1843
        %1925 = vmatpush1.msra.mxu0 %v1841
        %1926 = vmatprep.subr.mxu0 0.0
        %1927 = vmatpush1.msra.mxu0 0.0
        %1928 = vmatprep.subr.mxu0 0.0
        %1929 = vmatpush1.msra.mxu0 0.0
        %1930 = vmatprep.subr.mxu0 0.0
        %1931 = vmatpush1.msra.mxu0 0.0
        %1932 = vmatprep.subr.mxu0 0.0
        %1933 = vmatpush1.msra.mxu0 0.0
        %1934 = vmatprep.subr.mxu0 0.0
        %1935 = vmatpush1.msra.mxu0 0.0
        %1936 = vmatprep.subr.mxu0 0.0
        %1937 = vmatpush1.msra.mxu0 0.0
        %1938 = vmatprep.subr.mxu0 0.0
        %1939 = vmatpush1.msra.mxu0 0.0
        %1940 = vmatprep.subr.mxu0 0.0
        %1941 = vmatpush1.msra.mxu0 0.0
        %1942 = vmatprep.subr.mxu0 0.0
        %1943 = vmatpush1.msra.mxu0 0.0
        %1944 = vmatprep.subr.mxu0 0.0
        %1945 = vmatpush1.msra.mxu0 0.0
        %1946 = vmatprep.subr.mxu0 0.0
        %1947 = vmatpush1.msra.mxu0 0.0
        %1948 = vmatprep.subr.mxu0 0.0
        %1949 = vmatpush1.msra.mxu0 0.0
        %1950 = vmatprep.subr.mxu0 0.0
        %1951 = vmatpush1.msra.mxu0 0.0
        %1952 = vmatprep.subr.mxu0 0.0
        %1953 = vmatpush1.msra.mxu0 0.0
        %1954 = vmatprep.subr.mxu0 0.0
        %1955 = vmatpush1.msra.mxu0 0.0
        %1956 = vmatprep.subr.mxu0 0.0
        %1957 = vmatpush1.msra.mxu0 0.0
        %1958 = vmatprep.subr.mxu0 0.0
        %1959 = vmatpush1.msra.mxu0 0.0
        %1960 = vmatprep.subr.mxu0 0.0
        %1961 = vmatpush1.msra.mxu0 0.0
        %1962 = vmatprep.subr.mxu0 0.0
        %1963 = vmatpush1.msra.mxu0 0.0
        %1964 = vmatprep.subr.mxu0 0.0
        %1965 = vmatpush1.msra.mxu0 0.0
        %1966 = vmatprep.subr.mxu0 0.0
        %1967 = vmatpush1.msra.mxu0 0.0
        %1968 = vmatprep.subr.mxu0 0.0
        %1969 = vmatpush1.msra.mxu0 0.0
        %1970 = vmatprep.subr.mxu0 0.0
        %1971 = vmatpush1.msra.mxu0 0.0
        %1972 = vmatprep.subr.mxu0 0.0
        %1973 = vmatpush1.msra.mxu0 0.0
        %1974 = vmatprep.subr.mxu0 0.0
        %1975 = vmatpush1.msra.mxu0 0.0
        %1976 = vmatprep.subr.mxu0 0.0
        %1977 = vmatpush1.msra.mxu0 0.0
        %1978 = vmatprep.subr.mxu0 0.0
        %1979 = vmatpush1.msra.mxu0 0.0
        %1980 = vmatprep.subr.mxu0 0.0
        %1981 = vmatpush1.msra.mxu0 0.0
        %1982 = vmatprep.subr.mxu0 0.0
        %1983 = vmatpush1.msra.mxu0 0.0
        %1984 = vmatprep.subr.mxu0 0.0
        %1985 = vmatpush1.msra.mxu0 0.0
        %1986 = vmatprep.subr.mxu0 0.0
        %1987 = vmatpush1.msra.mxu0 0.0
        %1988 = vmatprep.mubr.f32.mxu0 0.0
        %1989 = vmatmul.mubr.f32.gmra.mrb[0].mxu0 %v1835
        %v1990 = vpop.f32.mrb[0].mxu0
        %v1991 = vadd.f32 0.0, %v1990
        %v1992 = vpop.f32.mrb[0].mxu0
        %v1993 = vadd.f32 0.0, %v1992
        %1994 = vdwg.mxu0
        %1995 = vmatprep.subr.mxu0 %v1847
        %1996 = vmatpush1.msra.mxu0 %v1845
        %1997 = vmatprep.subr.mxu0 0.0
        %1998 = vmatpush1.msra.mxu0 0.0
        %1999 = vmatprep.subr.mxu0 0.0
        %2000 = vmatpush1.msra.mxu0 0.0
        %2001 = vmatprep.subr.mxu0 0.0
        %2002 = vmatpush1.msra.mxu0 0.0
        %2003 = vmatprep.subr.mxu0 0.0
        %2004 = vmatpush1.msra.mxu0 0.0
        %2005 = vmatprep.subr.mxu0 0.0
        %2006 = vmatpush1.msra.mxu0 0.0
        %2007 = vmatprep.subr.mxu0 0.0
        %2008 = vmatpush1.msra.mxu0 0.0
        %2009 = vmatprep.subr.mxu0 0.0
        %2010 = vmatpush1.msra.mxu0 0.0
        %2011 = vmatprep.subr.mxu0 0.0
        %2012 = vmatpush1.msra.mxu0 0.0
        %2013 = vmatprep.subr.mxu0 0.0
        %2014 = vmatpush1.msra.mxu0 0.0
        %2015 = vmatprep.subr.mxu0 0.0
        %2016 = vmatpush1.msra.mxu0 0.0
        %2017 = vmatprep.subr.mxu0 0.0
        %2018 = vmatpush1.msra.mxu0 0.0
        %2019 = vmatprep.subr.mxu0 0.0
        %2020 = vmatpush1.msra.mxu0 0.0
        %2021 = vmatprep.subr.mxu0 0.0
        %2022 = vmatpush1.msra.mxu0 0.0
        %2023 = vmatprep.subr.mxu0 0.0
        %2024 = vmatpush1.msra.mxu0 0.0
        %2025 = vmatprep.subr.mxu0 0.0
        %2026 = vmatpush1.msra.mxu0 0.0
        %2027 = vmatprep.subr.mxu0 0.0
        %2028 = vmatpush1.msra.mxu0 0.0
        %2029 = vmatprep.subr.mxu0 0.0
        %2030 = vmatpush1.msra.mxu0 0.0
        %2031 = vmatprep.subr.mxu0 0.0
        %2032 = vmatpush1.msra.mxu0 0.0
        %2033 = vmatprep.subr.mxu0 0.0
        %2034 = vmatpush1.msra.mxu0 0.0
        %2035 = vmatprep.subr.mxu0 0.0
        %2036 = vmatpush1.msra.mxu0 0.0
        %2037 = vmatprep.subr.mxu0 0.0
        %2038 = vmatpush1.msra.mxu0 0.0
        %2039 = vmatprep.subr.mxu0 0.0
        %2040 = vmatpush1.msra.mxu0 0.0
        %2041 = vmatprep.subr.mxu0 0.0
        %2042 = vmatpush1.msra.mxu0 0.0
        %2043 = vmatprep.subr.mxu0 0.0
        %2044 = vmatpush1.msra.mxu0 0.0
        %2045 = vmatprep.subr.mxu0 0.0
        %2046 = vmatpush1.msra.mxu0 0.0
        %2047 = vmatprep.subr.mxu0 0.0
        %2048 = vmatpush1.msra.mxu0 0.0
        %2049 = vmatprep.subr.mxu0 0.0
        %2050 = vmatpush1.msra.mxu0 0.0
        %2051 = vmatprep.subr.mxu0 0.0
        %2052 = vmatpush1.msra.mxu0 0.0
        %2053 = vmatprep.subr.mxu0 0.0
        %2054 = vmatpush1.msra.mxu0 0.0
        %2055 = vmatprep.subr.mxu0 0.0
        %2056 = vmatpush1.msra.mxu0 0.0
        %2057 = vmatprep.subr.mxu0 0.0
        %2058 = vmatpush1.msra.mxu0 0.0
        %2059 = vmatprep.mubr.f32.mxu0 0.0
        %2060 = vmatmul.mubr.f32.gmra.mrb[0].mxu0 %v1835
        %v2061 = vpop.f32.mrb[0].mxu0
        %v2062 = vadd.f32 0.0, %v2061
        %v2063 = vpop.f32.mrb[0].mxu0
        %v2064 = vadd.f32 0.0, %v2063
        %2065 = vdwg.mxu0
        %2066 = vmatprep.subr.mxu0 %v1851
        %2067 = vmatpush1.msra.mxu0 %v1849
        %2068 = vmatprep.subr.mxu0 0.0
        %2069 = vmatpush1.msra.mxu0 0.0
        %2070 = vmatprep.subr.mxu0 0.0
        %2071 = vmatpush1.msra.mxu0 0.0
        %2072 = vmatprep.subr.mxu0 0.0
        %2073 = vmatpush1.msra.mxu0 0.0
        %2074 = vmatprep.subr.mxu0 0.0
        %2075 = vmatpush1.msra.mxu0 0.0
        %2076 = vmatprep.subr.mxu0 0.0
        %2077 = vmatpush1.msra.mxu0 0.0
        %2078 = vmatprep.subr.mxu0 0.0
        %2079 = vmatpush1.msra.mxu0 0.0
        %2080 = vmatprep.subr.mxu0 0.0
        %2081 = vmatpush1.msra.mxu0 0.0
        %2082 = vmatprep.subr.mxu0 0.0
        %2083 = vmatpush1.msra.mxu0 0.0
        %2084 = vmatprep.subr.mxu0 0.0
        %2085 = vmatpush1.msra.mxu0 0.0
        %2086 = vmatprep.subr.mxu0 0.0
        %2087 = vmatpush1.msra.mxu0 0.0
        %2088 = vmatprep.subr.mxu0 0.0
        %2089 = vmatpush1.msra.mxu0 0.0
        %2090 = vmatprep.subr.mxu0 0.0
        %2091 = vmatpush1.msra.mxu0 0.0
        %2092 = vmatprep.subr.mxu0 0.0
        %2093 = vmatpush1.msra.mxu0 0.0
        %2094 = vmatprep.subr.mxu0 0.0
        %2095 = vmatpush1.msra.mxu0 0.0
        %2096 = vmatprep.subr.mxu0 0.0
        %2097 = vmatpush1.msra.mxu0 0.0
        %2098 = vmatprep.subr.mxu0 0.0
        %2099 = vmatpush1.msra.mxu0 0.0
        %2100 = vmatprep.subr.mxu0 0.0
        %2101 = vmatpush1.msra.mxu0 0.0
        %2102 = vmatprep.subr.mxu0 0.0
        %2103 = vmatpush1.msra.mxu0 0.0
        %2104 = vmatprep.subr.mxu0 0.0
        %2105 = vmatpush1.msra.mxu0 0.0
        %2106 = vmatprep.subr.mxu0 0.0
        %2107 = vmatpush1.msra.mxu0 0.0
        %2108 = vmatprep.subr.mxu0 0.0
        %2109 = vmatpush1.msra.mxu0 0.0
        %2110 = vmatprep.subr.mxu0 0.0
        %2111 = vmatpush1.msra.mxu0 0.0
        %2112 = vmatprep.subr.mxu0 0.0
        %2113 = vmatpush1.msra.mxu0 0.0
        %2114 = vmatprep.subr.mxu0 0.0
        %2115 = vmatpush1.msra.mxu0 0.0
        %2116 = vmatprep.subr.mxu0 0.0
        %2117 = vmatpush1.msra.mxu0 0.0
        %2118 = vmatprep.subr.mxu0 0.0
        %2119 = vmatpush1.msra.mxu0 0.0
        %2120 = vmatprep.subr.mxu0 0.0
        %2121 = vmatpush1.msra.mxu0 0.0
        %2122 = vmatprep.subr.mxu0 0.0
        %2123 = vmatpush1.msra.mxu0 0.0
        %2124 = vmatprep.subr.mxu0 0.0
        %2125 = vmatpush1.msra.mxu0 0.0
        %2126 = vmatprep.subr.mxu0 0.0
        %2127 = vmatpush1.msra.mxu0 0.0
        %2128 = vmatprep.subr.mxu0 0.0
        %2129 = vmatpush1.msra.mxu0 0.0
        %2130 = vmatprep.mubr.f32.mxu0 0.0
        %2131 = vmatmul.mubr.f32.gmra.mrb[0].mxu0 %v1835
        %v2132 = vpop.f32.mrb[0].mxu0
        %v2133 = vadd.f32 0.0, %v2132
        %v2134 = vpop.f32.mrb[0].mxu0
        %v2135 = vadd.f32 0.0, %v2134
        %2136 = vdwg.mxu0
        %v2137 = vadd.f32 %v1825, %v1920
        %v2138 = vadd.f32 %v1826, %v1922
        %v2139 = vadd.f32 %v1827, %v1991
        %v2140 = vadd.f32 %v1828, %v1993
        %v2141 = vadd.f32 %v1829, %v2062
        %v2142 = vadd.f32 %v1830, %v2064
        %v2143 = vadd.f32 %v1831, %v2133
        %v2144 = vadd.f32 %v1832, %v2135
        %2145 = vrot.lane.b32.xlu0 %v253, 127
        %v2146 = vpop.permute.xlu0 %2145
        %2147 = vrot.lane.b32.xlu0 %v261, 127
        %v2148 = vpop.permute.xlu0 %2147
        %2149 = vrot.lane.b32.xlu0 %v254, 127
        %v2150 = vpop.permute.xlu0 %2149
        %2151 = vrot.lane.b32.xlu0 %v262, 127
        %v2152 = vpop.permute.xlu0 %2151
        %2153 = vrot.lane.b32.xlu0 %v255, 127
        %v2154 = vpop.permute.xlu0 %2153
        %2155 = vrot.lane.b32.xlu0 %v263, 127
        %v2156 = vpop.permute.xlu0 %2155
        %2157 = vrot.lane.b32.xlu0 %v256, 127
        %v2158 = vpop.permute.xlu0 %2157
        %2159 = vrot.lane.b32.xlu0 %v264, 127
        %v2160 = vpop.permute.xlu0 %2159
        %vm2161 = vcmp.lt.s32.totalorder %v286, 127
        %v2162 = vsel %vm2161, %v2158, %v2160
        %v2163 = vsel %vm2161, %v2156, %v2158
        %v2164 = vsel %vm2161, %v2154, %v2156
        %v2165 = vsel %vm2161, %v2152, %v2154
        %v2166 = vsel %vm2161, %v2150, %v2152
        %v2167 = vsel %vm2161, %v2148, %v2150
        %v2168 = vsel %vm2161, %v2146, %v2148
        %v2169 = vsel %vm2161, %v2160, %v2146
        %v2170 = vld [vmem:[%s1] sm:$0x44]
        %v2171 = vld [vmem:[%s1 + $0x8] sm:$0x44]
        %v2172 = vld [vmem:[%s1 + $0x10] sm:$0x44]
        %v2173 = vld [vmem:[%s1 + $0x18] sm:$0x44]
        %v2174 = vunpack.c.l.bf16 %v2170
        %v2175 = vunpack.c.h.bf16 %v2170
        %v2176 = vunpack.c.l.bf16 %v2171
        %v2177 = vunpack.c.h.bf16 %v2171
        %v2178 = vunpack.c.l.bf16 %v2172
        %v2179 = vunpack.c.h.bf16 %v2172
        %v2180 = vunpack.c.l.bf16 %v2173
        %v2181 = vunpack.c.h.bf16 %v2173
        %v2182 = vlaneseq
        %v2183 = vshrl.u32 %v2182, 7
        %v2184 = vsub.s32 5, %v2183
        %v2185 = vrot.slane %v2174, %v2184
        %v2186 = vlaneseq
        %v2187 = vshrl.u32 %v2186, 7
        %v2188 = vsub.s32 5, %v2187
        %v2189 = vrot.slane %v2175, %v2188
        %v2190 = vlaneseq
        %v2191 = vshrl.u32 %v2190, 7
        %v2192 = vsub.s32 5, %v2191
        %v2193 = vrot.slane %v2176, %v2192
        %v2194 = vlaneseq
        %v2195 = vshrl.u32 %v2194, 7
        %v2196 = vsub.s32 5, %v2195
        %v2197 = vrot.slane %v2177, %v2196
        %v2198 = vlaneseq
        %v2199 = vshrl.u32 %v2198, 7
        %v2200 = vsub.s32 5, %v2199
        %v2201 = vrot.slane %v2178, %v2200
        %v2202 = vlaneseq
        %v2203 = vshrl.u32 %v2202, 7
        %v2204 = vsub.s32 5, %v2203
        %v2205 = vrot.slane %v2179, %v2204
        %v2206 = vlaneseq
        %v2207 = vshrl.u32 %v2206, 7
        %v2208 = vsub.s32 5, %v2207
        %v2209 = vrot.slane %v2180, %v2208
        %v2210 = vlaneseq
        %v2211 = vshrl.u32 %v2210, 7
        %v2212 = vsub.s32 5, %v2211
        %v2213 = vrot.slane %v2181, %v2212
        %v2214 = vmul.f32 %v2168, %v2185
        %v2215 = vmul.f32 %v2167, %v2189
        %v2216 = vmul.f32 %v2166, %v2193
        %v2217 = vmul.f32 %v2165, %v2197
        %v2218 = vmul.f32 %v2164, %v2201
        %v2219 = vmul.f32 %v2163, %v2205
        %v2220 = vmul.f32 %v2162, %v2209
        %v2221 = vmul.f32 %v2169, %v2213
        %v2222 = vld [vmem:[%s2 + $0x28] sm:$0xff]
        %v2224 = vsel %vm415, %v2222, 0
        %v2227 = vsel %vm419, %v2214, 0
        %v2230 = vsel %vm419, %v2215, 0
        %v2233 = vsel %vm419, %v2216, 0
        %v2236 = vsel %vm419, %v2217, 0
        %v2239 = vsel %vm419, %v2218, 0
        %v2242 = vsel %vm419, %v2219, 0
        %v2245 = vsel %vm419, %v2220, 0
        %v2248 = vsel %vm419, %v2221, 0
        %2250 = vmatprep.subr.mxu0 %v2230
        %2251 = vmatpush1.msra.mxu0 %v2227
        %2252 = vmatprep.subr.mxu0 0.0
        %2253 = vmatpush1.msra.mxu0 0.0
        %2254 = vmatprep.subr.mxu0 0.0
        %2255 = vmatpush1.msra.mxu0 0.0
        %2256 = vmatprep.subr.mxu0 0.0
        %2257 = vmatpush1.msra.mxu0 0.0
        %2258 = vmatprep.subr.mxu0 0.0
        %2259 = vmatpush1.msra.mxu0 0.0
        %2260 = vmatprep.subr.mxu0 0.0
        %2261 = vmatpush1.msra.mxu0 0.0
        %2262 = vmatprep.subr.mxu0 0.0
        %2263 = vmatpush1.msra.mxu0 0.0
        %2264 = vmatprep.subr.mxu0 0.0
        %2265 = vmatpush1.msra.mxu0 0.0
        %2266 = vmatprep.subr.mxu0 0.0
        %2267 = vmatpush1.msra.mxu0 0.0
        %2268 = vmatprep.subr.mxu0 0.0
        %2269 = vmatpush1.msra.mxu0 0.0
        %2270 = vmatprep.subr.mxu0 0.0
        %2271 = vmatpush1.msra.mxu0 0.0
        %2272 = vmatprep.subr.mxu0 0.0
        %2273 = vmatpush1.msra.mxu0 0.0
        %2274 = vmatprep.subr.mxu0 0.0
        %2275 = vmatpush1.msra.mxu0 0.0
        %2276 = vmatprep.subr.mxu0 0.0
        %2277 = vmatpush1.msra.mxu0 0.0
        %2278 = vmatprep.subr.mxu0 0.0
        %2279 = vmatpush1.msra.mxu0 0.0
        %2280 = vmatprep.subr.mxu0 0.0
        %2281 = vmatpush1.msra.mxu0 0.0
        %2282 = vmatprep.subr.mxu0 0.0
        %2283 = vmatpush1.msra.mxu0 0.0
        %2284 = vmatprep.subr.mxu0 0.0
        %2285 = vmatpush1.msra.mxu0 0.0
        %2286 = vmatprep.subr.mxu0 0.0
        %2287 = vmatpush1.msra.mxu0 0.0
        %2288 = vmatprep.subr.mxu0 0.0
        %2289 = vmatpush1.msra.mxu0 0.0
        %2290 = vmatprep.subr.mxu0 0.0
        %2291 = vmatpush1.msra.mxu0 0.0
        %2292 = vmatprep.subr.mxu0 0.0
        %2293 = vmatpush1.msra.mxu0 0.0
        %2294 = vmatprep.subr.mxu0 0.0
        %2295 = vmatpush1.msra.mxu0 0.0
        %2296 = vmatprep.subr.mxu0 0.0
        %2297 = vmatpush1.msra.mxu0 0.0
        %2298 = vmatprep.subr.mxu0 0.0
        %2299 = vmatpush1.msra.mxu0 0.0
        %2300 = vmatprep.subr.mxu0 0.0
        %2301 = vmatpush1.msra.mxu0 0.0
        %2302 = vmatprep.subr.mxu0 0.0
        %2303 = vmatpush1.msra.mxu0 0.0
        %2304 = vmatprep.subr.mxu0 0.0
        %2305 = vmatpush1.msra.mxu0 0.0
        %2306 = vmatprep.subr.mxu0 0.0
        %2307 = vmatpush1.msra.mxu0 0.0
        %2308 = vmatprep.subr.mxu0 0.0
        %2309 = vmatpush1.msra.mxu0 0.0
        %2310 = vmatprep.subr.mxu0 0.0
        %2311 = vmatpush1.msra.mxu0 0.0
        %2312 = vmatprep.subr.mxu0 0.0
        %2313 = vmatpush1.msra.mxu0 0.0
        %2314 = vmatprep.mubr.f32.mxu0 0.0
        %2315 = vmatmul.mubr.f32.gmra.mrb[0].mxu0 %v2224
        %v2316 = vpop.f32.mrb[0].mxu0
        %v2317 = vadd.f32 0.0, %v2316
        %v2318 = vpop.f32.mrb[0].mxu0
        %v2319 = vadd.f32 0.0, %v2318
        %2320 = vdwg.mxu0
        %2321 = vmatprep.subr.mxu0 %v2236
        %2322 = vmatpush1.msra.mxu0 %v2233
        %2323 = vmatprep.subr.mxu0 0.0
        %2324 = vmatpush1.msra.mxu0 0.0
        %2325 = vmatprep.subr.mxu0 0.0
        %2326 = vmatpush1.msra.mxu0 0.0
        %2327 = vmatprep.subr.mxu0 0.0
        %2328 = vmatpush1.msra.mxu0 0.0
        %2329 = vmatprep.subr.mxu0 0.0
        %2330 = vmatpush1.msra.mxu0 0.0
        %2331 = vmatprep.subr.mxu0 0.0
        %2332 = vmatpush1.msra.mxu0 0.0
        %2333 = vmatprep.subr.mxu0 0.0
        %2334 = vmatpush1.msra.mxu0 0.0
        %2335 = vmatprep.subr.mxu0 0.0
        %2336 = vmatpush1.msra.mxu0 0.0
        %2337 = vmatprep.subr.mxu0 0.0
        %2338 = vmatpush1.msra.mxu0 0.0
        %2339 = vmatprep.subr.mxu0 0.0
        %2340 = vmatpush1.msra.mxu0 0.0
        %2341 = vmatprep.subr.mxu0 0.0
        %2342 = vmatpush1.msra.mxu0 0.0
        %2343 = vmatprep.subr.mxu0 0.0
        %2344 = vmatpush1.msra.mxu0 0.0
        %2345 = vmatprep.subr.mxu0 0.0
        %2346 = vmatpush1.msra.mxu0 0.0
        %2347 = vmatprep.subr.mxu0 0.0
        %2348 = vmatpush1.msra.mxu0 0.0
        %2349 = vmatprep.subr.mxu0 0.0
        %2350 = vmatpush1.msra.mxu0 0.0
        %2351 = vmatprep.subr.mxu0 0.0
        %2352 = vmatpush1.msra.mxu0 0.0
        %2353 = vmatprep.subr.mxu0 0.0
        %2354 = vmatpush1.msra.mxu0 0.0
        %2355 = vmatprep.subr.mxu0 0.0
        %2356 = vmatpush1.msra.mxu0 0.0
        %2357 = vmatprep.subr.mxu0 0.0
        %2358 = vmatpush1.msra.mxu0 0.0
        %2359 = vmatprep.subr.mxu0 0.0
        %2360 = vmatpush1.msra.mxu0 0.0
        %2361 = vmatprep.subr.mxu0 0.0
        %2362 = vmatpush1.msra.mxu0 0.0
        %2363 = vmatprep.subr.mxu0 0.0
        %2364 = vmatpush1.msra.mxu0 0.0
        %2365 = vmatprep.subr.mxu0 0.0
        %2366 = vmatpush1.msra.mxu0 0.0
        %2367 = vmatprep.subr.mxu0 0.0
        %2368 = vmatpush1.msra.mxu0 0.0
        %2369 = vmatprep.subr.mxu0 0.0
        %2370 = vmatpush1.msra.mxu0 0.0
        %2371 = vmatprep.subr.mxu0 0.0
        %2372 = vmatpush1.msra.mxu0 0.0
        %2373 = vmatprep.subr.mxu0 0.0
        %2374 = vmatpush1.msra.mxu0 0.0
        %2375 = vmatprep.subr.mxu0 0.0
        %2376 = vmatpush1.msra.mxu0 0.0
        %2377 = vmatprep.subr.mxu0 0.0
        %2378 = vmatpush1.msra.mxu0 0.0
        %2379 = vmatprep.subr.mxu0 0.0
        %2380 = vmatpush1.msra.mxu0 0.0
        %2381 = vmatprep.subr.mxu0 0.0
        %2382 = vmatpush1.msra.mxu0 0.0
        %2383 = vmatprep.subr.mxu0 0.0
        %2384 = vmatpush1.msra.mxu0 0.0
        %2385 = vmatprep.mubr.f32.mxu0 0.0
        %2386 = vmatmul.mubr.f32.gmra.mrb[0].mxu0 %v2224
        %v2387 = vpop.f32.mrb[0].mxu0
        %v2388 = vadd.f32 0.0, %v2387
        %v2389 = vpop.f32.mrb[0].mxu0
        %v2390 = vadd.f32 0.0, %v2389
        %2391 = vdwg.mxu0
        %2392 = vmatprep.subr.mxu0 %v2242
        %2393 = vmatpush1.msra.mxu0 %v2239
        %2394 = vmatprep.subr.mxu0 0.0
        %2395 = vmatpush1.msra.mxu0 0.0
        %2396 = vmatprep.subr.mxu0 0.0
        %2397 = vmatpush1.msra.mxu0 0.0
        %2398 = vmatprep.subr.mxu0 0.0
        %2399 = vmatpush1.msra.mxu0 0.0
        %2400 = vmatprep.subr.mxu0 0.0
        %2401 = vmatpush1.msra.mxu0 0.0
        %2402 = vmatprep.subr.mxu0 0.0
        %2403 = vmatpush1.msra.mxu0 0.0
        %2404 = vmatprep.subr.mxu0 0.0
        %2405 = vmatpush1.msra.mxu0 0.0
        %2406 = vmatprep.subr.mxu0 0.0
        %2407 = vmatpush1.msra.mxu0 0.0
        %2408 = vmatprep.subr.mxu0 0.0
        %2409 = vmatpush1.msra.mxu0 0.0
        %2410 = vmatprep.subr.mxu0 0.0
        %2411 = vmatpush1.msra.mxu0 0.0
        %2412 = vmatprep.subr.mxu0 0.0
        %2413 = vmatpush1.msra.mxu0 0.0
        %2414 = vmatprep.subr.mxu0 0.0
        %2415 = vmatpush1.msra.mxu0 0.0
        %2416 = vmatprep.subr.mxu0 0.0
        %2417 = vmatpush1.msra.mxu0 0.0
        %2418 = vmatprep.subr.mxu0 0.0
        %2419 = vmatpush1.msra.mxu0 0.0
        %2420 = vmatprep.subr.mxu0 0.0
        %2421 = vmatpush1.msra.mxu0 0.0
        %2422 = vmatprep.subr.mxu0 0.0
        %2423 = vmatpush1.msra.mxu0 0.0
        %2424 = vmatprep.subr.mxu0 0.0
        %2425 = vmatpush1.msra.mxu0 0.0
        %2426 = vmatprep.subr.mxu0 0.0
        %2427 = vmatpush1.msra.mxu0 0.0
        %2428 = vmatprep.subr.mxu0 0.0
        %2429 = vmatpush1.msra.mxu0 0.0
        %2430 = vmatprep.subr.mxu0 0.0
        %2431 = vmatpush1.msra.mxu0 0.0
        %2432 = vmatprep.subr.mxu0 0.0
        %2433 = vmatpush1.msra.mxu0 0.0
        %2434 = vmatprep.subr.mxu0 0.0
        %2435 = vmatpush1.msra.mxu0 0.0
        %2436 = vmatprep.subr.mxu0 0.0
        %2437 = vmatpush1.msra.mxu0 0.0
        %2438 = vmatprep.subr.mxu0 0.0
        %2439 = vmatpush1.msra.mxu0 0.0
        %2440 = vmatprep.subr.mxu0 0.0
        %2441 = vmatpush1.msra.mxu0 0.0
        %2442 = vmatprep.subr.mxu0 0.0
        %2443 = vmatpush1.msra.mxu0 0.0
        %2444 = vmatprep.subr.mxu0 0.0
        %2445 = vmatpush1.msra.mxu0 0.0
        %2446 = vmatprep.subr.mxu0 0.0
        %2447 = vmatpush1.msra.mxu0 0.0
        %2448 = vmatprep.subr.mxu0 0.0
        %2449 = vmatpush1.msra.mxu0 0.0
        %2450 = vmatprep.subr.mxu0 0.0
        %2451 = vmatpush1.msra.mxu0 0.0
        %2452 = vmatprep.subr.mxu0 0.0
        %2453 = vmatpush1.msra.mxu0 0.0
        %2454 = vmatprep.subr.mxu0 0.0
        %2455 = vmatpush1.msra.mxu0 0.0
        %2456 = vmatprep.mubr.f32.mxu0 0.0
        %2457 = vmatmul.mubr.f32.gmra.mrb[0].mxu0 %v2224
        %v2458 = vpop.f32.mrb[0].mxu0
        %v2459 = vadd.f32 0.0, %v2458
        %v2460 = vpop.f32.mrb[0].mxu0
        %v2461 = vadd.f32 0.0, %v2460
        %2462 = vdwg.mxu0
        %2463 = vmatprep.subr.mxu0 %v2248
        %2464 = vmatpush1.msra.mxu0 %v2245
        %2465 = vmatprep.subr.mxu0 0.0
        %2466 = vmatpush1.msra.mxu0 0.0
        %2467 = vmatprep.subr.mxu0 0.0
        %2468 = vmatpush1.msra.mxu0 0.0
        %2469 = vmatprep.subr.mxu0 0.0
        %2470 = vmatpush1.msra.mxu0 0.0
        %2471 = vmatprep.subr.mxu0 0.0
        %2472 = vmatpush1.msra.mxu0 0.0
        %2473 = vmatprep.subr.mxu0 0.0
        %2474 = vmatpush1.msra.mxu0 0.0
        %2475 = vmatprep.subr.mxu0 0.0
        %2476 = vmatpush1.msra.mxu0 0.0
        %2477 = vmatprep.subr.mxu0 0.0
        %2478 = vmatpush1.msra.mxu0 0.0
        %2479 = vmatprep.subr.mxu0 0.0
        %2480 = vmatpush1.msra.mxu0 0.0
        %2481 = vmatprep.subr.mxu0 0.0
        %2482 = vmatpush1.msra.mxu0 0.0
        %2483 = vmatprep.subr.mxu0 0.0
        %2484 = vmatpush1.msra.mxu0 0.0
        %2485 = vmatprep.subr.mxu0 0.0
        %2486 = vmatpush1.msra.mxu0 0.0
        %2487 = vmatprep.subr.mxu0 0.0
        %2488 = vmatpush1.msra.mxu0 0.0
        %2489 = vmatprep.subr.mxu0 0.0
        %2490 = vmatpush1.msra.mxu0 0.0
        %2491 = vmatprep.subr.mxu0 0.0
        %2492 = vmatpush1.msra.mxu0 0.0
        %2493 = vmatprep.subr.mxu0 0.0
        %2494 = vmatpush1.msra.mxu0 0.0
        %2495 = vmatprep.subr.mxu0 0.0
        %2496 = vmatpush1.msra.mxu0 0.0
        %2497 = vmatprep.subr.mxu0 0.0
        %2498 = vmatpush1.msra.mxu0 0.0
        %2499 = vmatprep.subr.mxu0 0.0
        %2500 = vmatpush1.msra.mxu0 0.0
        %2501 = vmatprep.subr.mxu0 0.0
        %2502 = vmatpush1.msra.mxu0 0.0
        %2503 = vmatprep.subr.mxu0 0.0
        %2504 = vmatpush1.msra.mxu0 0.0
        %2505 = vmatprep.subr.mxu0 0.0
        %2506 = vmatpush1.msra.mxu0 0.0
        %2507 = vmatprep.subr.mxu0 0.0
        %2508 = vmatpush1.msra.mxu0 0.0
        %2509 = vmatprep.subr.mxu0 0.0
        %2510 = vmatpush1.msra.mxu0 0.0
        %2511 = vmatprep.subr.mxu0 0.0
        %2512 = vmatpush1.msra.mxu0 0.0
        %2513 = vmatprep.subr.mxu0 0.0
        %2514 = vmatpush1.msra.mxu0 0.0
        %2515 = vmatprep.subr.mxu0 0.0
        %2516 = vmatpush1.msra.mxu0 0.0
        %2517 = vmatprep.subr.mxu0 0.0
        %2518 = vmatpush1.msra.mxu0 0.0
        %2519 = vmatprep.subr.mxu0 0.0
        %2520 = vmatpush1.msra.mxu0 0.0
        %2521 = vmatprep.subr.mxu0 0.0
        %2522 = vmatpush1.msra.mxu0 0.0
        %2523 = vmatprep.subr.mxu0 0.0
        %2524 = vmatpush1.msra.mxu0 0.0
        %2525 = vmatprep.subr.mxu0 0.0
        %2526 = vmatpush1.msra.mxu0 0.0
        %2527 = vmatprep.mubr.f32.mxu0 0.0
        %2528 = vmatmul.mubr.f32.gmra.mrb[0].mxu0 %v2224
        %v2529 = vpop.f32.mrb[0].mxu0
        %v2530 = vadd.f32 0.0, %v2529
        %v2531 = vpop.f32.mrb[0].mxu0
        %v2532 = vadd.f32 0.0, %v2531
        %2533 = vdwg.mxu0
        %v2534 = vadd.f32 %v2137, %v2317
        %v2535 = vadd.f32 %v2138, %v2319
        %v2536 = vadd.f32 %v2139, %v2388
        %v2537 = vadd.f32 %v2140, %v2390
        %v2538 = vadd.f32 %v2141, %v2459
        %v2539 = vadd.f32 %v2142, %v2461
        %v2540 = vadd.f32 %v2143, %v2530
        %v2541 = vadd.f32 %v2144, %v2532
        %2542 = vrot.lane.b32.xlu0 %v253, 97
        %v2543 = vpop.permute.xlu0 %2542
        %2544 = vrot.lane.b32.xlu0 %v261, 97
        %v2545 = vpop.permute.xlu0 %2544
        %2546 = vrot.lane.b32.xlu0 %v254, 97
        %v2547 = vpop.permute.xlu0 %2546
        %2548 = vrot.lane.b32.xlu0 %v262, 97
        %v2549 = vpop.permute.xlu0 %2548
        %2550 = vrot.lane.b32.xlu0 %v255, 97
        %v2551 = vpop.permute.xlu0 %2550
        %2552 = vrot.lane.b32.xlu0 %v263, 97
        %v2553 = vpop.permute.xlu0 %2552
        %2554 = vrot.lane.b32.xlu0 %v256, 97
        %v2555 = vpop.permute.xlu0 %2554
        %2556 = vrot.lane.b32.xlu0 %v264, 97
        %v2557 = vpop.permute.xlu0 %2556
        %vm2558 = vcmp.lt.s32.totalorder %v286, 97
        %v2559 = vsel %vm2558, %v2555, %v2557
        %v2560 = vsel %vm2558, %v2553, %v2555
        %v2561 = vsel %vm2558, %v2551, %v2553
        %v2562 = vsel %vm2558, %v2549, %v2551
        %v2563 = vsel %vm2558, %v2547, %v2549
        %v2564 = vsel %vm2558, %v2545, %v2547
        %v2565 = vsel %vm2558, %v2543, %v2545
        %v2566 = vsel %vm2558, %v2557, %v2543
        %v2567 = vld [vmem:[%s1] sm:$0x88]
        %v2568 = vld [vmem:[%s1 + $0x8] sm:$0x88]
        %v2569 = vld [vmem:[%s1 + $0x10] sm:$0x88]
        %v2570 = vld [vmem:[%s1 + $0x18] sm:$0x88]
        %v2571 = vunpack.c.l.bf16 %v2567
        %v2572 = vunpack.c.h.bf16 %v2567
        %v2573 = vunpack.c.l.bf16 %v2568
        %v2574 = vunpack.c.h.bf16 %v2568
        %v2575 = vunpack.c.l.bf16 %v2569
        %v2576 = vunpack.c.h.bf16 %v2569
        %v2577 = vunpack.c.l.bf16 %v2570
        %v2578 = vunpack.c.h.bf16 %v2570
        %v2579 = vlaneseq
        %v2580 = vshrl.u32 %v2579, 7
        %v2581 = vsub.s32 6, %v2580
        %v2582 = vrot.slane %v2571, %v2581
        %v2583 = vlaneseq
        %v2584 = vshrl.u32 %v2583, 7
        %v2585 = vsub.s32 6, %v2584
        %v2586 = vrot.slane %v2572, %v2585
        %v2587 = vlaneseq
        %v2588 = vshrl.u32 %v2587, 7
        %v2589 = vsub.s32 6, %v2588
        %v2590 = vrot.slane %v2573, %v2589
        %v2591 = vlaneseq
        %v2592 = vshrl.u32 %v2591, 7
        %v2593 = vsub.s32 6, %v2592
        %v2594 = vrot.slane %v2574, %v2593
        %v2595 = vlaneseq
        %v2596 = vshrl.u32 %v2595, 7
        %v2597 = vsub.s32 6, %v2596
        %v2598 = vrot.slane %v2575, %v2597
        %v2599 = vlaneseq
        %v2600 = vshrl.u32 %v2599, 7
        %v2601 = vsub.s32 6, %v2600
        %v2602 = vrot.slane %v2576, %v2601
        %v2603 = vlaneseq
        %v2604 = vshrl.u32 %v2603, 7
        %v2605 = vsub.s32 6, %v2604
        %v2606 = vrot.slane %v2577, %v2605
        %v2607 = vlaneseq
        %v2608 = vshrl.u32 %v2607, 7
        %v2609 = vsub.s32 6, %v2608
        %v2610 = vrot.slane %v2578, %v2609
        %v2611 = vmul.f32 %v2565, %v2582
        %v2612 = vmul.f32 %v2564, %v2586
        %v2613 = vmul.f32 %v2563, %v2590
        %v2614 = vmul.f32 %v2562, %v2594
        %v2615 = vmul.f32 %v2561, %v2598
        %v2616 = vmul.f32 %v2560, %v2602
        %v2617 = vmul.f32 %v2559, %v2606
        %v2618 = vmul.f32 %v2566, %v2610
        %v2619 = vld [vmem:[%s2 + $0x30] sm:$0xff]
        %v2621 = vsel %vm415, %v2619, 0
        %v2624 = vsel %vm419, %v2611, 0
        %v2627 = vsel %vm419, %v2612, 0
        %v2630 = vsel %vm419, %v2613, 0
        %v2633 = vsel %vm419, %v2614, 0
        %v2636 = vsel %vm419, %v2615, 0
        %v2639 = vsel %vm419, %v2616, 0
        %v2642 = vsel %vm419, %v2617, 0
        %v2645 = vsel %vm419, %v2618, 0
        %2647 = vmatprep.subr.mxu0 %v2627
        %2648 = vmatpush1.msra.mxu0 %v2624
        %2649 = vmatprep.subr.mxu0 0.0
        %2650 = vmatpush1.msra.mxu0 0.0
        %2651 = vmatprep.subr.mxu0 0.0
        %2652 = vmatpush1.msra.mxu0 0.0
        %2653 = vmatprep.subr.mxu0 0.0
        %2654 = vmatpush1.msra.mxu0 0.0
        %2655 = vmatprep.subr.mxu0 0.0
        %2656 = vmatpush1.msra.mxu0 0.0
        %2657 = vmatprep.subr.mxu0 0.0
        %2658 = vmatpush1.msra.mxu0 0.0
        %2659 = vmatprep.subr.mxu0 0.0
        %2660 = vmatpush1.msra.mxu0 0.0
        %2661 = vmatprep.subr.mxu0 0.0
        %2662 = vmatpush1.msra.mxu0 0.0
        %2663 = vmatprep.subr.mxu0 0.0
        %2664 = vmatpush1.msra.mxu0 0.0
        %2665 = vmatprep.subr.mxu0 0.0
        %2666 = vmatpush1.msra.mxu0 0.0
        %2667 = vmatprep.subr.mxu0 0.0
        %2668 = vmatpush1.msra.mxu0 0.0
        %2669 = vmatprep.subr.mxu0 0.0
        %2670 = vmatpush1.msra.mxu0 0.0
        %2671 = vmatprep.subr.mxu0 0.0
        %2672 = vmatpush1.msra.mxu0 0.0
        %2673 = vmatprep.subr.mxu0 0.0
        %2674 = vmatpush1.msra.mxu0 0.0
        %2675 = vmatprep.subr.mxu0 0.0
        %2676 = vmatpush1.msra.mxu0 0.0
        %2677 = vmatprep.subr.mxu0 0.0
        %2678 = vmatpush1.msra.mxu0 0.0
        %2679 = vmatprep.subr.mxu0 0.0
        %2680 = vmatpush1.msra.mxu0 0.0
        %2681 = vmatprep.subr.mxu0 0.0
        %2682 = vmatpush1.msra.mxu0 0.0
        %2683 = vmatprep.subr.mxu0 0.0
        %2684 = vmatpush1.msra.mxu0 0.0
        %2685 = vmatprep.subr.mxu0 0.0
        %2686 = vmatpush1.msra.mxu0 0.0
        %2687 = vmatprep.subr.mxu0 0.0
        %2688 = vmatpush1.msra.mxu0 0.0
        %2689 = vmatprep.subr.mxu0 0.0
        %2690 = vmatpush1.msra.mxu0 0.0
        %2691 = vmatprep.subr.mxu0 0.0
        %2692 = vmatpush1.msra.mxu0 0.0
        %2693 = vmatprep.subr.mxu0 0.0
        %2694 = vmatpush1.msra.mxu0 0.0
        %2695 = vmatprep.subr.mxu0 0.0
        %2696 = vmatpush1.msra.mxu0 0.0
        %2697 = vmatprep.subr.mxu0 0.0
        %2698 = vmatpush1.msra.mxu0 0.0
        %2699 = vmatprep.subr.mxu0 0.0
        %2700 = vmatpush1.msra.mxu0 0.0
        %2701 = vmatprep.subr.mxu0 0.0
        %2702 = vmatpush1.msra.mxu0 0.0
        %2703 = vmatprep.subr.mxu0 0.0
        %2704 = vmatpush1.msra.mxu0 0.0
        %2705 = vmatprep.subr.mxu0 0.0
        %2706 = vmatpush1.msra.mxu0 0.0
        %2707 = vmatprep.subr.mxu0 0.0
        %2708 = vmatpush1.msra.mxu0 0.0
        %2709 = vmatprep.subr.mxu0 0.0
        %2710 = vmatpush1.msra.mxu0 0.0
        %2711 = vmatprep.mubr.f32.mxu0 0.0
        %2712 = vmatmul.mubr.f32.gmra.mrb[0].mxu0 %v2621
        %v2713 = vpop.f32.mrb[0].mxu0
        %v2714 = vadd.f32 0.0, %v2713
        %v2715 = vpop.f32.mrb[0].mxu0
        %v2716 = vadd.f32 0.0, %v2715
        %2717 = vdwg.mxu0
        %2718 = vmatprep.subr.mxu0 %v2633
        %2719 = vmatpush1.msra.mxu0 %v2630
        %2720 = vmatprep.subr.mxu0 0.0
        %2721 = vmatpush1.msra.mxu0 0.0
        %2722 = vmatprep.subr.mxu0 0.0
        %2723 = vmatpush1.msra.mxu0 0.0
        %2724 = vmatprep.subr.mxu0 0.0
        %2725 = vmatpush1.msra.mxu0 0.0
        %2726 = vmatprep.subr.mxu0 0.0
        %2727 = vmatpush1.msra.mxu0 0.0
        %2728 = vmatprep.subr.mxu0 0.0
        %2729 = vmatpush1.msra.mxu0 0.0
        %2730 = vmatprep.subr.mxu0 0.0
        %2731 = vmatpush1.msra.mxu0 0.0
        %2732 = vmatprep.subr.mxu0 0.0
        %2733 = vmatpush1.msra.mxu0 0.0
        %2734 = vmatprep.subr.mxu0 0.0
        %2735 = vmatpush1.msra.mxu0 0.0
        %2736 = vmatprep.subr.mxu0 0.0
        %2737 = vmatpush1.msra.mxu0 0.0
        %2738 = vmatprep.subr.mxu0 0.0
        %2739 = vmatpush1.msra.mxu0 0.0
        %2740 = vmatprep.subr.mxu0 0.0
        %2741 = vmatpush1.msra.mxu0 0.0
        %2742 = vmatprep.subr.mxu0 0.0
        %2743 = vmatpush1.msra.mxu0 0.0
        %2744 = vmatprep.subr.mxu0 0.0
        %2745 = vmatpush1.msra.mxu0 0.0
        %2746 = vmatprep.subr.mxu0 0.0
        %2747 = vmatpush1.msra.mxu0 0.0
        %2748 = vmatprep.subr.mxu0 0.0
        %2749 = vmatpush1.msra.mxu0 0.0
        %2750 = vmatprep.subr.mxu0 0.0
        %2751 = vmatpush1.msra.mxu0 0.0
        %2752 = vmatprep.subr.mxu0 0.0
        %2753 = vmatpush1.msra.mxu0 0.0
        %2754 = vmatprep.subr.mxu0 0.0
        %2755 = vmatpush1.msra.mxu0 0.0
        %2756 = vmatprep.subr.mxu0 0.0
        %2757 = vmatpush1.msra.mxu0 0.0
        %2758 = vmatprep.subr.mxu0 0.0
        %2759 = vmatpush1.msra.mxu0 0.0
        %2760 = vmatprep.subr.mxu0 0.0
        %2761 = vmatpush1.msra.mxu0 0.0
        %2762 = vmatprep.subr.mxu0 0.0
        %2763 = vmatpush1.msra.mxu0 0.0
        %2764 = vmatprep.subr.mxu0 0.0
        %2765 = vmatpush1.msra.mxu0 0.0
        %2766 = vmatprep.subr.mxu0 0.0
        %2767 = vmatpush1.msra.mxu0 0.0
        %2768 = vmatprep.subr.mxu0 0.0
        %2769 = vmatpush1.msra.mxu0 0.0
        %2770 = vmatprep.subr.mxu0 0.0
        %2771 = vmatpush1.msra.mxu0 0.0
        %2772 = vmatprep.subr.mxu0 0.0
        %2773 = vmatpush1.msra.mxu0 0.0
        %2774 = vmatprep.subr.mxu0 0.0
        %2775 = vmatpush1.msra.mxu0 0.0
        %2776 = vmatprep.subr.mxu0 0.0
        %2777 = vmatpush1.msra.mxu0 0.0
        %2778 = vmatprep.subr.mxu0 0.0
        %2779 = vmatpush1.msra.mxu0 0.0
        %2780 = vmatprep.subr.mxu0 0.0
        %2781 = vmatpush1.msra.mxu0 0.0
        %2782 = vmatprep.mubr.f32.mxu0 0.0
        %2783 = vmatmul.mubr.f32.gmra.mrb[0].mxu0 %v2621
        %v2784 = vpop.f32.mrb[0].mxu0
        %v2785 = vadd.f32 0.0, %v2784
        %v2786 = vpop.f32.mrb[0].mxu0
        %v2787 = vadd.f32 0.0, %v2786
        %2788 = vdwg.mxu0
        %2789 = vmatprep.subr.mxu0 %v2639
        %2790 = vmatpush1.msra.mxu0 %v2636
        %2791 = vmatprep.subr.mxu0 0.0
        %2792 = vmatpush1.msra.mxu0 0.0
        %2793 = vmatprep.subr.mxu0 0.0
        %2794 = vmatpush1.msra.mxu0 0.0
        %2795 = vmatprep.subr.mxu0 0.0
        %2796 = vmatpush1.msra.mxu0 0.0
        %2797 = vmatprep.subr.mxu0 0.0
        %2798 = vmatpush1.msra.mxu0 0.0
        %2799 = vmatprep.subr.mxu0 0.0
        %2800 = vmatpush1.msra.mxu0 0.0
        %2801 = vmatprep.subr.mxu0 0.0
        %2802 = vmatpush1.msra.mxu0 0.0
        %2803 = vmatprep.subr.mxu0 0.0
        %2804 = vmatpush1.msra.mxu0 0.0
        %2805 = vmatprep.subr.mxu0 0.0
        %2806 = vmatpush1.msra.mxu0 0.0
        %2807 = vmatprep.subr.mxu0 0.0
        %2808 = vmatpush1.msra.mxu0 0.0
        %2809 = vmatprep.subr.mxu0 0.0
        %2810 = vmatpush1.msra.mxu0 0.0
        %2811 = vmatprep.subr.mxu0 0.0
        %2812 = vmatpush1.msra.mxu0 0.0
        %2813 = vmatprep.subr.mxu0 0.0
        %2814 = vmatpush1.msra.mxu0 0.0
        %2815 = vmatprep.subr.mxu0 0.0
        %2816 = vmatpush1.msra.mxu0 0.0
        %2817 = vmatprep.subr.mxu0 0.0
        %2818 = vmatpush1.msra.mxu0 0.0
        %2819 = vmatprep.subr.mxu0 0.0
        %2820 = vmatpush1.msra.mxu0 0.0
        %2821 = vmatprep.subr.mxu0 0.0
        %2822 = vmatpush1.msra.mxu0 0.0
        %2823 = vmatprep.subr.mxu0 0.0
        %2824 = vmatpush1.msra.mxu0 0.0
        %2825 = vmatprep.subr.mxu0 0.0
        %2826 = vmatpush1.msra.mxu0 0.0
        %2827 = vmatprep.subr.mxu0 0.0
        %2828 = vmatpush1.msra.mxu0 0.0
        %2829 = vmatprep.subr.mxu0 0.0
        %2830 = vmatpush1.msra.mxu0 0.0
        %2831 = vmatprep.subr.mxu0 0.0
        %2832 = vmatpush1.msra.mxu0 0.0
        %2833 = vmatprep.subr.mxu0 0.0
        %2834 = vmatpush1.msra.mxu0 0.0
        %2835 = vmatprep.subr.mxu0 0.0
        %2836 = vmatpush1.msra.mxu0 0.0
        %2837 = vmatprep.subr.mxu0 0.0
        %2838 = vmatpush1.msra.mxu0 0.0
        %2839 = vmatprep.subr.mxu0 0.0
        %2840 = vmatpush1.msra.mxu0 0.0
        %2841 = vmatprep.subr.mxu0 0.0
        %2842 = vmatpush1.msra.mxu0 0.0
        %2843 = vmatprep.subr.mxu0 0.0
        %2844 = vmatpush1.msra.mxu0 0.0
        %2845 = vmatprep.subr.mxu0 0.0
        %2846 = vmatpush1.msra.mxu0 0.0
        %2847 = vmatprep.subr.mxu0 0.0
        %2848 = vmatpush1.msra.mxu0 0.0
        %2849 = vmatprep.subr.mxu0 0.0
        %2850 = vmatpush1.msra.mxu0 0.0
        %2851 = vmatprep.subr.mxu0 0.0
        %2852 = vmatpush1.msra.mxu0 0.0
        %2853 = vmatprep.mubr.f32.mxu0 0.0
        %2854 = vmatmul.mubr.f32.gmra.mrb[0].mxu0 %v2621
        %v2855 = vpop.f32.mrb[0].mxu0
        %v2856 = vadd.f32 0.0, %v2855
        %v2857 = vpop.f32.mrb[0].mxu0
        %v2858 = vadd.f32 0.0, %v2857
        %2859 = vdwg.mxu0
        %2860 = vmatprep.subr.mxu0 %v2645
        %2861 = vmatpush1.msra.mxu0 %v2642
        %2862 = vmatprep.subr.mxu0 0.0
        %2863 = vmatpush1.msra.mxu0 0.0
        %2864 = vmatprep.subr.mxu0 0.0
        %2865 = vmatpush1.msra.mxu0 0.0
        %2866 = vmatprep.subr.mxu0 0.0
        %2867 = vmatpush1.msra.mxu0 0.0
        %2868 = vmatprep.subr.mxu0 0.0
        %2869 = vmatpush1.msra.mxu0 0.0
        %2870 = vmatprep.subr.mxu0 0.0
        %2871 = vmatpush1.msra.mxu0 0.0
        %2872 = vmatprep.subr.mxu0 0.0
        %2873 = vmatpush1.msra.mxu0 0.0
        %2874 = vmatprep.subr.mxu0 0.0
        %2875 = vmatpush1.msra.mxu0 0.0
        %2876 = vmatprep.subr.mxu0 0.0
        %2877 = vmatpush1.msra.mxu0 0.0
        %2878 = vmatprep.subr.mxu0 0.0
        %2879 = vmatpush1.msra.mxu0 0.0
        %2880 = vmatprep.subr.mxu0 0.0
        %2881 = vmatpush1.msra.mxu0 0.0
        %2882 = vmatprep.subr.mxu0 0.0
        %2883 = vmatpush1.msra.mxu0 0.0
        %2884 = vmatprep.subr.mxu0 0.0
        %2885 = vmatpush1.msra.mxu0 0.0
        %2886 = vmatprep.subr.mxu0 0.0
        %2887 = vmatpush1.msra.mxu0 0.0
        %2888 = vmatprep.subr.mxu0 0.0
        %2889 = vmatpush1.msra.mxu0 0.0
        %2890 = vmatprep.subr.mxu0 0.0
        %2891 = vmatpush1.msra.mxu0 0.0
        %2892 = vmatprep.subr.mxu0 0.0
        %2893 = vmatpush1.msra.mxu0 0.0
        %2894 = vmatprep.subr.mxu0 0.0
        %2895 = vmatpush1.msra.mxu0 0.0
        %2896 = vmatprep.subr.mxu0 0.0
        %2897 = vmatpush1.msra.mxu0 0.0
        %2898 = vmatprep.subr.mxu0 0.0
        %2899 = vmatpush1.msra.mxu0 0.0
        %2900 = vmatprep.subr.mxu0 0.0
        %2901 = vmatpush1.msra.mxu0 0.0
        %2902 = vmatprep.subr.mxu0 0.0
        %2903 = vmatpush1.msra.mxu0 0.0
        %2904 = vmatprep.subr.mxu0 0.0
        %2905 = vmatpush1.msra.mxu0 0.0
        %2906 = vmatprep.subr.mxu0 0.0
        %2907 = vmatpush1.msra.mxu0 0.0
        %2908 = vmatprep.subr.mxu0 0.0
        %2909 = vmatpush1.msra.mxu0 0.0
        %2910 = vmatprep.subr.mxu0 0.0
        %2911 = vmatpush1.msra.mxu0 0.0
        %2912 = vmatprep.subr.mxu0 0.0
        %2913 = vmatpush1.msra.mxu0 0.0
        %2914 = vmatprep.subr.mxu0 0.0
        %2915 = vmatpush1.msra.mxu0 0.0
        %2916 = vmatprep.subr.mxu0 0.0
        %2917 = vmatpush1.msra.mxu0 0.0
        %2918 = vmatprep.subr.mxu0 0.0
        %2919 = vmatpush1.msra.mxu0 0.0
        %2920 = vmatprep.subr.mxu0 0.0
        %2921 = vmatpush1.msra.mxu0 0.0
        %2922 = vmatprep.subr.mxu0 0.0
        %2923 = vmatpush1.msra.mxu0 0.0
        %2924 = vmatprep.mubr.f32.mxu0 0.0
        %2925 = vmatmul.mubr.f32.gmra.mrb[0].mxu0 %v2621
        %v2926 = vpop.f32.mrb[0].mxu0
        %v2927 = vadd.f32 0.0, %v2926
        %v2928 = vpop.f32.mrb[0].mxu0
        %v2929 = vadd.f32 0.0, %v2928
        %2930 = vdwg.mxu0
        %v2931 = vadd.f32 %v2534, %v2714
        %v2932 = vadd.f32 %v2535, %v2716
        %v2933 = vadd.f32 %v2536, %v2785
        %v2934 = vadd.f32 %v2537, %v2787
        %v2935 = vadd.f32 %v2538, %v2856
        %v2936 = vadd.f32 %v2539, %v2858
        %v2937 = vadd.f32 %v2540, %v2927
        %v2938 = vadd.f32 %v2541, %v2929
        %2939 = vrot.lane.b32.xlu0 %v253, 96
        %v2940 = vpop.permute.xlu0 %2939
        %2941 = vrot.lane.b32.xlu0 %v261, 96
        %v2942 = vpop.permute.xlu0 %2941
        %2943 = vrot.lane.b32.xlu0 %v254, 96
        %v2944 = vpop.permute.xlu0 %2943
        %2945 = vrot.lane.b32.xlu0 %v262, 96
        %v2946 = vpop.permute.xlu0 %2945
        %2947 = vrot.lane.b32.xlu0 %v255, 96
        %v2948 = vpop.permute.xlu0 %2947
        %2949 = vrot.lane.b32.xlu0 %v263, 96
        %v2950 = vpop.permute.xlu0 %2949
        %2951 = vrot.lane.b32.xlu0 %v256, 96
        %v2952 = vpop.permute.xlu0 %2951
        %2953 = vrot.lane.b32.xlu0 %v264, 96
        %v2954 = vpop.permute.xlu0 %2953
        %vm2955 = vcmp.lt.s32.totalorder %v286, 96
        %v2956 = vsel %vm2955, %v2952, %v2954
        %v2957 = vsel %vm2955, %v2950, %v2952
        %v2958 = vsel %vm2955, %v2948, %v2950
        %v2959 = vsel %vm2955, %v2946, %v2948
        %v2960 = vsel %vm2955, %v2944, %v2946
        %v2961 = vsel %vm2955, %v2942, %v2944
        %v2962 = vsel %vm2955, %v2940, %v2942
        %v2963 = vsel %vm2955, %v2954, %v2940
        %v2964 = vld [vmem:[%s1] sm:$0x88]
        %v2965 = vld [vmem:[%s1 + $0x8] sm:$0x88]
        %v2966 = vld [vmem:[%s1 + $0x10] sm:$0x88]
        %v2967 = vld [vmem:[%s1 + $0x18] sm:$0x88]
        %v2968 = vunpack.c.l.bf16 %v2964
        %v2969 = vunpack.c.h.bf16 %v2964
        %v2970 = vunpack.c.l.bf16 %v2965
        %v2971 = vunpack.c.h.bf16 %v2965
        %v2972 = vunpack.c.l.bf16 %v2966
        %v2973 = vunpack.c.h.bf16 %v2966
        %v2974 = vunpack.c.l.bf16 %v2967
        %v2975 = vunpack.c.h.bf16 %v2967
        %v2976 = vlaneseq
        %v2977 = vshrl.u32 %v2976, 7
        %v2978 = vsub.s32 7, %v2977
        %v2979 = vrot.slane %v2968, %v2978
        %v2980 = vlaneseq
        %v2981 = vshrl.u32 %v2980, 7
        %v2982 = vsub.s32 7, %v2981
        %v2983 = vrot.slane %v2969, %v2982
        %v2984 = vlaneseq
        %v2985 = vshrl.u32 %v2984, 7
        %v2986 = vsub.s32 7, %v2985
        %v2987 = vrot.slane %v2970, %v2986
        %v2988 = vlaneseq
        %v2989 = vshrl.u32 %v2988, 7
        %v2990 = vsub.s32 7, %v2989
        %v2991 = vrot.slane %v2971, %v2990
        %v2992 = vlaneseq
        %v2993 = vshrl.u32 %v2992, 7
        %v2994 = vsub.s32 7, %v2993
        %v2995 = vrot.slane %v2972, %v2994
        %v2996 = vlaneseq
        %v2997 = vshrl.u32 %v2996, 7
        %v2998 = vsub.s32 7, %v2997
        %v2999 = vrot.slane %v2973, %v2998
        %v3000 = vlaneseq
        %v3001 = vshrl.u32 %v3000, 7
        %v3002 = vsub.s32 7, %v3001
        %v3003 = vrot.slane %v2974, %v3002
        %v3004 = vlaneseq
        %v3005 = vshrl.u32 %v3004, 7
        %v3006 = vsub.s32 7, %v3005
        %v3007 = vrot.slane %v2975, %v3006
        %v3008 = vmul.f32 %v2962, %v2979
        %v3009 = vmul.f32 %v2961, %v2983
        %v3010 = vmul.f32 %v2960, %v2987
        %v3011 = vmul.f32 %v2959, %v2991
        %v3012 = vmul.f32 %v2958, %v2995
        %v3013 = vmul.f32 %v2957, %v2999
        %v3014 = vmul.f32 %v2956, %v3003
        %v3015 = vmul.f32 %v2963, %v3007
        %v3016 = vld [vmem:[%s2 + $0x38] sm:$0xff]
        %v3018 = vsel %vm415, %v3016, 0
        %v3021 = vsel %vm419, %v3008, 0
        %v3024 = vsel %vm419, %v3009, 0
        %v3027 = vsel %vm419, %v3010, 0
        %v3030 = vsel %vm419, %v3011, 0
        %v3033 = vsel %vm419, %v3012, 0
        %v3036 = vsel %vm419, %v3013, 0
        %v3039 = vsel %vm419, %v3014, 0
        %v3042 = vsel %vm419, %v3015, 0
        %3044 = vmatprep.subr.mxu0 %v3024
        %3045 = vmatpush1.msra.mxu0 %v3021
        %3046 = vmatprep.subr.mxu0 0.0
        %3047 = vmatpush1.msra.mxu0 0.0
        %3048 = vmatprep.subr.mxu0 0.0
        %3049 = vmatpush1.msra.mxu0 0.0
        %3050 = vmatprep.subr.mxu0 0.0
        %3051 = vmatpush1.msra.mxu0 0.0
        %3052 = vmatprep.subr.mxu0 0.0
        %3053 = vmatpush1.msra.mxu0 0.0
        %3054 = vmatprep.subr.mxu0 0.0
        %3055 = vmatpush1.msra.mxu0 0.0
        %3056 = vmatprep.subr.mxu0 0.0
        %3057 = vmatpush1.msra.mxu0 0.0
        %3058 = vmatprep.subr.mxu0 0.0
        %3059 = vmatpush1.msra.mxu0 0.0
        %3060 = vmatprep.subr.mxu0 0.0
        %3061 = vmatpush1.msra.mxu0 0.0
        %3062 = vmatprep.subr.mxu0 0.0
        %3063 = vmatpush1.msra.mxu0 0.0
        %3064 = vmatprep.subr.mxu0 0.0
        %3065 = vmatpush1.msra.mxu0 0.0
        %3066 = vmatprep.subr.mxu0 0.0
        %3067 = vmatpush1.msra.mxu0 0.0
        %3068 = vmatprep.subr.mxu0 0.0
        %3069 = vmatpush1.msra.mxu0 0.0
        %3070 = vmatprep.subr.mxu0 0.0
        %3071 = vmatpush1.msra.mxu0 0.0
        %3072 = vmatprep.subr.mxu0 0.0
        %3073 = vmatpush1.msra.mxu0 0.0
        %3074 = vmatprep.subr.mxu0 0.0
        %3075 = vmatpush1.msra.mxu0 0.0
        %3076 = vmatprep.subr.mxu0 0.0
        %3077 = vmatpush1.msra.mxu0 0.0
        %3078 = vmatprep.subr.mxu0 0.0
        %3079 = vmatpush1.msra.mxu0 0.0
        %3080 = vmatprep.subr.mxu0 0.0
        %3081 = vmatpush1.msra.mxu0 0.0
        %3082 = vmatprep.subr.mxu0 0.0
        %3083 = vmatpush1.msra.mxu0 0.0
        %3084 = vmatprep.subr.mxu0 0.0
        %3085 = vmatpush1.msra.mxu0 0.0
        %3086 = vmatprep.subr.mxu0 0.0
        %3087 = vmatpush1.msra.mxu0 0.0
        %3088 = vmatprep.subr.mxu0 0.0
        %3089 = vmatpush1.msra.mxu0 0.0
        %3090 = vmatprep.subr.mxu0 0.0
        %3091 = vmatpush1.msra.mxu0 0.0
        %3092 = vmatprep.subr.mxu0 0.0
        %3093 = vmatpush1.msra.mxu0 0.0
        %3094 = vmatprep.subr.mxu0 0.0
        %3095 = vmatpush1.msra.mxu0 0.0
        %3096 = vmatprep.subr.mxu0 0.0
        %3097 = vmatpush1.msra.mxu0 0.0
        %3098 = vmatprep.subr.mxu0 0.0
        %3099 = vmatpush1.msra.mxu0 0.0
        %3100 = vmatprep.subr.mxu0 0.0
        %3101 = vmatpush1.msra.mxu0 0.0
        %3102 = vmatprep.subr.mxu0 0.0
        %3103 = vmatpush1.msra.mxu0 0.0
        %3104 = vmatprep.subr.mxu0 0.0
        %3105 = vmatpush1.msra.mxu0 0.0
        %3106 = vmatprep.subr.mxu0 0.0
        %3107 = vmatpush1.msra.mxu0 0.0
        %3108 = vmatprep.mubr.f32.mxu0 0.0
        %3109 = vmatmul.mubr.f32.gmra.mrb[0].mxu0 %v3018
        %v3110 = vpop.f32.mrb[0].mxu0
        %v3111 = vadd.f32 0.0, %v3110
        %v3112 = vpop.f32.mrb[0].mxu0
        %v3113 = vadd.f32 0.0, %v3112
        %3114 = vdwg.mxu0
        %3115 = vmatprep.subr.mxu0 %v3030
        %3116 = vmatpush1.msra.mxu0 %v3027
        %3117 = vmatprep.subr.mxu0 0.0
        %3118 = vmatpush1.msra.mxu0 0.0
        %3119 = vmatprep.subr.mxu0 0.0
        %3120 = vmatpush1.msra.mxu0 0.0
        %3121 = vmatprep.subr.mxu0 0.0
        %3122 = vmatpush1.msra.mxu0 0.0
        %3123 = vmatprep.subr.mxu0 0.0
        %3124 = vmatpush1.msra.mxu0 0.0
        %3125 = vmatprep.subr.mxu0 0.0
        %3126 = vmatpush1.msra.mxu0 0.0
        %3127 = vmatprep.subr.mxu0 0.0
        %3128 = vmatpush1.msra.mxu0 0.0
        %3129 = vmatprep.subr.mxu0 0.0
        %3130 = vmatpush1.msra.mxu0 0.0
        %3131 = vmatprep.subr.mxu0 0.0
        %3132 = vmatpush1.msra.mxu0 0.0
        %3133 = vmatprep.subr.mxu0 0.0
        %3134 = vmatpush1.msra.mxu0 0.0
        %3135 = vmatprep.subr.mxu0 0.0
        %3136 = vmatpush1.msra.mxu0 0.0
        %3137 = vmatprep.subr.mxu0 0.0
        %3138 = vmatpush1.msra.mxu0 0.0
        %3139 = vmatprep.subr.mxu0 0.0
        %3140 = vmatpush1.msra.mxu0 0.0
        %3141 = vmatprep.subr.mxu0 0.0
        %3142 = vmatpush1.msra.mxu0 0.0
        %3143 = vmatprep.subr.mxu0 0.0
        %3144 = vmatpush1.msra.mxu0 0.0
        %3145 = vmatprep.subr.mxu0 0.0
        %3146 = vmatpush1.msra.mxu0 0.0
        %3147 = vmatprep.subr.mxu0 0.0
        %3148 = vmatpush1.msra.mxu0 0.0
        %3149 = vmatprep.subr.mxu0 0.0
        %3150 = vmatpush1.msra.mxu0 0.0
        %3151 = vmatprep.subr.mxu0 0.0
        %3152 = vmatpush1.msra.mxu0 0.0
        %3153 = vmatprep.subr.mxu0 0.0
        %3154 = vmatpush1.msra.mxu0 0.0
        %3155 = vmatprep.subr.mxu0 0.0
        %3156 = vmatpush1.msra.mxu0 0.0
        %3157 = vmatprep.subr.mxu0 0.0
        %3158 = vmatpush1.msra.mxu0 0.0
        %3159 = vmatprep.subr.mxu0 0.0
        %3160 = vmatpush1.msra.mxu0 0.0
        %3161 = vmatprep.subr.mxu0 0.0
        %3162 = vmatpush1.msra.mxu0 0.0
        %3163 = vmatprep.subr.mxu0 0.0
        %3164 = vmatpush1.msra.mxu0 0.0
        %3165 = vmatprep.subr.mxu0 0.0
        %3166 = vmatpush1.msra.mxu0 0.0
        %3167 = vmatprep.subr.mxu0 0.0
        %3168 = vmatpush1.msra.mxu0 0.0
        %3169 = vmatprep.subr.mxu0 0.0
        %3170 = vmatpush1.msra.mxu0 0.0
        %3171 = vmatprep.subr.mxu0 0.0
        %3172 = vmatpush1.msra.mxu0 0.0
        %3173 = vmatprep.subr.mxu0 0.0
        %3174 = vmatpush1.msra.mxu0 0.0
        %3175 = vmatprep.subr.mxu0 0.0
        %3176 = vmatpush1.msra.mxu0 0.0
        %3177 = vmatprep.subr.mxu0 0.0
        %3178 = vmatpush1.msra.mxu0 0.0
        %3179 = vmatprep.mubr.f32.mxu0 0.0
        %3180 = vmatmul.mubr.f32.gmra.mrb[0].mxu0 %v3018
        %v3181 = vpop.f32.mrb[0].mxu0
        %v3182 = vadd.f32 0.0, %v3181
        %v3183 = vpop.f32.mrb[0].mxu0
        %v3184 = vadd.f32 0.0, %v3183
        %3185 = vdwg.mxu0
        %3186 = vmatprep.subr.mxu0 %v3036
        %3187 = vmatpush1.msra.mxu0 %v3033
        %3188 = vmatprep.subr.mxu0 0.0
        %3189 = vmatpush1.msra.mxu0 0.0
        %3190 = vmatprep.subr.mxu0 0.0
        %3191 = vmatpush1.msra.mxu0 0.0
        %3192 = vmatprep.subr.mxu0 0.0
        %3193 = vmatpush1.msra.mxu0 0.0
        %3194 = vmatprep.subr.mxu0 0.0
        %3195 = vmatpush1.msra.mxu0 0.0
        %3196 = vmatprep.subr.mxu0 0.0
        %3197 = vmatpush1.msra.mxu0 0.0
        %3198 = vmatprep.subr.mxu0 0.0
        %3199 = vmatpush1.msra.mxu0 0.0
        %3200 = vmatprep.subr.mxu0 0.0
        %3201 = vmatpush1.msra.mxu0 0.0
        %3202 = vmatprep.subr.mxu0 0.0
        %3203 = vmatpush1.msra.mxu0 0.0
        %3204 = vmatprep.subr.mxu0 0.0
        %3205 = vmatpush1.msra.mxu0 0.0
        %3206 = vmatprep.subr.mxu0 0.0
        %3207 = vmatpush1.msra.mxu0 0.0
        %3208 = vmatprep.subr.mxu0 0.0
        %3209 = vmatpush1.msra.mxu0 0.0
        %3210 = vmatprep.subr.mxu0 0.0
        %3211 = vmatpush1.msra.mxu0 0.0
        %3212 = vmatprep.subr.mxu0 0.0
        %3213 = vmatpush1.msra.mxu0 0.0
        %3214 = vmatprep.subr.mxu0 0.0
        %3215 = vmatpush1.msra.mxu0 0.0
        %3216 = vmatprep.subr.mxu0 0.0
        %3217 = vmatpush1.msra.mxu0 0.0
        %3218 = vmatprep.subr.mxu0 0.0
        %3219 = vmatpush1.msra.mxu0 0.0
        %3220 = vmatprep.subr.mxu0 0.0
        %3221 = vmatpush1.msra.mxu0 0.0
        %3222 = vmatprep.subr.mxu0 0.0
        %3223 = vmatpush1.msra.mxu0 0.0
        %3224 = vmatprep.subr.mxu0 0.0
        %3225 = vmatpush1.msra.mxu0 0.0
        %3226 = vmatprep.subr.mxu0 0.0
        %3227 = vmatpush1.msra.mxu0 0.0
        %3228 = vmatprep.subr.mxu0 0.0
        %3229 = vmatpush1.msra.mxu0 0.0
        %3230 = vmatprep.subr.mxu0 0.0
        %3231 = vmatpush1.msra.mxu0 0.0
        %3232 = vmatprep.subr.mxu0 0.0
        %3233 = vmatpush1.msra.mxu0 0.0
        %3234 = vmatprep.subr.mxu0 0.0
        %3235 = vmatpush1.msra.mxu0 0.0
        %3236 = vmatprep.subr.mxu0 0.0
        %3237 = vmatpush1.msra.mxu0 0.0
        %3238 = vmatprep.subr.mxu0 0.0
        %3239 = vmatpush1.msra.mxu0 0.0
        %3240 = vmatprep.subr.mxu0 0.0
        %3241 = vmatpush1.msra.mxu0 0.0
        %3242 = vmatprep.subr.mxu0 0.0
        %3243 = vmatpush1.msra.mxu0 0.0
        %3244 = vmatprep.subr.mxu0 0.0
        %3245 = vmatpush1.msra.mxu0 0.0
        %3246 = vmatprep.subr.mxu0 0.0
        %3247 = vmatpush1.msra.mxu0 0.0
        %3248 = vmatprep.subr.mxu0 0.0
        %3249 = vmatpush1.msra.mxu0 0.0
        %3250 = vmatprep.mubr.f32.mxu0 0.0
        %3251 = vmatmul.mubr.f32.gmra.mrb[0].mxu0 %v3018
        %v3252 = vpop.f32.mrb[0].mxu0
        %v3253 = vadd.f32 0.0, %v3252
        %v3254 = vpop.f32.mrb[0].mxu0
        %v3255 = vadd.f32 0.0, %v3254
        %3256 = vdwg.mxu0
        %3257 = vmatprep.subr.mxu0 %v3042
        %3258 = vmatpush1.msra.mxu0 %v3039
        %3259 = vmatprep.subr.mxu0 0.0
        %3260 = vmatpush1.msra.mxu0 0.0
        %3261 = vmatprep.subr.mxu0 0.0
        %3262 = vmatpush1.msra.mxu0 0.0
        %3263 = vmatprep.subr.mxu0 0.0
        %3264 = vmatpush1.msra.mxu0 0.0
        %3265 = vmatprep.subr.mxu0 0.0
        %3266 = vmatpush1.msra.mxu0 0.0
        %3267 = vmatprep.subr.mxu0 0.0
        %3268 = vmatpush1.msra.mxu0 0.0
        %3269 = vmatprep.subr.mxu0 0.0
        %3270 = vmatpush1.msra.mxu0 0.0
        %3271 = vmatprep.subr.mxu0 0.0
        %3272 = vmatpush1.msra.mxu0 0.0
        %3273 = vmatprep.subr.mxu0 0.0
        %3274 = vmatpush1.msra.mxu0 0.0
        %3275 = vmatprep.subr.mxu0 0.0
        %3276 = vmatpush1.msra.mxu0 0.0
        %3277 = vmatprep.subr.mxu0 0.0
        %3278 = vmatpush1.msra.mxu0 0.0
        %3279 = vmatprep.subr.mxu0 0.0
        %3280 = vmatpush1.msra.mxu0 0.0
        %3281 = vmatprep.subr.mxu0 0.0
        %3282 = vmatpush1.msra.mxu0 0.0
        %3283 = vmatprep.subr.mxu0 0.0
        %3284 = vmatpush1.msra.mxu0 0.0
        %3285 = vmatprep.subr.mxu0 0.0
        %3286 = vmatpush1.msra.mxu0 0.0
        %3287 = vmatprep.subr.mxu0 0.0
        %3288 = vmatpush1.msra.mxu0 0.0
        %3289 = vmatprep.subr.mxu0 0.0
        %3290 = vmatpush1.msra.mxu0 0.0
        %3291 = vmatprep.subr.mxu0 0.0
        %3292 = vmatpush1.msra.mxu0 0.0
        %3293 = vmatprep.subr.mxu0 0.0
        %3294 = vmatpush1.msra.mxu0 0.0
        %3295 = vmatprep.subr.mxu0 0.0
        %3296 = vmatpush1.msra.mxu0 0.0
        %3297 = vmatprep.subr.mxu0 0.0
        %3298 = vmatpush1.msra.mxu0 0.0
        %3299 = vmatprep.subr.mxu0 0.0
        %3300 = vmatpush1.msra.mxu0 0.0
        %3301 = vmatprep.subr.mxu0 0.0
        %3302 = vmatpush1.msra.mxu0 0.0
        %3303 = vmatprep.subr.mxu0 0.0
        %3304 = vmatpush1.msra.mxu0 0.0
        %3305 = vmatprep.subr.mxu0 0.0
        %3306 = vmatpush1.msra.mxu0 0.0
        %3307 = vmatprep.subr.mxu0 0.0
        %3308 = vmatpush1.msra.mxu0 0.0
        %3309 = vmatprep.subr.mxu0 0.0
        %3310 = vmatpush1.msra.mxu0 0.0
        %3311 = vmatprep.subr.mxu0 0.0
        %3312 = vmatpush1.msra.mxu0 0.0
        %3313 = vmatprep.subr.mxu0 0.0
        %3314 = vmatpush1.msra.mxu0 0.0
        %3315 = vmatprep.subr.mxu0 0.0
        %3316 = vmatpush1.msra.mxu0 0.0
        %3317 = vmatprep.subr.mxu0 0.0
        %3318 = vmatpush1.msra.mxu0 0.0
        %3319 = vmatprep.subr.mxu0 0.0
        %3320 = vmatpush1.msra.mxu0 0.0
        %3321 = vmatprep.mubr.f32.mxu0 0.0
        %3322 = vmatmul.mubr.f32.gmra.mrb[0].mxu0 %v3018
        %v3323 = vpop.f32.mrb[0].mxu0
        %v3324 = vadd.f32 0.0, %v3323
        %v3325 = vpop.f32.mrb[0].mxu0
        %v3326 = vadd.f32 0.0, %v3325
        %3327 = vdwg.mxu0
        %v3328 = vadd.f32 %v2931, %v3111
        %v3329 = vadd.f32 %v2932, %v3113
        %v3330 = vadd.f32 %v2933, %v3182
        %v3331 = vadd.f32 %v2934, %v3184
        %v3332 = vadd.f32 %v2935, %v3253
        %v3333 = vadd.f32 %v2936, %v3255
        %v3334 = vadd.f32 %v2937, %v3324
        %v3335 = vadd.f32 %v2938, %v3326
        %3336 = vrot.lane.b32.xlu0 %v253, 95
        %v3337 = vpop.permute.xlu0 %3336
        %3338 = vrot.lane.b32.xlu0 %v261, 95
        %v3339 = vpop.permute.xlu0 %3338
        %3340 = vrot.lane.b32.xlu0 %v254, 95
        %v3341 = vpop.permute.xlu0 %3340
        %3342 = vrot.lane.b32.xlu0 %v262, 95
        %v3343 = vpop.permute.xlu0 %3342
        %3344 = vrot.lane.b32.xlu0 %v255, 95
        %v3345 = vpop.permute.xlu0 %3344
        %3346 = vrot.lane.b32.xlu0 %v263, 95
        %v3347 = vpop.permute.xlu0 %3346
        %3348 = vrot.lane.b32.xlu0 %v256, 95
        %v3349 = vpop.permute.xlu0 %3348
        %3350 = vrot.lane.b32.xlu0 %v264, 95
        %v3351 = vpop.permute.xlu0 %3350
        %vm3352 = vcmp.lt.s32.totalorder %v286, 95
        %v3353 = vsel %vm3352, %v3349, %v3351
        %v3354 = vsel %vm3352, %v3347, %v3349
        %v3355 = vsel %vm3352, %v3345, %v3347
        %v3356 = vsel %vm3352, %v3343, %v3345
        %v3357 = vsel %vm3352, %v3341, %v3343
        %v3358 = vsel %vm3352, %v3339, %v3341
        %v3359 = vsel %vm3352, %v3337, %v3339
        %v3360 = vsel %vm3352, %v3351, %v3337
        %v3361 = vld [vmem:[%s1 + $0x20] sm:$0x11]
        %v3362 = vld [vmem:[%s1 + $0x28] sm:$0x11]
        %v3363 = vld [vmem:[%s1 + $0x30] sm:$0x11]
        %v3364 = vld [vmem:[%s1 + $0x38] sm:$0x11]
        %v3365 = vunpack.c.l.bf16 %v3361
        %v3366 = vunpack.c.h.bf16 %v3361
        %v3367 = vunpack.c.l.bf16 %v3362
        %v3368 = vunpack.c.h.bf16 %v3362
        %v3369 = vunpack.c.l.bf16 %v3363
        %v3370 = vunpack.c.h.bf16 %v3363
        %v3371 = vunpack.c.l.bf16 %v3364
        %v3372 = vunpack.c.h.bf16 %v3364
        %v3373 = vlaneseq
        %v3374 = vshrl.u32 %v3373, 7
        %v3375 = vsub.s32 0, %v3374
        %v3376 = vrot.slane %v3365, %v3375
        %v3377 = vlaneseq
        %v3378 = vshrl.u32 %v3377, 7
        %v3379 = vsub.s32 0, %v3378
        %v3380 = vrot.slane %v3366, %v3379
        %v3381 = vlaneseq
        %v3382 = vshrl.u32 %v3381, 7
        %v3383 = vsub.s32 0, %v3382
        %v3384 = vrot.slane %v3367, %v3383
        %v3385 = vlaneseq
        %v3386 = vshrl.u32 %v3385, 7
        %v3387 = vsub.s32 0, %v3386
        %v3388 = vrot.slane %v3368, %v3387
        %v3389 = vlaneseq
        %v3390 = vshrl.u32 %v3389, 7
        %v3391 = vsub.s32 0, %v3390
        %v3392 = vrot.slane %v3369, %v3391
        %v3393 = vlaneseq
        %v3394 = vshrl.u32 %v3393, 7
        %v3395 = vsub.s32 0, %v3394
        %v3396 = vrot.slane %v3370, %v3395
        %v3397 = vlaneseq
        %v3398 = vshrl.u32 %v3397, 7
        %v3399 = vsub.s32 0, %v3398
        %v3400 = vrot.slane %v3371, %v3399
        %v3401 = vlaneseq
        %v3402 = vshrl.u32 %v3401, 7
        %v3403 = vsub.s32 0, %v3402
        %v3404 = vrot.slane %v3372, %v3403
        %v3405 = vmul.f32 %v3359, %v3376
        %v3406 = vmul.f32 %v3358, %v3380
        %v3407 = vmul.f32 %v3357, %v3384
        %v3408 = vmul.f32 %v3356, %v3388
        %v3409 = vmul.f32 %v3355, %v3392
        %v3410 = vmul.f32 %v3354, %v3396
        %v3411 = vmul.f32 %v3353, %v3400
        %v3412 = vmul.f32 %v3360, %v3404
        %v3413 = vld [vmem:[%s2 + $0x40] sm:$0xff]
        %v3415 = vsel %vm415, %v3413, 0
        %v3418 = vsel %vm419, %v3405, 0
        %v3421 = vsel %vm419, %v3406, 0
        %v3424 = vsel %vm419, %v3407, 0
        %v3427 = vsel %vm419, %v3408, 0
        %v3430 = vsel %vm419, %v3409, 0
        %v3433 = vsel %vm419, %v3410, 0
        %v3436 = vsel %vm419, %v3411, 0
        %v3439 = vsel %vm419, %v3412, 0
        %3441 = vmatprep.subr.mxu0 %v3421
        %3442 = vmatpush1.msra.mxu0 %v3418
        %3443 = vmatprep.subr.mxu0 0.0
        %3444 = vmatpush1.msra.mxu0 0.0
        %3445 = vmatprep.subr.mxu0 0.0
        %3446 = vmatpush1.msra.mxu0 0.0
        %3447 = vmatprep.subr.mxu0 0.0
        %3448 = vmatpush1.msra.mxu0 0.0
        %3449 = vmatprep.subr.mxu0 0.0
        %3450 = vmatpush1.msra.mxu0 0.0
        %3451 = vmatprep.subr.mxu0 0.0
        %3452 = vmatpush1.msra.mxu0 0.0
        %3453 = vmatprep.subr.mxu0 0.0
        %3454 = vmatpush1.msra.mxu0 0.0
        %3455 = vmatprep.subr.mxu0 0.0
        %3456 = vmatpush1.msra.mxu0 0.0
        %3457 = vmatprep.subr.mxu0 0.0
        %3458 = vmatpush1.msra.mxu0 0.0
        %3459 = vmatprep.subr.mxu0 0.0
        %3460 = vmatpush1.msra.mxu0 0.0
        %3461 = vmatprep.subr.mxu0 0.0
        %3462 = vmatpush1.msra.mxu0 0.0
        %3463 = vmatprep.subr.mxu0 0.0
        %3464 = vmatpush1.msra.mxu0 0.0
        %3465 = vmatprep.subr.mxu0 0.0
        %3466 = vmatpush1.msra.mxu0 0.0
        %3467 = vmatprep.subr.mxu0 0.0
        %3468 = vmatpush1.msra.mxu0 0.0
        %3469 = vmatprep.subr.mxu0 0.0
        %3470 = vmatpush1.msra.mxu0 0.0
        %3471 = vmatprep.subr.mxu0 0.0
        %3472 = vmatpush1.msra.mxu0 0.0
        %3473 = vmatprep.subr.mxu0 0.0
        %3474 = vmatpush1.msra.mxu0 0.0
        %3475 = vmatprep.subr.mxu0 0.0
        %3476 = vmatpush1.msra.mxu0 0.0
        %3477 = vmatprep.subr.mxu0 0.0
        %3478 = vmatpush1.msra.mxu0 0.0
        %3479 = vmatprep.subr.mxu0 0.0
        %3480 = vmatpush1.msra.mxu0 0.0
        %3481 = vmatprep.subr.mxu0 0.0
        %3482 = vmatpush1.msra.mxu0 0.0
        %3483 = vmatprep.subr.mxu0 0.0
        %3484 = vmatpush1.msra.mxu0 0.0
        %3485 = vmatprep.subr.mxu0 0.0
        %3486 = vmatpush1.msra.mxu0 0.0
        %3487 = vmatprep.subr.mxu0 0.0
        %3488 = vmatpush1.msra.mxu0 0.0
        %3489 = vmatprep.subr.mxu0 0.0
        %3490 = vmatpush1.msra.mxu0 0.0
        %3491 = vmatprep.subr.mxu0 0.0
        %3492 = vmatpush1.msra.mxu0 0.0
        %3493 = vmatprep.subr.mxu0 0.0
        %3494 = vmatpush1.msra.mxu0 0.0
        %3495 = vmatprep.subr.mxu0 0.0
        %3496 = vmatpush1.msra.mxu0 0.0
        %3497 = vmatprep.subr.mxu0 0.0
        %3498 = vmatpush1.msra.mxu0 0.0
        %3499 = vmatprep.subr.mxu0 0.0
        %3500 = vmatpush1.msra.mxu0 0.0
        %3501 = vmatprep.subr.mxu0 0.0
        %3502 = vmatpush1.msra.mxu0 0.0
        %3503 = vmatprep.subr.mxu0 0.0
        %3504 = vmatpush1.msra.mxu0 0.0
        %3505 = vmatprep.mubr.f32.mxu0 0.0
        %3506 = vmatmul.mubr.f32.gmra.mrb[0].mxu0 %v3415
        %v3507 = vpop.f32.mrb[0].mxu0
        %v3508 = vadd.f32 0.0, %v3507
        %v3509 = vpop.f32.mrb[0].mxu0
        %v3510 = vadd.f32 0.0, %v3509
        %3511 = vdwg.mxu0
        %3512 = vmatprep.subr.mxu0 %v3427
        %3513 = vmatpush1.msra.mxu0 %v3424
        %3514 = vmatprep.subr.mxu0 0.0
        %3515 = vmatpush1.msra.mxu0 0.0
        %3516 = vmatprep.subr.mxu0 0.0
        %3517 = vmatpush1.msra.mxu0 0.0
        %3518 = vmatprep.subr.mxu0 0.0
        %3519 = vmatpush1.msra.mxu0 0.0
        %3520 = vmatprep.subr.mxu0 0.0
        %3521 = vmatpush1.msra.mxu0 0.0
        %3522 = vmatprep.subr.mxu0 0.0
        %3523 = vmatpush1.msra.mxu0 0.0
        %3524 = vmatprep.subr.mxu0 0.0
        %3525 = vmatpush1.msra.mxu0 0.0
        %3526 = vmatprep.subr.mxu0 0.0
        %3527 = vmatpush1.msra.mxu0 0.0
        %3528 = vmatprep.subr.mxu0 0.0
        %3529 = vmatpush1.msra.mxu0 0.0
        %3530 = vmatprep.subr.mxu0 0.0
        %3531 = vmatpush1.msra.mxu0 0.0
        %3532 = vmatprep.subr.mxu0 0.0
        %3533 = vmatpush1.msra.mxu0 0.0
        %3534 = vmatprep.subr.mxu0 0.0
        %3535 = vmatpush1.msra.mxu0 0.0
        %3536 = vmatprep.subr.mxu0 0.0
        %3537 = vmatpush1.msra.mxu0 0.0
        %3538 = vmatprep.subr.mxu0 0.0
        %3539 = vmatpush1.msra.mxu0 0.0
        %3540 = vmatprep.subr.mxu0 0.0
        %3541 = vmatpush1.msra.mxu0 0.0
        %3542 = vmatprep.subr.mxu0 0.0
        %3543 = vmatpush1.msra.mxu0 0.0
        %3544 = vmatprep.subr.mxu0 0.0
        %3545 = vmatpush1.msra.mxu0 0.0
        %3546 = vmatprep.subr.mxu0 0.0
        %3547 = vmatpush1.msra.mxu0 0.0
        %3548 = vmatprep.subr.mxu0 0.0
        %3549 = vmatpush1.msra.mxu0 0.0
        %3550 = vmatprep.subr.mxu0 0.0
        %3551 = vmatpush1.msra.mxu0 0.0
        %3552 = vmatprep.subr.mxu0 0.0
        %3553 = vmatpush1.msra.mxu0 0.0
        %3554 = vmatprep.subr.mxu0 0.0
        %3555 = vmatpush1.msra.mxu0 0.0
        %3556 = vmatprep.subr.mxu0 0.0
        %3557 = vmatpush1.msra.mxu0 0.0
        %3558 = vmatprep.subr.mxu0 0.0
        %3559 = vmatpush1.msra.mxu0 0.0
        %3560 = vmatprep.subr.mxu0 0.0
        %3561 = vmatpush1.msra.mxu0 0.0
        %3562 = vmatprep.subr.mxu0 0.0
        %3563 = vmatpush1.msra.mxu0 0.0
        %3564 = vmatprep.subr.mxu0 0.0
        %3565 = vmatpush1.msra.mxu0 0.0
        %3566 = vmatprep.subr.mxu0 0.0
        %3567 = vmatpush1.msra.mxu0 0.0
        %3568 = vmatprep.subr.mxu0 0.0
        %3569 = vmatpush1.msra.mxu0 0.0
        %3570 = vmatprep.subr.mxu0 0.0
        %3571 = vmatpush1.msra.mxu0 0.0
        %3572 = vmatprep.subr.mxu0 0.0
        %3573 = vmatpush1.msra.mxu0 0.0
        %3574 = vmatprep.subr.mxu0 0.0
        %3575 = vmatpush1.msra.mxu0 0.0
        %3576 = vmatprep.mubr.f32.mxu0 0.0
        %3577 = vmatmul.mubr.f32.gmra.mrb[0].mxu0 %v3415
        %v3578 = vpop.f32.mrb[0].mxu0
        %v3579 = vadd.f32 0.0, %v3578
        %v3580 = vpop.f32.mrb[0].mxu0
        %v3581 = vadd.f32 0.0, %v3580
        %3582 = vdwg.mxu0
        %3583 = vmatprep.subr.mxu0 %v3433
        %3584 = vmatpush1.msra.mxu0 %v3430
        %3585 = vmatprep.subr.mxu0 0.0
        %3586 = vmatpush1.msra.mxu0 0.0
        %3587 = vmatprep.subr.mxu0 0.0
        %3588 = vmatpush1.msra.mxu0 0.0
        %3589 = vmatprep.subr.mxu0 0.0
        %3590 = vmatpush1.msra.mxu0 0.0
        %3591 = vmatprep.subr.mxu0 0.0
        %3592 = vmatpush1.msra.mxu0 0.0
        %3593 = vmatprep.subr.mxu0 0.0
        %3594 = vmatpush1.msra.mxu0 0.0
        %3595 = vmatprep.subr.mxu0 0.0
        %3596 = vmatpush1.msra.mxu0 0.0
        %3597 = vmatprep.subr.mxu0 0.0
        %3598 = vmatpush1.msra.mxu0 0.0
        %3599 = vmatprep.subr.mxu0 0.0
        %3600 = vmatpush1.msra.mxu0 0.0
        %3601 = vmatprep.subr.mxu0 0.0
        %3602 = vmatpush1.msra.mxu0 0.0
        %3603 = vmatprep.subr.mxu0 0.0
        %3604 = vmatpush1.msra.mxu0 0.0
        %3605 = vmatprep.subr.mxu0 0.0
        %3606 = vmatpush1.msra.mxu0 0.0
        %3607 = vmatprep.subr.mxu0 0.0
        %3608 = vmatpush1.msra.mxu0 0.0
        %3609 = vmatprep.subr.mxu0 0.0
        %3610 = vmatpush1.msra.mxu0 0.0
        %3611 = vmatprep.subr.mxu0 0.0
        %3612 = vmatpush1.msra.mxu0 0.0
        %3613 = vmatprep.subr.mxu0 0.0
        %3614 = vmatpush1.msra.mxu0 0.0
        %3615 = vmatprep.subr.mxu0 0.0
        %3616 = vmatpush1.msra.mxu0 0.0
        %3617 = vmatprep.subr.mxu0 0.0
        %3618 = vmatpush1.msra.mxu0 0.0
        %3619 = vmatprep.subr.mxu0 0.0
        %3620 = vmatpush1.msra.mxu0 0.0
        %3621 = vmatprep.subr.mxu0 0.0
        %3622 = vmatpush1.msra.mxu0 0.0
        %3623 = vmatprep.subr.mxu0 0.0
        %3624 = vmatpush1.msra.mxu0 0.0
        %3625 = vmatprep.subr.mxu0 0.0
        %3626 = vmatpush1.msra.mxu0 0.0
        %3627 = vmatprep.subr.mxu0 0.0
        %3628 = vmatpush1.msra.mxu0 0.0
        %3629 = vmatprep.subr.mxu0 0.0
        %3630 = vmatpush1.msra.mxu0 0.0
        %3631 = vmatprep.subr.mxu0 0.0
        %3632 = vmatpush1.msra.mxu0 0.0
        %3633 = vmatprep.subr.mxu0 0.0
        %3634 = vmatpush1.msra.mxu0 0.0
        %3635 = vmatprep.subr.mxu0 0.0
        %3636 = vmatpush1.msra.mxu0 0.0
        %3637 = vmatprep.subr.mxu0 0.0
        %3638 = vmatpush1.msra.mxu0 0.0
        %3639 = vmatprep.subr.mxu0 0.0
        %3640 = vmatpush1.msra.mxu0 0.0
        %3641 = vmatprep.subr.mxu0 0.0
        %3642 = vmatpush1.msra.mxu0 0.0
        %3643 = vmatprep.subr.mxu0 0.0
        %3644 = vmatpush1.msra.mxu0 0.0
        %3645 = vmatprep.subr.mxu0 0.0
        %3646 = vmatpush1.msra.mxu0 0.0
        %3647 = vmatprep.mubr.f32.mxu0 0.0
        %3648 = vmatmul.mubr.f32.gmra.mrb[0].mxu0 %v3415
        %v3649 = vpop.f32.mrb[0].mxu0
        %v3650 = vadd.f32 0.0, %v3649
        %v3651 = vpop.f32.mrb[0].mxu0
        %v3652 = vadd.f32 0.0, %v3651
        %3653 = vdwg.mxu0
        %3654 = vmatprep.subr.mxu0 %v3439
        %3655 = vmatpush1.msra.mxu0 %v3436
        %3656 = vmatprep.subr.mxu0 0.0
        %3657 = vmatpush1.msra.mxu0 0.0
        %3658 = vmatprep.subr.mxu0 0.0
        %3659 = vmatpush1.msra.mxu0 0.0
        %3660 = vmatprep.subr.mxu0 0.0
        %3661 = vmatpush1.msra.mxu0 0.0
        %3662 = vmatprep.subr.mxu0 0.0
        %3663 = vmatpush1.msra.mxu0 0.0
        %3664 = vmatprep.subr.mxu0 0.0
        %3665 = vmatpush1.msra.mxu0 0.0
        %3666 = vmatprep.subr.mxu0 0.0
        %3667 = vmatpush1.msra.mxu0 0.0
        %3668 = vmatprep.subr.mxu0 0.0
        %3669 = vmatpush1.msra.mxu0 0.0
        %3670 = vmatprep.subr.mxu0 0.0
        %3671 = vmatpush1.msra.mxu0 0.0
        %3672 = vmatprep.subr.mxu0 0.0
        %3673 = vmatpush1.msra.mxu0 0.0
        %3674 = vmatprep.subr.mxu0 0.0
        %3675 = vmatpush1.msra.mxu0 0.0
        %3676 = vmatprep.subr.mxu0 0.0
        %3677 = vmatpush1.msra.mxu0 0.0
        %3678 = vmatprep.subr.mxu0 0.0
        %3679 = vmatpush1.msra.mxu0 0.0
        %3680 = vmatprep.subr.mxu0 0.0
        %3681 = vmatpush1.msra.mxu0 0.0
        %3682 = vmatprep.subr.mxu0 0.0
        %3683 = vmatpush1.msra.mxu0 0.0
        %3684 = vmatprep.subr.mxu0 0.0
        %3685 = vmatpush1.msra.mxu0 0.0
        %3686 = vmatprep.subr.mxu0 0.0
        %3687 = vmatpush1.msra.mxu0 0.0
        %3688 = vmatprep.subr.mxu0 0.0
        %3689 = vmatpush1.msra.mxu0 0.0
        %3690 = vmatprep.subr.mxu0 0.0
        %3691 = vmatpush1.msra.mxu0 0.0
        %3692 = vmatprep.subr.mxu0 0.0
        %3693 = vmatpush1.msra.mxu0 0.0
        %3694 = vmatprep.subr.mxu0 0.0
        %3695 = vmatpush1.msra.mxu0 0.0
        %3696 = vmatprep.subr.mxu0 0.0
        %3697 = vmatpush1.msra.mxu0 0.0
        %3698 = vmatprep.subr.mxu0 0.0
        %3699 = vmatpush1.msra.mxu0 0.0
        %3700 = vmatprep.subr.mxu0 0.0
        %3701 = vmatpush1.msra.mxu0 0.0
        %3702 = vmatprep.subr.mxu0 0.0
        %3703 = vmatpush1.msra.mxu0 0.0
        %3704 = vmatprep.subr.mxu0 0.0
        %3705 = vmatpush1.msra.mxu0 0.0
        %3706 = vmatprep.subr.mxu0 0.0
        %3707 = vmatpush1.msra.mxu0 0.0
        %3708 = vmatprep.subr.mxu0 0.0
        %3709 = vmatpush1.msra.mxu0 0.0
        %3710 = vmatprep.subr.mxu0 0.0
        %3711 = vmatpush1.msra.mxu0 0.0
        %3712 = vmatprep.subr.mxu0 0.0
        %3713 = vmatpush1.msra.mxu0 0.0
        %3714 = vmatprep.subr.mxu0 0.0
        %3715 = vmatpush1.msra.mxu0 0.0
        %3716 = vmatprep.subr.mxu0 0.0
        %3717 = vmatpush1.msra.mxu0 0.0
        %3718 = vmatprep.mubr.f32.mxu0 0.0
        %3719 = vmatmul.mubr.f32.gmra.mrb[0].mxu0 %v3415
        %v3720 = vpop.f32.mrb[0].mxu0
        %v3721 = vadd.f32 0.0, %v3720
        %v3722 = vpop.f32.mrb[0].mxu0
        %v3723 = vadd.f32 0.0, %v3722
        %3724 = vdwg.mxu0
        %v3725 = vadd.f32 %v3328, %v3508
        %v3726 = vadd.f32 %v3329, %v3510
        %v3727 = vadd.f32 %v3330, %v3579
        %v3728 = vadd.f32 %v3331, %v3581
        %v3729 = vadd.f32 %v3332, %v3650
        %v3730 = vadd.f32 %v3333, %v3652
        %v3731 = vadd.f32 %v3334, %v3721
        %v3732 = vadd.f32 %v3335, %v3723
        %v3733 = vld [vmem:[%s3] sm:$0xff]
        %3735 = vset.pattern.permute.xlu0 0
        %3736 = vperm.xlu0 %3735, %v3733
        %v3737 = vpop.permute.xlu0 %3736
        %v3739 = vadd.f32 %v3725, %v3737
        %v3740 = vadd.f32 %v3726, %v3737
        %v3741 = vadd.f32 %v3727, %v3737
        %v3742 = vadd.f32 %v3728, %v3737
        %v3743 = vadd.f32 %v3729, %v3737
        %v3744 = vadd.f32 %v3730, %v3737
        %v3745 = vadd.f32 %v3731, %v3737
        %v3746 = vadd.f32 %v3732, %v3737
        %vm3747 = vcmp.ge.f32.partialorder %v3739, 0.0
        %vm3748 = vcmp.ge.f32.partialorder %v3740, 0.0
        %vm3749 = vcmp.ge.f32.partialorder %v3741, 0.0
        %vm3750 = vcmp.ge.f32.partialorder %v3742, 0.0
        %vm3751 = vcmp.ge.f32.partialorder %v3743, 0.0
        %vm3752 = vcmp.ge.f32.partialorder %v3744, 0.0
        %vm3753 = vcmp.ge.f32.partialorder %v3745, 0.0
        %vm3754 = vcmp.ge.f32.partialorder %v3746, 0.0
        %v3755 = vmul.f32 %v3739, 0.01
        %v3756 = vmul.f32 %v3740, 0.01
        %v3757 = vmul.f32 %v3741, 0.01
        %v3758 = vmul.f32 %v3742, 0.01
        %v3759 = vmul.f32 %v3743, 0.01
        %v3760 = vmul.f32 %v3744, 0.01
        %v3761 = vmul.f32 %v3745, 0.01
        %v3762 = vmul.f32 %v3746, 0.01
        %v3763 = vsel %vm3747, %v3739, %v3755
        %v3764 = vsel %vm3748, %v3740, %v3756
        %v3765 = vsel %vm3749, %v3741, %v3757
        %v3766 = vsel %vm3750, %v3742, %v3758
        %v3767 = vsel %vm3751, %v3743, %v3759
        %v3768 = vsel %vm3752, %v3744, %v3760
        %v3769 = vsel %vm3753, %v3745, %v3761
        %v3770 = vsel %vm3754, %v3746, %v3762
        %3771 = vrot.lane.b32.xlu0 %v3763, 33
        %v3772 = vpop.permute.xlu0 %3771
        %3773 = vrot.lane.b32.xlu0 %v3764, 33
        %v3774 = vpop.permute.xlu0 %3773
        %3775 = vrot.lane.b32.xlu0 %v3765, 33
        %v3776 = vpop.permute.xlu0 %3775
        %3777 = vrot.lane.b32.xlu0 %v3766, 33
        %v3778 = vpop.permute.xlu0 %3777
        %3779 = vrot.lane.b32.xlu0 %v3767, 33
        %v3780 = vpop.permute.xlu0 %3779
        %3781 = vrot.lane.b32.xlu0 %v3768, 33
        %v3782 = vpop.permute.xlu0 %3781
        %3783 = vrot.lane.b32.xlu0 %v3769, 33
        %v3784 = vpop.permute.xlu0 %3783
        %3785 = vrot.lane.b32.xlu0 %v3770, 33
        %v3786 = vpop.permute.xlu0 %3785
        %v3787 = vsel %vm287, %v3784, %v3786
        %v3788 = vsel %vm287, %v3782, %v3784
        %v3789 = vsel %vm287, %v3780, %v3782
        %v3790 = vsel %vm287, %v3778, %v3780
        %v3791 = vsel %vm287, %v3776, %v3778
        %v3792 = vsel %vm287, %v3774, %v3776
        %v3793 = vsel %vm287, %v3772, %v3774
        %v3794 = vsel %vm287, %v3786, %v3772
        %v3795 = vmul.f32 %v3794, %v311
        %v3796 = vmul.f32 %v3793, %v315
        %v3797 = vmul.f32 %v3792, %v319
        %v3798 = vmul.f32 %v3791, %v323
        %v3799 = vmul.f32 %v3790, %v327
        %v3800 = vmul.f32 %v3789, %v331
        %v3801 = vmul.f32 %v3788, %v335
        %v3802 = vmul.f32 %v3787, %v339
        %v3803 = vld [vmem:[%s4] sm:$0xff]
        %3804 = vrot.lane.b32.xlu0 %v3763, 32
        %v3805 = vpop.permute.xlu0 %3804
        %3806 = vrot.lane.b32.xlu0 %v3764, 32
        %v3807 = vpop.permute.xlu0 %3806
        %3808 = vrot.lane.b32.xlu0 %v3765, 32
        %v3809 = vpop.permute.xlu0 %3808
        %3810 = vrot.lane.b32.xlu0 %v3766, 32
        %v3811 = vpop.permute.xlu0 %3810
        %3812 = vrot.lane.b32.xlu0 %v3767, 32
        %v3813 = vpop.permute.xlu0 %3812
        %3814 = vrot.lane.b32.xlu0 %v3768, 32
        %v3815 = vpop.permute.xlu0 %3814
        %3816 = vrot.lane.b32.xlu0 %v3769, 32
        %v3817 = vpop.permute.xlu0 %3816
        %3818 = vrot.lane.b32.xlu0 %v3770, 32
        %v3819 = vpop.permute.xlu0 %3818
        %v3820 = vsel %vm365, %v3817, %v3819
        %v3821 = vsel %vm365, %v3815, %v3817
        %v3822 = vsel %vm365, %v3813, %v3815
        %v3823 = vsel %vm365, %v3811, %v3813
        %v3824 = vsel %vm365, %v3809, %v3811
        %v3825 = vsel %vm365, %v3807, %v3809
        %v3826 = vsel %vm365, %v3805, %v3807
        %v3827 = vsel %vm365, %v3819, %v3805
        %v3828 = vmul.f32 %v3827, %v377
        %v3829 = vmul.f32 %v3826, %v381
        %v3830 = vmul.f32 %v3825, %v385
        %v3831 = vmul.f32 %v3824, %v389
        %v3832 = vmul.f32 %v3823, %v393
        %v3833 = vmul.f32 %v3822, %v397
        %v3834 = vmul.f32 %v3821, %v401
        %v3835 = vmul.f32 %v3820, %v405
        %v3836 = vld [vmem:[%s4 + $0x8] sm:$0xff]
        %vm3837 = vcmask 64512
        %v3839 = vsel %vm3837, %v3836, 0
        %3841 = vmatprep.subr.mxu0 %v3829
        %3842 = vmatpush1.msra.mxu0 %v3828
        %3843 = vmatprep.subr.mxu0 0.0
        %3844 = vmatpush1.msra.mxu0 0.0
        %3845 = vmatprep.subr.mxu0 0.0
        %3846 = vmatpush1.msra.mxu0 0.0
        %3847 = vmatprep.subr.mxu0 0.0
        %3848 = vmatpush1.msra.mxu0 0.0
        %3849 = vmatprep.subr.mxu0 0.0
        %3850 = vmatpush1.msra.mxu0 0.0
        %3851 = vmatprep.subr.mxu0 0.0
        %3852 = vmatpush1.msra.mxu0 0.0
        %3853 = vmatprep.subr.mxu0 0.0
        %3854 = vmatpush1.msra.mxu0 0.0
        %3855 = vmatprep.subr.mxu0 0.0
        %3856 = vmatpush1.msra.mxu0 0.0
        %3857 = vmatprep.subr.mxu0 0.0
        %3858 = vmatpush1.msra.mxu0 0.0
        %3859 = vmatprep.subr.mxu0 0.0
        %3860 = vmatpush1.msra.mxu0 0.0
        %3861 = vmatprep.subr.mxu0 0.0
        %3862 = vmatpush1.msra.mxu0 0.0
        %3863 = vmatprep.subr.mxu0 0.0
        %3864 = vmatpush1.msra.mxu0 0.0
        %3865 = vmatprep.subr.mxu0 0.0
        %3866 = vmatpush1.msra.mxu0 0.0
        %3867 = vmatprep.subr.mxu0 0.0
        %3868 = vmatpush1.msra.mxu0 0.0
        %3869 = vmatprep.subr.mxu0 0.0
        %3870 = vmatpush1.msra.mxu0 0.0
        %3871 = vmatprep.subr.mxu0 0.0
        %3872 = vmatpush1.msra.mxu0 0.0
        %3873 = vmatprep.subr.mxu0 0.0
        %3874 = vmatpush1.msra.mxu0 0.0
        %3875 = vmatprep.subr.mxu0 0.0
        %3876 = vmatpush1.msra.mxu0 0.0
        %3877 = vmatprep.subr.mxu0 0.0
        %3878 = vmatpush1.msra.mxu0 0.0
        %3879 = vmatprep.subr.mxu0 0.0
        %3880 = vmatpush1.msra.mxu0 0.0
        %3881 = vmatprep.subr.mxu0 0.0
        %3882 = vmatpush1.msra.mxu0 0.0
        %3883 = vmatprep.subr.mxu0 0.0
        %3884 = vmatpush1.msra.mxu0 0.0
        %3885 = vmatprep.subr.mxu0 0.0
        %3886 = vmatpush1.msra.mxu0 0.0
        %3887 = vmatprep.subr.mxu0 0.0
        %3888 = vmatpush1.msra.mxu0 0.0
        %3889 = vmatprep.subr.mxu0 0.0
        %3890 = vmatpush1.msra.mxu0 0.0
        %3891 = vmatprep.subr.mxu0 0.0
        %3892 = vmatpush1.msra.mxu0 0.0
        %3893 = vmatprep.subr.mxu0 0.0
        %3894 = vmatpush1.msra.mxu0 0.0
        %3895 = vmatprep.subr.mxu0 0.0
        %3896 = vmatpush1.msra.mxu0 0.0
        %3897 = vmatprep.subr.mxu0 0.0
        %3898 = vmatpush1.msra.mxu0 0.0
        %3899 = vmatprep.subr.mxu0 0.0
        %3900 = vmatpush1.msra.mxu0 0.0
        %3901 = vmatprep.subr.mxu0 0.0
        %3902 = vmatpush1.msra.mxu0 0.0
        %3903 = vmatprep.subr.mxu0 0.0
        %3904 = vmatpush1.msra.mxu0 0.0
        %3905 = vmatprep.mubr.f32.mxu0 0.0
        %3906 = vmatmul.mubr.f32.gmra.mrb[0].mxu0 %v3839
        %v3907 = vpop.f32.mrb[0].mxu0
        %v3908 = vadd.f32 0.0, %v3907
        %v3909 = vpop.f32.mrb[0].mxu0
        %v3910 = vadd.f32 0.0, %v3909
        %3911 = vdwg.mxu0
        %3912 = vmatprep.subr.mxu0 %v3831
        %3913 = vmatpush1.msra.mxu0 %v3830
        %3914 = vmatprep.subr.mxu0 0.0
        %3915 = vmatpush1.msra.mxu0 0.0
        %3916 = vmatprep.subr.mxu0 0.0
        %3917 = vmatpush1.msra.mxu0 0.0
        %3918 = vmatprep.subr.mxu0 0.0
        %3919 = vmatpush1.msra.mxu0 0.0
        %3920 = vmatprep.subr.mxu0 0.0
        %3921 = vmatpush1.msra.mxu0 0.0
        %3922 = vmatprep.subr.mxu0 0.0
        %3923 = vmatpush1.msra.mxu0 0.0
        %3924 = vmatprep.subr.mxu0 0.0
        %3925 = vmatpush1.msra.mxu0 0.0
        %3926 = vmatprep.subr.mxu0 0.0
        %3927 = vmatpush1.msra.mxu0 0.0
        %3928 = vmatprep.subr.mxu0 0.0
        %3929 = vmatpush1.msra.mxu0 0.0
        %3930 = vmatprep.subr.mxu0 0.0
        %3931 = vmatpush1.msra.mxu0 0.0
        %3932 = vmatprep.subr.mxu0 0.0
        %3933 = vmatpush1.msra.mxu0 0.0
        %3934 = vmatprep.subr.mxu0 0.0
        %3935 = vmatpush1.msra.mxu0 0.0
        %3936 = vmatprep.subr.mxu0 0.0
        %3937 = vmatpush1.msra.mxu0 0.0
        %3938 = vmatprep.subr.mxu0 0.0
        %3939 = vmatpush1.msra.mxu0 0.0
        %3940 = vmatprep.subr.mxu0 0.0
        %3941 = vmatpush1.msra.mxu0 0.0
        %3942 = vmatprep.subr.mxu0 0.0
        %3943 = vmatpush1.msra.mxu0 0.0
        %3944 = vmatprep.subr.mxu0 0.0
        %3945 = vmatpush1.msra.mxu0 0.0
        %3946 = vmatprep.subr.mxu0 0.0
        %3947 = vmatpush1.msra.mxu0 0.0
        %3948 = vmatprep.subr.mxu0 0.0
        %3949 = vmatpush1.msra.mxu0 0.0
        %3950 = vmatprep.subr.mxu0 0.0
        %3951 = vmatpush1.msra.mxu0 0.0
        %3952 = vmatprep.subr.mxu0 0.0
        %3953 = vmatpush1.msra.mxu0 0.0
        %3954 = vmatprep.subr.mxu0 0.0
        %3955 = vmatpush1.msra.mxu0 0.0
        %3956 = vmatprep.subr.mxu0 0.0
        %3957 = vmatpush1.msra.mxu0 0.0
        %3958 = vmatprep.subr.mxu0 0.0
        %3959 = vmatpush1.msra.mxu0 0.0
        %3960 = vmatprep.subr.mxu0 0.0
        %3961 = vmatpush1.msra.mxu0 0.0
        %3962 = vmatprep.subr.mxu0 0.0
        %3963 = vmatpush1.msra.mxu0 0.0
        %3964 = vmatprep.subr.mxu0 0.0
        %3965 = vmatpush1.msra.mxu0 0.0
        %3966 = vmatprep.subr.mxu0 0.0
        %3967 = vmatpush1.msra.mxu0 0.0
        %3968 = vmatprep.subr.mxu0 0.0
        %3969 = vmatpush1.msra.mxu0 0.0
        %3970 = vmatprep.subr.mxu0 0.0
        %3971 = vmatpush1.msra.mxu0 0.0
        %3972 = vmatprep.subr.mxu0 0.0
        %3973 = vmatpush1.msra.mxu0 0.0
        %3974 = vmatprep.subr.mxu0 0.0
        %3975 = vmatpush1.msra.mxu0 0.0
        %3976 = vmatprep.mubr.f32.mxu0 0.0
        %3977 = vmatmul.mubr.f32.gmra.mrb[0].mxu0 %v3839
        %v3978 = vpop.f32.mrb[0].mxu0
        %v3979 = vadd.f32 0.0, %v3978
        %v3980 = vpop.f32.mrb[0].mxu0
        %v3981 = vadd.f32 0.0, %v3980
        %3982 = vdwg.mxu0
        %3983 = vmatprep.subr.mxu0 %v3833
        %3984 = vmatpush1.msra.mxu0 %v3832
        %3985 = vmatprep.subr.mxu0 0.0
        %3986 = vmatpush1.msra.mxu0 0.0
        %3987 = vmatprep.subr.mxu0 0.0
        %3988 = vmatpush1.msra.mxu0 0.0
        %3989 = vmatprep.subr.mxu0 0.0
        %3990 = vmatpush1.msra.mxu0 0.0
        %3991 = vmatprep.subr.mxu0 0.0
        %3992 = vmatpush1.msra.mxu0 0.0
        %3993 = vmatprep.subr.mxu0 0.0
        %3994 = vmatpush1.msra.mxu0 0.0
        %3995 = vmatprep.subr.mxu0 0.0
        %3996 = vmatpush1.msra.mxu0 0.0
        %3997 = vmatprep.subr.mxu0 0.0
        %3998 = vmatpush1.msra.mxu0 0.0
        %3999 = vmatprep.subr.mxu0 0.0
        %4000 = vmatpush1.msra.mxu0 0.0
        %4001 = vmatprep.subr.mxu0 0.0
        %4002 = vmatpush1.msra.mxu0 0.0
        %4003 = vmatprep.subr.mxu0 0.0
        %4004 = vmatpush1.msra.mxu0 0.0
        %4005 = vmatprep.subr.mxu0 0.0
        %4006 = vmatpush1.msra.mxu0 0.0
        %4007 = vmatprep.subr.mxu0 0.0
        %4008 = vmatpush1.msra.mxu0 0.0
        %4009 = vmatprep.subr.mxu0 0.0
        %4010 = vmatpush1.msra.mxu0 0.0
        %4011 = vmatprep.subr.mxu0 0.0
        %4012 = vmatpush1.msra.mxu0 0.0
        %4013 = vmatprep.subr.mxu0 0.0
        %4014 = vmatpush1.msra.mxu0 0.0
        %4015 = vmatprep.subr.mxu0 0.0
        %4016 = vmatpush1.msra.mxu0 0.0
        %4017 = vmatprep.subr.mxu0 0.0
        %4018 = vmatpush1.msra.mxu0 0.0
        %4019 = vmatprep.subr.mxu0 0.0
        %4020 = vmatpush1.msra.mxu0 0.0
        %4021 = vmatprep.subr.mxu0 0.0
        %4022 = vmatpush1.msra.mxu0 0.0
        %4023 = vmatprep.subr.mxu0 0.0
        %4024 = vmatpush1.msra.mxu0 0.0
        %4025 = vmatprep.subr.mxu0 0.0
        %4026 = vmatpush1.msra.mxu0 0.0
        %4027 = vmatprep.subr.mxu0 0.0
        %4028 = vmatpush1.msra.mxu0 0.0
        %4029 = vmatprep.subr.mxu0 0.0
        %4030 = vmatpush1.msra.mxu0 0.0
        %4031 = vmatprep.subr.mxu0 0.0
        %4032 = vmatpush1.msra.mxu0 0.0
        %4033 = vmatprep.subr.mxu0 0.0
        %4034 = vmatpush1.msra.mxu0 0.0
        %4035 = vmatprep.subr.mxu0 0.0
        %4036 = vmatpush1.msra.mxu0 0.0
        %4037 = vmatprep.subr.mxu0 0.0
        %4038 = vmatpush1.msra.mxu0 0.0
        %4039 = vmatprep.subr.mxu0 0.0
        %4040 = vmatpush1.msra.mxu0 0.0
        %4041 = vmatprep.subr.mxu0 0.0
        %4042 = vmatpush1.msra.mxu0 0.0
        %4043 = vmatprep.subr.mxu0 0.0
        %4044 = vmatpush1.msra.mxu0 0.0
        %4045 = vmatprep.subr.mxu0 0.0
        %4046 = vmatpush1.msra.mxu0 0.0
        %4047 = vmatprep.mubr.f32.mxu0 0.0
        %4048 = vmatmul.mubr.f32.gmra.mrb[0].mxu0 %v3839
        %v4049 = vpop.f32.mrb[0].mxu0
        %v4050 = vadd.f32 0.0, %v4049
        %v4051 = vpop.f32.mrb[0].mxu0
        %v4052 = vadd.f32 0.0, %v4051
        %4053 = vdwg.mxu0
        %4054 = vmatprep.subr.mxu0 %v3835
        %4055 = vmatpush1.msra.mxu0 %v3834
        %4056 = vmatprep.subr.mxu0 0.0
        %4057 = vmatpush1.msra.mxu0 0.0
        %4058 = vmatprep.subr.mxu0 0.0
        %4059 = vmatpush1.msra.mxu0 0.0
        %4060 = vmatprep.subr.mxu0 0.0
        %4061 = vmatpush1.msra.mxu0 0.0
        %4062 = vmatprep.subr.mxu0 0.0
        %4063 = vmatpush1.msra.mxu0 0.0
        %4064 = vmatprep.subr.mxu0 0.0
        %4065 = vmatpush1.msra.mxu0 0.0
        %4066 = vmatprep.subr.mxu0 0.0
        %4067 = vmatpush1.msra.mxu0 0.0
        %4068 = vmatprep.subr.mxu0 0.0
        %4069 = vmatpush1.msra.mxu0 0.0
        %4070 = vmatprep.subr.mxu0 0.0
        %4071 = vmatpush1.msra.mxu0 0.0
        %4072 = vmatprep.subr.mxu0 0.0
        %4073 = vmatpush1.msra.mxu0 0.0
        %4074 = vmatprep.subr.mxu0 0.0
        %4075 = vmatpush1.msra.mxu0 0.0
        %4076 = vmatprep.subr.mxu0 0.0
        %4077 = vmatpush1.msra.mxu0 0.0
        %4078 = vmatprep.subr.mxu0 0.0
        %4079 = vmatpush1.msra.mxu0 0.0
        %4080 = vmatprep.subr.mxu0 0.0
        %4081 = vmatpush1.msra.mxu0 0.0
        %4082 = vmatprep.subr.mxu0 0.0
        %4083 = vmatpush1.msra.mxu0 0.0
        %4084 = vmatprep.subr.mxu0 0.0
        %4085 = vmatpush1.msra.mxu0 0.0
        %4086 = vmatprep.subr.mxu0 0.0
        %4087 = vmatpush1.msra.mxu0 0.0
        %4088 = vmatprep.subr.mxu0 0.0
        %4089 = vmatpush1.msra.mxu0 0.0
        %4090 = vmatprep.subr.mxu0 0.0
        %4091 = vmatpush1.msra.mxu0 0.0
        %4092 = vmatprep.subr.mxu0 0.0
        %4093 = vmatpush1.msra.mxu0 0.0
        %4094 = vmatprep.subr.mxu0 0.0
        %4095 = vmatpush1.msra.mxu0 0.0
        %4096 = vmatprep.subr.mxu0 0.0
        %4097 = vmatpush1.msra.mxu0 0.0
        %4098 = vmatprep.subr.mxu0 0.0
        %4099 = vmatpush1.msra.mxu0 0.0
        %4100 = vmatprep.subr.mxu0 0.0
        %4101 = vmatpush1.msra.mxu0 0.0
        %4102 = vmatprep.subr.mxu0 0.0
        %4103 = vmatpush1.msra.mxu0 0.0
        %4104 = vmatprep.subr.mxu0 0.0
        %4105 = vmatpush1.msra.mxu0 0.0
        %4106 = vmatprep.subr.mxu0 0.0
        %4107 = vmatpush1.msra.mxu0 0.0
        %4108 = vmatprep.subr.mxu0 0.0
        %4109 = vmatpush1.msra.mxu0 0.0
        %4110 = vmatprep.subr.mxu0 0.0
        %4111 = vmatpush1.msra.mxu0 0.0
        %4112 = vmatprep.subr.mxu0 0.0
        %4113 = vmatpush1.msra.mxu0 0.0
        %4114 = vmatprep.subr.mxu0 0.0
        %4115 = vmatpush1.msra.mxu0 0.0
        %4116 = vmatprep.subr.mxu0 0.0
        %4117 = vmatpush1.msra.mxu0 0.0
        %4118 = vmatprep.mubr.f32.mxu0 0.0
        %4119 = vmatmul.mubr.f32.gmra.mrb[0].mxu0 %v3839
        %v4120 = vpop.f32.mrb[0].mxu0
        %v4121 = vadd.f32 0.0, %v4120
        %v4122 = vpop.f32.mrb[0].mxu0
        %v4123 = vadd.f32 0.0, %v4122
        %4124 = vdwg.mxu0
        %v4126 = vsel %vm3837, %v3803, 0
        %4128 = vmatprep.subr.mxu0 %v3796
        %4129 = vmatpush1.msra.mxu0 %v3795
        %4130 = vmatprep.subr.mxu0 0.0
        %4131 = vmatpush1.msra.mxu0 0.0
        %4132 = vmatprep.subr.mxu0 0.0
        %4133 = vmatpush1.msra.mxu0 0.0
        %4134 = vmatprep.subr.mxu0 0.0
        %4135 = vmatpush1.msra.mxu0 0.0
        %4136 = vmatprep.subr.mxu0 0.0
        %4137 = vmatpush1.msra.mxu0 0.0
        %4138 = vmatprep.subr.mxu0 0.0
        %4139 = vmatpush1.msra.mxu0 0.0
        %4140 = vmatprep.subr.mxu0 0.0
        %4141 = vmatpush1.msra.mxu0 0.0
        %4142 = vmatprep.subr.mxu0 0.0
        %4143 = vmatpush1.msra.mxu0 0.0
        %4144 = vmatprep.subr.mxu0 0.0
        %4145 = vmatpush1.msra.mxu0 0.0
        %4146 = vmatprep.subr.mxu0 0.0
        %4147 = vmatpush1.msra.mxu0 0.0
        %4148 = vmatprep.subr.mxu0 0.0
        %4149 = vmatpush1.msra.mxu0 0.0
        %4150 = vmatprep.subr.mxu0 0.0
        %4151 = vmatpush1.msra.mxu0 0.0
        %4152 = vmatprep.subr.mxu0 0.0
        %4153 = vmatpush1.msra.mxu0 0.0
        %4154 = vmatprep.subr.mxu0 0.0
        %4155 = vmatpush1.msra.mxu0 0.0
        %4156 = vmatprep.subr.mxu0 0.0
        %4157 = vmatpush1.msra.mxu0 0.0
        %4158 = vmatprep.subr.mxu0 0.0
        %4159 = vmatpush1.msra.mxu0 0.0
        %4160 = vmatprep.subr.mxu0 0.0
        %4161 = vmatpush1.msra.mxu0 0.0
        %4162 = vmatprep.subr.mxu0 0.0
        %4163 = vmatpush1.msra.mxu0 0.0
        %4164 = vmatprep.subr.mxu0 0.0
        %4165 = vmatpush1.msra.mxu0 0.0
        %4166 = vmatprep.subr.mxu0 0.0
        %4167 = vmatpush1.msra.mxu0 0.0
        %4168 = vmatprep.subr.mxu0 0.0
        %4169 = vmatpush1.msra.mxu0 0.0
        %4170 = vmatprep.subr.mxu0 0.0
        %4171 = vmatpush1.msra.mxu0 0.0
        %4172 = vmatprep.subr.mxu0 0.0
        %4173 = vmatpush1.msra.mxu0 0.0
        %4174 = vmatprep.subr.mxu0 0.0
        %4175 = vmatpush1.msra.mxu0 0.0
        %4176 = vmatprep.subr.mxu0 0.0
        %4177 = vmatpush1.msra.mxu0 0.0
        %4178 = vmatprep.subr.mxu0 0.0
        %4179 = vmatpush1.msra.mxu0 0.0
        %4180 = vmatprep.subr.mxu0 0.0
        %4181 = vmatpush1.msra.mxu0 0.0
        %4182 = vmatprep.subr.mxu0 0.0
        %4183 = vmatpush1.msra.mxu0 0.0
        %4184 = vmatprep.subr.mxu0 0.0
        %4185 = vmatpush1.msra.mxu0 0.0
        %4186 = vmatprep.subr.mxu0 0.0
        %4187 = vmatpush1.msra.mxu0 0.0
        %4188 = vmatprep.subr.mxu0 0.0
        %4189 = vmatpush1.msra.mxu0 0.0
        %4190 = vmatprep.subr.mxu0 0.0
        %4191 = vmatpush1.msra.mxu0 0.0
        %4192 = vmatprep.mubr.f32.mxu0 0.0
        %4193 = vmatmul.mubr.f32.gmra.mrb[0].mxu0 %v4126
        %v4194 = vpop.f32.mrb[0].mxu0
        %v4195 = vadd.f32 %v3908, %v4194
        %v4196 = vpop.f32.mrb[0].mxu0
        %v4197 = vadd.f32 %v3910, %v4196
        %4198 = vdwg.mxu0
        %4199 = vmatprep.subr.mxu0 %v3798
        %4200 = vmatpush1.msra.mxu0 %v3797
        %4201 = vmatprep.subr.mxu0 0.0
        %4202 = vmatpush1.msra.mxu0 0.0
        %4203 = vmatprep.subr.mxu0 0.0
        %4204 = vmatpush1.msra.mxu0 0.0
        %4205 = vmatprep.subr.mxu0 0.0
        %4206 = vmatpush1.msra.mxu0 0.0
        %4207 = vmatprep.subr.mxu0 0.0
        %4208 = vmatpush1.msra.mxu0 0.0
        %4209 = vmatprep.subr.mxu0 0.0
        %4210 = vmatpush1.msra.mxu0 0.0
        %4211 = vmatprep.subr.mxu0 0.0
        %4212 = vmatpush1.msra.mxu0 0.0
        %4213 = vmatprep.subr.mxu0 0.0
        %4214 = vmatpush1.msra.mxu0 0.0
        %4215 = vmatprep.subr.mxu0 0.0
        %4216 = vmatpush1.msra.mxu0 0.0
        %4217 = vmatprep.subr.mxu0 0.0
        %4218 = vmatpush1.msra.mxu0 0.0
        %4219 = vmatprep.subr.mxu0 0.0
        %4220 = vmatpush1.msra.mxu0 0.0
        %4221 = vmatprep.subr.mxu0 0.0
        %4222 = vmatpush1.msra.mxu0 0.0
        %4223 = vmatprep.subr.mxu0 0.0
        %4224 = vmatpush1.msra.mxu0 0.0
        %4225 = vmatprep.subr.mxu0 0.0
        %4226 = vmatpush1.msra.mxu0 0.0
        %4227 = vmatprep.subr.mxu0 0.0
        %4228 = vmatpush1.msra.mxu0 0.0
        %4229 = vmatprep.subr.mxu0 0.0
        %4230 = vmatpush1.msra.mxu0 0.0
        %4231 = vmatprep.subr.mxu0 0.0
        %4232 = vmatpush1.msra.mxu0 0.0
        %4233 = vmatprep.subr.mxu0 0.0
        %4234 = vmatpush1.msra.mxu0 0.0
        %4235 = vmatprep.subr.mxu0 0.0
        %4236 = vmatpush1.msra.mxu0 0.0
        %4237 = vmatprep.subr.mxu0 0.0
        %4238 = vmatpush1.msra.mxu0 0.0
        %4239 = vmatprep.subr.mxu0 0.0
        %4240 = vmatpush1.msra.mxu0 0.0
        %4241 = vmatprep.subr.mxu0 0.0
        %4242 = vmatpush1.msra.mxu0 0.0
        %4243 = vmatprep.subr.mxu0 0.0
        %4244 = vmatpush1.msra.mxu0 0.0
        %4245 = vmatprep.subr.mxu0 0.0
        %4246 = vmatpush1.msra.mxu0 0.0
        %4247 = vmatprep.subr.mxu0 0.0
        %4248 = vmatpush1.msra.mxu0 0.0
        %4249 = vmatprep.subr.mxu0 0.0
        %4250 = vmatpush1.msra.mxu0 0.0
        %4251 = vmatprep.subr.mxu0 0.0
        %4252 = vmatpush1.msra.mxu0 0.0
        %4253 = vmatprep.subr.mxu0 0.0
        %4254 = vmatpush1.msra.mxu0 0.0
        %4255 = vmatprep.subr.mxu0 0.0
        %4256 = vmatpush1.msra.mxu0 0.0
        %4257 = vmatprep.subr.mxu0 0.0
        %4258 = vmatpush1.msra.mxu0 0.0
        %4259 = vmatprep.subr.mxu0 0.0
        %4260 = vmatpush1.msra.mxu0 0.0
        %4261 = vmatprep.subr.mxu0 0.0
        %4262 = vmatpush1.msra.mxu0 0.0
        %4263 = vmatprep.mubr.f32.mxu0 0.0
        %4264 = vmatmul.mubr.f32.gmra.mrb[0].mxu0 %v4126
        %v4265 = vpop.f32.mrb[0].mxu0
        %v4266 = vadd.f32 %v3979, %v4265
        %v4267 = vpop.f32.mrb[0].mxu0
        %v4268 = vadd.f32 %v3981, %v4267
        %4269 = vdwg.mxu0
        %4270 = vmatprep.subr.mxu0 %v3800
        %4271 = vmatpush1.msra.mxu0 %v3799
        %4272 = vmatprep.subr.mxu0 0.0
        %4273 = vmatpush1.msra.mxu0 0.0
        %4274 = vmatprep.subr.mxu0 0.0
        %4275 = vmatpush1.msra.mxu0 0.0
        %4276 = vmatprep.subr.mxu0 0.0
        %4277 = vmatpush1.msra.mxu0 0.0
        %4278 = vmatprep.subr.mxu0 0.0
        %4279 = vmatpush1.msra.mxu0 0.0
        %4280 = vmatprep.subr.mxu0 0.0
        %4281 = vmatpush1.msra.mxu0 0.0
        %4282 = vmatprep.subr.mxu0 0.0
        %4283 = vmatpush1.msra.mxu0 0.0
        %4284 = vmatprep.subr.mxu0 0.0
        %4285 = vmatpush1.msra.mxu0 0.0
        %4286 = vmatprep.subr.mxu0 0.0
        %4287 = vmatpush1.msra.mxu0 0.0
        %4288 = vmatprep.subr.mxu0 0.0
        %4289 = vmatpush1.msra.mxu0 0.0
        %4290 = vmatprep.subr.mxu0 0.0
        %4291 = vmatpush1.msra.mxu0 0.0
        %4292 = vmatprep.subr.mxu0 0.0
        %4293 = vmatpush1.msra.mxu0 0.0
        %4294 = vmatprep.subr.mxu0 0.0
        %4295 = vmatpush1.msra.mxu0 0.0
        %4296 = vmatprep.subr.mxu0 0.0
        %4297 = vmatpush1.msra.mxu0 0.0
        %4298 = vmatprep.subr.mxu0 0.0
        %4299 = vmatpush1.msra.mxu0 0.0
        %4300 = vmatprep.subr.mxu0 0.0
        %4301 = vmatpush1.msra.mxu0 0.0
        %4302 = vmatprep.subr.mxu0 0.0
        %4303 = vmatpush1.msra.mxu0 0.0
        %4304 = vmatprep.subr.mxu0 0.0
        %4305 = vmatpush1.msra.mxu0 0.0
        %4306 = vmatprep.subr.mxu0 0.0
        %4307 = vmatpush1.msra.mxu0 0.0
        %4308 = vmatprep.subr.mxu0 0.0
        %4309 = vmatpush1.msra.mxu0 0.0
        %4310 = vmatprep.subr.mxu0 0.0
        %4311 = vmatpush1.msra.mxu0 0.0
        %4312 = vmatprep.subr.mxu0 0.0
        %4313 = vmatpush1.msra.mxu0 0.0
        %4314 = vmatprep.subr.mxu0 0.0
        %4315 = vmatpush1.msra.mxu0 0.0
        %4316 = vmatprep.subr.mxu0 0.0
        %4317 = vmatpush1.msra.mxu0 0.0
        %4318 = vmatprep.subr.mxu0 0.0
        %4319 = vmatpush1.msra.mxu0 0.0
        %4320 = vmatprep.subr.mxu0 0.0
        %4321 = vmatpush1.msra.mxu0 0.0
        %4322 = vmatprep.subr.mxu0 0.0
        %4323 = vmatpush1.msra.mxu0 0.0
        %4324 = vmatprep.subr.mxu0 0.0
        %4325 = vmatpush1.msra.mxu0 0.0
        %4326 = vmatprep.subr.mxu0 0.0
        %4327 = vmatpush1.msra.mxu0 0.0
        %4328 = vmatprep.subr.mxu0 0.0
        %4329 = vmatpush1.msra.mxu0 0.0
        %4330 = vmatprep.subr.mxu0 0.0
        %4331 = vmatpush1.msra.mxu0 0.0
        %4332 = vmatprep.subr.mxu0 0.0
        %4333 = vmatpush1.msra.mxu0 0.0
        %4334 = vmatprep.mubr.f32.mxu0 0.0
        %4335 = vmatmul.mubr.f32.gmra.mrb[0].mxu0 %v4126
        %v4336 = vpop.f32.mrb[0].mxu0
        %v4337 = vadd.f32 %v4050, %v4336
        %v4338 = vpop.f32.mrb[0].mxu0
        %v4339 = vadd.f32 %v4052, %v4338
        %4340 = vdwg.mxu0
        %4341 = vmatprep.subr.mxu0 %v3802
        %4342 = vmatpush1.msra.mxu0 %v3801
        %4343 = vmatprep.subr.mxu0 0.0
        %4344 = vmatpush1.msra.mxu0 0.0
        %4345 = vmatprep.subr.mxu0 0.0
        %4346 = vmatpush1.msra.mxu0 0.0
        %4347 = vmatprep.subr.mxu0 0.0
        %4348 = vmatpush1.msra.mxu0 0.0
        %4349 = vmatprep.subr.mxu0 0.0
        %4350 = vmatpush1.msra.mxu0 0.0
        %4351 = vmatprep.subr.mxu0 0.0
        %4352 = vmatpush1.msra.mxu0 0.0
        %4353 = vmatprep.subr.mxu0 0.0
        %4354 = vmatpush1.msra.mxu0 0.0
        %4355 = vmatprep.subr.mxu0 0.0
        %4356 = vmatpush1.msra.mxu0 0.0
        %4357 = vmatprep.subr.mxu0 0.0
        %4358 = vmatpush1.msra.mxu0 0.0
        %4359 = vmatprep.subr.mxu0 0.0
        %4360 = vmatpush1.msra.mxu0 0.0
        %4361 = vmatprep.subr.mxu0 0.0
        %4362 = vmatpush1.msra.mxu0 0.0
        %4363 = vmatprep.subr.mxu0 0.0
        %4364 = vmatpush1.msra.mxu0 0.0
        %4365 = vmatprep.subr.mxu0 0.0
        %4366 = vmatpush1.msra.mxu0 0.0
        %4367 = vmatprep.subr.mxu0 0.0
        %4368 = vmatpush1.msra.mxu0 0.0
        %4369 = vmatprep.subr.mxu0 0.0
        %4370 = vmatpush1.msra.mxu0 0.0
        %4371 = vmatprep.subr.mxu0 0.0
        %4372 = vmatpush1.msra.mxu0 0.0
        %4373 = vmatprep.subr.mxu0 0.0
        %4374 = vmatpush1.msra.mxu0 0.0
        %4375 = vmatprep.subr.mxu0 0.0
        %4376 = vmatpush1.msra.mxu0 0.0
        %4377 = vmatprep.subr.mxu0 0.0
        %4378 = vmatpush1.msra.mxu0 0.0
        %4379 = vmatprep.subr.mxu0 0.0
        %4380 = vmatpush1.msra.mxu0 0.0
        %4381 = vmatprep.subr.mxu0 0.0
        %4382 = vmatpush1.msra.mxu0 0.0
        %4383 = vmatprep.subr.mxu0 0.0
        %4384 = vmatpush1.msra.mxu0 0.0
        %4385 = vmatprep.subr.mxu0 0.0
        %4386 = vmatpush1.msra.mxu0 0.0
        %4387 = vmatprep.subr.mxu0 0.0
        %4388 = vmatpush1.msra.mxu0 0.0
        %4389 = vmatprep.subr.mxu0 0.0
        %4390 = vmatpush1.msra.mxu0 0.0
        %4391 = vmatprep.subr.mxu0 0.0
        %4392 = vmatpush1.msra.mxu0 0.0
        %4393 = vmatprep.subr.mxu0 0.0
        %4394 = vmatpush1.msra.mxu0 0.0
        %4395 = vmatprep.subr.mxu0 0.0
        %4396 = vmatpush1.msra.mxu0 0.0
        %4397 = vmatprep.subr.mxu0 0.0
        %4398 = vmatpush1.msra.mxu0 0.0
        %4399 = vmatprep.subr.mxu0 0.0
        %4400 = vmatpush1.msra.mxu0 0.0
        %4401 = vmatprep.subr.mxu0 0.0
        %4402 = vmatpush1.msra.mxu0 0.0
        %4403 = vmatprep.subr.mxu0 0.0
        %4404 = vmatpush1.msra.mxu0 0.0
        %4405 = vmatprep.mubr.f32.mxu0 0.0
        %4406 = vmatmul.mubr.f32.gmra.mrb[0].mxu0 %v4126
        %v4407 = vpop.f32.mrb[0].mxu0
        %v4408 = vadd.f32 %v4121, %v4407
        %v4409 = vpop.f32.mrb[0].mxu0
        %v4410 = vadd.f32 %v4123, %v4409
        %4411 = vdwg.mxu0
        %4412 = vrot.lane.b32.xlu0 %v3763, 31
        %v4413 = vpop.permute.xlu0 %4412
        %4414 = vrot.lane.b32.xlu0 %v3764, 31
        %v4415 = vpop.permute.xlu0 %4414
        %4416 = vrot.lane.b32.xlu0 %v3765, 31
        %v4417 = vpop.permute.xlu0 %4416
        %4418 = vrot.lane.b32.xlu0 %v3766, 31
        %v4419 = vpop.permute.xlu0 %4418
        %4420 = vrot.lane.b32.xlu0 %v3767, 31
        %v4421 = vpop.permute.xlu0 %4420
        %4422 = vrot.lane.b32.xlu0 %v3768, 31
        %v4423 = vpop.permute.xlu0 %4422
        %4424 = vrot.lane.b32.xlu0 %v3769, 31
        %v4425 = vpop.permute.xlu0 %4424
        %4426 = vrot.lane.b32.xlu0 %v3770, 31
        %v4427 = vpop.permute.xlu0 %4426
        %v4428 = vsel %vm1055, %v4425, %v4427
        %v4429 = vsel %vm1055, %v4423, %v4425
        %v4430 = vsel %vm1055, %v4421, %v4423
        %v4431 = vsel %vm1055, %v4419, %v4421
        %v4432 = vsel %vm1055, %v4417, %v4419
        %v4433 = vsel %vm1055, %v4415, %v4417
        %v4434 = vsel %vm1055, %v4413, %v4415
        %v4435 = vsel %vm1055, %v4427, %v4413
        %v4436 = vmul.f32 %v4435, %v1079
        %v4437 = vmul.f32 %v4434, %v1083
        %v4438 = vmul.f32 %v4433, %v1087
        %v4439 = vmul.f32 %v4432, %v1091
        %v4440 = vmul.f32 %v4431, %v1095
        %v4441 = vmul.f32 %v4430, %v1099
        %v4442 = vmul.f32 %v4429, %v1103
        %v4443 = vmul.f32 %v4428, %v1107
        %v4444 = vld [vmem:[%s4 + $0x10] sm:$0xff]
        %v4446 = vsel %vm3837, %v4444, 0
        %4448 = vmatprep.subr.mxu0 %v4437
        %4449 = vmatpush1.msra.mxu0 %v4436
        %4450 = vmatprep.subr.mxu0 0.0
        %4451 = vmatpush1.msra.mxu0 0.0
        %4452 = vmatprep.subr.mxu0 0.0
        %4453 = vmatpush1.msra.mxu0 0.0
        %4454 = vmatprep.subr.mxu0 0.0
        %4455 = vmatpush1.msra.mxu0 0.0
        %4456 = vmatprep.subr.mxu0 0.0
        %4457 = vmatpush1.msra.mxu0 0.0
        %4458 = vmatprep.subr.mxu0 0.0
        %4459 = vmatpush1.msra.mxu0 0.0
        %4460 = vmatprep.subr.mxu0 0.0
        %4461 = vmatpush1.msra.mxu0 0.0
        %4462 = vmatprep.subr.mxu0 0.0
        %4463 = vmatpush1.msra.mxu0 0.0
        %4464 = vmatprep.subr.mxu0 0.0
        %4465 = vmatpush1.msra.mxu0 0.0
        %4466 = vmatprep.subr.mxu0 0.0
        %4467 = vmatpush1.msra.mxu0 0.0
        %4468 = vmatprep.subr.mxu0 0.0
        %4469 = vmatpush1.msra.mxu0 0.0
        %4470 = vmatprep.subr.mxu0 0.0
        %4471 = vmatpush1.msra.mxu0 0.0
        %4472 = vmatprep.subr.mxu0 0.0
        %4473 = vmatpush1.msra.mxu0 0.0
        %4474 = vmatprep.subr.mxu0 0.0
        %4475 = vmatpush1.msra.mxu0 0.0
        %4476 = vmatprep.subr.mxu0 0.0
        %4477 = vmatpush1.msra.mxu0 0.0
        %4478 = vmatprep.subr.mxu0 0.0
        %4479 = vmatpush1.msra.mxu0 0.0
        %4480 = vmatprep.subr.mxu0 0.0
        %4481 = vmatpush1.msra.mxu0 0.0
        %4482 = vmatprep.subr.mxu0 0.0
        %4483 = vmatpush1.msra.mxu0 0.0
        %4484 = vmatprep.subr.mxu0 0.0
        %4485 = vmatpush1.msra.mxu0 0.0
        %4486 = vmatprep.subr.mxu0 0.0
        %4487 = vmatpush1.msra.mxu0 0.0
        %4488 = vmatprep.subr.mxu0 0.0
        %4489 = vmatpush1.msra.mxu0 0.0
        %4490 = vmatprep.subr.mxu0 0.0
        %4491 = vmatpush1.msra.mxu0 0.0
        %4492 = vmatprep.subr.mxu0 0.0
        %4493 = vmatpush1.msra.mxu0 0.0
        %4494 = vmatprep.subr.mxu0 0.0
        %4495 = vmatpush1.msra.mxu0 0.0
        %4496 = vmatprep.subr.mxu0 0.0
        %4497 = vmatpush1.msra.mxu0 0.0
        %4498 = vmatprep.subr.mxu0 0.0
        %4499 = vmatpush1.msra.mxu0 0.0
        %4500 = vmatprep.subr.mxu0 0.0
        %4501 = vmatpush1.msra.mxu0 0.0
        %4502 = vmatprep.subr.mxu0 0.0
        %4503 = vmatpush1.msra.mxu0 0.0
        %4504 = vmatprep.subr.mxu0 0.0
        %4505 = vmatpush1.msra.mxu0 0.0
        %4506 = vmatprep.subr.mxu0 0.0
        %4507 = vmatpush1.msra.mxu0 0.0
        %4508 = vmatprep.subr.mxu0 0.0
        %4509 = vmatpush1.msra.mxu0 0.0
        %4510 = vmatprep.subr.mxu0 0.0
        %4511 = vmatpush1.msra.mxu0 0.0
        %4512 = vmatprep.mubr.f32.mxu0 0.0
        %4513 = vmatmul.mubr.f32.gmra.mrb[0].mxu0 %v4446
        %v4514 = vpop.f32.mrb[0].mxu0
        %v4515 = vadd.f32 0.0, %v4514
        %v4516 = vpop.f32.mrb[0].mxu0
        %v4517 = vadd.f32 0.0, %v4516
        %4518 = vdwg.mxu0
        %4519 = vmatprep.subr.mxu0 %v4439
        %4520 = vmatpush1.msra.mxu0 %v4438
        %4521 = vmatprep.subr.mxu0 0.0
        %4522 = vmatpush1.msra.mxu0 0.0
        %4523 = vmatprep.subr.mxu0 0.0
        %4524 = vmatpush1.msra.mxu0 0.0
        %4525 = vmatprep.subr.mxu0 0.0
        %4526 = vmatpush1.msra.mxu0 0.0
        %4527 = vmatprep.subr.mxu0 0.0
        %4528 = vmatpush1.msra.mxu0 0.0
        %4529 = vmatprep.subr.mxu0 0.0
        %4530 = vmatpush1.msra.mxu0 0.0
        %4531 = vmatprep.subr.mxu0 0.0
        %4532 = vmatpush1.msra.mxu0 0.0
        %4533 = vmatprep.subr.mxu0 0.0
        %4534 = vmatpush1.msra.mxu0 0.0
        %4535 = vmatprep.subr.mxu0 0.0
        %4536 = vmatpush1.msra.mxu0 0.0
        %4537 = vmatprep.subr.mxu0 0.0
        %4538 = vmatpush1.msra.mxu0 0.0
        %4539 = vmatprep.subr.mxu0 0.0
        %4540 = vmatpush1.msra.mxu0 0.0
        %4541 = vmatprep.subr.mxu0 0.0
        %4542 = vmatpush1.msra.mxu0 0.0
        %4543 = vmatprep.subr.mxu0 0.0
        %4544 = vmatpush1.msra.mxu0 0.0
        %4545 = vmatprep.subr.mxu0 0.0
        %4546 = vmatpush1.msra.mxu0 0.0
        %4547 = vmatprep.subr.mxu0 0.0
        %4548 = vmatpush1.msra.mxu0 0.0
        %4549 = vmatprep.subr.mxu0 0.0
        %4550 = vmatpush1.msra.mxu0 0.0
        %4551 = vmatprep.subr.mxu0 0.0
        %4552 = vmatpush1.msra.mxu0 0.0
        %4553 = vmatprep.subr.mxu0 0.0
        %4554 = vmatpush1.msra.mxu0 0.0
        %4555 = vmatprep.subr.mxu0 0.0
        %4556 = vmatpush1.msra.mxu0 0.0
        %4557 = vmatprep.subr.mxu0 0.0
        %4558 = vmatpush1.msra.mxu0 0.0
        %4559 = vmatprep.subr.mxu0 0.0
        %4560 = vmatpush1.msra.mxu0 0.0
        %4561 = vmatprep.subr.mxu0 0.0
        %4562 = vmatpush1.msra.mxu0 0.0
        %4563 = vmatprep.subr.mxu0 0.0
        %4564 = vmatpush1.msra.mxu0 0.0
        %4565 = vmatprep.subr.mxu0 0.0
        %4566 = vmatpush1.msra.mxu0 0.0
        %4567 = vmatprep.subr.mxu0 0.0
        %4568 = vmatpush1.msra.mxu0 0.0
        %4569 = vmatprep.subr.mxu0 0.0
        %4570 = vmatpush1.msra.mxu0 0.0
        %4571 = vmatprep.subr.mxu0 0.0
        %4572 = vmatpush1.msra.mxu0 0.0
        %4573 = vmatprep.subr.mxu0 0.0
        %4574 = vmatpush1.msra.mxu0 0.0
        %4575 = vmatprep.subr.mxu0 0.0
        %4576 = vmatpush1.msra.mxu0 0.0
        %4577 = vmatprep.subr.mxu0 0.0
        %4578 = vmatpush1.msra.mxu0 0.0
        %4579 = vmatprep.subr.mxu0 0.0
        %4580 = vmatpush1.msra.mxu0 0.0
        %4581 = vmatprep.subr.mxu0 0.0
        %4582 = vmatpush1.msra.mxu0 0.0
        %4583 = vmatprep.mubr.f32.mxu0 0.0
        %4584 = vmatmul.mubr.f32.gmra.mrb[0].mxu0 %v4446
        %v4585 = vpop.f32.mrb[0].mxu0
        %v4586 = vadd.f32 0.0, %v4585
        %v4587 = vpop.f32.mrb[0].mxu0
        %v4588 = vadd.f32 0.0, %v4587
        %4589 = vdwg.mxu0
        %4590 = vmatprep.subr.mxu0 %v4441
        %4591 = vmatpush1.msra.mxu0 %v4440
        %4592 = vmatprep.subr.mxu0 0.0
        %4593 = vmatpush1.msra.mxu0 0.0
        %4594 = vmatprep.subr.mxu0 0.0
        %4595 = vmatpush1.msra.mxu0 0.0
        %4596 = vmatprep.subr.mxu0 0.0
        %4597 = vmatpush1.msra.mxu0 0.0
        %4598 = vmatprep.subr.mxu0 0.0
        %4599 = vmatpush1.msra.mxu0 0.0
        %4600 = vmatprep.subr.mxu0 0.0
        %4601 = vmatpush1.msra.mxu0 0.0
        %4602 = vmatprep.subr.mxu0 0.0
        %4603 = vmatpush1.msra.mxu0 0.0
        %4604 = vmatprep.subr.mxu0 0.0
        %4605 = vmatpush1.msra.mxu0 0.0
        %4606 = vmatprep.subr.mxu0 0.0
        %4607 = vmatpush1.msra.mxu0 0.0
        %4608 = vmatprep.subr.mxu0 0.0
        %4609 = vmatpush1.msra.mxu0 0.0
        %4610 = vmatprep.subr.mxu0 0.0
        %4611 = vmatpush1.msra.mxu0 0.0
        %4612 = vmatprep.subr.mxu0 0.0
        %4613 = vmatpush1.msra.mxu0 0.0
        %4614 = vmatprep.subr.mxu0 0.0
        %4615 = vmatpush1.msra.mxu0 0.0
        %4616 = vmatprep.subr.mxu0 0.0
        %4617 = vmatpush1.msra.mxu0 0.0
        %4618 = vmatprep.subr.mxu0 0.0
        %4619 = vmatpush1.msra.mxu0 0.0
        %4620 = vmatprep.subr.mxu0 0.0
        %4621 = vmatpush1.msra.mxu0 0.0
        %4622 = vmatprep.subr.mxu0 0.0
        %4623 = vmatpush1.msra.mxu0 0.0
        %4624 = vmatprep.subr.mxu0 0.0
        %4625 = vmatpush1.msra.mxu0 0.0
        %4626 = vmatprep.subr.mxu0 0.0
        %4627 = vmatpush1.msra.mxu0 0.0
        %4628 = vmatprep.subr.mxu0 0.0
        %4629 = vmatpush1.msra.mxu0 0.0
        %4630 = vmatprep.subr.mxu0 0.0
        %4631 = vmatpush1.msra.mxu0 0.0
        %4632 = vmatprep.subr.mxu0 0.0
        %4633 = vmatpush1.msra.mxu0 0.0
        %4634 = vmatprep.subr.mxu0 0.0
        %4635 = vmatpush1.msra.mxu0 0.0
        %4636 = vmatprep.subr.mxu0 0.0
        %4637 = vmatpush1.msra.mxu0 0.0
        %4638 = vmatprep.subr.mxu0 0.0
        %4639 = vmatpush1.msra.mxu0 0.0
        %4640 = vmatprep.subr.mxu0 0.0
        %4641 = vmatpush1.msra.mxu0 0.0
        %4642 = vmatprep.subr.mxu0 0.0
        %4643 = vmatpush1.msra.mxu0 0.0
        %4644 = vmatprep.subr.mxu0 0.0
        %4645 = vmatpush1.msra.mxu0 0.0
        %4646 = vmatprep.subr.mxu0 0.0
        %4647 = vmatpush1.msra.mxu0 0.0
        %4648 = vmatprep.subr.mxu0 0.0
        %4649 = vmatpush1.msra.mxu0 0.0
        %4650 = vmatprep.subr.mxu0 0.0
        %4651 = vmatpush1.msra.mxu0 0.0
        %4652 = vmatprep.subr.mxu0 0.0
        %4653 = vmatpush1.msra.mxu0 0.0
        %4654 = vmatprep.mubr.f32.mxu0 0.0
        %4655 = vmatmul.mubr.f32.gmra.mrb[0].mxu0 %v4446
        %v4656 = vpop.f32.mrb[0].mxu0
        %v4657 = vadd.f32 0.0, %v4656
        %v4658 = vpop.f32.mrb[0].mxu0
        %v4659 = vadd.f32 0.0, %v4658
        %4660 = vdwg.mxu0
        %4661 = vmatprep.subr.mxu0 %v4443
        %4662 = vmatpush1.msra.mxu0 %v4442
        %4663 = vmatprep.subr.mxu0 0.0
        %4664 = vmatpush1.msra.mxu0 0.0
        %4665 = vmatprep.subr.mxu0 0.0
        %4666 = vmatpush1.msra.mxu0 0.0
        %4667 = vmatprep.subr.mxu0 0.0
        %4668 = vmatpush1.msra.mxu0 0.0
        %4669 = vmatprep.subr.mxu0 0.0
        %4670 = vmatpush1.msra.mxu0 0.0
        %4671 = vmatprep.subr.mxu0 0.0
        %4672 = vmatpush1.msra.mxu0 0.0
        %4673 = vmatprep.subr.mxu0 0.0
        %4674 = vmatpush1.msra.mxu0 0.0
        %4675 = vmatprep.subr.mxu0 0.0
        %4676 = vmatpush1.msra.mxu0 0.0
        %4677 = vmatprep.subr.mxu0 0.0
        %4678 = vmatpush1.msra.mxu0 0.0
        %4679 = vmatprep.subr.mxu0 0.0
        %4680 = vmatpush1.msra.mxu0 0.0
        %4681 = vmatprep.subr.mxu0 0.0
        %4682 = vmatpush1.msra.mxu0 0.0
        %4683 = vmatprep.subr.mxu0 0.0
        %4684 = vmatpush1.msra.mxu0 0.0
        %4685 = vmatprep.subr.mxu0 0.0
        %4686 = vmatpush1.msra.mxu0 0.0
        %4687 = vmatprep.subr.mxu0 0.0
        %4688 = vmatpush1.msra.mxu0 0.0
        %4689 = vmatprep.subr.mxu0 0.0
        %4690 = vmatpush1.msra.mxu0 0.0
        %4691 = vmatprep.subr.mxu0 0.0
        %4692 = vmatpush1.msra.mxu0 0.0
        %4693 = vmatprep.subr.mxu0 0.0
        %4694 = vmatpush1.msra.mxu0 0.0
        %4695 = vmatprep.subr.mxu0 0.0
        %4696 = vmatpush1.msra.mxu0 0.0
        %4697 = vmatprep.subr.mxu0 0.0
        %4698 = vmatpush1.msra.mxu0 0.0
        %4699 = vmatprep.subr.mxu0 0.0
        %4700 = vmatpush1.msra.mxu0 0.0
        %4701 = vmatprep.subr.mxu0 0.0
        %4702 = vmatpush1.msra.mxu0 0.0
        %4703 = vmatprep.subr.mxu0 0.0
        %4704 = vmatpush1.msra.mxu0 0.0
        %4705 = vmatprep.subr.mxu0 0.0
        %4706 = vmatpush1.msra.mxu0 0.0
        %4707 = vmatprep.subr.mxu0 0.0
        %4708 = vmatpush1.msra.mxu0 0.0
        %4709 = vmatprep.subr.mxu0 0.0
        %4710 = vmatpush1.msra.mxu0 0.0
        %4711 = vmatprep.subr.mxu0 0.0
        %4712 = vmatpush1.msra.mxu0 0.0
        %4713 = vmatprep.subr.mxu0 0.0
        %4714 = vmatpush1.msra.mxu0 0.0
        %4715 = vmatprep.subr.mxu0 0.0
        %4716 = vmatpush1.msra.mxu0 0.0
        %4717 = vmatprep.subr.mxu0 0.0
        %4718 = vmatpush1.msra.mxu0 0.0
        %4719 = vmatprep.subr.mxu0 0.0
        %4720 = vmatpush1.msra.mxu0 0.0
        %4721 = vmatprep.subr.mxu0 0.0
        %4722 = vmatpush1.msra.mxu0 0.0
        %4723 = vmatprep.subr.mxu0 0.0
        %4724 = vmatpush1.msra.mxu0 0.0
        %4725 = vmatprep.mubr.f32.mxu0 0.0
        %4726 = vmatmul.mubr.f32.gmra.mrb[0].mxu0 %v4446
        %v4727 = vpop.f32.mrb[0].mxu0
        %v4728 = vadd.f32 0.0, %v4727
        %v4729 = vpop.f32.mrb[0].mxu0
        %v4730 = vadd.f32 0.0, %v4729
        %4731 = vdwg.mxu0
        %v4732 = vadd.f32 %v4195, %v4515
        %v4733 = vadd.f32 %v4197, %v4517
        %v4734 = vadd.f32 %v4266, %v4586
        %v4735 = vadd.f32 %v4268, %v4588
        %v4736 = vadd.f32 %v4337, %v4657
        %v4737 = vadd.f32 %v4339, %v4659
        %v4738 = vadd.f32 %v4408, %v4728
        %v4739 = vadd.f32 %v4410, %v4730
        %4740 = vrot.lane.b32.xlu0 %v3763, 1
        %v4741 = vpop.permute.xlu0 %4740
        %4742 = vrot.lane.b32.xlu0 %v3764, 1
        %v4743 = vpop.permute.xlu0 %4742
        %4744 = vrot.lane.b32.xlu0 %v3765, 1
        %v4745 = vpop.permute.xlu0 %4744
        %4746 = vrot.lane.b32.xlu0 %v3766, 1
        %v4747 = vpop.permute.xlu0 %4746
        %4748 = vrot.lane.b32.xlu0 %v3767, 1
        %v4749 = vpop.permute.xlu0 %4748
        %4750 = vrot.lane.b32.xlu0 %v3768, 1
        %v4751 = vpop.permute.xlu0 %4750
        %4752 = vrot.lane.b32.xlu0 %v3769, 1
        %v4753 = vpop.permute.xlu0 %4752
        %4754 = vrot.lane.b32.xlu0 %v3770, 1
        %v4755 = vpop.permute.xlu0 %4754
        %v4756 = vsel %vm1452, %v4753, %v4755
        %v4757 = vsel %vm1452, %v4751, %v4753
        %v4758 = vsel %vm1452, %v4749, %v4751
        %v4759 = vsel %vm1452, %v4747, %v4749
        %v4760 = vsel %vm1452, %v4745, %v4747
        %v4761 = vsel %vm1452, %v4743, %v4745
        %v4762 = vsel %vm1452, %v4741, %v4743
        %v4763 = vsel %vm1452, %v4755, %v4741
        %v4764 = vmul.f32 %v4763, %v1476
        %v4765 = vmul.f32 %v4762, %v1480
        %v4766 = vmul.f32 %v4761, %v1484
        %v4767 = vmul.f32 %v4760, %v1488
        %v4768 = vmul.f32 %v4759, %v1492
        %v4769 = vmul.f32 %v4758, %v1496
        %v4770 = vmul.f32 %v4757, %v1500
        %v4771 = vmul.f32 %v4756, %v1504
        %v4772 = vld [vmem:[%s4 + $0x18] sm:$0xff]
        %v4774 = vsel %vm3837, %v4772, 0
        %4776 = vmatprep.subr.mxu0 %v4765
        %4777 = vmatpush1.msra.mxu0 %v4764
        %4778 = vmatprep.subr.mxu0 0.0
        %4779 = vmatpush1.msra.mxu0 0.0
        %4780 = vmatprep.subr.mxu0 0.0
        %4781 = vmatpush1.msra.mxu0 0.0
        %4782 = vmatprep.subr.mxu0 0.0
        %4783 = vmatpush1.msra.mxu0 0.0
        %4784 = vmatprep.subr.mxu0 0.0
        %4785 = vmatpush1.msra.mxu0 0.0
        %4786 = vmatprep.subr.mxu0 0.0
        %4787 = vmatpush1.msra.mxu0 0.0
        %4788 = vmatprep.subr.mxu0 0.0
        %4789 = vmatpush1.msra.mxu0 0.0
        %4790 = vmatprep.subr.mxu0 0.0
        %4791 = vmatpush1.msra.mxu0 0.0
        %4792 = vmatprep.subr.mxu0 0.0
        %4793 = vmatpush1.msra.mxu0 0.0
        %4794 = vmatprep.subr.mxu0 0.0
        %4795 = vmatpush1.msra.mxu0 0.0
        %4796 = vmatprep.subr.mxu0 0.0
        %4797 = vmatpush1.msra.mxu0 0.0
        %4798 = vmatprep.subr.mxu0 0.0
        %4799 = vmatpush1.msra.mxu0 0.0
        %4800 = vmatprep.subr.mxu0 0.0
        %4801 = vmatpush1.msra.mxu0 0.0
        %4802 = vmatprep.subr.mxu0 0.0
        %4803 = vmatpush1.msra.mxu0 0.0
        %4804 = vmatprep.subr.mxu0 0.0
        %4805 = vmatpush1.msra.mxu0 0.0
        %4806 = vmatprep.subr.mxu0 0.0
        %4807 = vmatpush1.msra.mxu0 0.0
        %4808 = vmatprep.subr.mxu0 0.0
        %4809 = vmatpush1.msra.mxu0 0.0
        %4810 = vmatprep.subr.mxu0 0.0
        %4811 = vmatpush1.msra.mxu0 0.0
        %4812 = vmatprep.subr.mxu0 0.0
        %4813 = vmatpush1.msra.mxu0 0.0
        %4814 = vmatprep.subr.mxu0 0.0
        %4815 = vmatpush1.msra.mxu0 0.0
        %4816 = vmatprep.subr.mxu0 0.0
        %4817 = vmatpush1.msra.mxu0 0.0
        %4818 = vmatprep.subr.mxu0 0.0
        %4819 = vmatpush1.msra.mxu0 0.0
        %4820 = vmatprep.subr.mxu0 0.0
        %4821 = vmatpush1.msra.mxu0 0.0
        %4822 = vmatprep.subr.mxu0 0.0
        %4823 = vmatpush1.msra.mxu0 0.0
        %4824 = vmatprep.subr.mxu0 0.0
        %4825 = vmatpush1.msra.mxu0 0.0
        %4826 = vmatprep.subr.mxu0 0.0
        %4827 = vmatpush1.msra.mxu0 0.0
        %4828 = vmatprep.subr.mxu0 0.0
        %4829 = vmatpush1.msra.mxu0 0.0
        %4830 = vmatprep.subr.mxu0 0.0
        %4831 = vmatpush1.msra.mxu0 0.0
        %4832 = vmatprep.subr.mxu0 0.0
        %4833 = vmatpush1.msra.mxu0 0.0
        %4834 = vmatprep.subr.mxu0 0.0
        %4835 = vmatpush1.msra.mxu0 0.0
        %4836 = vmatprep.subr.mxu0 0.0
        %4837 = vmatpush1.msra.mxu0 0.0
        %4838 = vmatprep.subr.mxu0 0.0
        %4839 = vmatpush1.msra.mxu0 0.0
        %4840 = vmatprep.mubr.f32.mxu0 0.0
        %4841 = vmatmul.mubr.f32.gmra.mrb[0].mxu0 %v4774
        %v4842 = vpop.f32.mrb[0].mxu0
        %v4843 = vadd.f32 0.0, %v4842
        %v4844 = vpop.f32.mrb[0].mxu0
        %v4845 = vadd.f32 0.0, %v4844
        %4846 = vdwg.mxu0
        %4847 = vmatprep.subr.mxu0 %v4767
        %4848 = vmatpush1.msra.mxu0 %v4766
        %4849 = vmatprep.subr.mxu0 0.0
        %4850 = vmatpush1.msra.mxu0 0.0
        %4851 = vmatprep.subr.mxu0 0.0
        %4852 = vmatpush1.msra.mxu0 0.0
        %4853 = vmatprep.subr.mxu0 0.0
        %4854 = vmatpush1.msra.mxu0 0.0
        %4855 = vmatprep.subr.mxu0 0.0
        %4856 = vmatpush1.msra.mxu0 0.0
        %4857 = vmatprep.subr.mxu0 0.0
        %4858 = vmatpush1.msra.mxu0 0.0
        %4859 = vmatprep.subr.mxu0 0.0
        %4860 = vmatpush1.msra.mxu0 0.0
        %4861 = vmatprep.subr.mxu0 0.0
        %4862 = vmatpush1.msra.mxu0 0.0
        %4863 = vmatprep.subr.mxu0 0.0
        %4864 = vmatpush1.msra.mxu0 0.0
        %4865 = vmatprep.subr.mxu0 0.0
        %4866 = vmatpush1.msra.mxu0 0.0
        %4867 = vmatprep.subr.mxu0 0.0
        %4868 = vmatpush1.msra.mxu0 0.0
        %4869 = vmatprep.subr.mxu0 0.0
        %4870 = vmatpush1.msra.mxu0 0.0
        %4871 = vmatprep.subr.mxu0 0.0
        %4872 = vmatpush1.msra.mxu0 0.0
        %4873 = vmatprep.subr.mxu0 0.0
        %4874 = vmatpush1.msra.mxu0 0.0
        %4875 = vmatprep.subr.mxu0 0.0
        %4876 = vmatpush1.msra.mxu0 0.0
        %4877 = vmatprep.subr.mxu0 0.0
        %4878 = vmatpush1.msra.mxu0 0.0
        %4879 = vmatprep.subr.mxu0 0.0
        %4880 = vmatpush1.msra.mxu0 0.0
        %4881 = vmatprep.subr.mxu0 0.0
        %4882 = vmatpush1.msra.mxu0 0.0
        %4883 = vmatprep.subr.mxu0 0.0
        %4884 = vmatpush1.msra.mxu0 0.0
        %4885 = vmatprep.subr.mxu0 0.0
        %4886 = vmatpush1.msra.mxu0 0.0
        %4887 = vmatprep.subr.mxu0 0.0
        %4888 = vmatpush1.msra.mxu0 0.0
        %4889 = vmatprep.subr.mxu0 0.0
        %4890 = vmatpush1.msra.mxu0 0.0
        %4891 = vmatprep.subr.mxu0 0.0
        %4892 = vmatpush1.msra.mxu0 0.0
        %4893 = vmatprep.subr.mxu0 0.0
        %4894 = vmatpush1.msra.mxu0 0.0
        %4895 = vmatprep.subr.mxu0 0.0
        %4896 = vmatpush1.msra.mxu0 0.0
        %4897 = vmatprep.subr.mxu0 0.0
        %4898 = vmatpush1.msra.mxu0 0.0
        %4899 = vmatprep.subr.mxu0 0.0
        %4900 = vmatpush1.msra.mxu0 0.0
        %4901 = vmatprep.subr.mxu0 0.0
        %4902 = vmatpush1.msra.mxu0 0.0
        %4903 = vmatprep.subr.mxu0 0.0
        %4904 = vmatpush1.msra.mxu0 0.0
        %4905 = vmatprep.subr.mxu0 0.0
        %4906 = vmatpush1.msra.mxu0 0.0
        %4907 = vmatprep.subr.mxu0 0.0
        %4908 = vmatpush1.msra.mxu0 0.0
        %4909 = vmatprep.subr.mxu0 0.0
        %4910 = vmatpush1.msra.mxu0 0.0
        %4911 = vmatprep.mubr.f32.mxu0 0.0
        %4912 = vmatmul.mubr.f32.gmra.mrb[0].mxu0 %v4774
        %v4913 = vpop.f32.mrb[0].mxu0
        %v4914 = vadd.f32 0.0, %v4913
        %v4915 = vpop.f32.mrb[0].mxu0
        %v4916 = vadd.f32 0.0, %v4915
        %4917 = vdwg.mxu0
        %4918 = vmatprep.subr.mxu0 %v4769
        %4919 = vmatpush1.msra.mxu0 %v4768
        %4920 = vmatprep.subr.mxu0 0.0
        %4921 = vmatpush1.msra.mxu0 0.0
        %4922 = vmatprep.subr.mxu0 0.0
        %4923 = vmatpush1.msra.mxu0 0.0
        %4924 = vmatprep.subr.mxu0 0.0
        %4925 = vmatpush1.msra.mxu0 0.0
        %4926 = vmatprep.subr.mxu0 0.0
        %4927 = vmatpush1.msra.mxu0 0.0
        %4928 = vmatprep.subr.mxu0 0.0
        %4929 = vmatpush1.msra.mxu0 0.0
        %4930 = vmatprep.subr.mxu0 0.0
        %4931 = vmatpush1.msra.mxu0 0.0
        %4932 = vmatprep.subr.mxu0 0.0
        %4933 = vmatpush1.msra.mxu0 0.0
        %4934 = vmatprep.subr.mxu0 0.0
        %4935 = vmatpush1.msra.mxu0 0.0
        %4936 = vmatprep.subr.mxu0 0.0
        %4937 = vmatpush1.msra.mxu0 0.0
        %4938 = vmatprep.subr.mxu0 0.0
        %4939 = vmatpush1.msra.mxu0 0.0
        %4940 = vmatprep.subr.mxu0 0.0
        %4941 = vmatpush1.msra.mxu0 0.0
        %4942 = vmatprep.subr.mxu0 0.0
        %4943 = vmatpush1.msra.mxu0 0.0
        %4944 = vmatprep.subr.mxu0 0.0
        %4945 = vmatpush1.msra.mxu0 0.0
        %4946 = vmatprep.subr.mxu0 0.0
        %4947 = vmatpush1.msra.mxu0 0.0
        %4948 = vmatprep.subr.mxu0 0.0
        %4949 = vmatpush1.msra.mxu0 0.0
        %4950 = vmatprep.subr.mxu0 0.0
        %4951 = vmatpush1.msra.mxu0 0.0
        %4952 = vmatprep.subr.mxu0 0.0
        %4953 = vmatpush1.msra.mxu0 0.0
        %4954 = vmatprep.subr.mxu0 0.0
        %4955 = vmatpush1.msra.mxu0 0.0
        %4956 = vmatprep.subr.mxu0 0.0
        %4957 = vmatpush1.msra.mxu0 0.0
        %4958 = vmatprep.subr.mxu0 0.0
        %4959 = vmatpush1.msra.mxu0 0.0
        %4960 = vmatprep.subr.mxu0 0.0
        %4961 = vmatpush1.msra.mxu0 0.0
        %4962 = vmatprep.subr.mxu0 0.0
        %4963 = vmatpush1.msra.mxu0 0.0
        %4964 = vmatprep.subr.mxu0 0.0
        %4965 = vmatpush1.msra.mxu0 0.0
        %4966 = vmatprep.subr.mxu0 0.0
        %4967 = vmatpush1.msra.mxu0 0.0
        %4968 = vmatprep.subr.mxu0 0.0
        %4969 = vmatpush1.msra.mxu0 0.0
        %4970 = vmatprep.subr.mxu0 0.0
        %4971 = vmatpush1.msra.mxu0 0.0
        %4972 = vmatprep.subr.mxu0 0.0
        %4973 = vmatpush1.msra.mxu0 0.0
        %4974 = vmatprep.subr.mxu0 0.0
        %4975 = vmatpush1.msra.mxu0 0.0
        %4976 = vmatprep.subr.mxu0 0.0
        %4977 = vmatpush1.msra.mxu0 0.0
        %4978 = vmatprep.subr.mxu0 0.0
        %4979 = vmatpush1.msra.mxu0 0.0
        %4980 = vmatprep.subr.mxu0 0.0
        %4981 = vmatpush1.msra.mxu0 0.0
        %4982 = vmatprep.mubr.f32.mxu0 0.0
        %4983 = vmatmul.mubr.f32.gmra.mrb[0].mxu0 %v4774
        %v4984 = vpop.f32.mrb[0].mxu0
        %v4985 = vadd.f32 0.0, %v4984
        %v4986 = vpop.f32.mrb[0].mxu0
        %v4987 = vadd.f32 0.0, %v4986
        %4988 = vdwg.mxu0
        %4989 = vmatprep.subr.mxu0 %v4771
        %4990 = vmatpush1.msra.mxu0 %v4770
        %4991 = vmatprep.subr.mxu0 0.0
        %4992 = vmatpush1.msra.mxu0 0.0
        %4993 = vmatprep.subr.mxu0 0.0
        %4994 = vmatpush1.msra.mxu0 0.0
        %4995 = vmatprep.subr.mxu0 0.0
        %4996 = vmatpush1.msra.mxu0 0.0
        %4997 = vmatprep.subr.mxu0 0.0
        %4998 = vmatpush1.msra.mxu0 0.0
        %4999 = vmatprep.subr.mxu0 0.0
        %5000 = vmatpush1.msra.mxu0 0.0
        %5001 = vmatprep.subr.mxu0 0.0
        %5002 = vmatpush1.msra.mxu0 0.0
        %5003 = vmatprep.subr.mxu0 0.0
        %5004 = vmatpush1.msra.mxu0 0.0
        %5005 = vmatprep.subr.mxu0 0.0
        %5006 = vmatpush1.msra.mxu0 0.0
        %5007 = vmatprep.subr.mxu0 0.0
        %5008 = vmatpush1.msra.mxu0 0.0
        %5009 = vmatprep.subr.mxu0 0.0
        %5010 = vmatpush1.msra.mxu0 0.0
        %5011 = vmatprep.subr.mxu0 0.0
        %5012 = vmatpush1.msra.mxu0 0.0
        %5013 = vmatprep.subr.mxu0 0.0
        %5014 = vmatpush1.msra.mxu0 0.0
        %5015 = vmatprep.subr.mxu0 0.0
        %5016 = vmatpush1.msra.mxu0 0.0
        %5017 = vmatprep.subr.mxu0 0.0
        %5018 = vmatpush1.msra.mxu0 0.0
        %5019 = vmatprep.subr.mxu0 0.0
        %5020 = vmatpush1.msra.mxu0 0.0
        %5021 = vmatprep.subr.mxu0 0.0
        %5022 = vmatpush1.msra.mxu0 0.0
        %5023 = vmatprep.subr.mxu0 0.0
        %5024 = vmatpush1.msra.mxu0 0.0
        %5025 = vmatprep.subr.mxu0 0.0
        %5026 = vmatpush1.msra.mxu0 0.0
        %5027 = vmatprep.subr.mxu0 0.0
        %5028 = vmatpush1.msra.mxu0 0.0
        %5029 = vmatprep.subr.mxu0 0.0
        %5030 = vmatpush1.msra.mxu0 0.0
        %5031 = vmatprep.subr.mxu0 0.0
        %5032 = vmatpush1.msra.mxu0 0.0
        %5033 = vmatprep.subr.mxu0 0.0
        %5034 = vmatpush1.msra.mxu0 0.0
        %5035 = vmatprep.subr.mxu0 0.0
        %5036 = vmatpush1.msra.mxu0 0.0
        %5037 = vmatprep.subr.mxu0 0.0
        %5038 = vmatpush1.msra.mxu0 0.0
        %5039 = vmatprep.subr.mxu0 0.0
        %5040 = vmatpush1.msra.mxu0 0.0
        %5041 = vmatprep.subr.mxu0 0.0
        %5042 = vmatpush1.msra.mxu0 0.0
        %5043 = vmatprep.subr.mxu0 0.0
        %5044 = vmatpush1.msra.mxu0 0.0
        %5045 = vmatprep.subr.mxu0 0.0
        %5046 = vmatpush1.msra.mxu0 0.0
        %5047 = vmatprep.subr.mxu0 0.0
        %5048 = vmatpush1.msra.mxu0 0.0
        %5049 = vmatprep.subr.mxu0 0.0
        %5050 = vmatpush1.msra.mxu0 0.0
        %5051 = vmatprep.subr.mxu0 0.0
        %5052 = vmatpush1.msra.mxu0 0.0
        %5053 = vmatprep.mubr.f32.mxu0 0.0
        %5054 = vmatmul.mubr.f32.gmra.mrb[0].mxu0 %v4774
        %v5055 = vpop.f32.mrb[0].mxu0
        %v5056 = vadd.f32 0.0, %v5055
        %v5057 = vpop.f32.mrb[0].mxu0
        %v5058 = vadd.f32 0.0, %v5057
        %5059 = vdwg.mxu0
        %v5060 = vadd.f32 %v4732, %v4843
        %v5061 = vadd.f32 %v4733, %v4845
        %v5062 = vadd.f32 %v4734, %v4914
        %v5063 = vadd.f32 %v4735, %v4916
        %v5064 = vadd.f32 %v4736, %v4985
        %v5065 = vadd.f32 %v4737, %v4987
        %v5066 = vadd.f32 %v4738, %v5056
        %v5067 = vadd.f32 %v4739, %v5058
        %v5068 = vld [vmem:[%s4 + $0x20] sm:$0xff]
        %v5070 = vsel %vm3837, %v5068, 0
        %5072 = vmatprep.subr.mxu0 %v3764
        %5073 = vmatpush1.msra.mxu0 %v3763
        %5074 = vmatprep.subr.mxu0 0.0
        %5075 = vmatpush1.msra.mxu0 0.0
        %5076 = vmatprep.subr.mxu0 0.0
        %5077 = vmatpush1.msra.mxu0 0.0
        %5078 = vmatprep.subr.mxu0 0.0
        %5079 = vmatpush1.msra.mxu0 0.0
        %5080 = vmatprep.subr.mxu0 0.0
        %5081 = vmatpush1.msra.mxu0 0.0
        %5082 = vmatprep.subr.mxu0 0.0
        %5083 = vmatpush1.msra.mxu0 0.0
        %5084 = vmatprep.subr.mxu0 0.0
        %5085 = vmatpush1.msra.mxu0 0.0
        %5086 = vmatprep.subr.mxu0 0.0
        %5087 = vmatpush1.msra.mxu0 0.0
        %5088 = vmatprep.subr.mxu0 0.0
        %5089 = vmatpush1.msra.mxu0 0.0
        %5090 = vmatprep.subr.mxu0 0.0
        %5091 = vmatpush1.msra.mxu0 0.0
        %5092 = vmatprep.subr.mxu0 0.0
        %5093 = vmatpush1.msra.mxu0 0.0
        %5094 = vmatprep.subr.mxu0 0.0
        %5095 = vmatpush1.msra.mxu0 0.0
        %5096 = vmatprep.subr.mxu0 0.0
        %5097 = vmatpush1.msra.mxu0 0.0
        %5098 = vmatprep.subr.mxu0 0.0
        %5099 = vmatpush1.msra.mxu0 0.0
        %5100 = vmatprep.subr.mxu0 0.0
        %5101 = vmatpush1.msra.mxu0 0.0
        %5102 = vmatprep.subr.mxu0 0.0
        %5103 = vmatpush1.msra.mxu0 0.0
        %5104 = vmatprep.subr.mxu0 0.0
        %5105 = vmatpush1.msra.mxu0 0.0
        %5106 = vmatprep.subr.mxu0 0.0
        %5107 = vmatpush1.msra.mxu0 0.0
        %5108 = vmatprep.subr.mxu0 0.0
        %5109 = vmatpush1.msra.mxu0 0.0
        %5110 = vmatprep.subr.mxu0 0.0
        %5111 = vmatpush1.msra.mxu0 0.0
        %5112 = vmatprep.subr.mxu0 0.0
        %5113 = vmatpush1.msra.mxu0 0.0
        %5114 = vmatprep.subr.mxu0 0.0
        %5115 = vmatpush1.msra.mxu0 0.0
        %5116 = vmatprep.subr.mxu0 0.0
        %5117 = vmatpush1.msra.mxu0 0.0
        %5118 = vmatprep.subr.mxu0 0.0
        %5119 = vmatpush1.msra.mxu0 0.0
        %5120 = vmatprep.subr.mxu0 0.0
        %5121 = vmatpush1.msra.mxu0 0.0
        %5122 = vmatprep.subr.mxu0 0.0
        %5123 = vmatpush1.msra.mxu0 0.0
        %5124 = vmatprep.subr.mxu0 0.0
        %5125 = vmatpush1.msra.mxu0 0.0
        %5126 = vmatprep.subr.mxu0 0.0
        %5127 = vmatpush1.msra.mxu0 0.0
        %5128 = vmatprep.subr.mxu0 0.0
        %5129 = vmatpush1.msra.mxu0 0.0
        %5130 = vmatprep.subr.mxu0 0.0
        %5131 = vmatpush1.msra.mxu0 0.0
        %5132 = vmatprep.subr.mxu0 0.0
        %5133 = vmatpush1.msra.mxu0 0.0
        %5134 = vmatprep.subr.mxu0 0.0
        %5135 = vmatpush1.msra.mxu0 0.0
        %5136 = vmatprep.mubr.f32.mxu0 0.0
        %5137 = vmatmul.mubr.f32.gmra.mrb[0].mxu0 %v5070
        %v5138 = vpop.f32.mrb[0].mxu0
        %v5139 = vadd.f32 0.0, %v5138
        %v5140 = vpop.f32.mrb[0].mxu0
        %v5141 = vadd.f32 0.0, %v5140
        %5142 = vdwg.mxu0
        %5143 = vmatprep.subr.mxu0 %v3766
        %5144 = vmatpush1.msra.mxu0 %v3765
        %5145 = vmatprep.subr.mxu0 0.0
        %5146 = vmatpush1.msra.mxu0 0.0
        %5147 = vmatprep.subr.mxu0 0.0
        %5148 = vmatpush1.msra.mxu0 0.0
        %5149 = vmatprep.subr.mxu0 0.0
        %5150 = vmatpush1.msra.mxu0 0.0
        %5151 = vmatprep.subr.mxu0 0.0
        %5152 = vmatpush1.msra.mxu0 0.0
        %5153 = vmatprep.subr.mxu0 0.0
        %5154 = vmatpush1.msra.mxu0 0.0
        %5155 = vmatprep.subr.mxu0 0.0
        %5156 = vmatpush1.msra.mxu0 0.0
        %5157 = vmatprep.subr.mxu0 0.0
        %5158 = vmatpush1.msra.mxu0 0.0
        %5159 = vmatprep.subr.mxu0 0.0
        %5160 = vmatpush1.msra.mxu0 0.0
        %5161 = vmatprep.subr.mxu0 0.0
        %5162 = vmatpush1.msra.mxu0 0.0
        %5163 = vmatprep.subr.mxu0 0.0
        %5164 = vmatpush1.msra.mxu0 0.0
        %5165 = vmatprep.subr.mxu0 0.0
        %5166 = vmatpush1.msra.mxu0 0.0
        %5167 = vmatprep.subr.mxu0 0.0
        %5168 = vmatpush1.msra.mxu0 0.0
        %5169 = vmatprep.subr.mxu0 0.0
        %5170 = vmatpush1.msra.mxu0 0.0
        %5171 = vmatprep.subr.mxu0 0.0
        %5172 = vmatpush1.msra.mxu0 0.0
        %5173 = vmatprep.subr.mxu0 0.0
        %5174 = vmatpush1.msra.mxu0 0.0
        %5175 = vmatprep.subr.mxu0 0.0
        %5176 = vmatpush1.msra.mxu0 0.0
        %5177 = vmatprep.subr.mxu0 0.0
        %5178 = vmatpush1.msra.mxu0 0.0
        %5179 = vmatprep.subr.mxu0 0.0
        %5180 = vmatpush1.msra.mxu0 0.0
        %5181 = vmatprep.subr.mxu0 0.0
        %5182 = vmatpush1.msra.mxu0 0.0
        %5183 = vmatprep.subr.mxu0 0.0
        %5184 = vmatpush1.msra.mxu0 0.0
        %5185 = vmatprep.subr.mxu0 0.0
        %5186 = vmatpush1.msra.mxu0 0.0
        %5187 = vmatprep.subr.mxu0 0.0
        %5188 = vmatpush1.msra.mxu0 0.0
        %5189 = vmatprep.subr.mxu0 0.0
        %5190 = vmatpush1.msra.mxu0 0.0
        %5191 = vmatprep.subr.mxu0 0.0
        %5192 = vmatpush1.msra.mxu0 0.0
        %5193 = vmatprep.subr.mxu0 0.0
        %5194 = vmatpush1.msra.mxu0 0.0
        %5195 = vmatprep.subr.mxu0 0.0
        %5196 = vmatpush1.msra.mxu0 0.0
        %5197 = vmatprep.subr.mxu0 0.0
        %5198 = vmatpush1.msra.mxu0 0.0
        %5199 = vmatprep.subr.mxu0 0.0
        %5200 = vmatpush1.msra.mxu0 0.0
        %5201 = vmatprep.subr.mxu0 0.0
        %5202 = vmatpush1.msra.mxu0 0.0
        %5203 = vmatprep.subr.mxu0 0.0
        %5204 = vmatpush1.msra.mxu0 0.0
        %5205 = vmatprep.subr.mxu0 0.0
        %5206 = vmatpush1.msra.mxu0 0.0
        %5207 = vmatprep.mubr.f32.mxu0 0.0
        %5208 = vmatmul.mubr.f32.gmra.mrb[0].mxu0 %v5070
        %v5209 = vpop.f32.mrb[0].mxu0
        %v5210 = vadd.f32 0.0, %v5209
        %v5211 = vpop.f32.mrb[0].mxu0
        %v5212 = vadd.f32 0.0, %v5211
        %5213 = vdwg.mxu0
        %5214 = vmatprep.subr.mxu0 %v3768
        %5215 = vmatpush1.msra.mxu0 %v3767
        %5216 = vmatprep.subr.mxu0 0.0
        %5217 = vmatpush1.msra.mxu0 0.0
        %5218 = vmatprep.subr.mxu0 0.0
        %5219 = vmatpush1.msra.mxu0 0.0
        %5220 = vmatprep.subr.mxu0 0.0
        %5221 = vmatpush1.msra.mxu0 0.0
        %5222 = vmatprep.subr.mxu0 0.0
        %5223 = vmatpush1.msra.mxu0 0.0
        %5224 = vmatprep.subr.mxu0 0.0
        %5225 = vmatpush1.msra.mxu0 0.0
        %5226 = vmatprep.subr.mxu0 0.0
        %5227 = vmatpush1.msra.mxu0 0.0
        %5228 = vmatprep.subr.mxu0 0.0
        %5229 = vmatpush1.msra.mxu0 0.0
        %5230 = vmatprep.subr.mxu0 0.0
        %5231 = vmatpush1.msra.mxu0 0.0
        %5232 = vmatprep.subr.mxu0 0.0
        %5233 = vmatpush1.msra.mxu0 0.0
        %5234 = vmatprep.subr.mxu0 0.0
        %5235 = vmatpush1.msra.mxu0 0.0
        %5236 = vmatprep.subr.mxu0 0.0
        %5237 = vmatpush1.msra.mxu0 0.0
        %5238 = vmatprep.subr.mxu0 0.0
        %5239 = vmatpush1.msra.mxu0 0.0
        %5240 = vmatprep.subr.mxu0 0.0
        %5241 = vmatpush1.msra.mxu0 0.0
        %5242 = vmatprep.subr.mxu0 0.0
        %5243 = vmatpush1.msra.mxu0 0.0
        %5244 = vmatprep.subr.mxu0 0.0
        %5245 = vmatpush1.msra.mxu0 0.0
        %5246 = vmatprep.subr.mxu0 0.0
        %5247 = vmatpush1.msra.mxu0 0.0
        %5248 = vmatprep.subr.mxu0 0.0
        %5249 = vmatpush1.msra.mxu0 0.0
        %5250 = vmatprep.subr.mxu0 0.0
        %5251 = vmatpush1.msra.mxu0 0.0
        %5252 = vmatprep.subr.mxu0 0.0
        %5253 = vmatpush1.msra.mxu0 0.0
        %5254 = vmatprep.subr.mxu0 0.0
        %5255 = vmatpush1.msra.mxu0 0.0
        %5256 = vmatprep.subr.mxu0 0.0
        %5257 = vmatpush1.msra.mxu0 0.0
        %5258 = vmatprep.subr.mxu0 0.0
        %5259 = vmatpush1.msra.mxu0 0.0
        %5260 = vmatprep.subr.mxu0 0.0
        %5261 = vmatpush1.msra.mxu0 0.0
        %5262 = vmatprep.subr.mxu0 0.0
        %5263 = vmatpush1.msra.mxu0 0.0
        %5264 = vmatprep.subr.mxu0 0.0
        %5265 = vmatpush1.msra.mxu0 0.0
        %5266 = vmatprep.subr.mxu0 0.0
        %5267 = vmatpush1.msra.mxu0 0.0
        %5268 = vmatprep.subr.mxu0 0.0
        %5269 = vmatpush1.msra.mxu0 0.0
        %5270 = vmatprep.subr.mxu0 0.0
        %5271 = vmatpush1.msra.mxu0 0.0
        %5272 = vmatprep.subr.mxu0 0.0
        %5273 = vmatpush1.msra.mxu0 0.0
        %5274 = vmatprep.subr.mxu0 0.0
        %5275 = vmatpush1.msra.mxu0 0.0
        %5276 = vmatprep.subr.mxu0 0.0
        %5277 = vmatpush1.msra.mxu0 0.0
        %5278 = vmatprep.mubr.f32.mxu0 0.0
        %5279 = vmatmul.mubr.f32.gmra.mrb[0].mxu0 %v5070
        %v5280 = vpop.f32.mrb[0].mxu0
        %v5281 = vadd.f32 0.0, %v5280
        %v5282 = vpop.f32.mrb[0].mxu0
        %v5283 = vadd.f32 0.0, %v5282
        %5284 = vdwg.mxu0
        %5285 = vmatprep.subr.mxu0 %v3770
        %5286 = vmatpush1.msra.mxu0 %v3769
        %5287 = vmatprep.subr.mxu0 0.0
        %5288 = vmatpush1.msra.mxu0 0.0
        %5289 = vmatprep.subr.mxu0 0.0
        %5290 = vmatpush1.msra.mxu0 0.0
        %5291 = vmatprep.subr.mxu0 0.0
        %5292 = vmatpush1.msra.mxu0 0.0
        %5293 = vmatprep.subr.mxu0 0.0
        %5294 = vmatpush1.msra.mxu0 0.0
        %5295 = vmatprep.subr.mxu0 0.0
        %5296 = vmatpush1.msra.mxu0 0.0
        %5297 = vmatprep.subr.mxu0 0.0
        %5298 = vmatpush1.msra.mxu0 0.0
        %5299 = vmatprep.subr.mxu0 0.0
        %5300 = vmatpush1.msra.mxu0 0.0
        %5301 = vmatprep.subr.mxu0 0.0
        %5302 = vmatpush1.msra.mxu0 0.0
        %5303 = vmatprep.subr.mxu0 0.0
        %5304 = vmatpush1.msra.mxu0 0.0
        %5305 = vmatprep.subr.mxu0 0.0
        %5306 = vmatpush1.msra.mxu0 0.0
        %5307 = vmatprep.subr.mxu0 0.0
        %5308 = vmatpush1.msra.mxu0 0.0
        %5309 = vmatprep.subr.mxu0 0.0
        %5310 = vmatpush1.msra.mxu0 0.0
        %5311 = vmatprep.subr.mxu0 0.0
        %5312 = vmatpush1.msra.mxu0 0.0
        %5313 = vmatprep.subr.mxu0 0.0
        %5314 = vmatpush1.msra.mxu0 0.0
        %5315 = vmatprep.subr.mxu0 0.0
        %5316 = vmatpush1.msra.mxu0 0.0
        %5317 = vmatprep.subr.mxu0 0.0
        %5318 = vmatpush1.msra.mxu0 0.0
        %5319 = vmatprep.subr.mxu0 0.0
        %5320 = vmatpush1.msra.mxu0 0.0
        %5321 = vmatprep.subr.mxu0 0.0
        %5322 = vmatpush1.msra.mxu0 0.0
        %5323 = vmatprep.subr.mxu0 0.0
        %5324 = vmatpush1.msra.mxu0 0.0
        %5325 = vmatprep.subr.mxu0 0.0
        %5326 = vmatpush1.msra.mxu0 0.0
        %5327 = vmatprep.subr.mxu0 0.0
        %5328 = vmatpush1.msra.mxu0 0.0
        %5329 = vmatprep.subr.mxu0 0.0
        %5330 = vmatpush1.msra.mxu0 0.0
        %5331 = vmatprep.subr.mxu0 0.0
        %5332 = vmatpush1.msra.mxu0 0.0
        %5333 = vmatprep.subr.mxu0 0.0
        %5334 = vmatpush1.msra.mxu0 0.0
        %5335 = vmatprep.subr.mxu0 0.0
        %5336 = vmatpush1.msra.mxu0 0.0
        %5337 = vmatprep.subr.mxu0 0.0
        %5338 = vmatpush1.msra.mxu0 0.0
        %5339 = vmatprep.subr.mxu0 0.0
        %5340 = vmatpush1.msra.mxu0 0.0
        %5341 = vmatprep.subr.mxu0 0.0
        %5342 = vmatpush1.msra.mxu0 0.0
        %5343 = vmatprep.subr.mxu0 0.0
        %5344 = vmatpush1.msra.mxu0 0.0
        %5345 = vmatprep.subr.mxu0 0.0
        %5346 = vmatpush1.msra.mxu0 0.0
        %5347 = vmatprep.subr.mxu0 0.0
        %5348 = vmatpush1.msra.mxu0 0.0
        %5349 = vmatprep.mubr.f32.mxu0 0.0
        %5350 = vmatmul.mubr.f32.gmra.mrb[0].mxu0 %v5070
        %v5351 = vpop.f32.mrb[0].mxu0
        %v5352 = vadd.f32 0.0, %v5351
        %v5353 = vpop.f32.mrb[0].mxu0
        %v5354 = vadd.f32 0.0, %v5353
        %5355 = vdwg.mxu0
        %v5356 = vadd.f32 %v5060, %v5139
        %v5357 = vadd.f32 %v5061, %v5141
        %v5358 = vadd.f32 %v5062, %v5210
        %v5359 = vadd.f32 %v5063, %v5212
        %v5360 = vadd.f32 %v5064, %v5281
        %v5361 = vadd.f32 %v5065, %v5283
        %v5362 = vadd.f32 %v5066, %v5352
        %v5363 = vadd.f32 %v5067, %v5354
        %5364 = vrot.lane.b32.xlu0 %v3763, 127
        %v5365 = vpop.permute.xlu0 %5364
        %5366 = vrot.lane.b32.xlu0 %v3764, 127
        %v5367 = vpop.permute.xlu0 %5366
        %5368 = vrot.lane.b32.xlu0 %v3765, 127
        %v5369 = vpop.permute.xlu0 %5368
        %5370 = vrot.lane.b32.xlu0 %v3766, 127
        %v5371 = vpop.permute.xlu0 %5370
        %5372 = vrot.lane.b32.xlu0 %v3767, 127
        %v5373 = vpop.permute.xlu0 %5372
        %5374 = vrot.lane.b32.xlu0 %v3768, 127
        %v5375 = vpop.permute.xlu0 %5374
        %5376 = vrot.lane.b32.xlu0 %v3769, 127
        %v5377 = vpop.permute.xlu0 %5376
        %5378 = vrot.lane.b32.xlu0 %v3770, 127
        %v5379 = vpop.permute.xlu0 %5378
        %v5380 = vsel %vm2161, %v5377, %v5379
        %v5381 = vsel %vm2161, %v5375, %v5377
        %v5382 = vsel %vm2161, %v5373, %v5375
        %v5383 = vsel %vm2161, %v5371, %v5373
        %v5384 = vsel %vm2161, %v5369, %v5371
        %v5385 = vsel %vm2161, %v5367, %v5369
        %v5386 = vsel %vm2161, %v5365, %v5367
        %v5387 = vsel %vm2161, %v5379, %v5365
        %v5388 = vmul.f32 %v5386, %v2185
        %v5389 = vmul.f32 %v5385, %v2189
        %v5390 = vmul.f32 %v5384, %v2193
        %v5391 = vmul.f32 %v5383, %v2197
        %v5392 = vmul.f32 %v5382, %v2201
        %v5393 = vmul.f32 %v5381, %v2205
        %v5394 = vmul.f32 %v5380, %v2209
        %v5395 = vmul.f32 %v5387, %v2213
        %v5396 = vld [vmem:[%s4 + $0x28] sm:$0xff]
        %v5398 = vsel %vm3837, %v5396, 0
        %5400 = vmatprep.subr.mxu0 %v5389
        %5401 = vmatpush1.msra.mxu0 %v5388
        %5402 = vmatprep.subr.mxu0 0.0
        %5403 = vmatpush1.msra.mxu0 0.0
        %5404 = vmatprep.subr.mxu0 0.0
        %5405 = vmatpush1.msra.mxu0 0.0
        %5406 = vmatprep.subr.mxu0 0.0
        %5407 = vmatpush1.msra.mxu0 0.0
        %5408 = vmatprep.subr.mxu0 0.0
        %5409 = vmatpush1.msra.mxu0 0.0
        %5410 = vmatprep.subr.mxu0 0.0
        %5411 = vmatpush1.msra.mxu0 0.0
        %5412 = vmatprep.subr.mxu0 0.0
        %5413 = vmatpush1.msra.mxu0 0.0
        %5414 = vmatprep.subr.mxu0 0.0
        %5415 = vmatpush1.msra.mxu0 0.0
        %5416 = vmatprep.subr.mxu0 0.0
        %5417 = vmatpush1.msra.mxu0 0.0
        %5418 = vmatprep.subr.mxu0 0.0
        %5419 = vmatpush1.msra.mxu0 0.0
        %5420 = vmatprep.subr.mxu0 0.0
        %5421 = vmatpush1.msra.mxu0 0.0
        %5422 = vmatprep.subr.mxu0 0.0
        %5423 = vmatpush1.msra.mxu0 0.0
        %5424 = vmatprep.subr.mxu0 0.0
        %5425 = vmatpush1.msra.mxu0 0.0
        %5426 = vmatprep.subr.mxu0 0.0
        %5427 = vmatpush1.msra.mxu0 0.0
        %5428 = vmatprep.subr.mxu0 0.0
        %5429 = vmatpush1.msra.mxu0 0.0
        %5430 = vmatprep.subr.mxu0 0.0
        %5431 = vmatpush1.msra.mxu0 0.0
        %5432 = vmatprep.subr.mxu0 0.0
        %5433 = vmatpush1.msra.mxu0 0.0
        %5434 = vmatprep.subr.mxu0 0.0
        %5435 = vmatpush1.msra.mxu0 0.0
        %5436 = vmatprep.subr.mxu0 0.0
        %5437 = vmatpush1.msra.mxu0 0.0
        %5438 = vmatprep.subr.mxu0 0.0
        %5439 = vmatpush1.msra.mxu0 0.0
        %5440 = vmatprep.subr.mxu0 0.0
        %5441 = vmatpush1.msra.mxu0 0.0
        %5442 = vmatprep.subr.mxu0 0.0
        %5443 = vmatpush1.msra.mxu0 0.0
        %5444 = vmatprep.subr.mxu0 0.0
        %5445 = vmatpush1.msra.mxu0 0.0
        %5446 = vmatprep.subr.mxu0 0.0
        %5447 = vmatpush1.msra.mxu0 0.0
        %5448 = vmatprep.subr.mxu0 0.0
        %5449 = vmatpush1.msra.mxu0 0.0
        %5450 = vmatprep.subr.mxu0 0.0
        %5451 = vmatpush1.msra.mxu0 0.0
        %5452 = vmatprep.subr.mxu0 0.0
        %5453 = vmatpush1.msra.mxu0 0.0
        %5454 = vmatprep.subr.mxu0 0.0
        %5455 = vmatpush1.msra.mxu0 0.0
        %5456 = vmatprep.subr.mxu0 0.0
        %5457 = vmatpush1.msra.mxu0 0.0
        %5458 = vmatprep.subr.mxu0 0.0
        %5459 = vmatpush1.msra.mxu0 0.0
        %5460 = vmatprep.subr.mxu0 0.0
        %5461 = vmatpush1.msra.mxu0 0.0
        %5462 = vmatprep.subr.mxu0 0.0
        %5463 = vmatpush1.msra.mxu0 0.0
        %5464 = vmatprep.mubr.f32.mxu0 0.0
        %5465 = vmatmul.mubr.f32.gmra.mrb[0].mxu0 %v5398
        %v5466 = vpop.f32.mrb[0].mxu0
        %v5467 = vadd.f32 0.0, %v5466
        %v5468 = vpop.f32.mrb[0].mxu0
        %v5469 = vadd.f32 0.0, %v5468
        %5470 = vdwg.mxu0
        %5471 = vmatprep.subr.mxu0 %v5391
        %5472 = vmatpush1.msra.mxu0 %v5390
        %5473 = vmatprep.subr.mxu0 0.0
        %5474 = vmatpush1.msra.mxu0 0.0
        %5475 = vmatprep.subr.mxu0 0.0
        %5476 = vmatpush1.msra.mxu0 0.0
        %5477 = vmatprep.subr.mxu0 0.0
        %5478 = vmatpush1.msra.mxu0 0.0
        %5479 = vmatprep.subr.mxu0 0.0
        %5480 = vmatpush1.msra.mxu0 0.0
        %5481 = vmatprep.subr.mxu0 0.0
        %5482 = vmatpush1.msra.mxu0 0.0
        %5483 = vmatprep.subr.mxu0 0.0
        %5484 = vmatpush1.msra.mxu0 0.0
        %5485 = vmatprep.subr.mxu0 0.0
        %5486 = vmatpush1.msra.mxu0 0.0
        %5487 = vmatprep.subr.mxu0 0.0
        %5488 = vmatpush1.msra.mxu0 0.0
        %5489 = vmatprep.subr.mxu0 0.0
        %5490 = vmatpush1.msra.mxu0 0.0
        %5491 = vmatprep.subr.mxu0 0.0
        %5492 = vmatpush1.msra.mxu0 0.0
        %5493 = vmatprep.subr.mxu0 0.0
        %5494 = vmatpush1.msra.mxu0 0.0
        %5495 = vmatprep.subr.mxu0 0.0
        %5496 = vmatpush1.msra.mxu0 0.0
        %5497 = vmatprep.subr.mxu0 0.0
        %5498 = vmatpush1.msra.mxu0 0.0
        %5499 = vmatprep.subr.mxu0 0.0
        %5500 = vmatpush1.msra.mxu0 0.0
        %5501 = vmatprep.subr.mxu0 0.0
        %5502 = vmatpush1.msra.mxu0 0.0
        %5503 = vmatprep.subr.mxu0 0.0
        %5504 = vmatpush1.msra.mxu0 0.0
        %5505 = vmatprep.subr.mxu0 0.0
        %5506 = vmatpush1.msra.mxu0 0.0
        %5507 = vmatprep.subr.mxu0 0.0
        %5508 = vmatpush1.msra.mxu0 0.0
        %5509 = vmatprep.subr.mxu0 0.0
        %5510 = vmatpush1.msra.mxu0 0.0
        %5511 = vmatprep.subr.mxu0 0.0
        %5512 = vmatpush1.msra.mxu0 0.0
        %5513 = vmatprep.subr.mxu0 0.0
        %5514 = vmatpush1.msra.mxu0 0.0
        %5515 = vmatprep.subr.mxu0 0.0
        %5516 = vmatpush1.msra.mxu0 0.0
        %5517 = vmatprep.subr.mxu0 0.0
        %5518 = vmatpush1.msra.mxu0 0.0
        %5519 = vmatprep.subr.mxu0 0.0
        %5520 = vmatpush1.msra.mxu0 0.0
        %5521 = vmatprep.subr.mxu0 0.0
        %5522 = vmatpush1.msra.mxu0 0.0
        %5523 = vmatprep.subr.mxu0 0.0
        %5524 = vmatpush1.msra.mxu0 0.0
        %5525 = vmatprep.subr.mxu0 0.0
        %5526 = vmatpush1.msra.mxu0 0.0
        %5527 = vmatprep.subr.mxu0 0.0
        %5528 = vmatpush1.msra.mxu0 0.0
        %5529 = vmatprep.subr.mxu0 0.0
        %5530 = vmatpush1.msra.mxu0 0.0
        %5531 = vmatprep.subr.mxu0 0.0
        %5532 = vmatpush1.msra.mxu0 0.0
        %5533 = vmatprep.subr.mxu0 0.0
        %5534 = vmatpush1.msra.mxu0 0.0
        %5535 = vmatprep.mubr.f32.mxu0 0.0
        %5536 = vmatmul.mubr.f32.gmra.mrb[0].mxu0 %v5398
        %v5537 = vpop.f32.mrb[0].mxu0
        %v5538 = vadd.f32 0.0, %v5537
        %v5539 = vpop.f32.mrb[0].mxu0
        %v5540 = vadd.f32 0.0, %v5539
        %5541 = vdwg.mxu0
        %5542 = vmatprep.subr.mxu0 %v5393
        %5543 = vmatpush1.msra.mxu0 %v5392
        %5544 = vmatprep.subr.mxu0 0.0
        %5545 = vmatpush1.msra.mxu0 0.0
        %5546 = vmatprep.subr.mxu0 0.0
        %5547 = vmatpush1.msra.mxu0 0.0
        %5548 = vmatprep.subr.mxu0 0.0
        %5549 = vmatpush1.msra.mxu0 0.0
        %5550 = vmatprep.subr.mxu0 0.0
        %5551 = vmatpush1.msra.mxu0 0.0
        %5552 = vmatprep.subr.mxu0 0.0
        %5553 = vmatpush1.msra.mxu0 0.0
        %5554 = vmatprep.subr.mxu0 0.0
        %5555 = vmatpush1.msra.mxu0 0.0
        %5556 = vmatprep.subr.mxu0 0.0
        %5557 = vmatpush1.msra.mxu0 0.0
        %5558 = vmatprep.subr.mxu0 0.0
        %5559 = vmatpush1.msra.mxu0 0.0
        %5560 = vmatprep.subr.mxu0 0.0
        %5561 = vmatpush1.msra.mxu0 0.0
        %5562 = vmatprep.subr.mxu0 0.0
        %5563 = vmatpush1.msra.mxu0 0.0
        %5564 = vmatprep.subr.mxu0 0.0
        %5565 = vmatpush1.msra.mxu0 0.0
        %5566 = vmatprep.subr.mxu0 0.0
        %5567 = vmatpush1.msra.mxu0 0.0
        %5568 = vmatprep.subr.mxu0 0.0
        %5569 = vmatpush1.msra.mxu0 0.0
        %5570 = vmatprep.subr.mxu0 0.0
        %5571 = vmatpush1.msra.mxu0 0.0
        %5572 = vmatprep.subr.mxu0 0.0
        %5573 = vmatpush1.msra.mxu0 0.0
        %5574 = vmatprep.subr.mxu0 0.0
        %5575 = vmatpush1.msra.mxu0 0.0
        %5576 = vmatprep.subr.mxu0 0.0
        %5577 = vmatpush1.msra.mxu0 0.0
        %5578 = vmatprep.subr.mxu0 0.0
        %5579 = vmatpush1.msra.mxu0 0.0
        %5580 = vmatprep.subr.mxu0 0.0
        %5581 = vmatpush1.msra.mxu0 0.0
        %5582 = vmatprep.subr.mxu0 0.0
        %5583 = vmatpush1.msra.mxu0 0.0
        %5584 = vmatprep.subr.mxu0 0.0
        %5585 = vmatpush1.msra.mxu0 0.0
        %5586 = vmatprep.subr.mxu0 0.0
        %5587 = vmatpush1.msra.mxu0 0.0
        %5588 = vmatprep.subr.mxu0 0.0
        %5589 = vmatpush1.msra.mxu0 0.0
        %5590 = vmatprep.subr.mxu0 0.0
        %5591 = vmatpush1.msra.mxu0 0.0
        %5592 = vmatprep.subr.mxu0 0.0
        %5593 = vmatpush1.msra.mxu0 0.0
        %5594 = vmatprep.subr.mxu0 0.0
        %5595 = vmatpush1.msra.mxu0 0.0
        %5596 = vmatprep.subr.mxu0 0.0
        %5597 = vmatpush1.msra.mxu0 0.0
        %5598 = vmatprep.subr.mxu0 0.0
        %5599 = vmatpush1.msra.mxu0 0.0
        %5600 = vmatprep.subr.mxu0 0.0
        %5601 = vmatpush1.msra.mxu0 0.0
        %5602 = vmatprep.subr.mxu0 0.0
        %5603 = vmatpush1.msra.mxu0 0.0
        %5604 = vmatprep.subr.mxu0 0.0
        %5605 = vmatpush1.msra.mxu0 0.0
        %5606 = vmatprep.mubr.f32.mxu0 0.0
        %5607 = vmatmul.mubr.f32.gmra.mrb[0].mxu0 %v5398
        %v5608 = vpop.f32.mrb[0].mxu0
        %v5609 = vadd.f32 0.0, %v5608
        %v5610 = vpop.f32.mrb[0].mxu0
        %v5611 = vadd.f32 0.0, %v5610
        %5612 = vdwg.mxu0
        %5613 = vmatprep.subr.mxu0 %v5395
        %5614 = vmatpush1.msra.mxu0 %v5394
        %5615 = vmatprep.subr.mxu0 0.0
        %5616 = vmatpush1.msra.mxu0 0.0
        %5617 = vmatprep.subr.mxu0 0.0
        %5618 = vmatpush1.msra.mxu0 0.0
        %5619 = vmatprep.subr.mxu0 0.0
        %5620 = vmatpush1.msra.mxu0 0.0
        %5621 = vmatprep.subr.mxu0 0.0
        %5622 = vmatpush1.msra.mxu0 0.0
        %5623 = vmatprep.subr.mxu0 0.0
        %5624 = vmatpush1.msra.mxu0 0.0
        %5625 = vmatprep.subr.mxu0 0.0
        %5626 = vmatpush1.msra.mxu0 0.0
        %5627 = vmatprep.subr.mxu0 0.0
        %5628 = vmatpush1.msra.mxu0 0.0
        %5629 = vmatprep.subr.mxu0 0.0
        %5630 = vmatpush1.msra.mxu0 0.0
        %5631 = vmatprep.subr.mxu0 0.0
        %5632 = vmatpush1.msra.mxu0 0.0
        %5633 = vmatprep.subr.mxu0 0.0
        %5634 = vmatpush1.msra.mxu0 0.0
        %5635 = vmatprep.subr.mxu0 0.0
        %5636 = vmatpush1.msra.mxu0 0.0
        %5637 = vmatprep.subr.mxu0 0.0
        %5638 = vmatpush1.msra.mxu0 0.0
        %5639 = vmatprep.subr.mxu0 0.0
        %5640 = vmatpush1.msra.mxu0 0.0
        %5641 = vmatprep.subr.mxu0 0.0
        %5642 = vmatpush1.msra.mxu0 0.0
        %5643 = vmatprep.subr.mxu0 0.0
        %5644 = vmatpush1.msra.mxu0 0.0
        %5645 = vmatprep.subr.mxu0 0.0
        %5646 = vmatpush1.msra.mxu0 0.0
        %5647 = vmatprep.subr.mxu0 0.0
        %5648 = vmatpush1.msra.mxu0 0.0
        %5649 = vmatprep.subr.mxu0 0.0
        %5650 = vmatpush1.msra.mxu0 0.0
        %5651 = vmatprep.subr.mxu0 0.0
        %5652 = vmatpush1.msra.mxu0 0.0
        %5653 = vmatprep.subr.mxu0 0.0
        %5654 = vmatpush1.msra.mxu0 0.0
        %5655 = vmatprep.subr.mxu0 0.0
        %5656 = vmatpush1.msra.mxu0 0.0
        %5657 = vmatprep.subr.mxu0 0.0
        %5658 = vmatpush1.msra.mxu0 0.0
        %5659 = vmatprep.subr.mxu0 0.0
        %5660 = vmatpush1.msra.mxu0 0.0
        %5661 = vmatprep.subr.mxu0 0.0
        %5662 = vmatpush1.msra.mxu0 0.0
        %5663 = vmatprep.subr.mxu0 0.0
        %5664 = vmatpush1.msra.mxu0 0.0
        %5665 = vmatprep.subr.mxu0 0.0
        %5666 = vmatpush1.msra.mxu0 0.0
        %5667 = vmatprep.subr.mxu0 0.0
        %5668 = vmatpush1.msra.mxu0 0.0
        %5669 = vmatprep.subr.mxu0 0.0
        %5670 = vmatpush1.msra.mxu0 0.0
        %5671 = vmatprep.subr.mxu0 0.0
        %5672 = vmatpush1.msra.mxu0 0.0
        %5673 = vmatprep.subr.mxu0 0.0
        %5674 = vmatpush1.msra.mxu0 0.0
        %5675 = vmatprep.subr.mxu0 0.0
        %5676 = vmatpush1.msra.mxu0 0.0
        %5677 = vmatprep.mubr.f32.mxu0 0.0
        %5678 = vmatmul.mubr.f32.gmra.mrb[0].mxu0 %v5398
        %v5679 = vpop.f32.mrb[0].mxu0
        %v5680 = vadd.f32 0.0, %v5679
        %v5681 = vpop.f32.mrb[0].mxu0
        %v5682 = vadd.f32 0.0, %v5681
        %5683 = vdwg.mxu0
        %v5684 = vadd.f32 %v5356, %v5467
        %v5685 = vadd.f32 %v5357, %v5469
        %v5686 = vadd.f32 %v5358, %v5538
        %v5687 = vadd.f32 %v5359, %v5540
        %v5688 = vadd.f32 %v5360, %v5609
        %v5689 = vadd.f32 %v5361, %v5611
        %v5690 = vadd.f32 %v5362, %v5680
        %v5691 = vadd.f32 %v5363, %v5682
        %5692 = vrot.lane.b32.xlu0 %v3763, 97
        %v5693 = vpop.permute.xlu0 %5692
        %5694 = vrot.lane.b32.xlu0 %v3764, 97
        %v5695 = vpop.permute.xlu0 %5694
        %5696 = vrot.lane.b32.xlu0 %v3765, 97
        %v5697 = vpop.permute.xlu0 %5696
        %5698 = vrot.lane.b32.xlu0 %v3766, 97
        %v5699 = vpop.permute.xlu0 %5698
        %5700 = vrot.lane.b32.xlu0 %v3767, 97
        %v5701 = vpop.permute.xlu0 %5700
        %5702 = vrot.lane.b32.xlu0 %v3768, 97
        %v5703 = vpop.permute.xlu0 %5702
        %5704 = vrot.lane.b32.xlu0 %v3769, 97
        %v5705 = vpop.permute.xlu0 %5704
        %5706 = vrot.lane.b32.xlu0 %v3770, 97
        %v5707 = vpop.permute.xlu0 %5706
        %v5708 = vsel %vm2558, %v5705, %v5707
        %v5709 = vsel %vm2558, %v5703, %v5705
        %v5710 = vsel %vm2558, %v5701, %v5703
        %v5711 = vsel %vm2558, %v5699, %v5701
        %v5712 = vsel %vm2558, %v5697, %v5699
        %v5713 = vsel %vm2558, %v5695, %v5697
        %v5714 = vsel %vm2558, %v5693, %v5695
        %v5715 = vsel %vm2558, %v5707, %v5693
        %v5716 = vmul.f32 %v5714, %v2582
        %v5717 = vmul.f32 %v5713, %v2586
        %v5718 = vmul.f32 %v5712, %v2590
        %v5719 = vmul.f32 %v5711, %v2594
        %v5720 = vmul.f32 %v5710, %v2598
        %v5721 = vmul.f32 %v5709, %v2602
        %v5722 = vmul.f32 %v5708, %v2606
        %v5723 = vmul.f32 %v5715, %v2610
        %v5724 = vld [vmem:[%s4 + $0x30] sm:$0xff]
        %v5726 = vsel %vm3837, %v5724, 0
        %5728 = vmatprep.subr.mxu0 %v5717
        %5729 = vmatpush1.msra.mxu0 %v5716
        %5730 = vmatprep.subr.mxu0 0.0
        %5731 = vmatpush1.msra.mxu0 0.0
        %5732 = vmatprep.subr.mxu0 0.0
        %5733 = vmatpush1.msra.mxu0 0.0
        %5734 = vmatprep.subr.mxu0 0.0
        %5735 = vmatpush1.msra.mxu0 0.0
        %5736 = vmatprep.subr.mxu0 0.0
        %5737 = vmatpush1.msra.mxu0 0.0
        %5738 = vmatprep.subr.mxu0 0.0
        %5739 = vmatpush1.msra.mxu0 0.0
        %5740 = vmatprep.subr.mxu0 0.0
        %5741 = vmatpush1.msra.mxu0 0.0
        %5742 = vmatprep.subr.mxu0 0.0
        %5743 = vmatpush1.msra.mxu0 0.0
        %5744 = vmatprep.subr.mxu0 0.0
        %5745 = vmatpush1.msra.mxu0 0.0
        %5746 = vmatprep.subr.mxu0 0.0
        %5747 = vmatpush1.msra.mxu0 0.0
        %5748 = vmatprep.subr.mxu0 0.0
        %5749 = vmatpush1.msra.mxu0 0.0
        %5750 = vmatprep.subr.mxu0 0.0
        %5751 = vmatpush1.msra.mxu0 0.0
        %5752 = vmatprep.subr.mxu0 0.0
        %5753 = vmatpush1.msra.mxu0 0.0
        %5754 = vmatprep.subr.mxu0 0.0
        %5755 = vmatpush1.msra.mxu0 0.0
        %5756 = vmatprep.subr.mxu0 0.0
        %5757 = vmatpush1.msra.mxu0 0.0
        %5758 = vmatprep.subr.mxu0 0.0
        %5759 = vmatpush1.msra.mxu0 0.0
        %5760 = vmatprep.subr.mxu0 0.0
        %5761 = vmatpush1.msra.mxu0 0.0
        %5762 = vmatprep.subr.mxu0 0.0
        %5763 = vmatpush1.msra.mxu0 0.0
        %5764 = vmatprep.subr.mxu0 0.0
        %5765 = vmatpush1.msra.mxu0 0.0
        %5766 = vmatprep.subr.mxu0 0.0
        %5767 = vmatpush1.msra.mxu0 0.0
        %5768 = vmatprep.subr.mxu0 0.0
        %5769 = vmatpush1.msra.mxu0 0.0
        %5770 = vmatprep.subr.mxu0 0.0
        %5771 = vmatpush1.msra.mxu0 0.0
        %5772 = vmatprep.subr.mxu0 0.0
        %5773 = vmatpush1.msra.mxu0 0.0
        %5774 = vmatprep.subr.mxu0 0.0
        %5775 = vmatpush1.msra.mxu0 0.0
        %5776 = vmatprep.subr.mxu0 0.0
        %5777 = vmatpush1.msra.mxu0 0.0
        %5778 = vmatprep.subr.mxu0 0.0
        %5779 = vmatpush1.msra.mxu0 0.0
        %5780 = vmatprep.subr.mxu0 0.0
        %5781 = vmatpush1.msra.mxu0 0.0
        %5782 = vmatprep.subr.mxu0 0.0
        %5783 = vmatpush1.msra.mxu0 0.0
        %5784 = vmatprep.subr.mxu0 0.0
        %5785 = vmatpush1.msra.mxu0 0.0
        %5786 = vmatprep.subr.mxu0 0.0
        %5787 = vmatpush1.msra.mxu0 0.0
        %5788 = vmatprep.subr.mxu0 0.0
        %5789 = vmatpush1.msra.mxu0 0.0
        %5790 = vmatprep.subr.mxu0 0.0
        %5791 = vmatpush1.msra.mxu0 0.0
        %5792 = vmatprep.mubr.f32.mxu0 0.0
        %5793 = vmatmul.mubr.f32.gmra.mrb[0].mxu0 %v5726
        %v5794 = vpop.f32.mrb[0].mxu0
        %v5795 = vadd.f32 0.0, %v5794
        %v5796 = vpop.f32.mrb[0].mxu0
        %v5797 = vadd.f32 0.0, %v5796
        %5798 = vdwg.mxu0
        %5799 = vmatprep.subr.mxu0 %v5719
        %5800 = vmatpush1.msra.mxu0 %v5718
        %5801 = vmatprep.subr.mxu0 0.0
        %5802 = vmatpush1.msra.mxu0 0.0
        %5803 = vmatprep.subr.mxu0 0.0
        %5804 = vmatpush1.msra.mxu0 0.0
        %5805 = vmatprep.subr.mxu0 0.0
        %5806 = vmatpush1.msra.mxu0 0.0
        %5807 = vmatprep.subr.mxu0 0.0
        %5808 = vmatpush1.msra.mxu0 0.0
        %5809 = vmatprep.subr.mxu0 0.0
        %5810 = vmatpush1.msra.mxu0 0.0
        %5811 = vmatprep.subr.mxu0 0.0
        %5812 = vmatpush1.msra.mxu0 0.0
        %5813 = vmatprep.subr.mxu0 0.0
        %5814 = vmatpush1.msra.mxu0 0.0
        %5815 = vmatprep.subr.mxu0 0.0
        %5816 = vmatpush1.msra.mxu0 0.0
        %5817 = vmatprep.subr.mxu0 0.0
        %5818 = vmatpush1.msra.mxu0 0.0
        %5819 = vmatprep.subr.mxu0 0.0
        %5820 = vmatpush1.msra.mxu0 0.0
        %5821 = vmatprep.subr.mxu0 0.0
        %5822 = vmatpush1.msra.mxu0 0.0
        %5823 = vmatprep.subr.mxu0 0.0
        %5824 = vmatpush1.msra.mxu0 0.0
        %5825 = vmatprep.subr.mxu0 0.0
        %5826 = vmatpush1.msra.mxu0 0.0
        %5827 = vmatprep.subr.mxu0 0.0
        %5828 = vmatpush1.msra.mxu0 0.0
        %5829 = vmatprep.subr.mxu0 0.0
        %5830 = vmatpush1.msra.mxu0 0.0
        %5831 = vmatprep.subr.mxu0 0.0
        %5832 = vmatpush1.msra.mxu0 0.0
        %5833 = vmatprep.subr.mxu0 0.0
        %5834 = vmatpush1.msra.mxu0 0.0
        %5835 = vmatprep.subr.mxu0 0.0
        %5836 = vmatpush1.msra.mxu0 0.0
        %5837 = vmatprep.subr.mxu0 0.0
        %5838 = vmatpush1.msra.mxu0 0.0
        %5839 = vmatprep.subr.mxu0 0.0
        %5840 = vmatpush1.msra.mxu0 0.0
        %5841 = vmatprep.subr.mxu0 0.0
        %5842 = vmatpush1.msra.mxu0 0.0
        %5843 = vmatprep.subr.mxu0 0.0
        %5844 = vmatpush1.msra.mxu0 0.0
        %5845 = vmatprep.subr.mxu0 0.0
        %5846 = vmatpush1.msra.mxu0 0.0
        %5847 = vmatprep.subr.mxu0 0.0
        %5848 = vmatpush1.msra.mxu0 0.0
        %5849 = vmatprep.subr.mxu0 0.0
        %5850 = vmatpush1.msra.mxu0 0.0
        %5851 = vmatprep.subr.mxu0 0.0
        %5852 = vmatpush1.msra.mxu0 0.0
        %5853 = vmatprep.subr.mxu0 0.0
        %5854 = vmatpush1.msra.mxu0 0.0
        %5855 = vmatprep.subr.mxu0 0.0
        %5856 = vmatpush1.msra.mxu0 0.0
        %5857 = vmatprep.subr.mxu0 0.0
        %5858 = vmatpush1.msra.mxu0 0.0
        %5859 = vmatprep.subr.mxu0 0.0
        %5860 = vmatpush1.msra.mxu0 0.0
        %5861 = vmatprep.subr.mxu0 0.0
        %5862 = vmatpush1.msra.mxu0 0.0
        %5863 = vmatprep.mubr.f32.mxu0 0.0
        %5864 = vmatmul.mubr.f32.gmra.mrb[0].mxu0 %v5726
        %v5865 = vpop.f32.mrb[0].mxu0
        %v5866 = vadd.f32 0.0, %v5865
        %v5867 = vpop.f32.mrb[0].mxu0
        %v5868 = vadd.f32 0.0, %v5867
        %5869 = vdwg.mxu0
        %5870 = vmatprep.subr.mxu0 %v5721
        %5871 = vmatpush1.msra.mxu0 %v5720
        %5872 = vmatprep.subr.mxu0 0.0
        %5873 = vmatpush1.msra.mxu0 0.0
        %5874 = vmatprep.subr.mxu0 0.0
        %5875 = vmatpush1.msra.mxu0 0.0
        %5876 = vmatprep.subr.mxu0 0.0
        %5877 = vmatpush1.msra.mxu0 0.0
        %5878 = vmatprep.subr.mxu0 0.0
        %5879 = vmatpush1.msra.mxu0 0.0
        %5880 = vmatprep.subr.mxu0 0.0
        %5881 = vmatpush1.msra.mxu0 0.0
        %5882 = vmatprep.subr.mxu0 0.0
        %5883 = vmatpush1.msra.mxu0 0.0
        %5884 = vmatprep.subr.mxu0 0.0
        %5885 = vmatpush1.msra.mxu0 0.0
        %5886 = vmatprep.subr.mxu0 0.0
        %5887 = vmatpush1.msra.mxu0 0.0
        %5888 = vmatprep.subr.mxu0 0.0
        %5889 = vmatpush1.msra.mxu0 0.0
        %5890 = vmatprep.subr.mxu0 0.0
        %5891 = vmatpush1.msra.mxu0 0.0
        %5892 = vmatprep.subr.mxu0 0.0
        %5893 = vmatpush1.msra.mxu0 0.0
        %5894 = vmatprep.subr.mxu0 0.0
        %5895 = vmatpush1.msra.mxu0 0.0
        %5896 = vmatprep.subr.mxu0 0.0
        %5897 = vmatpush1.msra.mxu0 0.0
        %5898 = vmatprep.subr.mxu0 0.0
        %5899 = vmatpush1.msra.mxu0 0.0
        %5900 = vmatprep.subr.mxu0 0.0
        %5901 = vmatpush1.msra.mxu0 0.0
        %5902 = vmatprep.subr.mxu0 0.0
        %5903 = vmatpush1.msra.mxu0 0.0
        %5904 = vmatprep.subr.mxu0 0.0
        %5905 = vmatpush1.msra.mxu0 0.0
        %5906 = vmatprep.subr.mxu0 0.0
        %5907 = vmatpush1.msra.mxu0 0.0
        %5908 = vmatprep.subr.mxu0 0.0
        %5909 = vmatpush1.msra.mxu0 0.0
        %5910 = vmatprep.subr.mxu0 0.0
        %5911 = vmatpush1.msra.mxu0 0.0
        %5912 = vmatprep.subr.mxu0 0.0
        %5913 = vmatpush1.msra.mxu0 0.0
        %5914 = vmatprep.subr.mxu0 0.0
        %5915 = vmatpush1.msra.mxu0 0.0
        %5916 = vmatprep.subr.mxu0 0.0
        %5917 = vmatpush1.msra.mxu0 0.0
        %5918 = vmatprep.subr.mxu0 0.0
        %5919 = vmatpush1.msra.mxu0 0.0
        %5920 = vmatprep.subr.mxu0 0.0
        %5921 = vmatpush1.msra.mxu0 0.0
        %5922 = vmatprep.subr.mxu0 0.0
        %5923 = vmatpush1.msra.mxu0 0.0
        %5924 = vmatprep.subr.mxu0 0.0
        %5925 = vmatpush1.msra.mxu0 0.0
        %5926 = vmatprep.subr.mxu0 0.0
        %5927 = vmatpush1.msra.mxu0 0.0
        %5928 = vmatprep.subr.mxu0 0.0
        %5929 = vmatpush1.msra.mxu0 0.0
        %5930 = vmatprep.subr.mxu0 0.0
        %5931 = vmatpush1.msra.mxu0 0.0
        %5932 = vmatprep.subr.mxu0 0.0
        %5933 = vmatpush1.msra.mxu0 0.0
        %5934 = vmatprep.mubr.f32.mxu0 0.0
        %5935 = vmatmul.mubr.f32.gmra.mrb[0].mxu0 %v5726
        %v5936 = vpop.f32.mrb[0].mxu0
        %v5937 = vadd.f32 0.0, %v5936
        %v5938 = vpop.f32.mrb[0].mxu0
        %v5939 = vadd.f32 0.0, %v5938
        %5940 = vdwg.mxu0
        %5941 = vmatprep.subr.mxu0 %v5723
        %5942 = vmatpush1.msra.mxu0 %v5722
        %5943 = vmatprep.subr.mxu0 0.0
        %5944 = vmatpush1.msra.mxu0 0.0
        %5945 = vmatprep.subr.mxu0 0.0
        %5946 = vmatpush1.msra.mxu0 0.0
        %5947 = vmatprep.subr.mxu0 0.0
        %5948 = vmatpush1.msra.mxu0 0.0
        %5949 = vmatprep.subr.mxu0 0.0
        %5950 = vmatpush1.msra.mxu0 0.0
        %5951 = vmatprep.subr.mxu0 0.0
        %5952 = vmatpush1.msra.mxu0 0.0
        %5953 = vmatprep.subr.mxu0 0.0
        %5954 = vmatpush1.msra.mxu0 0.0
        %5955 = vmatprep.subr.mxu0 0.0
        %5956 = vmatpush1.msra.mxu0 0.0
        %5957 = vmatprep.subr.mxu0 0.0
        %5958 = vmatpush1.msra.mxu0 0.0
        %5959 = vmatprep.subr.mxu0 0.0
        %5960 = vmatpush1.msra.mxu0 0.0
        %5961 = vmatprep.subr.mxu0 0.0
        %5962 = vmatpush1.msra.mxu0 0.0
        %5963 = vmatprep.subr.mxu0 0.0
        %5964 = vmatpush1.msra.mxu0 0.0
        %5965 = vmatprep.subr.mxu0 0.0
        %5966 = vmatpush1.msra.mxu0 0.0
        %5967 = vmatprep.subr.mxu0 0.0
        %5968 = vmatpush1.msra.mxu0 0.0
        %5969 = vmatprep.subr.mxu0 0.0
        %5970 = vmatpush1.msra.mxu0 0.0
        %5971 = vmatprep.subr.mxu0 0.0
        %5972 = vmatpush1.msra.mxu0 0.0
        %5973 = vmatprep.subr.mxu0 0.0
        %5974 = vmatpush1.msra.mxu0 0.0
        %5975 = vmatprep.subr.mxu0 0.0
        %5976 = vmatpush1.msra.mxu0 0.0
        %5977 = vmatprep.subr.mxu0 0.0
        %5978 = vmatpush1.msra.mxu0 0.0
        %5979 = vmatprep.subr.mxu0 0.0
        %5980 = vmatpush1.msra.mxu0 0.0
        %5981 = vmatprep.subr.mxu0 0.0
        %5982 = vmatpush1.msra.mxu0 0.0
        %5983 = vmatprep.subr.mxu0 0.0
        %5984 = vmatpush1.msra.mxu0 0.0
        %5985 = vmatprep.subr.mxu0 0.0
        %5986 = vmatpush1.msra.mxu0 0.0
        %5987 = vmatprep.subr.mxu0 0.0
        %5988 = vmatpush1.msra.mxu0 0.0
        %5989 = vmatprep.subr.mxu0 0.0
        %5990 = vmatpush1.msra.mxu0 0.0
        %5991 = vmatprep.subr.mxu0 0.0
        %5992 = vmatpush1.msra.mxu0 0.0
        %5993 = vmatprep.subr.mxu0 0.0
        %5994 = vmatpush1.msra.mxu0 0.0
        %5995 = vmatprep.subr.mxu0 0.0
        %5996 = vmatpush1.msra.mxu0 0.0
        %5997 = vmatprep.subr.mxu0 0.0
        %5998 = vmatpush1.msra.mxu0 0.0
        %5999 = vmatprep.subr.mxu0 0.0
        %6000 = vmatpush1.msra.mxu0 0.0
        %6001 = vmatprep.subr.mxu0 0.0
        %6002 = vmatpush1.msra.mxu0 0.0
        %6003 = vmatprep.subr.mxu0 0.0
        %6004 = vmatpush1.msra.mxu0 0.0
        %6005 = vmatprep.mubr.f32.mxu0 0.0
        %6006 = vmatmul.mubr.f32.gmra.mrb[0].mxu0 %v5726
        %v6007 = vpop.f32.mrb[0].mxu0
        %v6008 = vadd.f32 0.0, %v6007
        %v6009 = vpop.f32.mrb[0].mxu0
        %v6010 = vadd.f32 0.0, %v6009
        %6011 = vdwg.mxu0
        %v6012 = vadd.f32 %v5684, %v5795
        %v6013 = vadd.f32 %v5685, %v5797
        %v6014 = vadd.f32 %v5686, %v5866
        %v6015 = vadd.f32 %v5687, %v5868
        %v6016 = vadd.f32 %v5688, %v5937
        %v6017 = vadd.f32 %v5689, %v5939
        %v6018 = vadd.f32 %v5690, %v6008
        %v6019 = vadd.f32 %v5691, %v6010
        %6020 = vrot.lane.b32.xlu0 %v3763, 96
        %v6021 = vpop.permute.xlu0 %6020
        %6022 = vrot.lane.b32.xlu0 %v3764, 96
        %v6023 = vpop.permute.xlu0 %6022
        %6024 = vrot.lane.b32.xlu0 %v3765, 96
        %v6025 = vpop.permute.xlu0 %6024
        %6026 = vrot.lane.b32.xlu0 %v3766, 96
        %v6027 = vpop.permute.xlu0 %6026
        %6028 = vrot.lane.b32.xlu0 %v3767, 96
        %v6029 = vpop.permute.xlu0 %6028
        %6030 = vrot.lane.b32.xlu0 %v3768, 96
        %v6031 = vpop.permute.xlu0 %6030
        %6032 = vrot.lane.b32.xlu0 %v3769, 96
        %v6033 = vpop.permute.xlu0 %6032
        %6034 = vrot.lane.b32.xlu0 %v3770, 96
        %v6035 = vpop.permute.xlu0 %6034
        %v6036 = vsel %vm2955, %v6033, %v6035
        %v6037 = vsel %vm2955, %v6031, %v6033
        %v6038 = vsel %vm2955, %v6029, %v6031
        %v6039 = vsel %vm2955, %v6027, %v6029
        %v6040 = vsel %vm2955, %v6025, %v6027
        %v6041 = vsel %vm2955, %v6023, %v6025
        %v6042 = vsel %vm2955, %v6021, %v6023
        %v6043 = vsel %vm2955, %v6035, %v6021
        %v6044 = vmul.f32 %v6042, %v2979
        %v6045 = vmul.f32 %v6041, %v2983
        %v6046 = vmul.f32 %v6040, %v2987
        %v6047 = vmul.f32 %v6039, %v2991
        %v6048 = vmul.f32 %v6038, %v2995
        %v6049 = vmul.f32 %v6037, %v2999
        %v6050 = vmul.f32 %v6036, %v3003
        %v6051 = vmul.f32 %v6043, %v3007
        %v6052 = vld [vmem:[%s4 + $0x38] sm:$0xff]
        %v6054 = vsel %vm3837, %v6052, 0
        %6056 = vmatprep.subr.mxu0 %v6045
        %6057 = vmatpush1.msra.mxu0 %v6044
        %6058 = vmatprep.subr.mxu0 0.0
        %6059 = vmatpush1.msra.mxu0 0.0
        %6060 = vmatprep.subr.mxu0 0.0
        %6061 = vmatpush1.msra.mxu0 0.0
        %6062 = vmatprep.subr.mxu0 0.0
        %6063 = vmatpush1.msra.mxu0 0.0
        %6064 = vmatprep.subr.mxu0 0.0
        %6065 = vmatpush1.msra.mxu0 0.0
        %6066 = vmatprep.subr.mxu0 0.0
        %6067 = vmatpush1.msra.mxu0 0.0
        %6068 = vmatprep.subr.mxu0 0.0
        %6069 = vmatpush1.msra.mxu0 0.0
        %6070 = vmatprep.subr.mxu0 0.0
        %6071 = vmatpush1.msra.mxu0 0.0
        %6072 = vmatprep.subr.mxu0 0.0
        %6073 = vmatpush1.msra.mxu0 0.0
        %6074 = vmatprep.subr.mxu0 0.0
        %6075 = vmatpush1.msra.mxu0 0.0
        %6076 = vmatprep.subr.mxu0 0.0
        %6077 = vmatpush1.msra.mxu0 0.0
        %6078 = vmatprep.subr.mxu0 0.0
        %6079 = vmatpush1.msra.mxu0 0.0
        %6080 = vmatprep.subr.mxu0 0.0
        %6081 = vmatpush1.msra.mxu0 0.0
        %6082 = vmatprep.subr.mxu0 0.0
        %6083 = vmatpush1.msra.mxu0 0.0
        %6084 = vmatprep.subr.mxu0 0.0
        %6085 = vmatpush1.msra.mxu0 0.0
        %6086 = vmatprep.subr.mxu0 0.0
        %6087 = vmatpush1.msra.mxu0 0.0
        %6088 = vmatprep.subr.mxu0 0.0
        %6089 = vmatpush1.msra.mxu0 0.0
        %6090 = vmatprep.subr.mxu0 0.0
        %6091 = vmatpush1.msra.mxu0 0.0
        %6092 = vmatprep.subr.mxu0 0.0
        %6093 = vmatpush1.msra.mxu0 0.0
        %6094 = vmatprep.subr.mxu0 0.0
        %6095 = vmatpush1.msra.mxu0 0.0
        %6096 = vmatprep.subr.mxu0 0.0
        %6097 = vmatpush1.msra.mxu0 0.0
        %6098 = vmatprep.subr.mxu0 0.0
        %6099 = vmatpush1.msra.mxu0 0.0
        %6100 = vmatprep.subr.mxu0 0.0
        %6101 = vmatpush1.msra.mxu0 0.0
        %6102 = vmatprep.subr.mxu0 0.0
        %6103 = vmatpush1.msra.mxu0 0.0
        %6104 = vmatprep.subr.mxu0 0.0
        %6105 = vmatpush1.msra.mxu0 0.0
        %6106 = vmatprep.subr.mxu0 0.0
        %6107 = vmatpush1.msra.mxu0 0.0
        %6108 = vmatprep.subr.mxu0 0.0
        %6109 = vmatpush1.msra.mxu0 0.0
        %6110 = vmatprep.subr.mxu0 0.0
        %6111 = vmatpush1.msra.mxu0 0.0
        %6112 = vmatprep.subr.mxu0 0.0
        %6113 = vmatpush1.msra.mxu0 0.0
        %6114 = vmatprep.subr.mxu0 0.0
        %6115 = vmatpush1.msra.mxu0 0.0
        %6116 = vmatprep.subr.mxu0 0.0
        %6117 = vmatpush1.msra.mxu0 0.0
        %6118 = vmatprep.subr.mxu0 0.0
        %6119 = vmatpush1.msra.mxu0 0.0
        %6120 = vmatprep.mubr.f32.mxu0 0.0
        %6121 = vmatmul.mubr.f32.gmra.mrb[0].mxu0 %v6054
        %v6122 = vpop.f32.mrb[0].mxu0
        %v6123 = vadd.f32 0.0, %v6122
        %v6124 = vpop.f32.mrb[0].mxu0
        %v6125 = vadd.f32 0.0, %v6124
        %6126 = vdwg.mxu0
        %6127 = vmatprep.subr.mxu0 %v6047
        %6128 = vmatpush1.msra.mxu0 %v6046
        %6129 = vmatprep.subr.mxu0 0.0
        %6130 = vmatpush1.msra.mxu0 0.0
        %6131 = vmatprep.subr.mxu0 0.0
        %6132 = vmatpush1.msra.mxu0 0.0
        %6133 = vmatprep.subr.mxu0 0.0
        %6134 = vmatpush1.msra.mxu0 0.0
        %6135 = vmatprep.subr.mxu0 0.0
        %6136 = vmatpush1.msra.mxu0 0.0
        %6137 = vmatprep.subr.mxu0 0.0
        %6138 = vmatpush1.msra.mxu0 0.0
        %6139 = vmatprep.subr.mxu0 0.0
        %6140 = vmatpush1.msra.mxu0 0.0
        %6141 = vmatprep.subr.mxu0 0.0
        %6142 = vmatpush1.msra.mxu0 0.0
        %6143 = vmatprep.subr.mxu0 0.0
        %6144 = vmatpush1.msra.mxu0 0.0
        %6145 = vmatprep.subr.mxu0 0.0
        %6146 = vmatpush1.msra.mxu0 0.0
        %6147 = vmatprep.subr.mxu0 0.0
        %6148 = vmatpush1.msra.mxu0 0.0
        %6149 = vmatprep.subr.mxu0 0.0
        %6150 = vmatpush1.msra.mxu0 0.0
        %6151 = vmatprep.subr.mxu0 0.0
        %6152 = vmatpush1.msra.mxu0 0.0
        %6153 = vmatprep.subr.mxu0 0.0
        %6154 = vmatpush1.msra.mxu0 0.0
        %6155 = vmatprep.subr.mxu0 0.0
        %6156 = vmatpush1.msra.mxu0 0.0
        %6157 = vmatprep.subr.mxu0 0.0
        %6158 = vmatpush1.msra.mxu0 0.0
        %6159 = vmatprep.subr.mxu0 0.0
        %6160 = vmatpush1.msra.mxu0 0.0
        %6161 = vmatprep.subr.mxu0 0.0
        %6162 = vmatpush1.msra.mxu0 0.0
        %6163 = vmatprep.subr.mxu0 0.0
        %6164 = vmatpush1.msra.mxu0 0.0
        %6165 = vmatprep.subr.mxu0 0.0
        %6166 = vmatpush1.msra.mxu0 0.0
        %6167 = vmatprep.subr.mxu0 0.0
        %6168 = vmatpush1.msra.mxu0 0.0
        %6169 = vmatprep.subr.mxu0 0.0
        %6170 = vmatpush1.msra.mxu0 0.0
        %6171 = vmatprep.subr.mxu0 0.0
        %6172 = vmatpush1.msra.mxu0 0.0
        %6173 = vmatprep.subr.mxu0 0.0
        %6174 = vmatpush1.msra.mxu0 0.0
        %6175 = vmatprep.subr.mxu0 0.0
        %6176 = vmatpush1.msra.mxu0 0.0
        %6177 = vmatprep.subr.mxu0 0.0
        %6178 = vmatpush1.msra.mxu0 0.0
        %6179 = vmatprep.subr.mxu0 0.0
        %6180 = vmatpush1.msra.mxu0 0.0
        %6181 = vmatprep.subr.mxu0 0.0
        %6182 = vmatpush1.msra.mxu0 0.0
        %6183 = vmatprep.subr.mxu0 0.0
        %6184 = vmatpush1.msra.mxu0 0.0
        %6185 = vmatprep.subr.mxu0 0.0
        %6186 = vmatpush1.msra.mxu0 0.0
        %6187 = vmatprep.subr.mxu0 0.0
        %6188 = vmatpush1.msra.mxu0 0.0
        %6189 = vmatprep.subr.mxu0 0.0
        %6190 = vmatpush1.msra.mxu0 0.0
        %6191 = vmatprep.mubr.f32.mxu0 0.0
        %6192 = vmatmul.mubr.f32.gmra.mrb[0].mxu0 %v6054
        %v6193 = vpop.f32.mrb[0].mxu0
        %v6194 = vadd.f32 0.0, %v6193
        %v6195 = vpop.f32.mrb[0].mxu0
        %v6196 = vadd.f32 0.0, %v6195
        %6197 = vdwg.mxu0
        %6198 = vmatprep.subr.mxu0 %v6049
        %6199 = vmatpush1.msra.mxu0 %v6048
        %6200 = vmatprep.subr.mxu0 0.0
        %6201 = vmatpush1.msra.mxu0 0.0
        %6202 = vmatprep.subr.mxu0 0.0
        %6203 = vmatpush1.msra.mxu0 0.0
        %6204 = vmatprep.subr.mxu0 0.0
        %6205 = vmatpush1.msra.mxu0 0.0
        %6206 = vmatprep.subr.mxu0 0.0
        %6207 = vmatpush1.msra.mxu0 0.0
        %6208 = vmatprep.subr.mxu0 0.0
        %6209 = vmatpush1.msra.mxu0 0.0
        %6210 = vmatprep.subr.mxu0 0.0
        %6211 = vmatpush1.msra.mxu0 0.0
        %6212 = vmatprep.subr.mxu0 0.0
        %6213 = vmatpush1.msra.mxu0 0.0
        %6214 = vmatprep.subr.mxu0 0.0
        %6215 = vmatpush1.msra.mxu0 0.0
        %6216 = vmatprep.subr.mxu0 0.0
        %6217 = vmatpush1.msra.mxu0 0.0
        %6218 = vmatprep.subr.mxu0 0.0
        %6219 = vmatpush1.msra.mxu0 0.0
        %6220 = vmatprep.subr.mxu0 0.0
        %6221 = vmatpush1.msra.mxu0 0.0
        %6222 = vmatprep.subr.mxu0 0.0
        %6223 = vmatpush1.msra.mxu0 0.0
        %6224 = vmatprep.subr.mxu0 0.0
        %6225 = vmatpush1.msra.mxu0 0.0
        %6226 = vmatprep.subr.mxu0 0.0
        %6227 = vmatpush1.msra.mxu0 0.0
        %6228 = vmatprep.subr.mxu0 0.0
        %6229 = vmatpush1.msra.mxu0 0.0
        %6230 = vmatprep.subr.mxu0 0.0
        %6231 = vmatpush1.msra.mxu0 0.0
        %6232 = vmatprep.subr.mxu0 0.0
        %6233 = vmatpush1.msra.mxu0 0.0
        %6234 = vmatprep.subr.mxu0 0.0
        %6235 = vmatpush1.msra.mxu0 0.0
        %6236 = vmatprep.subr.mxu0 0.0
        %6237 = vmatpush1.msra.mxu0 0.0
        %6238 = vmatprep.subr.mxu0 0.0
        %6239 = vmatpush1.msra.mxu0 0.0
        %6240 = vmatprep.subr.mxu0 0.0
        %6241 = vmatpush1.msra.mxu0 0.0
        %6242 = vmatprep.subr.mxu0 0.0
        %6243 = vmatpush1.msra.mxu0 0.0
        %6244 = vmatprep.subr.mxu0 0.0
        %6245 = vmatpush1.msra.mxu0 0.0
        %6246 = vmatprep.subr.mxu0 0.0
        %6247 = vmatpush1.msra.mxu0 0.0
        %6248 = vmatprep.subr.mxu0 0.0
        %6249 = vmatpush1.msra.mxu0 0.0
        %6250 = vmatprep.subr.mxu0 0.0
        %6251 = vmatpush1.msra.mxu0 0.0
        %6252 = vmatprep.subr.mxu0 0.0
        %6253 = vmatpush1.msra.mxu0 0.0
        %6254 = vmatprep.subr.mxu0 0.0
        %6255 = vmatpush1.msra.mxu0 0.0
        %6256 = vmatprep.subr.mxu0 0.0
        %6257 = vmatpush1.msra.mxu0 0.0
        %6258 = vmatprep.subr.mxu0 0.0
        %6259 = vmatpush1.msra.mxu0 0.0
        %6260 = vmatprep.subr.mxu0 0.0
        %6261 = vmatpush1.msra.mxu0 0.0
        %6262 = vmatprep.mubr.f32.mxu0 0.0
        %6263 = vmatmul.mubr.f32.gmra.mrb[0].mxu0 %v6054
        %v6264 = vpop.f32.mrb[0].mxu0
        %v6265 = vadd.f32 0.0, %v6264
        %v6266 = vpop.f32.mrb[0].mxu0
        %v6267 = vadd.f32 0.0, %v6266
        %6268 = vdwg.mxu0
        %6269 = vmatprep.subr.mxu0 %v6051
        %6270 = vmatpush1.msra.mxu0 %v6050
        %6271 = vmatprep.subr.mxu0 0.0
        %6272 = vmatpush1.msra.mxu0 0.0
        %6273 = vmatprep.subr.mxu0 0.0
        %6274 = vmatpush1.msra.mxu0 0.0
        %6275 = vmatprep.subr.mxu0 0.0
        %6276 = vmatpush1.msra.mxu0 0.0
        %6277 = vmatprep.subr.mxu0 0.0
        %6278 = vmatpush1.msra.mxu0 0.0
        %6279 = vmatprep.subr.mxu0 0.0
        %6280 = vmatpush1.msra.mxu0 0.0
        %6281 = vmatprep.subr.mxu0 0.0
        %6282 = vmatpush1.msra.mxu0 0.0
        %6283 = vmatprep.subr.mxu0 0.0
        %6284 = vmatpush1.msra.mxu0 0.0
        %6285 = vmatprep.subr.mxu0 0.0
        %6286 = vmatpush1.msra.mxu0 0.0
        %6287 = vmatprep.subr.mxu0 0.0
        %6288 = vmatpush1.msra.mxu0 0.0
        %6289 = vmatprep.subr.mxu0 0.0
        %6290 = vmatpush1.msra.mxu0 0.0
        %6291 = vmatprep.subr.mxu0 0.0
        %6292 = vmatpush1.msra.mxu0 0.0
        %6293 = vmatprep.subr.mxu0 0.0
        %6294 = vmatpush1.msra.mxu0 0.0
        %6295 = vmatprep.subr.mxu0 0.0
        %6296 = vmatpush1.msra.mxu0 0.0
        %6297 = vmatprep.subr.mxu0 0.0
        %6298 = vmatpush1.msra.mxu0 0.0
        %6299 = vmatprep.subr.mxu0 0.0
        %6300 = vmatpush1.msra.mxu0 0.0
        %6301 = vmatprep.subr.mxu0 0.0
        %6302 = vmatpush1.msra.mxu0 0.0
        %6303 = vmatprep.subr.mxu0 0.0
        %6304 = vmatpush1.msra.mxu0 0.0
        %6305 = vmatprep.subr.mxu0 0.0
        %6306 = vmatpush1.msra.mxu0 0.0
        %6307 = vmatprep.subr.mxu0 0.0
        %6308 = vmatpush1.msra.mxu0 0.0
        %6309 = vmatprep.subr.mxu0 0.0
        %6310 = vmatpush1.msra.mxu0 0.0
        %6311 = vmatprep.subr.mxu0 0.0
        %6312 = vmatpush1.msra.mxu0 0.0
        %6313 = vmatprep.subr.mxu0 0.0
        %6314 = vmatpush1.msra.mxu0 0.0
        %6315 = vmatprep.subr.mxu0 0.0
        %6316 = vmatpush1.msra.mxu0 0.0
        %6317 = vmatprep.subr.mxu0 0.0
        %6318 = vmatpush1.msra.mxu0 0.0
        %6319 = vmatprep.subr.mxu0 0.0
        %6320 = vmatpush1.msra.mxu0 0.0
        %6321 = vmatprep.subr.mxu0 0.0
        %6322 = vmatpush1.msra.mxu0 0.0
        %6323 = vmatprep.subr.mxu0 0.0
        %6324 = vmatpush1.msra.mxu0 0.0
        %6325 = vmatprep.subr.mxu0 0.0
        %6326 = vmatpush1.msra.mxu0 0.0
        %6327 = vmatprep.subr.mxu0 0.0
        %6328 = vmatpush1.msra.mxu0 0.0
        %6329 = vmatprep.subr.mxu0 0.0
        %6330 = vmatpush1.msra.mxu0 0.0
        %6331 = vmatprep.subr.mxu0 0.0
        %6332 = vmatpush1.msra.mxu0 0.0
        %6333 = vmatprep.mubr.f32.mxu0 0.0
        %6334 = vmatmul.mubr.f32.gmra.mrb[0].mxu0 %v6054
        %v6335 = vpop.f32.mrb[0].mxu0
        %v6336 = vadd.f32 0.0, %v6335
        %v6337 = vpop.f32.mrb[0].mxu0
        %v6338 = vadd.f32 0.0, %v6337
        %6339 = vdwg.mxu0
        %v6340 = vadd.f32 %v6012, %v6123
        %v6341 = vadd.f32 %v6013, %v6125
        %v6342 = vadd.f32 %v6014, %v6194
        %v6343 = vadd.f32 %v6015, %v6196
        %v6344 = vadd.f32 %v6016, %v6265
        %v6345 = vadd.f32 %v6017, %v6267
        %v6346 = vadd.f32 %v6018, %v6336
        %v6347 = vadd.f32 %v6019, %v6338
        %6348 = vrot.lane.b32.xlu0 %v3763, 95
        %v6349 = vpop.permute.xlu0 %6348
        %6350 = vrot.lane.b32.xlu0 %v3764, 95
        %v6351 = vpop.permute.xlu0 %6350
        %6352 = vrot.lane.b32.xlu0 %v3765, 95
        %v6353 = vpop.permute.xlu0 %6352
        %6354 = vrot.lane.b32.xlu0 %v3766, 95
        %v6355 = vpop.permute.xlu0 %6354
        %6356 = vrot.lane.b32.xlu0 %v3767, 95
        %v6357 = vpop.permute.xlu0 %6356
        %6358 = vrot.lane.b32.xlu0 %v3768, 95
        %v6359 = vpop.permute.xlu0 %6358
        %6360 = vrot.lane.b32.xlu0 %v3769, 95
        %v6361 = vpop.permute.xlu0 %6360
        %6362 = vrot.lane.b32.xlu0 %v3770, 95
        %v6363 = vpop.permute.xlu0 %6362
        %v6364 = vsel %vm3352, %v6361, %v6363
        %v6365 = vsel %vm3352, %v6359, %v6361
        %v6366 = vsel %vm3352, %v6357, %v6359
        %v6367 = vsel %vm3352, %v6355, %v6357
        %v6368 = vsel %vm3352, %v6353, %v6355
        %v6369 = vsel %vm3352, %v6351, %v6353
        %v6370 = vsel %vm3352, %v6349, %v6351
        %v6371 = vsel %vm3352, %v6363, %v6349
        %v6372 = vmul.f32 %v6370, %v3376
        %v6373 = vmul.f32 %v6369, %v3380
        %v6374 = vmul.f32 %v6368, %v3384
        %v6375 = vmul.f32 %v6367, %v3388
        %v6376 = vmul.f32 %v6366, %v3392
        %v6377 = vmul.f32 %v6365, %v3396
        %v6378 = vmul.f32 %v6364, %v3400
        %v6379 = vmul.f32 %v6371, %v3404
        %v6380 = vld [vmem:[%s4 + $0x40] sm:$0xff]
        %v6382 = vsel %vm3837, %v6380, 0
        %6384 = vmatprep.subr.mxu0 %v6373
        %6385 = vmatpush1.msra.mxu0 %v6372
        %6386 = vmatprep.subr.mxu0 0.0
        %6387 = vmatpush1.msra.mxu0 0.0
        %6388 = vmatprep.subr.mxu0 0.0
        %6389 = vmatpush1.msra.mxu0 0.0
        %6390 = vmatprep.subr.mxu0 0.0
        %6391 = vmatpush1.msra.mxu0 0.0
        %6392 = vmatprep.subr.mxu0 0.0
        %6393 = vmatpush1.msra.mxu0 0.0
        %6394 = vmatprep.subr.mxu0 0.0
        %6395 = vmatpush1.msra.mxu0 0.0
        %6396 = vmatprep.subr.mxu0 0.0
        %6397 = vmatpush1.msra.mxu0 0.0
        %6398 = vmatprep.subr.mxu0 0.0
        %6399 = vmatpush1.msra.mxu0 0.0
        %6400 = vmatprep.subr.mxu0 0.0
        %6401 = vmatpush1.msra.mxu0 0.0
        %6402 = vmatprep.subr.mxu0 0.0
        %6403 = vmatpush1.msra.mxu0 0.0
        %6404 = vmatprep.subr.mxu0 0.0
        %6405 = vmatpush1.msra.mxu0 0.0
        %6406 = vmatprep.subr.mxu0 0.0
        %6407 = vmatpush1.msra.mxu0 0.0
        %6408 = vmatprep.subr.mxu0 0.0
        %6409 = vmatpush1.msra.mxu0 0.0
        %6410 = vmatprep.subr.mxu0 0.0
        %6411 = vmatpush1.msra.mxu0 0.0
        %6412 = vmatprep.subr.mxu0 0.0
        %6413 = vmatpush1.msra.mxu0 0.0
        %6414 = vmatprep.subr.mxu0 0.0
        %6415 = vmatpush1.msra.mxu0 0.0
        %6416 = vmatprep.subr.mxu0 0.0
        %6417 = vmatpush1.msra.mxu0 0.0
        %6418 = vmatprep.subr.mxu0 0.0
        %6419 = vmatpush1.msra.mxu0 0.0
        %6420 = vmatprep.subr.mxu0 0.0
        %6421 = vmatpush1.msra.mxu0 0.0
        %6422 = vmatprep.subr.mxu0 0.0
        %6423 = vmatpush1.msra.mxu0 0.0
        %6424 = vmatprep.subr.mxu0 0.0
        %6425 = vmatpush1.msra.mxu0 0.0
        %6426 = vmatprep.subr.mxu0 0.0
        %6427 = vmatpush1.msra.mxu0 0.0
        %6428 = vmatprep.subr.mxu0 0.0
        %6429 = vmatpush1.msra.mxu0 0.0
        %6430 = vmatprep.subr.mxu0 0.0
        %6431 = vmatpush1.msra.mxu0 0.0
        %6432 = vmatprep.subr.mxu0 0.0
        %6433 = vmatpush1.msra.mxu0 0.0
        %6434 = vmatprep.subr.mxu0 0.0
        %6435 = vmatpush1.msra.mxu0 0.0
        %6436 = vmatprep.subr.mxu0 0.0
        %6437 = vmatpush1.msra.mxu0 0.0
        %6438 = vmatprep.subr.mxu0 0.0
        %6439 = vmatpush1.msra.mxu0 0.0
        %6440 = vmatprep.subr.mxu0 0.0
        %6441 = vmatpush1.msra.mxu0 0.0
        %6442 = vmatprep.subr.mxu0 0.0
        %6443 = vmatpush1.msra.mxu0 0.0
        %6444 = vmatprep.subr.mxu0 0.0
        %6445 = vmatpush1.msra.mxu0 0.0
        %6446 = vmatprep.subr.mxu0 0.0
        %6447 = vmatpush1.msra.mxu0 0.0
        %6448 = vmatprep.mubr.f32.mxu0 0.0
        %6449 = vmatmul.mubr.f32.gmra.mrb[0].mxu0 %v6382
        %v6450 = vpop.f32.mrb[0].mxu0
        %v6451 = vadd.f32 0.0, %v6450
        %v6452 = vpop.f32.mrb[0].mxu0
        %v6453 = vadd.f32 0.0, %v6452
        %6454 = vdwg.mxu0
        %6455 = vmatprep.subr.mxu0 %v6375
        %6456 = vmatpush1.msra.mxu0 %v6374
        %6457 = vmatprep.subr.mxu0 0.0
        %6458 = vmatpush1.msra.mxu0 0.0
        %6459 = vmatprep.subr.mxu0 0.0
        %6460 = vmatpush1.msra.mxu0 0.0
        %6461 = vmatprep.subr.mxu0 0.0
        %6462 = vmatpush1.msra.mxu0 0.0
        %6463 = vmatprep.subr.mxu0 0.0
        %6464 = vmatpush1.msra.mxu0 0.0
        %6465 = vmatprep.subr.mxu0 0.0
        %6466 = vmatpush1.msra.mxu0 0.0
        %6467 = vmatprep.subr.mxu0 0.0
        %6468 = vmatpush1.msra.mxu0 0.0
        %6469 = vmatprep.subr.mxu0 0.0
        %6470 = vmatpush1.msra.mxu0 0.0
        %6471 = vmatprep.subr.mxu0 0.0
        %6472 = vmatpush1.msra.mxu0 0.0
        %6473 = vmatprep.subr.mxu0 0.0
        %6474 = vmatpush1.msra.mxu0 0.0
        %6475 = vmatprep.subr.mxu0 0.0
        %6476 = vmatpush1.msra.mxu0 0.0
        %6477 = vmatprep.subr.mxu0 0.0
        %6478 = vmatpush1.msra.mxu0 0.0
        %6479 = vmatprep.subr.mxu0 0.0
        %6480 = vmatpush1.msra.mxu0 0.0
        %6481 = vmatprep.subr.mxu0 0.0
        %6482 = vmatpush1.msra.mxu0 0.0
        %6483 = vmatprep.subr.mxu0 0.0
        %6484 = vmatpush1.msra.mxu0 0.0
        %6485 = vmatprep.subr.mxu0 0.0
        %6486 = vmatpush1.msra.mxu0 0.0
        %6487 = vmatprep.subr.mxu0 0.0
        %6488 = vmatpush1.msra.mxu0 0.0
        %6489 = vmatprep.subr.mxu0 0.0
        %6490 = vmatpush1.msra.mxu0 0.0
        %6491 = vmatprep.subr.mxu0 0.0
        %6492 = vmatpush1.msra.mxu0 0.0
        %6493 = vmatprep.subr.mxu0 0.0
        %6494 = vmatpush1.msra.mxu0 0.0
        %6495 = vmatprep.subr.mxu0 0.0
        %6496 = vmatpush1.msra.mxu0 0.0
        %6497 = vmatprep.subr.mxu0 0.0
        %6498 = vmatpush1.msra.mxu0 0.0
        %6499 = vmatprep.subr.mxu0 0.0
        %6500 = vmatpush1.msra.mxu0 0.0
        %6501 = vmatprep.subr.mxu0 0.0
        %6502 = vmatpush1.msra.mxu0 0.0
        %6503 = vmatprep.subr.mxu0 0.0
        %6504 = vmatpush1.msra.mxu0 0.0
        %6505 = vmatprep.subr.mxu0 0.0
        %6506 = vmatpush1.msra.mxu0 0.0
        %6507 = vmatprep.subr.mxu0 0.0
        %6508 = vmatpush1.msra.mxu0 0.0
        %6509 = vmatprep.subr.mxu0 0.0
        %6510 = vmatpush1.msra.mxu0 0.0
        %6511 = vmatprep.subr.mxu0 0.0
        %6512 = vmatpush1.msra.mxu0 0.0
        %6513 = vmatprep.subr.mxu0 0.0
        %6514 = vmatpush1.msra.mxu0 0.0
        %6515 = vmatprep.subr.mxu0 0.0
        %6516 = vmatpush1.msra.mxu0 0.0
        %6517 = vmatprep.subr.mxu0 0.0
        %6518 = vmatpush1.msra.mxu0 0.0
        %6519 = vmatprep.mubr.f32.mxu0 0.0
        %6520 = vmatmul.mubr.f32.gmra.mrb[0].mxu0 %v6382
        %v6521 = vpop.f32.mrb[0].mxu0
        %v6522 = vadd.f32 0.0, %v6521
        %v6523 = vpop.f32.mrb[0].mxu0
        %v6524 = vadd.f32 0.0, %v6523
        %6525 = vdwg.mxu0
        %6526 = vmatprep.subr.mxu0 %v6377
        %6527 = vmatpush1.msra.mxu0 %v6376
        %6528 = vmatprep.subr.mxu0 0.0
        %6529 = vmatpush1.msra.mxu0 0.0
        %6530 = vmatprep.subr.mxu0 0.0
        %6531 = vmatpush1.msra.mxu0 0.0
        %6532 = vmatprep.subr.mxu0 0.0
        %6533 = vmatpush1.msra.mxu0 0.0
        %6534 = vmatprep.subr.mxu0 0.0
        %6535 = vmatpush1.msra.mxu0 0.0
        %6536 = vmatprep.subr.mxu0 0.0
        %6537 = vmatpush1.msra.mxu0 0.0
        %6538 = vmatprep.subr.mxu0 0.0
        %6539 = vmatpush1.msra.mxu0 0.0
        %6540 = vmatprep.subr.mxu0 0.0
        %6541 = vmatpush1.msra.mxu0 0.0
        %6542 = vmatprep.subr.mxu0 0.0
        %6543 = vmatpush1.msra.mxu0 0.0
        %6544 = vmatprep.subr.mxu0 0.0
        %6545 = vmatpush1.msra.mxu0 0.0
        %6546 = vmatprep.subr.mxu0 0.0
        %6547 = vmatpush1.msra.mxu0 0.0
        %6548 = vmatprep.subr.mxu0 0.0
        %6549 = vmatpush1.msra.mxu0 0.0
        %6550 = vmatprep.subr.mxu0 0.0
        %6551 = vmatpush1.msra.mxu0 0.0
        %6552 = vmatprep.subr.mxu0 0.0
        %6553 = vmatpush1.msra.mxu0 0.0
        %6554 = vmatprep.subr.mxu0 0.0
        %6555 = vmatpush1.msra.mxu0 0.0
        %6556 = vmatprep.subr.mxu0 0.0
        %6557 = vmatpush1.msra.mxu0 0.0
        %6558 = vmatprep.subr.mxu0 0.0
        %6559 = vmatpush1.msra.mxu0 0.0
        %6560 = vmatprep.subr.mxu0 0.0
        %6561 = vmatpush1.msra.mxu0 0.0
        %6562 = vmatprep.subr.mxu0 0.0
        %6563 = vmatpush1.msra.mxu0 0.0
        %6564 = vmatprep.subr.mxu0 0.0
        %6565 = vmatpush1.msra.mxu0 0.0
        %6566 = vmatprep.subr.mxu0 0.0
        %6567 = vmatpush1.msra.mxu0 0.0
        %6568 = vmatprep.subr.mxu0 0.0
        %6569 = vmatpush1.msra.mxu0 0.0
        %6570 = vmatprep.subr.mxu0 0.0
        %6571 = vmatpush1.msra.mxu0 0.0
        %6572 = vmatprep.subr.mxu0 0.0
        %6573 = vmatpush1.msra.mxu0 0.0
        %6574 = vmatprep.subr.mxu0 0.0
        %6575 = vmatpush1.msra.mxu0 0.0
        %6576 = vmatprep.subr.mxu0 0.0
        %6577 = vmatpush1.msra.mxu0 0.0
        %6578 = vmatprep.subr.mxu0 0.0
        %6579 = vmatpush1.msra.mxu0 0.0
        %6580 = vmatprep.subr.mxu0 0.0
        %6581 = vmatpush1.msra.mxu0 0.0
        %6582 = vmatprep.subr.mxu0 0.0
        %6583 = vmatpush1.msra.mxu0 0.0
        %6584 = vmatprep.subr.mxu0 0.0
        %6585 = vmatpush1.msra.mxu0 0.0
        %6586 = vmatprep.subr.mxu0 0.0
        %6587 = vmatpush1.msra.mxu0 0.0
        %6588 = vmatprep.subr.mxu0 0.0
        %6589 = vmatpush1.msra.mxu0 0.0
        %6590 = vmatprep.mubr.f32.mxu0 0.0
        %6591 = vmatmul.mubr.f32.gmra.mrb[0].mxu0 %v6382
        %v6592 = vpop.f32.mrb[0].mxu0
        %v6593 = vadd.f32 0.0, %v6592
        %v6594 = vpop.f32.mrb[0].mxu0
        %v6595 = vadd.f32 0.0, %v6594
        %6596 = vdwg.mxu0
        %6597 = vmatprep.subr.mxu0 %v6379
        %6598 = vmatpush1.msra.mxu0 %v6378
        %6599 = vmatprep.subr.mxu0 0.0
        %6600 = vmatpush1.msra.mxu0 0.0
        %6601 = vmatprep.subr.mxu0 0.0
        %6602 = vmatpush1.msra.mxu0 0.0
        %6603 = vmatprep.subr.mxu0 0.0
        %6604 = vmatpush1.msra.mxu0 0.0
        %6605 = vmatprep.subr.mxu0 0.0
        %6606 = vmatpush1.msra.mxu0 0.0
        %6607 = vmatprep.subr.mxu0 0.0
        %6608 = vmatpush1.msra.mxu0 0.0
        %6609 = vmatprep.subr.mxu0 0.0
        %6610 = vmatpush1.msra.mxu0 0.0
        %6611 = vmatprep.subr.mxu0 0.0
        %6612 = vmatpush1.msra.mxu0 0.0
        %6613 = vmatprep.subr.mxu0 0.0
        %6614 = vmatpush1.msra.mxu0 0.0
        %6615 = vmatprep.subr.mxu0 0.0
        %6616 = vmatpush1.msra.mxu0 0.0
        %6617 = vmatprep.subr.mxu0 0.0
        %6618 = vmatpush1.msra.mxu0 0.0
        %6619 = vmatprep.subr.mxu0 0.0
        %6620 = vmatpush1.msra.mxu0 0.0
        %6621 = vmatprep.subr.mxu0 0.0
        %6622 = vmatpush1.msra.mxu0 0.0
        %6623 = vmatprep.subr.mxu0 0.0
        %6624 = vmatpush1.msra.mxu0 0.0
        %6625 = vmatprep.subr.mxu0 0.0
        %6626 = vmatpush1.msra.mxu0 0.0
        %6627 = vmatprep.subr.mxu0 0.0
        %6628 = vmatpush1.msra.mxu0 0.0
        %6629 = vmatprep.subr.mxu0 0.0
        %6630 = vmatpush1.msra.mxu0 0.0
        %6631 = vmatprep.subr.mxu0 0.0
        %6632 = vmatpush1.msra.mxu0 0.0
        %6633 = vmatprep.subr.mxu0 0.0
        %6634 = vmatpush1.msra.mxu0 0.0
        %6635 = vmatprep.subr.mxu0 0.0
        %6636 = vmatpush1.msra.mxu0 0.0
        %6637 = vmatprep.subr.mxu0 0.0
        %6638 = vmatpush1.msra.mxu0 0.0
        %6639 = vmatprep.subr.mxu0 0.0
        %6640 = vmatpush1.msra.mxu0 0.0
        %6641 = vmatprep.subr.mxu0 0.0
        %6642 = vmatpush1.msra.mxu0 0.0
        %6643 = vmatprep.subr.mxu0 0.0
        %6644 = vmatpush1.msra.mxu0 0.0
        %6645 = vmatprep.subr.mxu0 0.0
        %6646 = vmatpush1.msra.mxu0 0.0
        %6647 = vmatprep.subr.mxu0 0.0
        %6648 = vmatpush1.msra.mxu0 0.0
        %6649 = vmatprep.subr.mxu0 0.0
        %6650 = vmatpush1.msra.mxu0 0.0
        %6651 = vmatprep.subr.mxu0 0.0
        %6652 = vmatpush1.msra.mxu0 0.0
        %6653 = vmatprep.subr.mxu0 0.0
        %6654 = vmatpush1.msra.mxu0 0.0
        %6655 = vmatprep.subr.mxu0 0.0
        %6656 = vmatpush1.msra.mxu0 0.0
        %6657 = vmatprep.subr.mxu0 0.0
        %6658 = vmatpush1.msra.mxu0 0.0
        %6659 = vmatprep.subr.mxu0 0.0
        %6660 = vmatpush1.msra.mxu0 0.0
        %6661 = vmatprep.mubr.f32.mxu0 0.0
        %6662 = vmatmul.mubr.f32.gmra.mrb[0].mxu0 %v6382
        %v6663 = vpop.f32.mrb[0].mxu0
        %v6664 = vadd.f32 0.0, %v6663
        %v6665 = vpop.f32.mrb[0].mxu0
        %v6666 = vadd.f32 0.0, %v6665
        %6667 = vdwg.mxu0
        %v6668 = vadd.f32 %v6340, %v6451
        %v6669 = vadd.f32 %v6341, %v6453
        %v6670 = vadd.f32 %v6342, %v6522
        %v6671 = vadd.f32 %v6343, %v6524
        %v6672 = vadd.f32 %v6344, %v6593
        %v6673 = vadd.f32 %v6345, %v6595
        %v6674 = vadd.f32 %v6346, %v6664
        %v6675 = vadd.f32 %v6347, %v6666
        %v6676 = vld [vmem:[%s5] sm:$0xff]
        %6678 = vset.pattern.permute.xlu0 0
        %6679 = vperm.xlu0 %6678, %v6676
        %v6680 = vpop.permute.xlu0 %6679
        %v6682 = vadd.f32 %v6668, %v6680
        %v6683 = vadd.f32 %v6669, %v6680
        %v6684 = vadd.f32 %v6670, %v6680
        %v6685 = vadd.f32 %v6671, %v6680
        %v6686 = vadd.f32 %v6672, %v6680
        %v6687 = vadd.f32 %v6673, %v6680
        %v6688 = vadd.f32 %v6674, %v6680
        %v6689 = vadd.f32 %v6675, %v6680
        %vm6690 = vcmp.ge.f32.partialorder %v6682, 0.0
        %vm6691 = vcmp.ge.f32.partialorder %v6683, 0.0
        %vm6692 = vcmp.ge.f32.partialorder %v6684, 0.0
        %vm6693 = vcmp.ge.f32.partialorder %v6685, 0.0
        %vm6694 = vcmp.ge.f32.partialorder %v6686, 0.0
        %vm6695 = vcmp.ge.f32.partialorder %v6687, 0.0
        %vm6696 = vcmp.ge.f32.partialorder %v6688, 0.0
        %vm6697 = vcmp.ge.f32.partialorder %v6689, 0.0
        %v6698 = vmul.f32 %v6682, 0.01
        %v6699 = vmul.f32 %v6683, 0.01
        %v6700 = vmul.f32 %v6684, 0.01
        %v6701 = vmul.f32 %v6685, 0.01
        %v6702 = vmul.f32 %v6686, 0.01
        %v6703 = vmul.f32 %v6687, 0.01
        %v6704 = vmul.f32 %v6688, 0.01
        %v6705 = vmul.f32 %v6689, 0.01
        %v6706 = vsel %vm6690, %v6682, %v6698
        %v6707 = vsel %vm6691, %v6683, %v6699
        %v6708 = vsel %vm6692, %v6684, %v6700
        %v6709 = vsel %vm6693, %v6685, %v6701
        %v6710 = vsel %vm6694, %v6686, %v6702
        %v6711 = vsel %vm6695, %v6687, %v6703
        %v6712 = vsel %vm6696, %v6688, %v6704
        %v6713 = vsel %vm6697, %v6689, %v6705
        %6714 = vst [vmem:[%s245] sm:$0xff] %v6706
        %6715 = vst [vmem:[%s245 + $0x8] sm:$0xff] %v6707
        %6716 = vst [vmem:[%s245 + $0x10] sm:$0xff] %v6708
        %6717 = vst [vmem:[%s245 + $0x18] sm:$0xff] %v6709
        %6718 = vst [vmem:[%s245 + $0x20] sm:$0xff] %v6710
        %6719 = vst [vmem:[%s245 + $0x28] sm:$0xff] %v6711
        %6720 = vst [vmem:[%s245 + $0x30] sm:$0xff] %v6712
        %6721 = vst [vmem:[%s245 + $0x38] sm:$0xff] %v6713
        %s6722 = sand.u32 %s159, 1
        %s6723 = scalar_lea.sflag [#allocation3], %s6722
        %s6724 = sand.u32 %s159, 1
        %s6725 = smul.addr %s6724, 64
        %s6726 = scalar_lea.vmem [#allocation2], %s6725
        // Predicated region
        $region45: #{tpu_custom_call.1} parent=43 // pred_check
          %p6727 = pneg %p169
        $region46: #{tpu_custom_call.1} parent=43 // pred_check_branch
          %6729 = sbr.rel (%p6727) target = $region48
        $region47: #{tpu_custom_call.1} parent=43 // pred_region
          %s6730 = smul.u32 8, %s20
          %s6732 = ssub.s32 1024, 1024
          %6733 = vsyncadd %s6723, %s6732
          %s6734 = smul.addr %s6730, 128
          %s6735 = scalar_lea.hbm %s6, %s6734
          %s6737 = sshll.u32 %s6726, 4
          %s6738 = int_to_ptr.vmem [resolvable:$true] %s6737
          %6740 = dma.vmem_to_hbm [thread:$0]  %s6738, 1024, %s6735, %s6723
        $region48: #{tpu_custom_call.1} parent=43 // pred_fallthru
          _
      $region44: #{tpu_custom_call.1} parent=5 // pred_fallthru
        _
      %p6741 = scmp.le.s32.totalorder 2, %s15
      // Predicated region
      $region49: #{tpu_custom_call.1} parent=5 // pred_check
        %p6742 = pneg %p6741
      $region50: #{tpu_custom_call.1} parent=5 // pred_check_branch
        %6744 = sbr.rel (%p6742) target = $region52
      $region51: #{tpu_custom_call.1} parent=5 // pred_region
        %s6745 = ssub.s32 %s15, 2
        // Predicated region
        $region53: #{tpu_custom_call.1} parent=51 // pred_check
          %p6746 = pneg %p175
        $region54: #{tpu_custom_call.1} parent=51 // pred_check_branch
          %6748 = sbr.rel (%p6746) target = $region56
        $region55: #{tpu_custom_call.1} parent=51 // pred_region
          %s6749 = sand.u32 %s160, 1
          %s6750 = scalar_lea.sflag [#allocation3], %s6749
          %s6751 = sand.u32 %s160, 1
          %s6752 = smul.addr %s6751, 64
          %s6753 = scalar_lea.vmem [#allocation2], %s6752
          %6754 = dma.done %s6750, 1024
        $region56: #{tpu_custom_call.1} parent=51 // pred_fallthru
          _
      $region52: #{tpu_custom_call.1} parent=5 // pred_fallthru
        _
    $region6: #{tpu_custom_call.1} parent=1 // loop_footer
      %s19 = sadd.s32 1, %s15
    $region7: #{tpu_custom_call.1} parent=1 // loop_footer_branch
      %14 = sbr.rel target = $region3
    $region8: #{tpu_custom_call.1} parent=1 // loop_exit
      _
    %6755 = vsyncpa [#allocation3], 1
    %s6756 = scalar_lea.sflag [#allocation3], 1
    %6757 = vsyncpa %s6756, 1

</llo_original>
